<compile_context>
chip_gen: v6e
topology: v6e:2x2x1
jax: 0.10.0
libtpu: 0.0.40
codegen_flags: <defaults>
</compile_context>

<pallas_src>
import functools

import numpy as np
import jax
import jax.numpy as jnp
from jax.experimental import pallas as pl
from jax.experimental.pallas import tpu as pltpu

_LANE = 128
_BLOCK_CAP_BYTES = 4 << 20      # per-operand VMEM block budget for tiling choices

ASPP_DILATIONS = (1, 2, 4, 6)   # branch 0 = 1x1; branches 1..3 = 3x3 dilated


# ---------------------------------------------------------------------------
# small helpers
# ---------------------------------------------------------------------------
@functools.lru_cache(maxsize=None)
def _is_megacore():
    """True on chips with >1 TensorCore per JAX device (v4 / v5p / v7x)."""
    try:
        kind = jax.devices()[0].device_kind.lower()
    except Exception:
        return False
    return any(t in kind for t in ("v4", "v5p", "v7", "7x"))


def _pick_tile_n(n, k, itemsize):
    """Lane-dim tile: full extent on single-TC chips (v5e/v6e); split in two on
    megacore chips when large; halved further only if the block would blow the
    per-operand VMEM budget.  Always returns a divisor of n."""
    if n <= _LANE or n % _LANE != 0:
        return n
    cap = max(_LANE, (_BLOCK_CAP_BYTES // max(1, k * itemsize)) // _LANE * _LANE)
    tn = n
    if _is_megacore() and n >= 2 * _LANE and (n // 2) % _LANE == 0:
        tn = n // 2
    while tn > cap and tn % 2 == 0 and (tn // 2) % _LANE == 0:
        tn //= 2
    return tn


def _mosaic_params(semantics, block_bytes):
    # Explicit VMEM budgeting (matters on v7x: 64 MiB physical / 32 MiB scoped).
    limit = int(min(64 << 20, max(3 * block_bytes + (4 << 20), 32 << 20)))
    return pltpu.CompilerParams(dimension_semantics=tuple(semantics),
                                vmem_limit_bytes=limit)


def _full_spec(shape):
    shape = tuple(shape)
    return pl.BlockSpec(shape, lambda *_: (0,) * len(shape))


# ---------------------------------------------------------------------------
# GEMM kernel: out = act(W @ X + b), lane-dense output (lanes = B*H*W)
# ---------------------------------------------------------------------------
def _gemm_kernel(w_ref, x_ref, b_ref, o_ref, *, relu):
    y = jnp.dot(w_ref[...], x_ref[...], preferred_element_type=jnp.float32)
    y = y + b_ref[...]
    if relu:
        y = jnp.maximum(y, 0.0)
    o_ref[...] = y.astype(o_ref.dtype)


def matmul_bias_act(w, x, bias, *, relu=False, op_dtype=jnp.bfloat16,
                    out_dtype=jnp.bfloat16):
    """w: (M, K), x: (K, N), bias: (M, 1) -> (M, N).  N (= batch*spatial) sits
    on the lane axis so stores are unmasked; M/K are always full blocks."""
    M, K = w.shape
    K2, N = x.shape
    assert K2 == K and bias.shape == (M, 1)
    w = w.astype(op_dtype)
    x = x.astype(op_dtype)
    bias = bias.astype(jnp.float32)
    isz = np.dtype(op_dtype).itemsize
    osz = np.dtype(out_dtype).itemsize
    tn = _pick_tile_n(N, K, isz)
    block_bytes = (M * K + K * tn) * isz + M * 4 + M * tn * osz
    return pl.pallas_call(
        functools.partial(_gemm_kernel, relu=relu),
        out_shape=jax.ShapeDtypeStruct((M, N), out_dtype),
        grid=(N // tn,),
        in_specs=[
            _full_spec((M, K)),
            pl.BlockSpec((K, tn), lambda j: (0, j)),
            _full_spec((M, 1)),
        ],
        out_specs=pl.BlockSpec((M, tn), lambda j: (0, j)),
        compiler_params=_mosaic_params(("parallel",), block_bytes),
    )(w, x, bias)


# ---------------------------------------------------------------------------
# Fused ASPP (+ image pooling folded into a bias) + low-level projection
# ---------------------------------------------------------------------------
def _aspp_lowproj_kernel(a0_ref, ad_ref, w0_ref, b0_ref, wd_ref, bd_ref,
                         wp_ref, bp_ref, wpool_ref, bpool_ref, wp4_ref,
                         pm_ref, pe_ref, lowf_ref, wlp_ref, blp_ref,
                         aspp_ref, lowp_ref):
    f32 = jnp.float32
    bf16 = jnp.bfloat16
    a0 = a0_ref[...]
    # branch 0: 1x1 conv (fast path, no centre-tap 3x3 embedding)
    br = jnp.maximum(jnp.dot(w0_ref[...], a0, preferred_element_type=f32)
                     + b0_ref[...], 0.0)
    acc = jnp.dot(wp_ref[0], br.astype(bf16), preferred_element_type=f32)
    # branches 1..3: dilated 3x3 convs, accumulated straight into the 1x1
    # projection -- the 5-way channel concat never materializes.
    for g in range(3):
        brg = jnp.maximum(
            jnp.dot(wd_ref[g], ad_ref[g], preferred_element_type=f32)
            + bd_ref[g], 0.0)
        acc = acc + jnp.dot(wp_ref[g + 1], brg.astype(bf16),
                            preferred_element_type=f32)
    # image-pooling branch folded into a per-batch additive bias:
    #   spatial mean -> 1x1 conv + ReLU -> projection slice -> expand over lanes.
    means = jnp.dot(a0.astype(f32), pm_ref[...], preferred_element_type=f32)
    pooled = jnp.maximum(
        jnp.dot(wpool_ref[...], means, preferred_element_type=f32)
        + bpool_ref[...], 0.0)
    pooled_bias = jnp.dot(
        jnp.dot(wp4_ref[...], pooled, preferred_element_type=f32),
        pe_ref[...], preferred_element_type=f32)
    aspp_ref[...] = jnp.maximum(acc + bp_ref[...] + pooled_bias,
                                0.0).astype(aspp_ref.dtype)
    # low-level 1x1 projection (independent work, horizontally fused here)
    lowp_ref[...] = jnp.maximum(
        jnp.dot(wlp_ref[...], lowf_ref[...], preferred_element_type=f32)
        + blp_ref[...], 0.0).astype(lowp_ref.dtype)


def aspp_lowproj(pa, plp, a0, ad, lowf, pm, pe):
    cout = pa["w0"].shape[0]
    m16 = a0.shape[1]
    clp = plp["w"].shape[0]
    ml = lowf.shape[1]
    ins = [a0.astype(jnp.bfloat16), ad.astype(jnp.bfloat16),
           pa["w0"], pa["b0"], pa["wd"], pa["bd"], pa["wp"], pa["bp"],
           pa["wpool"], pa["bpool"], pa["wp4"], pm, pe,
           lowf.astype(jnp.bfloat16), plp["w"], plp["b"]]
    block_bytes = sum(int(v.size) * v.dtype.itemsize for v in ins)
    block_bytes += cout * m16 * 2 + clp * ml * 2
    return pl.pallas_call(
        _aspp_lowproj_kernel,
        out_shape=(jax.ShapeDtypeStruct((cout, m16), jnp.bfloat16),
                   jax.ShapeDtypeStruct((clp, ml), jnp.bfloat16)),
        grid=(1,),
        in_specs=[_full_spec(v.shape) for v in ins],
        out_specs=(_full_spec((cout, m16)), _full_spec((clp, ml))),
        compiler_params=_mosaic_params(("arbitrary",), block_bytes),
    )(*ins)


# ---------------------------------------------------------------------------
# Fused decoder 3x3 conv (split-K over [up ; low-proj]) + 1x1 head
# ---------------------------------------------------------------------------
def _decoder_head_kernel(a_up_ref, a_low_ref, w_up_ref, w_low_ref, b_dec_ref,
                         w_head_ref, b_head_ref, o_ref):
    f32 = jnp.float32
    dec = jnp.dot(w_up_ref[...], a_up_ref[...], preferred_element_type=f32)
    dec = dec + jnp.dot(w_low_ref[...], a_low_ref[...], preferred_element_type=f32)
    dec = jnp.maximum(dec + b_dec_ref[...], 0.0)
    logits = jnp.dot(w_head_ref[...], dec.astype(jnp.bfloat16),
                     preferred_element_type=f32) + b_head_ref[...]
    o_ref[...] = logits.astype(o_ref.dtype)


def decoder_head(pdec, phead, a_up, a_low):
    w_up, w_low, b_dec = pdec["w_up"], pdec["w_low"], pdec["b"]
    w_head, b_head = phead["w"], phead["b"]
    cdec, kup = w_up.shape
    klo = w_low.shape[1]
    classes = w_head.shape[0]
    n = a_up.shape[1]
    a_up = a_up.astype(jnp.bfloat16)
    a_low = a_low.astype(jnp.bfloat16)
    tn = _pick_tile_n(n, kup + klo, 2)
    block_bytes = ((kup + klo) * tn + cdec * (kup + klo) + classes * cdec) * 2 \
                  + (cdec + classes) * 4 + classes * tn * 4
    return pl.pallas_call(
        _decoder_head_kernel,
        out_shape=jax.ShapeDtypeStruct((classes, n), jnp.float32),
        grid=(n // tn,),
        in_specs=[
            pl.BlockSpec((kup, tn), lambda j: (0, j)),
            pl.BlockSpec((klo, tn), lambda j: (0, j)),
            _full_spec((cdec, kup)),
            _full_spec((cdec, klo)),
            _full_spec((cdec, 1)),
            _full_spec((classes, cdec)),
            _full_spec((classes, 1)),
        ],
        out_specs=pl.BlockSpec((classes, tn), lambda j: (0, j)),
        compiler_params=_mosaic_params(("parallel",), block_bytes),
    )(a_up, a_low, w_up, w_low, b_dec, w_head, b_head)


# ---------------------------------------------------------------------------
# Separable bilinear upsampling (align_corners=True, i.e. nn.UpsamplingBilinear2d)
# ---------------------------------------------------------------------------
def _interp_matrix(out_size, in_size, align_corners=True):
    if align_corners and out_size > 1:
        c = np.arange(out_size, dtype=np.float64) * (in_size - 1) / max(out_size - 1, 1)
    else:
        c = (np.arange(out_size, dtype=np.float64) + 0.5) * (in_size / out_size) - 0.5
        c = np.clip(c, 0.0, in_size - 1)
    lo = np.floor(c).astype(np.int64)
    hi = np.minimum(lo + 1, in_size - 1)
    frac = c - lo
    R = np.zeros((out_size, in_size), np.float64)
    np.add.at(R, (np.arange(out_size), lo), 1.0 - frac)
    np.add.at(R, (np.arange(out_size), hi), frac)
    return R.astype(np.float32)


def upsample_bilinear_cm(x, oh, ow):
    """(C, B, h, w) -> (C, B, oh, ow): separable bilinear as two lane-dense
    Pallas GEMMs (no O(oh*ow x h*w) Kronecker matrix)."""
    C, B, h, w = x.shape
    if (oh, ow) == (h, w):
        return x
    rx = jnp.asarray(_interp_matrix(ow, w))
    ry = jnp.asarray(_interp_matrix(oh, h))
    # W axis: (ow, w) @ (w, C*B*h)
    xt = jnp.transpose(x, (3, 0, 1, 2)).reshape(w, C * B * h)
    zw = matmul_bias_act(rx, xt, jnp.zeros((ow, 1), jnp.float32))
    # H axis: (oh, h) @ (h, ow*C*B)
    zt = jnp.transpose(zw.reshape(ow, C, B, h), (3, 0, 1, 2)).reshape(h, ow * C * B)
    zh = matmul_bias_act(ry, zt, jnp.zeros((oh, 1), jnp.float32))
    return jnp.transpose(zh.reshape(oh, ow, C, B), (2, 3, 0, 1))


def _bilinear_slice_kernel(x_ref, rxt_ref, ry_ref, o_ref):
    z = jnp.dot(x_ref[...], rxt_ref[...], preferred_element_type=jnp.float32)
    o_ref[...] = jnp.dot(ry_ref[...], z,
                         preferred_element_type=jnp.float32).astype(o_ref.dtype)


def upsample_bilinear_slices(x, oh, ow):
    """(S, h, w) -> (S, oh, ow) f32: one launch, grid over the (few) class*batch
    slices; per slice Ry @ X @ Rx^T, all in f32 for the final logits."""
    S, h, w = x.shape
    rxt = jnp.asarray(_interp_matrix(ow, w).T)
    ry = jnp.asarray(_interp_matrix(oh, h))
    block_bytes = (h * w + w * ow + oh * h + oh * ow) * 4
    return pl.pallas_call(
        _bilinear_slice_kernel,
        out_shape=jax.ShapeDtypeStruct((S, oh, ow), jnp.float32),
        grid=(S,),
        in_specs=[
            pl.BlockSpec((None, h, w), lambda s: (s, 0, 0)),
            _full_spec((w, ow)),
            _full_spec((oh, h)),
        ],
        out_specs=pl.BlockSpec((None, oh, ow), lambda s: (s, 0, 0)),
        compiler_params=_mosaic_params(("parallel",), block_bytes),
    )(x.astype(jnp.float32), rxt, ry)


# ---------------------------------------------------------------------------
# Channel-major im2col (XLA glue) + conv wrapper
# ---------------------------------------------------------------------------
def _im2col_cm(x, kh, kw, stride, dilation, pad):
    """(C, B, H, W) -> (kh*kw*C, B*ho*wo); tap-major, channel-minor rows."""
    C, B, H, W = x.shape
    xp = jnp.pad(x, ((0, 0), (0, 0), (pad, pad), (pad, pad)))
    Hp, Wp = H + 2 * pad, W + 2 * pad
    ho = (Hp - dilation * (kh - 1) - 1) // stride + 1
    wo = (Wp - dilation * (kw - 1) - 1) // stride + 1
    taps = []
    for i in range(kh):
        for j in range(kw):
            taps.append(
                xp[:, :, i * dilation: i * dilation + (ho - 1) * stride + 1: stride,
                         j * dilation: j * dilation + (wo - 1) * stride + 1: stride])
    cols = jnp.concatenate(taps, axis=0)
    return cols.reshape(kh * kw * C, B * ho * wo), ho, wo


def conv_bn_act_cm(x, p, *, stride=1, dilation=1, relu=True):
    """Conv + folded BN (+ReLU).  x: (Cin, B, H, W) -> (Cout, B, ho, wo)."""
    w, bias = p["w"], p["b"]
    kh, kw = p["ksize"]
    Cin, B, H, W = x.shape
    if kh == 1 and kw == 1 and stride == 1 and dilation == 1:
        A, ho, wo = x.reshape(Cin, B * H * W), H, W
    else:
        pad = dilation * (kh // 2)
        A, ho, wo = _im2col_cm(x, kh, kw, stride, dilation, pad)
    y = matmul_bias_act(w, A, bias, relu=relu)
    return y.reshape(w.shape[0], B, ho, wo)


# ---------------------------------------------------------------------------
# Deterministic synthetic parameters (BN folded into weights at init)
# ---------------------------------------------------------------------------
def _conv_weights(key, kh, kw, cin, cout, *, bn=True):
    k1, k2, k3 = jax.random.split(key, 3)
    fan_in = kh * kw * cin
    w = jax.random.normal(k1, (kh, kw, cin, cout), jnp.float32) * (2.0 / fan_in) ** 0.5
    if bn:
        scale = 1.0 + 0.05 * jax.random.normal(k2, (cout,), jnp.float32)
    else:
        scale = jnp.ones((cout,), jnp.float32)
    bias = 0.05 * jax.random.normal(k3, (cout,), jnp.float32)
    return w, scale, bias


def _fold_cm(w, scale, bias, dtype=jnp.bfloat16):
    """HWIO weight + BN scale/bias -> channel-major (Cout, kh*kw*Cin) + (Cout,1)."""
    kh, kw, cin, cout = w.shape
    wm = (w * scale[None, None, None, :]).transpose(3, 0, 1, 2).reshape(cout, kh * kw * cin)
    return wm.astype(dtype), bias.reshape(cout, 1).astype(jnp.float32)


def init_params(key, classes=1):
    params = {}
    enc = [("stem", 3, 3, 16), ("stage1", 3, 16, 24), ("stage2", 3, 24, 32),
           ("stage3", 3, 32, 48), ("stage4", 3, 48, 64)]
    for i, (name, k, cin, cout) in enumerate(enc):
        w, s, b = _conv_weights(jax.random.fold_in(key, i), k, k, cin, cout)
        wm, bm = _fold_cm(w, s, b)
        params[name] = {"w": wm, "b": bm, "ksize": (k, k)}

    # ASPP: 1x1 branch + three dilated 3x3 branches
    w0, s0, b0 = _conv_weights(jax.random.fold_in(key, 50), 1, 1, 64, 64)
    w0m, b0m = _fold_cm(w0, s0, b0)
    wds, bds = [], []
    for bi in range(3):
        w, s, b = _conv_weights(jax.random.fold_in(key, 51 + bi), 3, 3, 64, 64)
        wm, bm = _fold_cm(w, s, b)
        wds.append(wm)
        bds.append(bm)
    # image-pooling 1x1 conv (kept f32: folded into a per-batch bias in-kernel)
    wpo, spo, bpo = _conv_weights(jax.random.fold_in(key, 60), 1, 1, 64, 64)
    wpom, bpom = _fold_cm(wpo, spo, bpo, dtype=jnp.float32)
    # 1x1 projection over the 5 concatenated groups, split per group so the
    # concat never materializes (group 4 = pooled branch).
    wpr, spr, bpr = _conv_weights(jax.random.fold_in(key, 61), 1, 1, 5 * 64, 64)
    wprm, bprm = _fold_cm(wpr, spr, bpr, dtype=jnp.float32)
    wp = jnp.stack([wprm[:, g * 64:(g + 1) * 64].astype(jnp.bfloat16) for g in range(4)])
    wp4 = wprm[:, 4 * 64:]
    params["aspp"] = {"w0": w0m, "b0": b0m, "wd": jnp.stack(wds), "bd": jnp.stack(bds),
                      "wp": wp, "wp4": wp4, "bp": bprm,
                      "wpool": wpom, "bpool": bpom}

    # low-level 1x1 projection
    w, s, b = _conv_weights(jax.random.fold_in(key, 70), 1, 1, 24, 48)
    wm, bm = _fold_cm(w, s, b)
    params["low_proj"] = {"w": wm, "b": bm}

    # decoder 3x3 conv over the [up(64) ; lowp(48)] channels, split per source
    w, s, b = _conv_weights(jax.random.fold_in(key, 80), 3, 3, 64 + 48, 64)
    w_up, _ = _fold_cm(w[:, :, :64, :], s, jnp.zeros((64,), jnp.float32))
    w_lo, bdec = _fold_cm(w[:, :, 64:, :], s, b)
    params["decoder"] = {"w_up": w_up, "w_low": w_lo, "b": bdec}

    # 1x1 segmentation head (no BN), fused into the decoder kernel
    w, s, b = _conv_weights(jax.random.fold_in(key, 90), 1, 1, 64, classes, bn=False)
    wm, bm = _fold_cm(w, s, b)
    params["head"] = {"w": wm, "b": bm}
    return params


# ---------------------------------------------------------------------------
# DeepLabV3Plus-style forward
# ---------------------------------------------------------------------------
def segmentation_model_forward(params, x_nchw):
    B, _, H, W = x_nchw.shape
    assert H % 16 == 0 and W % 16 == 0
    x = jnp.transpose(x_nchw, (1, 0, 2, 3)).astype(jnp.float32)      # channel-major

    # Encoder (reduced ResNet-style stack, output_stride = 16)
    f = conv_bn_act_cm(x, params["stem"], stride=2)                  # /2
    low = conv_bn_act_cm(f, params["stage1"], stride=2)              # /4  (skip)
    f = conv_bn_act_cm(low, params["stage2"], stride=2)              # /8
    f = conv_bn_act_cm(f, params["stage3"], stride=2)                # /16
    high = conv_bn_act_cm(f, params["stage4"], stride=1, dilation=2)  # /16 dilated

    # ASPP (4 conv branches + image pooling + projection) + low-proj: ONE launch
    c_h, _, hh, wh = high.shape
    a0 = high.reshape(c_h, B * hh * wh)
    ad = jnp.stack([_im2col_cm(high, 3, 3, 1, d, d)[0] for d in ASPP_DILATIONS[1:]])
    lowf = low.reshape(low.shape[0], -1)
    hw = hh * wh
    pm = jnp.asarray(np.kron(np.eye(B, dtype=np.float32),
                             np.full((hw, 1), 1.0 / hw, np.float32)))
    pe = jnp.asarray(np.kron(np.eye(B, dtype=np.float32),
                             np.ones((1, hw), np.float32)))
    aspp_flat, lowp_flat = aspp_lowproj(params["aspp"], params["low_proj"],
                                        a0, ad, lowf, pm, pe)
    aspp = aspp_flat.reshape(-1, B, hh, wh)
    h4, w4 = low.shape[2], low.shape[3]
    lowp = lowp_flat.reshape(-1, B, h4, w4)

    # Decoder: x4 separable upsample, split-K fuse with skip, 3x3 conv + 1x1 head
    up = upsample_bilinear_cm(aspp, h4, w4)
    a_up = _im2col_cm(up, 3, 3, 1, 1, 1)[0]
    a_lo = _im2col_cm(lowp, 3, 3, 1, 1, 1)[0]
    logits_low = decoder_head(params["decoder"], params["head"], a_up, a_lo)

    # Final x4 upsample to full resolution, emit NCHW f32 logits
    classes = logits_low.shape[0]
    ll = logits_low.reshape(classes * B, h4, w4)
    full = upsample_bilinear_slices(ll, H, W)
    return full.reshape(classes, B, H, W).transpose(1, 0, 2, 3)


if __name__ == "__main__":
    B, C_IN, H, W = 2, 3, 64, 64
    CLASSES = 1

    x = jax.random.normal(jax.random.PRNGKey(0), (B, C_IN, H, W), jnp.float32)
    params = init_params(jax.random.PRNGKey(1), classes=CLASSES)

    fwd = jax.jit(lambda inp: segmentation_model_forward(params, inp))
    y = fwd(x)
    jax.block_until_ready(y)

    assert y.shape == (B, CLASSES, H, W), y.shape
    assert y.dtype == jnp.float32, y.dtype
    assert bool(jnp.all(jnp.isfinite(y)))
    print("KERNEL_OK")
</pallas_src>

<mosaic_0001>
module attributes {stable_mosaic.version = 11 : i64} {
  func.func @_gemm_kernel(%arg0: i32, %arg1: memref<16x27xbf16, #tpu.memory_space<vmem>>, %arg2: memref<27x2048xbf16, #tpu.memory_space<vmem>>, %arg3: memref<16x1xf32, #tpu.memory_space<vmem>>, %arg4: memref<16x2048xbf16, #tpu.memory_space<vmem>>) attributes {dimension_semantics = [#tpu.dimension_semantics<parallel>], iteration_bounds = array<i64: 1>, scalar_prefetch = 0 : i64, scratch_operands = 0 : i64, tpu.core_type = #tpu.core_type<tc>, window_params = [{pipeline_mode = #tpu.pipeline_mode<synchronous>, transform_indices = @transform_0, window_bounds = array<i64: 16, 27>}, {transform_indices = @transform_1, window_bounds = array<i64: 27, 2048>}, {pipeline_mode = #tpu.pipeline_mode<synchronous>, transform_indices = @transform_2, window_bounds = array<i64: 16, 1>}, {transform_indices = @transform_3, window_bounds = array<i64: 16, 2048>}]} {
    %c0 = arith.constant 0 : index
    %c0_0 = arith.constant 0 : index
    %0 = vector.load %arg1[%c0, %c0_0] : memref<16x27xbf16, #tpu.memory_space<vmem>>, vector<16x27xbf16>
    %c0_1 = arith.constant 0 : index
    %c0_2 = arith.constant 0 : index
    %1 = vector.load %arg2[%c0_1, %c0_2] : memref<27x2048xbf16, #tpu.memory_space<vmem>>, vector<27x2048xbf16>
    %cst = arith.constant dense<0.000000e+00> : vector<16x2048xf32>
    %2 = tpu.matmul %0, %1, %cst {dimension_numbers = #tpu.dot_dimension_numbers<[1], [0], [0], [1], [0, 0, 1, 1], [], []>} : vector<16x27xbf16>, vector<27x2048xbf16>, vector<16x2048xf32> -> vector<16x2048xf32>
    %c0_3 = arith.constant 0 : index
    %c0_4 = arith.constant 0 : index
    %3 = vector.load %arg3[%c0_3, %c0_4] : memref<16x1xf32, #tpu.memory_space<vmem>>, vector<16x1xf32>
    %4 = vector.broadcast %3 : vector<16x1xf32> to vector<16x2048xf32>
    %5 = arith.addf %2, %4 : vector<16x2048xf32>
    %cst_5 = arith.constant 0.000000e+00 : f32
    %6 = vector.broadcast %cst_5 : f32 to vector<16x2048xf32>
    %7 = arith.maximumf %5, %6 : vector<16x2048xf32>
    %8 = arith.truncf %7 : vector<16x2048xf32> to vector<16x2048xbf16>
    %c0_6 = arith.constant 0 : index
    %c0_7 = arith.constant 0 : index
    %9 = vector.load %arg4[%c0_6, %c0_7] : memref<16x2048xbf16, #tpu.memory_space<vmem>>, vector<16x2048xbf16>
    tpu.vector_store %arg4[%c0_6, %c0_7], %8 {strides = array<i32>} : memref<16x2048xbf16, #tpu.memory_space<vmem>>, vector<16x2048xbf16>,
    return
  }
  func.func @transform_0(%arg0: i32) -> (i32, i32) {
    %c0_i32 = arith.constant 0 : i32
    %c0_i32_0 = arith.constant 0 : i32
    %c0_i32_1 = arith.constant 0 : i32
    return %c0_i32, %c0_i32_0 : i32, i32
  }
  func.func @transform_1(%arg0: i32) -> (i32, i32) {
    %c0_i32 = arith.constant 0 : i32
    %c0_i32_0 = arith.constant 0 : i32
    return %c0_i32, %arg0 : i32, i32
  }
  func.func @transform_2(%arg0: i32) -> (i32, i32) {
    %c0_i32 = arith.constant 0 : i32
    %c0_i32_0 = arith.constant 0 : i32
    %c0_i32_1 = arith.constant 0 : i32
    return %c0_i32, %c0_i32_0 : i32, i32
  }
  func.func @transform_3(%arg0: i32) -> (i32, i32) {
    %c0_i32 = arith.constant 0 : i32
    %c0_i32_0 = arith.constant 0 : i32
    return %c0_i32, %arg0 : i32, i32
  }
}

module attributes {stable_mosaic.version = 11 : i64} {
  func.func @_gemm_kernel(%arg0: i32, %arg1: memref<24x144xbf16, #tpu.memory_space<vmem>>, %arg2: memref<144x512xbf16, #tpu.memory_space<vmem>>, %arg3: memref<24x1xf32, #tpu.memory_space<vmem>>, %arg4: memref<24x512xbf16, #tpu.memory_space<vmem>>) attributes {dimension_semantics = [#tpu.dimension_semantics<parallel>], iteration_bounds = array<i64: 1>, scalar_prefetch = 0 : i64, scratch_operands = 0 : i64, tpu.core_type = #tpu.core_type<tc>, window_params = [{pipeline_mode = #tpu.pipeline_mode<synchronous>, transform_indices = @transform_0, window_bounds = array<i64: 24, 144>}, {transform_indices = @transform_1, window_bounds = array<i64: 144, 512>}, {pipeline_mode = #tpu.pipeline_mode<synchronous>, transform_indices = @transform_2, window_bounds = array<i64: 24, 1>}, {transform_indices = @transform_3, window_bounds = array<i64: 24, 512>}]} {
    %c0 = arith.constant 0 : index
    %c0_0 = arith.constant 0 : index
    %0 = vector.load %arg1[%c0, %c0_0] : memref<24x144xbf16, #tpu.memory_space<vmem>>, vector<24x144xbf16>
    %c0_1 = arith.constant 0 : index
    %c0_2 = arith.constant 0 : index
    %1 = vector.load %arg2[%c0_1, %c0_2] : memref<144x512xbf16, #tpu.memory_space<vmem>>, vector<144x512xbf16>
    %cst = arith.constant dense<0.000000e+00> : vector<24x512xf32>
    %2 = tpu.matmul %0, %1, %cst {dimension_numbers = #tpu.dot_dimension_numbers<[1], [0], [0], [1], [0, 0, 1, 1], [], []>} : vector<24x144xbf16>, vector<144x512xbf16>, vector<24x512xf32> -> vector<24x512xf32>
    %c0_3 = arith.constant 0 : index
    %c0_4 = arith.constant 0 : index
    %3 = vector.load %arg3[%c0_3, %c0_4] : memref<24x1xf32, #tpu.memory_space<vmem>>, vector<24x1xf32>
    %4 = vector.broadcast %3 : vector<24x1xf32> to vector<24x512xf32>
    %5 = arith.addf %2, %4 : vector<24x512xf32>
    %cst_5 = arith.constant 0.000000e+00 : f32
    %6 = vector.broadcast %cst_5 : f32 to vector<24x512xf32>
    %7 = arith.maximumf %5, %6 : vector<24x512xf32>
    %8 = arith.truncf %7 : vector<24x512xf32> to vector<24x512xbf16>
    %c0_6 = arith.constant 0 : index
    %c0_7 = arith.constant 0 : index
    %9 = vector.load %arg4[%c0_6, %c0_7] : memref<24x512xbf16, #tpu.memory_space<vmem>>, vector<24x512xbf16>
    tpu.vector_store %arg4[%c0_6, %c0_7], %8 {strides = array<i32>} : memref<24x512xbf16, #tpu.memory_space<vmem>>, vector<24x512xbf16>,
    return
  }
  func.func @transform_0(%arg0: i32) -> (i32, i32) {
    %c0_i32 = arith.constant 0 : i32
    %c0_i32_0 = arith.constant 0 : i32
    %c0_i32_1 = arith.constant 0 : i32
    return %c0_i32, %c0_i32_0 : i32, i32
  }
  func.func @transform_1(%arg0: i32) -> (i32, i32) {
    %c0_i32 = arith.constant 0 : i32
    %c0_i32_0 = arith.constant 0 : i32
    return %c0_i32, %arg0 : i32, i32
  }
  func.func @transform_2(%arg0: i32) -> (i32, i32) {
    %c0_i32 = arith.constant 0 : i32
    %c0_i32_0 = arith.constant 0 : i32
    %c0_i32_1 = arith.constant 0 : i32
    return %c0_i32, %c0_i32_0 : i32, i32
  }
  func.func @transform_3(%arg0: i32) -> (i32, i32) {
    %c0_i32 = arith.constant 0 : i32
    %c0_i32_0 = arith.constant 0 : i32
    return %c0_i32, %arg0 : i32, i32
  }
}

module attributes {stable_mosaic.version = 11 : i64} {
  func.func @_gemm_kernel(%arg0: i32, %arg1: memref<32x216xbf16, #tpu.memory_space<vmem>>, %arg2: memref<216x128xbf16, #tpu.memory_space<vmem>>, %arg3: memref<32x1xf32, #tpu.memory_space<vmem>>, %arg4: memref<32x128xbf16, #tpu.memory_space<vmem>>) attributes {dimension_semantics = [#tpu.dimension_semantics<parallel>], iteration_bounds = array<i64: 1>, scalar_prefetch = 0 : i64, scratch_operands = 0 : i64, tpu.core_type = #tpu.core_type<tc>, window_params = [{pipeline_mode = #tpu.pipeline_mode<synchronous>, transform_indices = @transform_0, window_bounds = array<i64: 32, 216>}, {transform_indices = @transform_1, window_bounds = array<i64: 216, 128>}, {pipeline_mode = #tpu.pipeline_mode<synchronous>, transform_indices = @transform_2, window_bounds = array<i64: 32, 1>}, {transform_indices = @transform_3, window_bounds = array<i64: 32, 128>}]} {
    %c0 = arith.constant 0 : index
    %c0_0 = arith.constant 0 : index
    %0 = vector.load %arg1[%c0, %c0_0] : memref<32x216xbf16, #tpu.memory_space<vmem>>, vector<32x216xbf16>
    %c0_1 = arith.constant 0 : index
    %c0_2 = arith.constant 0 : index
    %1 = vector.load %arg2[%c0_1, %c0_2] : memref<216x128xbf16, #tpu.memory_space<vmem>>, vector<216x128xbf16>
    %cst = arith.constant dense<0.000000e+00> : vector<32x128xf32>
    %2 = tpu.matmul %0, %1, %cst {dimension_numbers = #tpu.dot_dimension_numbers<[1], [0], [0], [1], [0, 0, 1, 1], [], []>} : vector<32x216xbf16>, vector<216x128xbf16>, vector<32x128xf32> -> vector<32x128xf32>
    %c0_3 = arith.constant 0 : index
    %c0_4 = arith.constant 0 : index
    %3 = vector.load %arg3[%c0_3, %c0_4] : memref<32x1xf32, #tpu.memory_space<vmem>>, vector<32x1xf32>
    %4 = vector.broadcast %3 : vector<32x1xf32> to vector<32x128xf32>
    %5 = arith.addf %2, %4 : vector<32x128xf32>
    %cst_5 = arith.constant 0.000000e+00 : f32
    %6 = vector.broadcast %cst_5 : f32 to vector<32x128xf32>
    %7 = arith.maximumf %5, %6 : vector<32x128xf32>
    %8 = arith.truncf %7 : vector<32x128xf32> to vector<32x128xbf16>
    %c0_6 = arith.constant 0 : index
    %c0_7 = arith.constant 0 : index
    %9 = vector.load %arg4[%c0_6, %c0_7] : memref<32x128xbf16, #tpu.memory_space<vmem>>, vector<32x128xbf16>
    tpu.vector_store %arg4[%c0_6, %c0_7], %8 {strides = array<i32>} : memref<32x128xbf16, #tpu.memory_space<vmem>>, vector<32x128xbf16>,
    return
  }
  func.func @transform_0(%arg0: i32) -> (i32, i32) {
    %c0_i32 = arith.constant 0 : i32
    %c0_i32_0 = arith.constant 0 : i32
    %c0_i32_1 = arith.constant 0 : i32
    return %c0_i32, %c0_i32_0 : i32, i32
  }
  func.func @transform_1(%arg0: i32) -> (i32, i32) {
    %c0_i32 = arith.constant 0 : i32
    %c0_i32_0 = arith.constant 0 : i32
    return %c0_i32, %arg0 : i32, i32
  }
  func.func @transform_2(%arg0: i32) -> (i32, i32) {
    %c0_i32 = arith.constant 0 : i32
    %c0_i32_0 = arith.constant 0 : i32
    %c0_i32_1 = arith.constant 0 : i32
    return %c0_i32, %c0_i32_0 : i32, i32
  }
  func.func @transform_3(%arg0: i32) -> (i32, i32) {
    %c0_i32 = arith.constant 0 : i32
    %c0_i32_0 = arith.constant 0 : i32
    return %c0_i32, %arg0 : i32, i32
  }
}

module attributes {stable_mosaic.version = 11 : i64} {
  func.func @_gemm_kernel(%arg0: i32, %arg1: memref<48x288xbf16, #tpu.memory_space<vmem>>, %arg2: memref<288x32xbf16, #tpu.memory_space<vmem>>, %arg3: memref<48x1xf32, #tpu.memory_space<vmem>>, %arg4: memref<48x32xbf16, #tpu.memory_space<vmem>>) attributes {dimension_semantics = [#tpu.dimension_semantics<parallel>], iteration_bounds = array<i64: 1>, scalar_prefetch = 0 : i64, scratch_operands = 0 : i64, tpu.core_type = #tpu.core_type<tc>, window_params = [{pipeline_mode = #tpu.pipeline_mode<synchronous>, transform_indices = @transform_0, window_bounds = array<i64: 48, 288>}, {transform_indices = @transform_1, window_bounds = array<i64: 288, 32>}, {pipeline_mode = #tpu.pipeline_mode<synchronous>, transform_indices = @transform_2, window_bounds = array<i64: 48, 1>}, {transform_indices = @transform_3, window_bounds = array<i64: 48, 32>}]} {
    %c0 = arith.constant 0 : index
    %c0_0 = arith.constant 0 : index
    %0 = vector.load %arg1[%c0, %c0_0] : memref<48x288xbf16, #tpu.memory_space<vmem>>, vector<48x288xbf16>
    %c0_1 = arith.constant 0 : index
    %c0_2 = arith.constant 0 : index
    %1 = vector.load %arg2[%c0_1, %c0_2] : memref<288x32xbf16, #tpu.memory_space<vmem>>, vector<288x32xbf16>
    %cst = arith.constant dense<0.000000e+00> : vector<48x32xf32>
    %2 = tpu.matmul %0, %1, %cst {dimension_numbers = #tpu.dot_dimension_numbers<[1], [0], [0], [1], [0, 0, 1, 1], [], []>} : vector<48x288xbf16>, vector<288x32xbf16>, vector<48x32xf32> -> vector<48x32xf32>
    %c0_3 = arith.constant 0 : index
    %c0_4 = arith.constant 0 : index
    %3 = vector.load %arg3[%c0_3, %c0_4] : memref<48x1xf32, #tpu.memory_space<vmem>>, vector<48x1xf32>
    %4 = vector.broadcast %3 : vector<48x1xf32> to vector<48x32xf32>
    %5 = arith.addf %2, %4 : vector<48x32xf32>
    %cst_5 = arith.constant 0.000000e+00 : f32
    %6 = vector.broadcast %cst_5 : f32 to vector<48x32xf32>
    %7 = arith.maximumf %5, %6 : vector<48x32xf32>
    %8 = arith.truncf %7 : vector<48x32xf32> to vector<48x32xbf16>
    %c0_6 = arith.constant 0 : index
    %c0_7 = arith.constant 0 : index
    %9 = vector.load %arg4[%c0_6, %c0_7] : memref<48x32xbf16, #tpu.memory_space<vmem>>, vector<48x32xbf16>
    tpu.vector_store %arg4[%c0_6, %c0_7], %8 {strides = array<i32>} : memref<48x32xbf16, #tpu.memory_space<vmem>>, vector<48x32xbf16>,
    return
  }
  func.func @transform_0(%arg0: i32) -> (i32, i32) {
    %c0_i32 = arith.constant 0 : i32
    %c0_i32_0 = arith.constant 0 : i32
    %c0_i32_1 = arith.constant 0 : i32
    return %c0_i32, %c0_i32_0 : i32, i32
  }
  func.func @transform_1(%arg0: i32) -> (i32, i32) {
    %c0_i32 = arith.constant 0 : i32
    %c0_i32_0 = arith.constant 0 : i32
    return %c0_i32, %arg0 : i32, i32
  }
  func.func @transform_2(%arg0: i32) -> (i32, i32) {
    %c0_i32 = arith.constant 0 : i32
    %c0_i32_0 = arith.constant 0 : i32
    %c0_i32_1 = arith.constant 0 : i32
    return %c0_i32, %c0_i32_0 : i32, i32
  }
  func.func @transform_3(%arg0: i32) -> (i32, i32) {
    %c0_i32 = arith.constant 0 : i32
    %c0_i32_0 = arith.constant 0 : i32
    return %c0_i32, %arg0 : i32, i32
  }
}

module attributes {stable_mosaic.version = 11 : i64} {
  func.func @_gemm_kernel(%arg0: i32, %arg1: memref<64x432xbf16, #tpu.memory_space<vmem>>, %arg2: memref<432x32xbf16, #tpu.memory_space<vmem>>, %arg3: memref<64x1xf32, #tpu.memory_space<vmem>>, %arg4: memref<64x32xbf16, #tpu.memory_space<vmem>>) attributes {dimension_semantics = [#tpu.dimension_semantics<parallel>], iteration_bounds = array<i64: 1>, scalar_prefetch = 0 : i64, scratch_operands = 0 : i64, tpu.core_type = #tpu.core_type<tc>, window_params = [{pipeline_mode = #tpu.pipeline_mode<synchronous>, transform_indices = @transform_0, window_bounds = array<i64: 64, 432>}, {transform_indices = @transform_1, window_bounds = array<i64: 432, 32>}, {pipeline_mode = #tpu.pipeline_mode<synchronous>, transform_indices = @transform_2, window_bounds = array<i64: 64, 1>}, {transform_indices = @transform_3, window_bounds = array<i64: 64, 32>}]} {
    %c0 = arith.constant 0 : index
    %c0_0 = arith.constant 0 : index
    %0 = vector.load %arg1[%c0, %c0_0] : memref<64x432xbf16, #tpu.memory_space<vmem>>, vector<64x432xbf16>
    %c0_1 = arith.constant 0 : index
    %c0_2 = arith.constant 0 : index
    %1 = vector.load %arg2[%c0_1, %c0_2] : memref<432x32xbf16, #tpu.memory_space<vmem>>, vector<432x32xbf16>
    %cst = arith.constant dense<0.000000e+00> : vector<64x32xf32>
    %2 = tpu.matmul %0, %1, %cst {dimension_numbers = #tpu.dot_dimension_numbers<[1], [0], [0], [1], [0, 0, 1, 1], [], []>} : vector<64x432xbf16>, vector<432x32xbf16>, vector<64x32xf32> -> vector<64x32xf32>
    %c0_3 = arith.constant 0 : index
    %c0_4 = arith.constant 0 : index
    %3 = vector.load %arg3[%c0_3, %c0_4] : memref<64x1xf32, #tpu.memory_space<vmem>>, vector<64x1xf32>
    %4 = vector.broadcast %3 : vector<64x1xf32> to vector<64x32xf32>
    %5 = arith.addf %2, %4 : vector<64x32xf32>
    %cst_5 = arith.constant 0.000000e+00 : f32
    %6 = vector.broadcast %cst_5 : f32 to vector<64x32xf32>
    %7 = arith.maximumf %5, %6 : vector<64x32xf32>
    %8 = arith.truncf %7 : vector<64x32xf32> to vector<64x32xbf16>
    %c0_6 = arith.constant 0 : index
    %c0_7 = arith.constant 0 : index
    %9 = vector.load %arg4[%c0_6, %c0_7] : memref<64x32xbf16, #tpu.memory_space<vmem>>, vector<64x32xbf16>
    tpu.vector_store %arg4[%c0_6, %c0_7], %8 {strides = array<i32>} : memref<64x32xbf16, #tpu.memory_space<vmem>>, vector<64x32xbf16>,
    return
  }
  func.func @transform_0(%arg0: i32) -> (i32, i32) {
    %c0_i32 = arith.constant 0 : i32
    %c0_i32_0 = arith.constant 0 : i32
    %c0_i32_1 = arith.constant 0 : i32
    return %c0_i32, %c0_i32_0 : i32, i32
  }
  func.func @transform_1(%arg0: i32) -> (i32, i32) {
    %c0_i32 = arith.constant 0 : i32
    %c0_i32_0 = arith.constant 0 : i32
    return %c0_i32, %arg0 : i32, i32
  }
  func.func @transform_2(%arg0: i32) -> (i32, i32) {
    %c0_i32 = arith.constant 0 : i32
    %c0_i32_0 = arith.constant 0 : i32
    %c0_i32_1 = arith.constant 0 : i32
    return %c0_i32, %c0_i32_0 : i32, i32
  }
  func.func @transform_3(%arg0: i32) -> (i32, i32) {
    %c0_i32 = arith.constant 0 : i32
    %c0_i32_0 = arith.constant 0 : i32
    return %c0_i32, %arg0 : i32, i32
  }
}

module attributes {stable_mosaic.version = 11 : i64} {
  func.func @_aspp_lowproj_kernel(%arg0: i32, %arg1: memref<64x32xbf16, #tpu.memory_space<vmem>>, %arg2: memref<3x576x32xbf16, #tpu.memory_space<vmem>>, %arg3: memref<64x64xbf16, #tpu.memory_space<vmem>>, %arg4: memref<64x1xf32, #tpu.memory_space<vmem>>, %arg5: memref<3x64x576xbf16, #tpu.memory_space<vmem>>, %arg6: memref<3x64x1xf32, #tpu.memory_space<vmem>>, %arg7: memref<4x64x64xbf16, #tpu.memory_space<vmem>>, %arg8: memref<64x1xf32, #tpu.memory_space<vmem>>, %arg9: memref<64x64xf32, #tpu.memory_space<vmem>>, %arg10: memref<64x1xf32, #tpu.memory_space<vmem>>, %arg11: memref<64x64xf32, #tpu.memory_space<vmem>>, %arg12: memref<32x2xf32, #tpu.memory_space<vmem>>, %arg13: memref<2x32xf32, #tpu.memory_space<vmem>>, %arg14: memref<24x512xbf16, #tpu.memory_space<vmem>>, %arg15: memref<48x24xbf16, #tpu.memory_space<vmem>>, %arg16: memref<48x1xf32, #tpu.memory_space<vmem>>, %arg17: memref<64x32xbf16, #tpu.memory_space<vmem>>, %arg18: memref<48x512xbf16, #tpu.memory_space<vmem>>) attributes {dimension_semantics = [#tpu.dimension_semantics<arbitrary>], iteration_bounds = array<i64: 1>, scalar_prefetch = 0 : i64, scratch_operands = 0 : i64, tpu.core_type = #tpu.core_type<tc>, window_params = [{pipeline_mode = #tpu.pipeline_mode<synchronous>, transform_indices = @transform_0, window_bounds = array<i64: 64, 32>}, {pipeline_mode = #tpu.pipeline_mode<synchronous>, transform_indices = @transform_1, window_bounds = array<i64: 3, 576, 32>}, {pipeline_mode = #tpu.pipeline_mode<synchronous>, transform_indices = @transform_2, window_bounds = array<i64: 64, 64>}, {pipeline_mode = #tpu.pipeline_mode<synchronous>, transform_indices = @transform_3, window_bounds = array<i64: 64, 1>}, {pipeline_mode = #tpu.pipeline_mode<synchronous>, transform_indices = @transform_4, window_bounds = array<i64: 3, 64, 576>}, {pipeline_mode = #tpu.pipeline_mode<synchronous>, transform_indices = @transform_5, window_bounds = array<i64: 3, 64, 1>}, {pipeline_mode = #tpu.pipeline_mode<synchronous>, transform_indices = @transform_6, window_bounds = array<i64: 4, 64, 64>}, {pipeline_mode = #tpu.pipeline_mode<synchronous>, transform_indices = @transform_7, window_bounds = array<i64: 64, 1>}, {pipeline_mode = #tpu.pipeline_mode<synchronous>, transform_indices = @transform_8, window_bounds = array<i64: 64, 64>}, {pipeline_mode = #tpu.pipeline_mode<synchronous>, transform_indices = @transform_9, window_bounds = array<i64: 64, 1>}, {pipeline_mode = #tpu.pipeline_mode<synchronous>, transform_indices = @transform_10, window_bounds = array<i64: 64, 64>}, {pipeline_mode = #tpu.pipeline_mode<synchronous>, transform_indices = @transform_11, window_bounds = array<i64: 32, 2>}, {pipeline_mode = #tpu.pipeline_mode<synchronous>, transform_indices = @transform_12, window_bounds = array<i64: 2, 32>}, {pipeline_mode = #tpu.pipeline_mode<synchronous>, transform_indices = @transform_13, window_bounds = array<i64: 24, 512>}, {pipeline_mode = #tpu.pipeline_mode<synchronous>, transform_indices = @transform_14, window_bounds = array<i64: 48, 24>}, {pipeline_mode = #tpu.pipeline_mode<synchronous>, transform_indices = @transform_15, window_bounds = array<i64: 48, 1>}, {pipeline_mode = #tpu.pipeline_mode<synchronous>, transform_indices = @transform_16, window_bounds = array<i64: 64, 32>}, {pipeline_mode = #tpu.pipeline_mode<synchronous>, transform_indices = @transform_17, window_bounds = array<i64: 48, 512>}]} {
    %c0 = arith.constant 0 : index
    %c0_0 = arith.constant 0 : index
    %0 = vector.load %arg1[%c0, %c0_0] : memref<64x32xbf16, #tpu.memory_space<vmem>>, vector<64x32xbf16>
    %c0_1 = arith.constant 0 : index
    %c0_2 = arith.constant 0 : index
    %1 = vector.load %arg3[%c0_1, %c0_2] : memref<64x64xbf16, #tpu.memory_space<vmem>>, vector<64x64xbf16>
    %cst = arith.constant dense<0.000000e+00> : vector<64x32xf32>
    %2 = tpu.matmul %1, %0, %cst {dimension_numbers = #tpu.dot_dimension_numbers<[1], [0], [0], [1], [0, 0, 1, 1], [], []>} : vector<64x64xbf16>, vector<64x32xbf16>, vector<64x32xf32> -> vector<64x32xf32>
    %c0_3 = arith.constant 0 : index
    %c0_4 = arith.constant 0 : index
    %3 = vector.load %arg4[%c0_3, %c0_4] : memref<64x1xf32, #tpu.memory_space<vmem>>, vector<64x1xf32>
    %4 = vector.broadcast %3 : vector<64x1xf32> to vector<64x32xf32>
    %5 = arith.addf %2, %4 : vector<64x32xf32>
    %cst_5 = arith.constant 0.000000e+00 : f32
    %6 = vector.broadcast %cst_5 : f32 to vector<64x32xf32>
    %7 = arith.maximumf %5, %6 : vector<64x32xf32>
    %c0_6 = arith.constant 0 : index
    %c0_7 = arith.constant 0 : index
    %c0_8 = arith.constant 0 : index
    %8 = vector.load %arg7[%c0_6, %c0_7, %c0_8] : memref<4x64x64xbf16, #tpu.memory_space<vmem>>, vector<1x64x64xbf16>
    %9 = vector.shape_cast %8 : vector<1x64x64xbf16> to vector<64x64xbf16>
    %10 = arith.truncf %7 : vector<64x32xf32> to vector<64x32xbf16>
    %cst_9 = arith.constant dense<0.000000e+00> : vector<64x32xf32>
    %11 = tpu.matmul %9, %10, %cst_9 {dimension_numbers = #tpu.dot_dimension_numbers<[1], [0], [0], [1], [0, 0, 1, 1], [], []>} : vector<64x64xbf16>, vector<64x32xbf16>, vector<64x32xf32> -> vector<64x32xf32>
    %c0_10 = arith.constant 0 : index
    %c0_11 = arith.constant 0 : index
    %c0_12 = arith.constant 0 : index
    %12 = vector.load %arg5[%c0_10, %c0_11, %c0_12] : memref<3x64x576xbf16, #tpu.memory_space<vmem>>, vector<1x64x576xbf16>
    %13 = vector.shape_cast %12 : vector<1x64x576xbf16> to vector<64x576xbf16>
    %c0_13 = arith.constant 0 : index
    %c0_14 = arith.constant 0 : index
    %c0_15 = arith.constant 0 : index
    %14 = vector.load %arg2[%c0_13, %c0_14, %c0_15] : memref<3x576x32xbf16, #tpu.memory_space<vmem>>, vector<1x576x32xbf16>
    %15 = vector.shape_cast %14 : vector<1x576x32xbf16> to vector<576x32xbf16>
    %cst_16 = arith.constant dense<0.000000e+00> : vector<64x32xf32>
    %16 = tpu.matmul %13, %15, %cst_16 {dimension_numbers = #tpu.dot_dimension_numbers<[1], [0], [0], [1], [0, 0, 1, 1], [], []>} : vector<64x576xbf16>, vector<576x32xbf16>, vector<64x32xf32> -> vector<64x32xf32>
    %c0_17 = arith.constant 0 : index
    %c0_18 = arith.constant 0 : index
    %c0_19 = arith.constant 0 : index
    %17 = vector.load %arg6[%c0_17, %c0_18, %c0_19] : memref<3x64x1xf32, #tpu.memory_space<vmem>>, vector<1x64x1xf32>
    %18 = vector.shape_cast %17 : vector<1x64x1xf32> to vector<64x1xf32>
    %19 = vector.broadcast %18 : vector<64x1xf32> to vector<64x32xf32>
    %20 = arith.addf %16, %19 : vector<64x32xf32>
    %cst_20 = arith.constant 0.000000e+00 : f32
    %21 = vector.broadcast %cst_20 : f32 to vector<64x32xf32>
    %22 = arith.maximumf %20, %21 : vector<64x32xf32>
    %c1 = arith.constant 1 : index
    %c0_21 = arith.constant 0 : index
    %c0_22 = arith.constant 0 : index
    %23 = vector.load %arg7[%c1, %c0_21, %c0_22] : memref<4x64x64xbf16, #tpu.memory_space<vmem>>, vector<1x64x64xbf16>
    %24 = vector.shape_cast %23 : vector<1x64x64xbf16> to vector<64x64xbf16>
    %25 = arith.truncf %22 : vector<64x32xf32> to vector<64x32xbf16>
    %cst_23 = arith.constant dense<0.000000e+00> : vector<64x32xf32>
    %26 = tpu.matmul %24, %25, %cst_23 {dimension_numbers = #tpu.dot_dimension_numbers<[1], [0], [0], [1], [0, 0, 1, 1], [], []>} : vector<64x64xbf16>, vector<64x32xbf16>, vector<64x32xf32> -> vector<64x32xf32>
    %27 = arith.addf %11, %26 : vector<64x32xf32>
    %c1_24 = arith.constant 1 : index
    %c0_25 = arith.constant 0 : index
    %c0_26 = arith.constant 0 : index
    %28 = vector.load %arg5[%c1_24, %c0_25, %c0_26] : memref<3x64x576xbf16, #tpu.memory_space<vmem>>, vector<1x64x576xbf16>
    %29 = vector.shape_cast %28 : vector<1x64x576xbf16> to vector<64x576xbf16>
    %c1_27 = arith.constant 1 : index
    %c0_28 = arith.constant 0 : index
    %c0_29 = arith.constant 0 : index
    %30 = vector.load %arg2[%c1_27, %c0_28, %c0_29] : memref<3x576x32xbf16, #tpu.memory_space<vmem>>, vector<1x576x32xbf16>
    %31 = vector.shape_cast %30 : vector<1x576x32xbf16> to vector<576x32xbf16>
    %cst_30 = arith.constant dense<0.000000e+00> : vector<64x32xf32>
    %32 = tpu.matmul %29, %31, %cst_30 {dimension_numbers = #tpu.dot_dimension_numbers<[1], [0], [0], [1], [0, 0, 1, 1], [], []>} : vector<64x576xbf16>, vector<576x32xbf16>, vector<64x32xf32> -> vector<64x32xf32>
    %c1_31 = arith.constant 1 : index
    %c0_32 = arith.constant 0 : index
    %c0_33 = arith.constant 0 : index
    %33 = vector.load %arg6[%c1_31, %c0_32, %c0_33] : memref<3x64x1xf32, #tpu.memory_space<vmem>>, vector<1x64x1xf32>
    %34 = vector.shape_cast %33 : vector<1x64x1xf32> to vector<64x1xf32>
    %35 = vector.broadcast %34 : vector<64x1xf32> to vector<64x32xf32>
    %36 = arith.addf %32, %35 : vector<64x32xf32>
    %cst_34 = arith.constant 0.000000e+00 : f32
    %37 = vector.broadcast %cst_34 : f32 to vector<64x32xf32>
    %38 = arith.maximumf %36, %37 : vector<64x32xf32>
    %c2 = arith.constant 2 : index
    %c0_35 = arith.constant 0 : index
    %c0_36 = arith.constant 0 : index
    %39 = vector.load %arg7[%c2, %c0_35, %c0_36] : memref<4x64x64xbf16, #tpu.memory_space<vmem>>, vector<1x64x64xbf16>
    %40 = vector.shape_cast %39 : vector<1x64x64xbf16> to vector<64x64xbf16>
    %41 = arith.truncf %38 : vector<64x32xf32> to vector<64x32xbf16>
    %cst_37 = arith.constant dense<0.000000e+00> : vector<64x32xf32>
    %42 = tpu.matmul %40, %41, %cst_37 {dimension_numbers = #tpu.dot_dimension_numbers<[1], [0], [0], [1], [0, 0, 1, 1], [], []>} : vector<64x64xbf16>, vector<64x32xbf16>, vector<64x32xf32> -> vector<64x32xf32>
    %43 = arith.addf %27, %42 : vector<64x32xf32>
    %c2_38 = arith.constant 2 : index
    %c0_39 = arith.constant 0 : index
    %c0_40 = arith.constant 0 : index
    %44 = vector.load %arg5[%c2_38, %c0_39, %c0_40] : memref<3x64x576xbf16, #tpu.memory_space<vmem>>, vector<1x64x576xbf16>
    %45 = vector.shape_cast %44 : vector<1x64x576xbf16> to vector<64x576xbf16>
    %c2_41 = arith.constant 2 : index
    %c0_42 = arith.constant 0 : index
    %c0_43 = arith.constant 0 : index
    %46 = vector.load %arg2[%c2_41, %c0_42, %c0_43] : memref<3x576x32xbf16, #tpu.memory_space<vmem>>, vector<1x576x32xbf16>
    %47 = vector.shape_cast %46 : vector<1x576x32xbf16> to vector<576x32xbf16>
    %cst_44 = arith.constant dense<0.000000e+00> : vector<64x32xf32>
    %48 = tpu.matmul %45, %47, %cst_44 {dimension_numbers = #tpu.dot_dimension_numbers<[1], [0], [0], [1], [0, 0, 1, 1], [], []>} : vector<64x576xbf16>, vector<576x32xbf16>, vector<64x32xf32> -> vector<64x32xf32>
    %c2_45 = arith.constant 2 : index
    %c0_46 = arith.constant 0 : index
    %c0_47 = arith.constant 0 : index
    %49 = vector.load %arg6[%c2_45, %c0_46, %c0_47] : memref<3x64x1xf32, #tpu.memory_space<vmem>>, vector<1x64x1xf32>
    %50 = vector.shape_cast %49 : vector<1x64x1xf32> to vector<64x1xf32>
    %51 = vector.broadcast %50 : vector<64x1xf32> to vector<64x32xf32>
    %52 = arith.addf %48, %51 : vector<64x32xf32>
    %cst_48 = arith.constant 0.000000e+00 : f32
    %53 = vector.broadcast %cst_48 : f32 to vector<64x32xf32>
    %54 = arith.maximumf %52, %53 : vector<64x32xf32>
    %c3 = arith.constant 3 : index
    %c0_49 = arith.constant 0 : index
    %c0_50 = arith.constant 0 : index
    %55 = vector.load %arg7[%c3, %c0_49, %c0_50] : memref<4x64x64xbf16, #tpu.memory_space<vmem>>, vector<1x64x64xbf16>
    %56 = vector.shape_cast %55 : vector<1x64x64xbf16> to vector<64x64xbf16>
    %57 = arith.truncf %54 : vector<64x32xf32> to vector<64x32xbf16>
    %cst_51 = arith.constant dense<0.000000e+00> : vector<64x32xf32>
    %58 = tpu.matmul %56, %57, %cst_51 {dimension_numbers = #tpu.dot_dimension_numbers<[1], [0], [0], [1], [0, 0, 1, 1], [], []>} : vector<64x64xbf16>, vector<64x32xbf16>, vector<64x32xf32> -> vector<64x32xf32>
    %59 = arith.addf %43, %58 : vector<64x32xf32>
    %60 = arith.extf %0 : vector<64x32xbf16> to vector<64x32xf32>
    %c0_52 = arith.constant 0 : index
    %c0_53 = arith.constant 0 : index
    %61 = vector.load %arg12[%c0_52, %c0_53] : memref<32x2xf32, #tpu.memory_space<vmem>>, vector<32x2xf32>
    %cst_54 = arith.constant dense<0.000000e+00> : vector<64x2xf32>
    %62 = tpu.matmul %60, %61, %cst_54 {dimension_numbers = #tpu.dot_dimension_numbers<[1], [0], [0], [1], [0, 0, 1, 1], [], []>} : vector<64x32xf32>, vector<32x2xf32>, vector<64x2xf32> -> vector<64x2xf32>
    %c0_55 = arith.constant 0 : index
    %c0_56 = arith.constant 0 : index
    %63 = vector.load %arg9[%c0_55, %c0_56] : memref<64x64xf32, #tpu.memory_space<vmem>>, vector<64x64xf32>
    %cst_57 = arith.constant dense<0.000000e+00> : vector<64x2xf32>
    %64 = tpu.matmul %63, %62, %cst_57 {dimension_numbers = #tpu.dot_dimension_numbers<[1], [0], [0], [1], [0, 0, 1, 1], [], []>} : vector<64x64xf32>, vector<64x2xf32>, vector<64x2xf32> -> vector<64x2xf32>
    %c0_58 = arith.constant 0 : index
    %c0_59 = arith.constant 0 : index
    %65 = vector.load %arg10[%c0_58, %c0_59] : memref<64x1xf32, #tpu.memory_space<vmem>>, vector<64x1xf32>
    %66 = vector.broadcast %65 : vector<64x1xf32> to vector<64x2xf32>
    %67 = arith.addf %64, %66 : vector<64x2xf32>
    %cst_60 = arith.constant 0.000000e+00 : f32
    %68 = vector.broadcast %cst_60 : f32 to vector<64x2xf32>
    %69 = arith.maximumf %67, %68 : vector<64x2xf32>
    %c0_61 = arith.constant 0 : index
    %c0_62 = arith.constant 0 : index
    %70 = vector.load %arg11[%c0_61, %c0_62] : memref<64x64xf32, #tpu.memory_space<vmem>>, vector<64x64xf32>
    %cst_63 = arith.constant dense<0.000000e+00> : vector<64x2xf32>
    %71 = tpu.matmul %70, %69, %cst_63 {dimension_numbers = #tpu.dot_dimension_numbers<[1], [0], [0], [1], [0, 0, 1, 1], [], []>} : vector<64x64xf32>, vector<64x2xf32>, vector<64x2xf32> -> vector<64x2xf32>
    %c0_64 = arith.constant 0 : index
    %c0_65 = arith.constant 0 : index
    %72 = vector.load %arg13[%c0_64, %c0_65] : memref<2x32xf32, #tpu.memory_space<vmem>>, vector<2x32xf32>
    %cst_66 = arith.constant dense<0.000000e+00> : vector<64x32xf32>
    %73 = tpu.matmul %71, %72, %cst_66 {dimension_numbers = #tpu.dot_dimension_numbers<[1], [0], [0], [1], [0, 0, 1, 1], [], []>} : vector<64x2xf32>, vector<2x32xf32>, vector<64x32xf32> -> vector<64x32xf32>
    %c0_67 = arith.constant 0 : index
    %c0_68 = arith.constant 0 : index
    %74 = vector.load %arg8[%c0_67, %c0_68] : memref<64x1xf32, #tpu.memory_space<vmem>>, vector<64x1xf32>
    %75 = vector.broadcast %74 : vector<64x1xf32> to vector<64x32xf32>
    %76 = arith.addf %59, %75 : vector<64x32xf32>
    %77 = arith.addf %76, %73 : vector<64x32xf32>
    %cst_69 = arith.constant 0.000000e+00 : f32
    %78 = vector.broadcast %cst_69 : f32 to vector<64x32xf32>
    %79 = arith.maximumf %77, %78 : vector<64x32xf32>
    %80 = arith.truncf %79 : vector<64x32xf32> to vector<64x32xbf16>
    %c0_70 = arith.constant 0 : index
    %c0_71 = arith.constant 0 : index
    %81 = vector.load %arg17[%c0_70, %c0_71] : memref<64x32xbf16, #tpu.memory_space<vmem>>, vector<64x32xbf16>
    tpu.vector_store %arg17[%c0_70, %c0_71], %80 {strides = array<i32>} : memref<64x32xbf16, #tpu.memory_space<vmem>>, vector<64x32xbf16>,
    %c0_72 = arith.constant 0 : index
    %c0_73 = arith.constant 0 : index
    %82 = vector.load %arg15[%c0_72, %c0_73] : memref<48x24xbf16, #tpu.memory_space<vmem>>, vector<48x24xbf16>
    %c0_74 = arith.constant 0 : index
    %c0_75 = arith.constant 0 : index
    %83 = vector.load %arg14[%c0_74, %c0_75] : memref<24x512xbf16, #tpu.memory_space<vmem>>, vector<24x512xbf16>
    %cst_76 = arith.constant dense<0.000000e+00> : vector<48x512xf32>
    %84 = tpu.matmul %82, %83, %cst_76 {dimension_numbers = #tpu.dot_dimension_numbers<[1], [0], [0], [1], [0, 0, 1, 1], [], []>} : vector<48x24xbf16>, vector<24x512xbf16>, vector<48x512xf32> -> vector<48x512xf32>
    %c0_77 = arith.constant 0 : index
    %c0_78 = arith.constant 0 : index
    %85 = vector.load %arg16[%c0_77, %c0_78] : memref<48x1xf32, #tpu.memory_space<vmem>>, vector<48x1xf32>
    %86 = vector.broadcast %85 : vector<48x1xf32> to vector<48x512xf32>
    %87 = arith.addf %84, %86 : vector<48x512xf32>
    %cst_79 = arith.constant 0.000000e+00 : f32
    %88 = vector.broadcast %cst_79 : f32 to vector<48x512xf32>
    %89 = arith.maximumf %87, %88 : vector<48x512xf32>
    %90 = arith.truncf %89 : vector<48x512xf32> to vector<48x512xbf16>
    %c0_80 = arith.constant 0 : index
    %c0_81 = arith.constant 0 : index
    %91 = vector.load %arg18[%c0_80, %c0_81] : memref<48x512xbf16, #tpu.memory_space<vmem>>, vector<48x512xbf16>
    tpu.vector_store %arg18[%c0_80, %c0_81], %90 {strides = array<i32>} : memref<48x512xbf16, #tpu.memory_space<vmem>>, vector<48x512xbf16>,
    return
  }
  func.func @transform_0(%arg0: i32) -> (i32, i32) {
    %c0_i32 = arith.constant 0 : i32
    %c0_i32_0 = arith.constant 0 : i32
    %c0_i32_1 = arith.constant 0 : i32
    return %c0_i32, %c0_i32_0 : i32, i32
  }
  func.func @transform_1(%arg0: i32) -> (i32, i32, i32) {
    %c0_i32 = arith.constant 0 : i32
    %c0_i32_0 = arith.constant 0 : i32
    %c0_i32_1 = arith.constant 0 : i32
    %c0_i32_2 = arith.constant 0 : i32
    return %c0_i32, %c0_i32_0, %c0_i32_1 : i32, i32, i32
  }
  func.func @transform_2(%arg0: i32) -> (i32, i32) {
    %c0_i32 = arith.constant 0 : i32
    %c0_i32_0 = arith.constant 0 : i32
    %c0_i32_1 = arith.constant 0 : i32
    return %c0_i32, %c0_i32_0 : i32, i32
  }
  func.func @transform_3(%arg0: i32) -> (i32, i32) {
    %c0_i32 = arith.constant 0 : i32
    %c0_i32_0 = arith.constant 0 : i32
    %c0_i32_1 = arith.constant 0 : i32
    return %c0_i32, %c0_i32_0 : i32, i32
  }
  func.func @transform_4(%arg0: i32) -> (i32, i32, i32) {
    %c0_i32 = arith.constant 0 : i32
    %c0_i32_0 = arith.constant 0 : i32
    %c0_i32_1 = arith.constant 0 : i32
    %c0_i32_2 = arith.constant 0 : i32
    return %c0_i32, %c0_i32_0, %c0_i32_1 : i32, i32, i32
  }
  func.func @transform_5(%arg0: i32) -> (i32, i32, i32) {
    %c0_i32 = arith.constant 0 : i32
    %c0_i32_0 = arith.constant 0 : i32
    %c0_i32_1 = arith.constant 0 : i32
    %c0_i32_2 = arith.constant 0 : i32
    return %c0_i32, %c0_i32_0, %c0_i32_1 : i32, i32, i32
  }
  func.func @transform_6(%arg0: i32) -> (i32, i32, i32) {
    %c0_i32 = arith.constant 0 : i32
    %c0_i32_0 = arith.constant 0 : i32
    %c0_i32_1 = arith.constant 0 : i32
    %c0_i32_2 = arith.constant 0 : i32
    return %c0_i32, %c0_i32_0, %c0_i32_1 : i32, i32, i32
  }
  func.func @transform_7(%arg0: i32) -> (i32, i32) {
    %c0_i32 = arith.constant 0 : i32
    %c0_i32_0 = arith.constant 0 : i32
    %c0_i32_1 = arith.constant 0 : i32
    return %c0_i32, %c0_i32_0 : i32, i32
  }
  func.func @transform_8(%arg0: i32) -> (i32, i32) {
    %c0_i32 = arith.constant 0 : i32
    %c0_i32_0 = arith.constant 0 : i32
    %c0_i32_1 = arith.constant 0 : i32
    return %c0_i32, %c0_i32_0 : i32, i32
  }
  func.func @transform_9(%arg0: i32) -> (i32, i32) {
    %c0_i32 = arith.constant 0 : i32
    %c0_i32_0 = arith.constant 0 : i32
    %c0_i32_1 = arith.constant 0 : i32
    return %c0_i32, %c0_i32_0 : i32, i32
  }
  func.func @transform_10(%arg0: i32) -> (i32, i32) {
    %c0_i32 = arith.constant 0 : i32
    %c0_i32_0 = arith.constant 0 : i32
    %c0_i32_1 = arith.constant 0 : i32
    return %c0_i32, %c0_i32_0 : i32, i32
  }
  func.func @transform_11(%arg0: i32) -> (i32, i32) {
    %c0_i32 = arith.constant 0 : i32
    %c0_i32_0 = arith.constant 0 : i32
    %c0_i32_1 = arith.constant 0 : i32
    return %c0_i32, %c0_i32_0 : i32, i32
  }
  func.func @transform_12(%arg0: i32) -> (i32, i32) {
    %c0_i32 = arith.constant 0 : i32
    %c0_i32_0 = arith.constant 0 : i32
    %c0_i32_1 = arith.constant 0 : i32
    return %c0_i32, %c0_i32_0 : i32, i32
  }
  func.func @transform_13(%arg0: i32) -> (i32, i32) {
    %c0_i32 = arith.constant 0 : i32
    %c0_i32_0 = arith.constant 0 : i32
    %c0_i32_1 = arith.constant 0 : i32
    return %c0_i32, %c0_i32_0 : i32, i32
  }
  func.func @transform_14(%arg0: i32) -> (i32, i32) {
    %c0_i32 = arith.constant 0 : i32
    %c0_i32_0 = arith.constant 0 : i32
    %c0_i32_1 = arith.constant 0 : i32
    return %c0_i32, %c0_i32_0 : i32, i32
  }
  func.func @transform_15(%arg0: i32) -> (i32, i32) {
    %c0_i32 = arith.constant 0 : i32
    %c0_i32_0 = arith.constant 0 : i32
    %c0_i32_1 = arith.constant 0 : i32
    return %c0_i32, %c0_i32_0 : i32, i32
  }
  func.func @transform_16(%arg0: i32) -> (i32, i32) {
    %c0_i32 = arith.constant 0 : i32
    %c0_i32_0 = arith.constant 0 : i32
    %c0_i32_1 = arith.constant 0 : i32
    return %c0_i32, %c0_i32_0 : i32, i32
  }
  func.func @transform_17(%arg0: i32) -> (i32, i32) {
    %c0_i32 = arith.constant 0 : i32
    %c0_i32_0 = arith.constant 0 : i32
    %c0_i32_1 = arith.constant 0 : i32
    return %c0_i32, %c0_i32_0 : i32, i32
  }
}

module attributes {stable_mosaic.version = 11 : i64} {
  func.func @_gemm_kernel(%arg0: i32, %arg1: memref<16x4xbf16, #tpu.memory_space<vmem>>, %arg2: memref<4x512xbf16, #tpu.memory_space<vmem>>, %arg3: memref<16x1xf32, #tpu.memory_space<vmem>>, %arg4: memref<16x512xbf16, #tpu.memory_space<vmem>>) attributes {dimension_semantics = [#tpu.dimension_semantics<parallel>], iteration_bounds = array<i64: 1>, scalar_prefetch = 0 : i64, scratch_operands = 0 : i64, tpu.core_type = #tpu.core_type<tc>, window_params = [{pipeline_mode = #tpu.pipeline_mode<synchronous>, transform_indices = @transform_0, window_bounds = array<i64: 16, 4>}, {transform_indices = @transform_1, window_bounds = array<i64: 4, 512>}, {pipeline_mode = #tpu.pipeline_mode<synchronous>, transform_indices = @transform_2, window_bounds = array<i64: 16, 1>}, {transform_indices = @transform_3, window_bounds = array<i64: 16, 512>}]} {
    %c0 = arith.constant 0 : index
    %c0_0 = arith.constant 0 : index
    %0 = vector.load %arg1[%c0, %c0_0] : memref<16x4xbf16, #tpu.memory_space<vmem>>, vector<16x4xbf16>
    %c0_1 = arith.constant 0 : index
    %c0_2 = arith.constant 0 : index
    %1 = vector.load %arg2[%c0_1, %c0_2] : memref<4x512xbf16, #tpu.memory_space<vmem>>, vector<4x512xbf16>
    %cst = arith.constant dense<0.000000e+00> : vector<16x512xf32>
    %2 = tpu.matmul %0, %1, %cst {dimension_numbers = #tpu.dot_dimension_numbers<[1], [0], [0], [1], [0, 0, 1, 1], [], []>} : vector<16x4xbf16>, vector<4x512xbf16>, vector<16x512xf32> -> vector<16x512xf32>
    %c0_3 = arith.constant 0 : index
    %c0_4 = arith.constant 0 : index
    %3 = vector.load %arg3[%c0_3, %c0_4] : memref<16x1xf32, #tpu.memory_space<vmem>>, vector<16x1xf32>
    %4 = vector.broadcast %3 : vector<16x1xf32> to vector<16x512xf32>
    %5 = arith.addf %2, %4 : vector<16x512xf32>
    %6 = arith.truncf %5 : vector<16x512xf32> to vector<16x512xbf16>
    %c0_5 = arith.constant 0 : index
    %c0_6 = arith.constant 0 : index
    %7 = vector.load %arg4[%c0_5, %c0_6] : memref<16x512xbf16, #tpu.memory_space<vmem>>, vector<16x512xbf16>
    tpu.vector_store %arg4[%c0_5, %c0_6], %6 {strides = array<i32>} : memref<16x512xbf16, #tpu.memory_space<vmem>>, vector<16x512xbf16>,
    return
  }
  func.func @transform_0(%arg0: i32) -> (i32, i32) {
    %c0_i32 = arith.constant 0 : i32
    %c0_i32_0 = arith.constant 0 : i32
    %c0_i32_1 = arith.constant 0 : i32
    return %c0_i32, %c0_i32_0 : i32, i32
  }
  func.func @transform_1(%arg0: i32) -> (i32, i32) {
    %c0_i32 = arith.constant 0 : i32
    %c0_i32_0 = arith.constant 0 : i32
    return %c0_i32, %arg0 : i32, i32
  }
  func.func @transform_2(%arg0: i32) -> (i32, i32) {
    %c0_i32 = arith.constant 0 : i32
    %c0_i32_0 = arith.constant 0 : i32
    %c0_i32_1 = arith.constant 0 : i32
    return %c0_i32, %c0_i32_0 : i32, i32
  }
  func.func @transform_3(%arg0: i32) -> (i32, i32) {
    %c0_i32 = arith.constant 0 : i32
    %c0_i32_0 = arith.constant 0 : i32
    return %c0_i32, %arg0 : i32, i32
  }
}

module attributes {stable_mosaic.version = 11 : i64} {
  func.func @_gemm_kernel(%arg0: i32, %arg1: memref<16x4xbf16, #tpu.memory_space<vmem>>, %arg2: memref<4x2048xbf16, #tpu.memory_space<vmem>>, %arg3: memref<16x1xf32, #tpu.memory_space<vmem>>, %arg4: memref<16x2048xbf16, #tpu.memory_space<vmem>>) attributes {dimension_semantics = [#tpu.dimension_semantics<parallel>], iteration_bounds = array<i64: 1>, scalar_prefetch = 0 : i64, scratch_operands = 0 : i64, tpu.core_type = #tpu.core_type<tc>, window_params = [{pipeline_mode = #tpu.pipeline_mode<synchronous>, transform_indices = @transform_0, window_bounds = array<i64: 16, 4>}, {transform_indices = @transform_1, window_bounds = array<i64: 4, 2048>}, {pipeline_mode = #tpu.pipeline_mode<synchronous>, transform_indices = @transform_2, window_bounds = array<i64: 16, 1>}, {transform_indices = @transform_3, window_bounds = array<i64: 16, 2048>}]} {
    %c0 = arith.constant 0 : index
    %c0_0 = arith.constant 0 : index
    %0 = vector.load %arg1[%c0, %c0_0] : memref<16x4xbf16, #tpu.memory_space<vmem>>, vector<16x4xbf16>
    %c0_1 = arith.constant 0 : index
    %c0_2 = arith.constant 0 : index
    %1 = vector.load %arg2[%c0_1, %c0_2] : memref<4x2048xbf16, #tpu.memory_space<vmem>>, vector<4x2048xbf16>
    %cst = arith.constant dense<0.000000e+00> : vector<16x2048xf32>
    %2 = tpu.matmul %0, %1, %cst {dimension_numbers = #tpu.dot_dimension_numbers<[1], [0], [0], [1], [0, 0, 1, 1], [], []>} : vector<16x4xbf16>, vector<4x2048xbf16>, vector<16x2048xf32> -> vector<16x2048xf32>
    %c0_3 = arith.constant 0 : index
    %c0_4 = arith.constant 0 : index
    %3 = vector.load %arg3[%c0_3, %c0_4] : memref<16x1xf32, #tpu.memory_space<vmem>>, vector<16x1xf32>
    %4 = vector.broadcast %3 : vector<16x1xf32> to vector<16x2048xf32>
    %5 = arith.addf %2, %4 : vector<16x2048xf32>
    %6 = arith.truncf %5 : vector<16x2048xf32> to vector<16x2048xbf16>
    %c0_5 = arith.constant 0 : index
    %c0_6 = arith.constant 0 : index
    %7 = vector.load %arg4[%c0_5, %c0_6] : memref<16x2048xbf16, #tpu.memory_space<vmem>>, vector<16x2048xbf16>
    tpu.vector_store %arg4[%c0_5, %c0_6], %6 {strides = array<i32>} : memref<16x2048xbf16, #tpu.memory_space<vmem>>, vector<16x2048xbf16>,
    return
  }
  func.func @transform_0(%arg0: i32) -> (i32, i32) {
    %c0_i32 = arith.constant 0 : i32
    %c0_i32_0 = arith.constant 0 : i32
    %c0_i32_1 = arith.constant 0 : i32
    return %c0_i32, %c0_i32_0 : i32, i32
  }
  func.func @transform_1(%arg0: i32) -> (i32, i32) {
    %c0_i32 = arith.constant 0 : i32
    %c0_i32_0 = arith.constant 0 : i32
    return %c0_i32, %arg0 : i32, i32
  }
  func.func @transform_2(%arg0: i32) -> (i32, i32) {
    %c0_i32 = arith.constant 0 : i32
    %c0_i32_0 = arith.constant 0 : i32
    %c0_i32_1 = arith.constant 0 : i32
    return %c0_i32, %c0_i32_0 : i32, i32
  }
  func.func @transform_3(%arg0: i32) -> (i32, i32) {
    %c0_i32 = arith.constant 0 : i32
    %c0_i32_0 = arith.constant 0 : i32
    return %c0_i32, %arg0 : i32, i32
  }
}

module attributes {stable_mosaic.version = 11 : i64} {
  func.func @_decoder_head_kernel(%arg0: i32, %arg1: memref<576x512xbf16, #tpu.memory_space<vmem>>, %arg2: memref<432x512xbf16, #tpu.memory_space<vmem>>, %arg3: memref<64x576xbf16, #tpu.memory_space<vmem>>, %arg4: memref<64x432xbf16, #tpu.memory_space<vmem>>, %arg5: memref<64x1xf32, #tpu.memory_space<vmem>>, %arg6: memref<1x64xbf16, #tpu.memory_space<vmem>>, %arg7: memref<1x1xf32, #tpu.memory_space<vmem>>, %arg8: memref<1x512xf32, #tpu.memory_space<vmem>>) attributes {dimension_semantics = [#tpu.dimension_semantics<parallel>], iteration_bounds = array<i64: 1>, scalar_prefetch = 0 : i64, scratch_operands = 0 : i64, tpu.core_type = #tpu.core_type<tc>, window_params = [{transform_indices = @transform_0, window_bounds = array<i64: 576, 512>}, {transform_indices = @transform_1, window_bounds = array<i64: 432, 512>}, {pipeline_mode = #tpu.pipeline_mode<synchronous>, transform_indices = @transform_2, window_bounds = array<i64: 64, 576>}, {pipeline_mode = #tpu.pipeline_mode<synchronous>, transform_indices = @transform_3, window_bounds = array<i64: 64, 432>}, {pipeline_mode = #tpu.pipeline_mode<synchronous>, transform_indices = @transform_4, window_bounds = array<i64: 64, 1>}, {pipeline_mode = #tpu.pipeline_mode<synchronous>, transform_indices = @transform_5, window_bounds = array<i64: 1, 64>}, {pipeline_mode = #tpu.pipeline_mode<synchronous>, transform_indices = @transform_6, window_bounds = array<i64: 1, 1>}, {transform_indices = @transform_7, window_bounds = array<i64: 1, 512>}]} {
    %c0 = arith.constant 0 : index
    %c0_0 = arith.constant 0 : index
    %0 = vector.load %arg3[%c0, %c0_0] : memref<64x576xbf16, #tpu.memory_space<vmem>>, vector<64x576xbf16>
    %c0_1 = arith.constant 0 : index
    %c0_2 = arith.constant 0 : index
    %1 = vector.load %arg1[%c0_1, %c0_2] : memref<576x512xbf16, #tpu.memory_space<vmem>>, vector<576x512xbf16>
    %cst = arith.constant dense<0.000000e+00> : vector<64x512xf32>
    %2 = tpu.matmul %0, %1, %cst {dimension_numbers = #tpu.dot_dimension_numbers<[1], [0], [0], [1], [0, 0, 1, 1], [], []>} : vector<64x576xbf16>, vector<576x512xbf16>, vector<64x512xf32> -> vector<64x512xf32>
    %c0_3 = arith.constant 0 : index
    %c0_4 = arith.constant 0 : index
    %3 = vector.load %arg4[%c0_3, %c0_4] : memref<64x432xbf16, #tpu.memory_space<vmem>>, vector<64x432xbf16>
    %c0_5 = arith.constant 0 : index
    %c0_6 = arith.constant 0 : index
    %4 = vector.load %arg2[%c0_5, %c0_6] : memref<432x512xbf16, #tpu.memory_space<vmem>>, vector<432x512xbf16>
    %cst_7 = arith.constant dense<0.000000e+00> : vector<64x512xf32>
    %5 = tpu.matmul %3, %4, %cst_7 {dimension_numbers = #tpu.dot_dimension_numbers<[1], [0], [0], [1], [0, 0, 1, 1], [], []>} : vector<64x432xbf16>, vector<432x512xbf16>, vector<64x512xf32> -> vector<64x512xf32>
    %6 = arith.addf %2, %5 : vector<64x512xf32>
    %c0_8 = arith.constant 0 : index
    %c0_9 = arith.constant 0 : index
    %7 = vector.load %arg5[%c0_8, %c0_9] : memref<64x1xf32, #tpu.memory_space<vmem>>, vector<64x1xf32>
    %8 = vector.broadcast %7 : vector<64x1xf32> to vector<64x512xf32>
    %9 = arith.addf %6, %8 : vector<64x512xf32>
    %cst_10 = arith.constant 0.000000e+00 : f32
    %10 = vector.broadcast %cst_10 : f32 to vector<64x512xf32>
    %11 = arith.maximumf %9, %10 : vector<64x512xf32>
    %c0_11 = arith.constant 0 : index
    %c0_12 = arith.constant 0 : index
    %12 = vector.load %arg6[%c0_11, %c0_12] : memref<1x64xbf16, #tpu.memory_space<vmem>>, vector<1x64xbf16>
    %13 = arith.truncf %11 : vector<64x512xf32> to vector<64x512xbf16>
    %cst_13 = arith.constant dense<0.000000e+00> : vector<1x512xf32>
    %14 = tpu.matmul %12, %13, %cst_13 {dimension_numbers = #tpu.dot_dimension_numbers<[1], [0], [0], [1], [0, 0, 1, 1], [], []>} : vector<1x64xbf16>, vector<64x512xbf16>, vector<1x512xf32> -> vector<1x512xf32>
    %c0_14 = arith.constant 0 : index
    %c0_15 = arith.constant 0 : index
    %15 = vector.load %arg7[%c0_14, %c0_15] : memref<1x1xf32, #tpu.memory_space<vmem>>, vector<1x1xf32>
    %16 = vector.broadcast %15 : vector<1x1xf32> to vector<1x512xf32>
    %17 = arith.addf %14, %16 : vector<1x512xf32>
    %c0_16 = arith.constant 0 : index
    %c0_17 = arith.constant 0 : index
    %18 = vector.load %arg8[%c0_16, %c0_17] : memref<1x512xf32, #tpu.memory_space<vmem>>, vector<1x512xf32>
    tpu.vector_store %arg8[%c0_16, %c0_17], %17 {strides = array<i32>} : memref<1x512xf32, #tpu.memory_space<vmem>>, vector<1x512xf32>,
    return
  }
  func.func @transform_0(%arg0: i32) -> (i32, i32) {
    %c0_i32 = arith.constant 0 : i32
    %c0_i32_0 = arith.constant 0 : i32
    return %c0_i32, %arg0 : i32, i32
  }
  func.func @transform_1(%arg0: i32) -> (i32, i32) {
    %c0_i32 = arith.constant 0 : i32
    %c0_i32_0 = arith.constant 0 : i32
    return %c0_i32, %arg0 : i32, i32
  }
  func.func @transform_2(%arg0: i32) -> (i32, i32) {
    %c0_i32 = arith.constant 0 : i32
    %c0_i32_0 = arith.constant 0 : i32
    %c0_i32_1 = arith.constant 0 : i32
    return %c0_i32, %c0_i32_0 : i32, i32
  }
  func.func @transform_3(%arg0: i32) -> (i32, i32) {
    %c0_i32 = arith.constant 0 : i32
    %c0_i32_0 = arith.constant 0 : i32
    %c0_i32_1 = arith.constant 0 : i32
    return %c0_i32, %c0_i32_0 : i32, i32
  }
  func.func @transform_4(%arg0: i32) -> (i32, i32) {
    %c0_i32 = arith.constant 0 : i32
    %c0_i32_0 = arith.constant 0 : i32
    %c0_i32_1 = arith.constant 0 : i32
    return %c0_i32, %c0_i32_0 : i32, i32
  }
  func.func @transform_5(%arg0: i32) -> (i32, i32) {
    %c0_i32 = arith.constant 0 : i32
    %c0_i32_0 = arith.constant 0 : i32
    %c0_i32_1 = arith.constant 0 : i32
    return %c0_i32, %c0_i32_0 : i32, i32
  }
  func.func @transform_6(%arg0: i32) -> (i32, i32) {
    %c0_i32 = arith.constant 0 : i32
    %c0_i32_0 = arith.constant 0 : i32
    %c0_i32_1 = arith.constant 0 : i32
    return %c0_i32, %c0_i32_0 : i32, i32
  }
  func.func @transform_7(%arg0: i32) -> (i32, i32) {
    %c0_i32 = arith.constant 0 : i32
    %c0_i32_0 = arith.constant 0 : i32
    return %c0_i32, %arg0 : i32, i32
  }
}

module attributes {stable_mosaic.version = 11 : i64} {
  func.func @_bilinear_slice_kernel(%arg0: i32, %arg1: memref<1x16x16xf32, #tpu.memory_space<vmem>>, %arg2: memref<16x64xf32, #tpu.memory_space<vmem>>, %arg3: memref<64x16xf32, #tpu.memory_space<vmem>>, %arg4: memref<1x64x64xf32, #tpu.memory_space<vmem>>) attributes {dimension_semantics = [#tpu.dimension_semantics<parallel>], iteration_bounds = array<i64: 2>, scalar_prefetch = 0 : i64, scratch_operands = 0 : i64, tpu.core_type = #tpu.core_type<tc>, window_params = [{transform_indices = @transform_0, window_bounds = array<i64: 1, 16, 16>}, {pipeline_mode = #tpu.pipeline_mode<synchronous>, transform_indices = @transform_1, window_bounds = array<i64: 16, 64>}, {pipeline_mode = #tpu.pipeline_mode<synchronous>, transform_indices = @transform_2, window_bounds = array<i64: 64, 16>}, {transform_indices = @transform_3, window_bounds = array<i64: 1, 64, 64>}]} {
    %c0 = arith.constant 0 : index
    %c0_0 = arith.constant 0 : index
    %c0_1 = arith.constant 0 : index
    %0 = vector.load %arg1[%c0, %c0_0, %c0_1] : memref<1x16x16xf32, #tpu.memory_space<vmem>>, vector<1x16x16xf32>
    %1 = vector.shape_cast %0 : vector<1x16x16xf32> to vector<16x16xf32>
    %c0_2 = arith.constant 0 : index
    %c0_3 = arith.constant 0 : index
    %2 = vector.load %arg2[%c0_2, %c0_3] : memref<16x64xf32, #tpu.memory_space<vmem>>, vector<16x64xf32>
    %cst = arith.constant dense<0.000000e+00> : vector<16x64xf32>
    %3 = tpu.matmul %1, %2, %cst {dimension_numbers = #tpu.dot_dimension_numbers<[1], [0], [0], [1], [0, 0, 1, 1], [], []>} : vector<16x16xf32>, vector<16x64xf32>, vector<16x64xf32> -> vector<16x64xf32>
    %c0_4 = arith.constant 0 : index
    %c0_5 = arith.constant 0 : index
    %4 = vector.load %arg3[%c0_4, %c0_5] : memref<64x16xf32, #tpu.memory_space<vmem>>, vector<64x16xf32>
    %cst_6 = arith.constant dense<0.000000e+00> : vector<64x64xf32>
    %5 = tpu.matmul %4, %3, %cst_6 {dimension_numbers = #tpu.dot_dimension_numbers<[1], [0], [0], [1], [0, 0, 1, 1], [], []>} : vector<64x16xf32>, vector<16x64xf32>, vector<64x64xf32> -> vector<64x64xf32>
    %c0_7 = arith.constant 0 : index
    %c0_8 = arith.constant 0 : index
    %c0_9 = arith.constant 0 : index
    %6 = vector.load %arg4[%c0_7, %c0_8, %c0_9] : memref<1x64x64xf32, #tpu.memory_space<vmem>>, vector<1x64x64xf32>
    %7 = vector.shape_cast %6 : vector<1x64x64xf32> to vector<64x64xf32>
    %8 = vector.shape_cast %5 : vector<64x64xf32> to vector<1x64x64xf32>
    tpu.vector_store %arg4[%c0_7, %c0_8, %c0_9], %8 {strides = array<i32>} : memref<1x64x64xf32, #tpu.memory_space<vmem>>, vector<1x64x64xf32>,
    return
  }
  func.func @transform_0(%arg0: i32) -> (i32, i32, i32) {
    %c0_i32 = arith.constant 0 : i32
    %c0_i32_0 = arith.constant 0 : i32
    %c0_i32_1 = arith.constant 0 : i32
    return %arg0, %c0_i32, %c0_i32_0 : i32, i32, i32
  }
  func.func @transform_1(%arg0: i32) -> (i32, i32) {
    %c0_i32 = arith.constant 0 : i32
    %c0_i32_0 = arith.constant 0 : i32
    %c0_i32_1 = arith.constant 0 : i32
    return %c0_i32, %c0_i32_0 : i32, i32
  }
  func.func @transform_2(%arg0: i32) -> (i32, i32) {
    %c0_i32 = arith.constant 0 : i32
    %c0_i32_0 = arith.constant 0 : i32
    %c0_i32_1 = arith.constant 0 : i32
    return %c0_i32, %c0_i32_0 : i32, i32
  }
  func.func @transform_3(%arg0: i32) -> (i32, i32, i32) {
    %c0_i32 = arith.constant 0 : i32
    %c0_i32_0 = arith.constant 0 : i32
    %c0_i32_1 = arith.constant 0 : i32
    return %arg0, %c0_i32, %c0_i32_0 : i32, i32, i32
  }
}

</mosaic_0001>

<llo_original>
// kernel: _lambda_.10
$region0: #{_lambda_.10}
  #allocation0 [shape = 'u32[]', space=smem, size = 0x4, offset = 0x4, fixed_abs, tag = 'smem constant byte address 0x4 - core index']
  #allocation1 [shape = 'u32[144,128]{1,0:T(1,128)}', space=vmem, size = 0x12000, scoped, tag = 'internal scratch']
  %s0 = inlined_call_operand.vmem [shape: bf16[16,27], index: 0, kind: input, shape index: {}]
  %s1 = inlined_call_operand.vmem [shape: bf16[27,2048], index: 1, kind: input, shape index: {}]
  %s2 = inlined_call_operand.vmem [shape: f32[16,1], index: 2, kind: input, shape index: {}]
  %s3 = inlined_call_operand.vmem [shape: bf16[16,2048], index: 3, kind: output, shape index: {}]
  %s4 = sld [smem:[#allocation0]]
  $region22: #{_lambda_.10} parent=0
    _
  %s6 = ssub.s32 1, %s4
  %s7 = scalar_select 0, %s6, %s4
  // Predicated region
  $region2: #{_lambda_.10} parent=0 // pred_check
    _
  $region3: #{_lambda_.10} parent=0 // pred_check_branch
    %9 = sbr.rel (0) target = $region5
  $region4: #{_lambda_.10} parent=0 // pred_region
    _
  $region5: #{_lambda_.10} parent=0 // pred_fallthru
    _
  // Predicated region
  $region6: #{_lambda_.10} parent=0 // pred_check
    _
  $region7: #{_lambda_.10} parent=0 // pred_check_branch
    %11 = sbr.rel (0) target = $region9
  $region8: #{_lambda_.10} parent=0 // pred_region
    _
  $region9: #{_lambda_.10} parent=0 // pred_fallthru
    _
  // Predicated region
  $region10: #{_lambda_.10} parent=0 // pred_check
    _
  $region11: #{_lambda_.10} parent=0 // pred_check_branch
    %13 = sbr.rel (0) target = $region13
  $region12: #{_lambda_.10} parent=0 // pred_region
    _
  $region13: #{_lambda_.10} parent=0 // pred_fallthru
    _
  %v15 = vld [vmem:[%s0] sm:$0xf]
  %v16 = vld [vmem:[%s0 + $0x4] sm:$0xf]
  %v17 = vld [vmem:[%s1] sm:$0xff]
  %v18 = vld [vmem:[%s1 + $0x8] sm:$0xff]
  %v19 = vld [vmem:[%s1 + $0x10] sm:$0xff]
  %v20 = vld [vmem:[%s1 + $0x18] sm:$0xff]
  %v21 = vld [vmem:[%s1 + $0x20] sm:$0xff]
  %v22 = vld [vmem:[%s1 + $0x28] sm:$0xff]
  %v23 = vld [vmem:[%s1 + $0x30] sm:$0xff]
  %v24 = vld [vmem:[%s1 + $0x38] sm:$0xff]
  %v25 = vld [vmem:[%s1 + $0x40] sm:$0xff]
  %v26 = vld [vmem:[%s1 + $0x48] sm:$0xff]
  %v27 = vld [vmem:[%s1 + $0x50] sm:$0xff]
  %v28 = vld [vmem:[%s1 + $0x58] sm:$0xff]
  %v29 = vld [vmem:[%s1 + $0x60] sm:$0xff]
  %v30 = vld [vmem:[%s1 + $0x68] sm:$0xff]
  %v31 = vld [vmem:[%s1 + $0x70] sm:$0xff]
  %v32 = vld [vmem:[%s1 + $0x78] sm:$0xff]
  %v33 = vld [vmem:[%s1 + $0x80] sm:$0xff]
  %v34 = vld [vmem:[%s1 + $0x88] sm:$0xff]
  %v35 = vld [vmem:[%s1 + $0x90] sm:$0xff]
  %v36 = vld [vmem:[%s1 + $0x98] sm:$0xff]
  %v37 = vld [vmem:[%s1 + $0xa0] sm:$0xff]
  %v38 = vld [vmem:[%s1 + $0xa8] sm:$0xff]
  %v39 = vld [vmem:[%s1 + $0xb0] sm:$0xff]
  %v40 = vld [vmem:[%s1 + $0xb8] sm:$0xff]
  %v41 = vld [vmem:[%s1 + $0xc0] sm:$0x33]
  %v42 = vld [vmem:[%s1 + $0xc8] sm:$0x33]
  %v43 = vld [vmem:[%s1 + $0xd0] sm:$0x33]
  %v44 = vld [vmem:[%s1 + $0xd8] sm:$0x33]
  %v45 = vld [vmem:[%s1 + $0xe0] sm:$0x33]
  %v46 = vld [vmem:[%s1 + $0xe8] sm:$0x33]
  %v47 = vld [vmem:[%s1 + $0xf0] sm:$0x33]
  %v48 = vld [vmem:[%s1 + $0xf8] sm:$0x33]
  %v49 = vld [vmem:[%s2] sm:$0xff]
  %v50 = vld [vmem:[%s2 + $0x8] sm:$0xff]
  %52 = vset.pattern.permute.xlu0 0
  %53 = vperm.xlu0 %52, %v49
  %v54 = vpop.permute.xlu0 %53
  %57 = vset.pattern.permute.xlu0 0
  %58 = vperm.xlu0 %57, %v50
  %v59 = vpop.permute.xlu0 %58
  %v63 = vunpack.c.l.b16 %v15
  %v64 = vunpack.c.l.b16 %v16
  %v65 = vpack.c.b16 %v64, %v63
  %v98 = vunpack.c.l.b16 %v17
  %v99 = vunpack.c.h.b16 %v17
  %v100 = vunpack.c.l.b16 %v18
  %v101 = vunpack.c.h.b16 %v18
  %v102 = vunpack.c.l.b16 %v19
  %v103 = vunpack.c.h.b16 %v19
  %v104 = vunpack.c.l.b16 %v20
  %v105 = vunpack.c.h.b16 %v20
  %v106 = vunpack.c.l.b16 %v21
  %v107 = vunpack.c.h.b16 %v21
  %v108 = vunpack.c.l.b16 %v22
  %v109 = vunpack.c.h.b16 %v22
  %v110 = vunpack.c.l.b16 %v23
  %v111 = vunpack.c.h.b16 %v23
  %v112 = vunpack.c.l.b16 %v24
  %v113 = vunpack.c.h.b16 %v24
  %v114 = vunpack.c.l.b16 %v25
  %v115 = vunpack.c.h.b16 %v25
  %v116 = vunpack.c.l.b16 %v26
  %v117 = vunpack.c.h.b16 %v26
  %v118 = vunpack.c.l.b16 %v27
  %v119 = vunpack.c.h.b16 %v27
  %v120 = vunpack.c.l.b16 %v28
  %v121 = vunpack.c.h.b16 %v28
  %v122 = vunpack.c.l.b16 %v29
  %v123 = vunpack.c.h.b16 %v29
  %v124 = vunpack.c.l.b16 %v30
  %v125 = vunpack.c.h.b16 %v30
  %v126 = vunpack.c.l.b16 %v31
  %v127 = vunpack.c.h.b16 %v31
  %v128 = vunpack.c.l.b16 %v32
  %v129 = vunpack.c.h.b16 %v32
  %v130 = vunpack.c.l.b16 %v33
  %v131 = vunpack.c.h.b16 %v33
  %v132 = vunpack.c.l.b16 %v34
  %v133 = vunpack.c.h.b16 %v34
  %v134 = vunpack.c.l.b16 %v35
  %v135 = vunpack.c.h.b16 %v35
  %v136 = vunpack.c.l.b16 %v36
  %v137 = vunpack.c.h.b16 %v36
  %v138 = vunpack.c.l.b16 %v37
  %v139 = vunpack.c.h.b16 %v37
  %v140 = vunpack.c.l.b16 %v38
  %v141 = vunpack.c.h.b16 %v38
  %v142 = vunpack.c.l.b16 %v39
  %v143 = vunpack.c.h.b16 %v39
  %v144 = vunpack.c.l.b16 %v40
  %v145 = vunpack.c.h.b16 %v40
  %v146 = vunpack.c.l.b16 %v41
  %v147 = vunpack.c.h.b16 %v41
  %v148 = vunpack.c.l.b16 %v42
  %v149 = vunpack.c.h.b16 %v42
  %v150 = vunpack.c.l.b16 %v43
  %v151 = vunpack.c.h.b16 %v43
  %v152 = vunpack.c.l.b16 %v44
  %v153 = vunpack.c.h.b16 %v44
  %v154 = vunpack.c.l.b16 %v45
  %v155 = vunpack.c.h.b16 %v45
  %v156 = vunpack.c.l.b16 %v46
  %v157 = vunpack.c.h.b16 %v46
  %v158 = vunpack.c.l.b16 %v47
  %v159 = vunpack.c.h.b16 %v47
  %v160 = vunpack.c.l.b16 %v48
  %v161 = vunpack.c.h.b16 %v48
  %v162 = vpack.c.b16 %v114, %v98
  %v163 = vpack.c.b16 %v115, %v99
  %v164 = vpack.c.b16 %v116, %v100
  %v165 = vpack.c.b16 %v117, %v101
  %v166 = vpack.c.b16 %v118, %v102
  %v167 = vpack.c.b16 %v119, %v103
  %v168 = vpack.c.b16 %v120, %v104
  %v169 = vpack.c.b16 %v121, %v105
  %v170 = vpack.c.b16 %v122, %v106
  %v171 = vpack.c.b16 %v123, %v107
  %v172 = vpack.c.b16 %v124, %v108
  %v173 = vpack.c.b16 %v125, %v109
  %v174 = vpack.c.b16 %v126, %v110
  %v175 = vpack.c.b16 %v127, %v111
  %v176 = vpack.c.b16 %v128, %v112
  %v177 = vpack.c.b16 %v129, %v113
  %v178 = vpack.c.b16 %v146, %v130
  %v179 = vpack.c.b16 %v147, %v131
  %v180 = vpack.c.b16 %v148, %v132
  %v181 = vpack.c.b16 %v149, %v133
  %v182 = vpack.c.b16 %v150, %v134
  %v183 = vpack.c.b16 %v151, %v135
  %v184 = vpack.c.b16 %v152, %v136
  %v185 = vpack.c.b16 %v153, %v137
  %v186 = vpack.c.b16 %v154, %v138
  %v187 = vpack.c.b16 %v155, %v139
  %v188 = vpack.c.b16 %v156, %v140
  %v189 = vpack.c.b16 %v157, %v141
  %v190 = vpack.c.b16 %v158, %v142
  %v191 = vpack.c.b16 %v159, %v143
  %v192 = vpack.c.b16 %v160, %v144
  %v193 = vpack.c.b16 %v161, %v145
  %vm210 = vcmask 220160
  %v212 = vsel %vm210, %v65, 0
  %vm214 = vcmask 1044480
  %vm215 = vcmask 1045504
  %v216 = vsel %vm214, 4294967295, 65535
  %v217 = vsel %vm215, %v216, 0
  %v219 = vand.u32 %v178, %v217
  %v222 = vand.u32 %v179, %v217
  %v225 = vand.u32 %v180, %v217
  %v228 = vand.u32 %v181, %v217
  %v231 = vand.u32 %v182, %v217
  %v234 = vand.u32 %v183, %v217
  %v237 = vand.u32 %v184, %v217
  %v240 = vand.u32 %v185, %v217
  %v243 = vand.u32 %v186, %v217
  %v246 = vand.u32 %v187, %v217
  %v249 = vand.u32 %v188, %v217
  %v252 = vand.u32 %v189, %v217
  %v255 = vand.u32 %v190, %v217
  %v258 = vand.u32 %v191, %v217
  %v261 = vand.u32 %v192, %v217
  %v264 = vand.u32 %v193, %v217
  %266 = vmatprep.subr.bf16.mxu0 0
  %267 = vmatpush1.bf16.msra.mxu0 0
  %268 = vmatprep.subr.bf16.mxu0 0
  %269 = vmatpush1.bf16.msra.mxu0 0
  %270 = vmatprep.subr.bf16.mxu0 0
  %271 = vmatpush1.bf16.msra.mxu0 0
  %272 = vmatprep.subr.bf16.mxu0 0
  %273 = vmatpush1.bf16.msra.mxu0 0
  %274 = vmatprep.subr.bf16.mxu0 0
  %275 = vmatpush1.bf16.msra.mxu0 0
  %276 = vmatprep.subr.bf16.mxu0 0
  %277 = vmatpush1.bf16.msra.mxu0 0
  %278 = vmatprep.subr.bf16.mxu0 %v222
  %279 = vmatpush1.bf16.msra.mxu0 %v219
  %280 = vmatprep.subr.bf16.mxu0 %v163
  %281 = vmatpush1.bf16.msra.mxu0 %v162
  %282 = vmatprep.subr.bf16.mxu0 0
  %283 = vmatpush2.bf16.msra.mxu0 0
  %284 = vmatprep.subr.bf16.mxu0 0
  %285 = vmatpush2.bf16.msra.mxu0 0
  %286 = vmatprep.subr.bf16.mxu0 0
  %287 = vmatpush2.bf16.msra.mxu0 0
  %288 = vmatprep.subr.bf16.mxu0 0
  %289 = vmatpush2.bf16.msra.mxu0 0
  %290 = vmatprep.subr.bf16.mxu0 0
  %291 = vmatpush2.bf16.msra.mxu0 0
  %292 = vmatprep.subr.bf16.mxu0 0
  %293 = vmatpush2.bf16.msra.mxu0 0
  %294 = vmatprep.subr.bf16.mxu0 0
  %295 = vmatpush2.bf16.msra.mxu0 0
  %296 = vmatprep.subr.bf16.mxu0 0
  %297 = vmatpush2.bf16.msra.mxu0 0
  %298 = vmatprep.mubr.bf16.mxu0 0
  %299 = vmatmul.mubr.bf16.gmra.mxu0 %v212
  %v300 = vpop.f32.mrf.mxu0
  %v301 = vadd.f32 %v54, %v300
  %v302 = vpop.f32.mrf.mxu0
  %v303 = vadd.f32 %v54, %v302
  %v304 = vpop.f32.mrf.mxu0
  %v305 = vadd.f32 %v59, %v304
  %v306 = vpop.f32.mrf.mxu0
  %v307 = vadd.f32 %v59, %v306
  %308 = vdwg.mxu0
  %309 = vmatprep.subr.bf16.mxu0 0
  %310 = vmatpush1.bf16.msra.mxu0 0
  %311 = vmatprep.subr.bf16.mxu0 0
  %312 = vmatpush1.bf16.msra.mxu0 0
  %313 = vmatprep.subr.bf16.mxu0 0
  %314 = vmatpush1.bf16.msra.mxu0 0
  %315 = vmatprep.subr.bf16.mxu0 0
  %316 = vmatpush1.bf16.msra.mxu0 0
  %317 = vmatprep.subr.bf16.mxu0 0
  %318 = vmatpush1.bf16.msra.mxu0 0
  %319 = vmatprep.subr.bf16.mxu0 0
  %320 = vmatpush1.bf16.msra.mxu0 0
  %321 = vmatprep.subr.bf16.mxu0 %v228
  %322 = vmatpush1.bf16.msra.mxu0 %v225
  %323 = vmatprep.subr.bf16.mxu0 %v165
  %324 = vmatpush1.bf16.msra.mxu0 %v164
  %325 = vmatprep.subr.bf16.mxu0 0
  %326 = vmatpush2.bf16.msra.mxu0 0
  %327 = vmatprep.subr.bf16.mxu0 0
  %328 = vmatpush2.bf16.msra.mxu0 0
  %329 = vmatprep.subr.bf16.mxu0 0
  %330 = vmatpush2.bf16.msra.mxu0 0
  %331 = vmatprep.subr.bf16.mxu0 0
  %332 = vmatpush2.bf16.msra.mxu0 0
  %333 = vmatprep.subr.bf16.mxu0 0
  %334 = vmatpush2.bf16.msra.mxu0 0
  %335 = vmatprep.subr.bf16.mxu0 0
  %336 = vmatpush2.bf16.msra.mxu0 0
  %337 = vmatprep.subr.bf16.mxu0 0
  %338 = vmatpush2.bf16.msra.mxu0 0
  %339 = vmatprep.subr.bf16.mxu0 0
  %340 = vmatpush2.bf16.msra.mxu0 0
  %341 = vmatprep.mubr.bf16.mxu0 0
  %342 = vmatmul.mubr.bf16.gmra.mxu0 %v212
  %v343 = vpop.f32.mrf.mxu0
  %v344 = vadd.f32 %v54, %v343
  %v345 = vpop.f32.mrf.mxu0
  %v346 = vadd.f32 %v54, %v345
  %v347 = vpop.f32.mrf.mxu0
  %v348 = vadd.f32 %v59, %v347
  %v349 = vpop.f32.mrf.mxu0
  %v350 = vadd.f32 %v59, %v349
  %351 = vdwg.mxu0
  %352 = vmatprep.subr.bf16.mxu0 0
  %353 = vmatpush1.bf16.msra.mxu0 0
  %354 = vmatprep.subr.bf16.mxu0 0
  %355 = vmatpush1.bf16.msra.mxu0 0
  %356 = vmatprep.subr.bf16.mxu0 0
  %357 = vmatpush1.bf16.msra.mxu0 0
  %358 = vmatprep.subr.bf16.mxu0 0
  %359 = vmatpush1.bf16.msra.mxu0 0
  %360 = vmatprep.subr.bf16.mxu0 0
  %361 = vmatpush1.bf16.msra.mxu0 0
  %362 = vmatprep.subr.bf16.mxu0 0
  %363 = vmatpush1.bf16.msra.mxu0 0
  %364 = vmatprep.subr.bf16.mxu0 %v234
  %365 = vmatpush1.bf16.msra.mxu0 %v231
  %366 = vmatprep.subr.bf16.mxu0 %v167
  %367 = vmatpush1.bf16.msra.mxu0 %v166
  %368 = vmatprep.subr.bf16.mxu0 0
  %369 = vmatpush2.bf16.msra.mxu0 0
  %370 = vmatprep.subr.bf16.mxu0 0
  %371 = vmatpush2.bf16.msra.mxu0 0
  %372 = vmatprep.subr.bf16.mxu0 0
  %373 = vmatpush2.bf16.msra.mxu0 0
  %374 = vmatprep.subr.bf16.mxu0 0
  %375 = vmatpush2.bf16.msra.mxu0 0
  %376 = vmatprep.subr.bf16.mxu0 0
  %377 = vmatpush2.bf16.msra.mxu0 0
  %378 = vmatprep.subr.bf16.mxu0 0
  %379 = vmatpush2.bf16.msra.mxu0 0
  %380 = vmatprep.subr.bf16.mxu0 0
  %381 = vmatpush2.bf16.msra.mxu0 0
  %382 = vmatprep.subr.bf16.mxu0 0
  %383 = vmatpush2.bf16.msra.mxu0 0
  %384 = vmatprep.mubr.bf16.mxu0 0
  %385 = vmatmul.mubr.bf16.gmra.mxu0 %v212
  %v386 = vpop.f32.mrf.mxu0
  %v387 = vadd.f32 %v54, %v386
  %v388 = vpop.f32.mrf.mxu0
  %v389 = vadd.f32 %v54, %v388
  %v390 = vpop.f32.mrf.mxu0
  %v391 = vadd.f32 %v59, %v390
  %v392 = vpop.f32.mrf.mxu0
  %v393 = vadd.f32 %v59, %v392
  %394 = vdwg.mxu0
  %395 = vmatprep.subr.bf16.mxu0 0
  %396 = vmatpush1.bf16.msra.mxu0 0
  %397 = vmatprep.subr.bf16.mxu0 0
  %398 = vmatpush1.bf16.msra.mxu0 0
  %399 = vmatprep.subr.bf16.mxu0 0
  %400 = vmatpush1.bf16.msra.mxu0 0
  %401 = vmatprep.subr.bf16.mxu0 0
  %402 = vmatpush1.bf16.msra.mxu0 0
  %403 = vmatprep.subr.bf16.mxu0 0
  %404 = vmatpush1.bf16.msra.mxu0 0
  %405 = vmatprep.subr.bf16.mxu0 0
  %406 = vmatpush1.bf16.msra.mxu0 0
  %407 = vmatprep.subr.bf16.mxu0 %v240
  %408 = vmatpush1.bf16.msra.mxu0 %v237
  %409 = vmatprep.subr.bf16.mxu0 %v169
  %410 = vmatpush1.bf16.msra.mxu0 %v168
  %411 = vmatprep.subr.bf16.mxu0 0
  %412 = vmatpush2.bf16.msra.mxu0 0
  %413 = vmatprep.subr.bf16.mxu0 0
  %414 = vmatpush2.bf16.msra.mxu0 0
  %415 = vmatprep.subr.bf16.mxu0 0
  %416 = vmatpush2.bf16.msra.mxu0 0
  %417 = vmatprep.subr.bf16.mxu0 0
  %418 = vmatpush2.bf16.msra.mxu0 0
  %419 = vmatprep.subr.bf16.mxu0 0
  %420 = vmatpush2.bf16.msra.mxu0 0
  %421 = vmatprep.subr.bf16.mxu0 0
  %422 = vmatpush2.bf16.msra.mxu0 0
  %423 = vmatprep.subr.bf16.mxu0 0
  %424 = vmatpush2.bf16.msra.mxu0 0
  %425 = vmatprep.subr.bf16.mxu0 0
  %426 = vmatpush2.bf16.msra.mxu0 0
  %427 = vmatprep.mubr.bf16.mxu0 0
  %428 = vmatmul.mubr.bf16.gmra.mxu0 %v212
  %v429 = vpop.f32.mrf.mxu0
  %v430 = vadd.f32 %v54, %v429
  %v431 = vpop.f32.mrf.mxu0
  %v432 = vadd.f32 %v54, %v431
  %v433 = vpop.f32.mrf.mxu0
  %v434 = vadd.f32 %v59, %v433
  %v435 = vpop.f32.mrf.mxu0
  %v436 = vadd.f32 %v59, %v435
  %437 = vdwg.mxu0
  %438 = vmatprep.subr.bf16.mxu0 0
  %439 = vmatpush1.bf16.msra.mxu0 0
  %440 = vmatprep.subr.bf16.mxu0 0
  %441 = vmatpush1.bf16.msra.mxu0 0
  %442 = vmatprep.subr.bf16.mxu0 0
  %443 = vmatpush1.bf16.msra.mxu0 0
  %444 = vmatprep.subr.bf16.mxu0 0
  %445 = vmatpush1.bf16.msra.mxu0 0
  %446 = vmatprep.subr.bf16.mxu0 0
  %447 = vmatpush1.bf16.msra.mxu0 0
  %448 = vmatprep.subr.bf16.mxu0 0
  %449 = vmatpush1.bf16.msra.mxu0 0
  %450 = vmatprep.subr.bf16.mxu0 %v246
  %451 = vmatpush1.bf16.msra.mxu0 %v243
  %452 = vmatprep.subr.bf16.mxu0 %v171
  %453 = vmatpush1.bf16.msra.mxu0 %v170
  %454 = vmatprep.subr.bf16.mxu0 0
  %455 = vmatpush2.bf16.msra.mxu0 0
  %456 = vmatprep.subr.bf16.mxu0 0
  %457 = vmatpush2.bf16.msra.mxu0 0
  %458 = vmatprep.subr.bf16.mxu0 0
  %459 = vmatpush2.bf16.msra.mxu0 0
  %460 = vmatprep.subr.bf16.mxu0 0
  %461 = vmatpush2.bf16.msra.mxu0 0
  %462 = vmatprep.subr.bf16.mxu0 0
  %463 = vmatpush2.bf16.msra.mxu0 0
  %464 = vmatprep.subr.bf16.mxu0 0
  %465 = vmatpush2.bf16.msra.mxu0 0
  %466 = vmatprep.subr.bf16.mxu0 0
  %467 = vmatpush2.bf16.msra.mxu0 0
  %468 = vmatprep.subr.bf16.mxu0 0
  %469 = vmatpush2.bf16.msra.mxu0 0
  %470 = vmatprep.mubr.bf16.mxu0 0
  %471 = vmatmul.mubr.bf16.gmra.mxu0 %v212
  %v472 = vpop.f32.mrf.mxu0
  %v473 = vadd.f32 %v54, %v472
  %v474 = vpop.f32.mrf.mxu0
  %v475 = vadd.f32 %v54, %v474
  %v476 = vpop.f32.mrf.mxu0
  %v477 = vadd.f32 %v59, %v476
  %v478 = vpop.f32.mrf.mxu0
  %v479 = vadd.f32 %v59, %v478
  %480 = vdwg.mxu0
  %481 = vmatprep.subr.bf16.mxu0 0
  %482 = vmatpush1.bf16.msra.mxu0 0
  %483 = vmatprep.subr.bf16.mxu0 0
  %484 = vmatpush1.bf16.msra.mxu0 0
  %485 = vmatprep.subr.bf16.mxu0 0
  %486 = vmatpush1.bf16.msra.mxu0 0
  %487 = vmatprep.subr.bf16.mxu0 0
  %488 = vmatpush1.bf16.msra.mxu0 0
  %489 = vmatprep.subr.bf16.mxu0 0
  %490 = vmatpush1.bf16.msra.mxu0 0
  %491 = vmatprep.subr.bf16.mxu0 0
  %492 = vmatpush1.bf16.msra.mxu0 0
  %493 = vmatprep.subr.bf16.mxu0 %v252
  %494 = vmatpush1.bf16.msra.mxu0 %v249
  %495 = vmatprep.subr.bf16.mxu0 %v173
  %496 = vmatpush1.bf16.msra.mxu0 %v172
  %497 = vmatprep.subr.bf16.mxu0 0
  %498 = vmatpush2.bf16.msra.mxu0 0
  %499 = vmatprep.subr.bf16.mxu0 0
  %500 = vmatpush2.bf16.msra.mxu0 0
  %501 = vmatprep.subr.bf16.mxu0 0
  %502 = vmatpush2.bf16.msra.mxu0 0
  %503 = vmatprep.subr.bf16.mxu0 0
  %504 = vmatpush2.bf16.msra.mxu0 0
  %505 = vmatprep.subr.bf16.mxu0 0
  %506 = vmatpush2.bf16.msra.mxu0 0
  %507 = vmatprep.subr.bf16.mxu0 0
  %508 = vmatpush2.bf16.msra.mxu0 0
  %509 = vmatprep.subr.bf16.mxu0 0
  %510 = vmatpush2.bf16.msra.mxu0 0
  %511 = vmatprep.subr.bf16.mxu0 0
  %512 = vmatpush2.bf16.msra.mxu0 0
  %513 = vmatprep.mubr.bf16.mxu0 0
  %514 = vmatmul.mubr.bf16.gmra.mxu0 %v212
  %v515 = vpop.f32.mrf.mxu0
  %v516 = vadd.f32 %v54, %v515
  %v517 = vpop.f32.mrf.mxu0
  %v518 = vadd.f32 %v54, %v517
  %v519 = vpop.f32.mrf.mxu0
  %v520 = vadd.f32 %v59, %v519
  %v521 = vpop.f32.mrf.mxu0
  %v522 = vadd.f32 %v59, %v521
  %523 = vdwg.mxu0
  %524 = vmatprep.subr.bf16.mxu0 0
  %525 = vmatpush1.bf16.msra.mxu0 0
  %526 = vmatprep.subr.bf16.mxu0 0
  %527 = vmatpush1.bf16.msra.mxu0 0
  %528 = vmatprep.subr.bf16.mxu0 0
  %529 = vmatpush1.bf16.msra.mxu0 0
  %530 = vmatprep.subr.bf16.mxu0 0
  %531 = vmatpush1.bf16.msra.mxu0 0
  %532 = vmatprep.subr.bf16.mxu0 0
  %533 = vmatpush1.bf16.msra.mxu0 0
  %534 = vmatprep.subr.bf16.mxu0 0
  %535 = vmatpush1.bf16.msra.mxu0 0
  %536 = vmatprep.subr.bf16.mxu0 %v258
  %537 = vmatpush1.bf16.msra.mxu0 %v255
  %538 = vmatprep.subr.bf16.mxu0 %v175
  %539 = vmatpush1.bf16.msra.mxu0 %v174
  %540 = vmatprep.subr.bf16.mxu0 0
  %541 = vmatpush2.bf16.msra.mxu0 0
  %542 = vmatprep.subr.bf16.mxu0 0
  %543 = vmatpush2.bf16.msra.mxu0 0
  %544 = vmatprep.subr.bf16.mxu0 0
  %545 = vmatpush2.bf16.msra.mxu0 0
  %546 = vmatprep.subr.bf16.mxu0 0
  %547 = vmatpush2.bf16.msra.mxu0 0
  %548 = vmatprep.subr.bf16.mxu0 0
  %549 = vmatpush2.bf16.msra.mxu0 0
  %550 = vmatprep.subr.bf16.mxu0 0
  %551 = vmatpush2.bf16.msra.mxu0 0
  %552 = vmatprep.subr.bf16.mxu0 0
  %553 = vmatpush2.bf16.msra.mxu0 0
  %554 = vmatprep.subr.bf16.mxu0 0
  %555 = vmatpush2.bf16.msra.mxu0 0
  %556 = vmatprep.mubr.bf16.mxu0 0
  %557 = vmatmul.mubr.bf16.gmra.mxu0 %v212
  %v558 = vpop.f32.mrf.mxu0
  %v559 = vadd.f32 %v54, %v558
  %v560 = vpop.f32.mrf.mxu0
  %v561 = vadd.f32 %v54, %v560
  %v562 = vpop.f32.mrf.mxu0
  %v563 = vadd.f32 %v59, %v562
  %v564 = vpop.f32.mrf.mxu0
  %v565 = vadd.f32 %v59, %v564
  %566 = vdwg.mxu0
  %567 = vmatprep.subr.bf16.mxu0 0
  %568 = vmatpush1.bf16.msra.mxu0 0
  %569 = vmatprep.subr.bf16.mxu0 0
  %570 = vmatpush1.bf16.msra.mxu0 0
  %571 = vmatprep.subr.bf16.mxu0 0
  %572 = vmatpush1.bf16.msra.mxu0 0
  %573 = vmatprep.subr.bf16.mxu0 0
  %574 = vmatpush1.bf16.msra.mxu0 0
  %575 = vmatprep.subr.bf16.mxu0 0
  %576 = vmatpush1.bf16.msra.mxu0 0
  %577 = vmatprep.subr.bf16.mxu0 0
  %578 = vmatpush1.bf16.msra.mxu0 0
  %579 = vmatprep.subr.bf16.mxu0 %v264
  %580 = vmatpush1.bf16.msra.mxu0 %v261
  %581 = vmatprep.subr.bf16.mxu0 %v177
  %582 = vmatpush1.bf16.msra.mxu0 %v176
  %583 = vmatprep.subr.bf16.mxu0 0
  %584 = vmatpush2.bf16.msra.mxu0 0
  %585 = vmatprep.subr.bf16.mxu0 0
  %586 = vmatpush2.bf16.msra.mxu0 0
  %587 = vmatprep.subr.bf16.mxu0 0
  %588 = vmatpush2.bf16.msra.mxu0 0
  %589 = vmatprep.subr.bf16.mxu0 0
  %590 = vmatpush2.bf16.msra.mxu0 0
  %591 = vmatprep.subr.bf16.mxu0 0
  %592 = vmatpush2.bf16.msra.mxu0 0
  %593 = vmatprep.subr.bf16.mxu0 0
  %594 = vmatpush2.bf16.msra.mxu0 0
  %595 = vmatprep.subr.bf16.mxu0 0
  %596 = vmatpush2.bf16.msra.mxu0 0
  %597 = vmatprep.subr.bf16.mxu0 0
  %598 = vmatpush2.bf16.msra.mxu0 0
  %599 = vmatprep.mubr.bf16.mxu0 0
  %600 = vmatmul.mubr.bf16.gmra.mxu0 %v212
  %v601 = vpop.f32.mrf.mxu0
  %v602 = vadd.f32 %v54, %v601
  %v603 = vpop.f32.mrf.mxu0
  %v604 = vadd.f32 %v54, %v603
  %v605 = vpop.f32.mrf.mxu0
  %v606 = vadd.f32 %v59, %v605
  %v607 = vpop.f32.mrf.mxu0
  %v608 = vadd.f32 %v59, %v607
  %609 = vdwg.mxu0
  %v610 = vmax.f32 %v301, 0.0
  %v611 = vmax.f32 %v303, 0.0
  %v612 = vmax.f32 %v344, 0.0
  %v613 = vmax.f32 %v346, 0.0
  %v614 = vmax.f32 %v387, 0.0
  %v615 = vmax.f32 %v389, 0.0
  %v616 = vmax.f32 %v430, 0.0
  %v617 = vmax.f32 %v432, 0.0
  %v618 = vmax.f32 %v473, 0.0
  %v619 = vmax.f32 %v475, 0.0
  %v620 = vmax.f32 %v516, 0.0
  %v621 = vmax.f32 %v518, 0.0
  %v622 = vmax.f32 %v559, 0.0
  %v623 = vmax.f32 %v561, 0.0
  %v624 = vmax.f32 %v602, 0.0
  %v625 = vmax.f32 %v604, 0.0
  %v626 = vmax.f32 %v305, 0.0
  %v627 = vmax.f32 %v307, 0.0
  %v628 = vmax.f32 %v348, 0.0
  %v629 = vmax.f32 %v350, 0.0
  %v630 = vmax.f32 %v391, 0.0
  %v631 = vmax.f32 %v393, 0.0
  %v632 = vmax.f32 %v434, 0.0
  %v633 = vmax.f32 %v436, 0.0
  %v634 = vmax.f32 %v477, 0.0
  %v635 = vmax.f32 %v479, 0.0
  %v636 = vmax.f32 %v520, 0.0
  %v637 = vmax.f32 %v522, 0.0
  %v638 = vmax.f32 %v563, 0.0
  %v639 = vmax.f32 %v565, 0.0
  %v640 = vmax.f32 %v606, 0.0
  %v641 = vmax.f32 %v608, 0.0
  %v642 = vpack.c.bf16 %v626, %v610
  %v643 = vpack.c.bf16 %v627, %v611
  %v644 = vpack.c.bf16 %v628, %v612
  %v645 = vpack.c.bf16 %v629, %v613
  %v646 = vpack.c.bf16 %v630, %v614
  %v647 = vpack.c.bf16 %v631, %v615
  %v648 = vpack.c.bf16 %v632, %v616
  %v649 = vpack.c.bf16 %v633, %v617
  %v650 = vpack.c.bf16 %v634, %v618
  %v651 = vpack.c.bf16 %v635, %v619
  %v652 = vpack.c.bf16 %v636, %v620
  %v653 = vpack.c.bf16 %v637, %v621
  %v654 = vpack.c.bf16 %v638, %v622
  %v655 = vpack.c.bf16 %v639, %v623
  %v656 = vpack.c.bf16 %v640, %v624
  %v657 = vpack.c.bf16 %v641, %v625
  %v674 = vunpack.c.l.b16 %v642
  %v675 = vunpack.c.l.b16 %v643
  %v676 = vunpack.c.l.b16 %v644
  %v677 = vunpack.c.l.b16 %v645
  %v678 = vunpack.c.l.b16 %v646
  %v679 = vunpack.c.l.b16 %v647
  %v680 = vunpack.c.l.b16 %v648
  %v681 = vunpack.c.l.b16 %v649
  %v682 = vunpack.c.l.b16 %v650
  %v683 = vunpack.c.l.b16 %v651
  %v684 = vunpack.c.l.b16 %v652
  %v685 = vunpack.c.l.b16 %v653
  %v686 = vunpack.c.l.b16 %v654
  %v687 = vunpack.c.l.b16 %v655
  %v688 = vunpack.c.l.b16 %v656
  %v689 = vunpack.c.l.b16 %v657
  %v690 = vunpack.c.h.b16 %v642
  %v691 = vunpack.c.h.b16 %v643
  %v692 = vunpack.c.h.b16 %v644
  %v693 = vunpack.c.h.b16 %v645
  %v694 = vunpack.c.h.b16 %v646
  %v695 = vunpack.c.h.b16 %v647
  %v696 = vunpack.c.h.b16 %v648
  %v697 = vunpack.c.h.b16 %v649
  %v698 = vunpack.c.h.b16 %v650
  %v699 = vunpack.c.h.b16 %v651
  %v700 = vunpack.c.h.b16 %v652
  %v701 = vunpack.c.h.b16 %v653
  %v702 = vunpack.c.h.b16 %v654
  %v703 = vunpack.c.h.b16 %v655
  %v704 = vunpack.c.h.b16 %v656
  %v705 = vunpack.c.h.b16 %v657
  %v706 = vpack.c.b16 %v675, %v674
  %v707 = vpack.c.b16 %v677, %v676
  %v708 = vpack.c.b16 %v679, %v678
  %v709 = vpack.c.b16 %v681, %v680
  %v710 = vpack.c.b16 %v683, %v682
  %v711 = vpack.c.b16 %v685, %v684
  %v712 = vpack.c.b16 %v687, %v686
  %v713 = vpack.c.b16 %v689, %v688
  %v714 = vpack.c.b16 %v691, %v690
  %v715 = vpack.c.b16 %v693, %v692
  %v716 = vpack.c.b16 %v695, %v694
  %v717 = vpack.c.b16 %v697, %v696
  %v718 = vpack.c.b16 %v699, %v698
  %v719 = vpack.c.b16 %v701, %v700
  %v720 = vpack.c.b16 %v703, %v702
  %v721 = vpack.c.b16 %v705, %v704
  %738 = vst [vmem:[%s3] sm:$0xff] %v706
  %739 = vst [vmem:[%s3 + $0x8] sm:$0xff] %v707
  %740 = vst [vmem:[%s3 + $0x10] sm:$0xff] %v708
  %741 = vst [vmem:[%s3 + $0x18] sm:$0xff] %v709
  %742 = vst [vmem:[%s3 + $0x20] sm:$0xff] %v710
  %743 = vst [vmem:[%s3 + $0x28] sm:$0xff] %v711
  %744 = vst [vmem:[%s3 + $0x30] sm:$0xff] %v712
  %745 = vst [vmem:[%s3 + $0x38] sm:$0xff] %v713
  %746 = vst [vmem:[%s3 + $0x40] sm:$0xff] %v714
  %747 = vst [vmem:[%s3 + $0x48] sm:$0xff] %v715
  %748 = vst [vmem:[%s3 + $0x50] sm:$0xff] %v716
  %749 = vst [vmem:[%s3 + $0x58] sm:$0xff] %v717
  %750 = vst [vmem:[%s3 + $0x60] sm:$0xff] %v718
  %751 = vst [vmem:[%s3 + $0x68] sm:$0xff] %v719
  %752 = vst [vmem:[%s3 + $0x70] sm:$0xff] %v720
  %753 = vst [vmem:[%s3 + $0x78] sm:$0xff] %v721
  // Predicated region
  $region14: #{_lambda_.10} parent=0 // pred_check
    _
  $region15: #{_lambda_.10} parent=0 // pred_check_branch
    %755 = sbr.rel (0) target = $region17
  $region16: #{_lambda_.10} parent=0 // pred_region
    _
  $region17: #{_lambda_.10} parent=0 // pred_fallthru
    _
  // Predicated region
  $region18: #{_lambda_.10} parent=0 // pred_check
    _
  $region19: #{_lambda_.10} parent=0 // pred_check_branch
    %757 = sbr.rel (0) target = $region21
  $region20: #{_lambda_.10} parent=0 // pred_region
    _
  $region21: #{_lambda_.10} parent=0 // pred_fallthru
    _

// kernel: _lambda_.11
$region0: #{_lambda_.11}
  #allocation0 [shape = 'u32[]', space=smem, size = 0x4, offset = 0x4, fixed_abs, tag = 'smem constant byte address 0x4 - core index']
  #allocation1 [shape = 'u32[144,128]{1,0:T(1,128)}', space=vmem, size = 0x12000, scoped, tag = 'internal scratch']
  %s0 = inlined_call_operand.vmem [shape: bf16[24,144], index: 0, kind: input, shape index: {}]
  %s1 = inlined_call_operand.vmem [shape: bf16[144,512], index: 1, kind: input, shape index: {}]
  %s2 = inlined_call_operand.vmem [shape: f32[24,1], index: 2, kind: input, shape index: {}]
  %s3 = inlined_call_operand.vmem [shape: bf16[24,512], index: 3, kind: output, shape index: {}]
  %s4 = sld [smem:[#allocation0]]
  $region22: #{_lambda_.11} parent=0
    _
  %s6 = ssub.s32 1, %s4
  %s7 = scalar_select 0, %s6, %s4
  // Predicated region
  $region2: #{_lambda_.11} parent=0 // pred_check
    _
  $region3: #{_lambda_.11} parent=0 // pred_check_branch
    %9 = sbr.rel (0) target = $region5
  $region4: #{_lambda_.11} parent=0 // pred_region
    _
  $region5: #{_lambda_.11} parent=0 // pred_fallthru
    _
  // Predicated region
  $region6: #{_lambda_.11} parent=0 // pred_check
    _
  $region7: #{_lambda_.11} parent=0 // pred_check_branch
    %11 = sbr.rel (0) target = $region9
  $region8: #{_lambda_.11} parent=0 // pred_region
    _
  $region9: #{_lambda_.11} parent=0 // pred_fallthru
    _
  // Predicated region
  $region10: #{_lambda_.11} parent=0 // pred_check
    _
  $region11: #{_lambda_.11} parent=0 // pred_check_branch
    %13 = sbr.rel (0) target = $region13
  $region12: #{_lambda_.11} parent=0 // pred_region
    _
  $region13: #{_lambda_.11} parent=0 // pred_fallthru
    _
  %v15 = vld [vmem:[%s0] sm:$0xff]
  %v16 = vld [vmem:[%s0 + $0x8] sm:$0xff]
  %v17 = vld [vmem:[%s0 + $0x10] sm:$0xff]
  %v18 = vld [vmem:[%s1] sm:$0xff]
  %v19 = vld [vmem:[%s1 + $0x8] sm:$0xff]
  %v20 = vld [vmem:[%s1 + $0x10] sm:$0xff]
  %v21 = vld [vmem:[%s1 + $0x18] sm:$0xff]
  %v22 = vld [vmem:[%s1 + $0x20] sm:$0xff]
  %v23 = vld [vmem:[%s1 + $0x28] sm:$0xff]
  %v24 = vld [vmem:[%s1 + $0x30] sm:$0xff]
  %v25 = vld [vmem:[%s1 + $0x38] sm:$0xff]
  %v26 = vld [vmem:[%s1 + $0x40] sm:$0xff]
  %v27 = vld [vmem:[%s1 + $0x48] sm:$0xff]
  %v28 = vld [vmem:[%s1 + $0x50] sm:$0xff]
  %v29 = vld [vmem:[%s1 + $0x58] sm:$0xff]
  %v30 = vld [vmem:[%s1 + $0x60] sm:$0xff]
  %v31 = vld [vmem:[%s1 + $0x68] sm:$0xff]
  %v32 = vld [vmem:[%s1 + $0x70] sm:$0xff]
  %v33 = vld [vmem:[%s1 + $0x78] sm:$0xff]
  %v34 = vld [vmem:[%s1 + $0x80] sm:$0xff]
  %v35 = vld [vmem:[%s1 + $0x88] sm:$0xff]
  %v36 = vld [vmem:[%s1 + $0x90] sm:$0xff]
  %v37 = vld [vmem:[%s1 + $0x98] sm:$0xff]
  %v38 = vld [vmem:[%s1 + $0xa0] sm:$0xff]
  %v39 = vld [vmem:[%s1 + $0xa8] sm:$0xff]
  %v40 = vld [vmem:[%s1 + $0xb0] sm:$0xff]
  %v41 = vld [vmem:[%s1 + $0xb8] sm:$0xff]
  %v42 = vld [vmem:[%s1 + $0xc0] sm:$0xff]
  %v43 = vld [vmem:[%s1 + $0xc8] sm:$0xff]
  %v44 = vld [vmem:[%s1 + $0xd0] sm:$0xff]
  %v45 = vld [vmem:[%s1 + $0xd8] sm:$0xff]
  %v46 = vld [vmem:[%s1 + $0xe0] sm:$0xff]
  %v47 = vld [vmem:[%s1 + $0xe8] sm:$0xff]
  %v48 = vld [vmem:[%s1 + $0xf0] sm:$0xff]
  %v49 = vld [vmem:[%s1 + $0xf8] sm:$0xff]
  %v50 = vld [vmem:[%s1 + $0x100] sm:$0xff]
  %v51 = vld [vmem:[%s1 + $0x108] sm:$0xff]
  %v52 = vld [vmem:[%s1 + $0x110] sm:$0xff]
  %v53 = vld [vmem:[%s1 + $0x118] sm:$0xff]
  %v54 = vld [vmem:[%s2] sm:$0xff]
  %v55 = vld [vmem:[%s2 + $0x8] sm:$0xff]
  %v56 = vld [vmem:[%s2 + $0x10] sm:$0xff]
  %58 = vset.pattern.permute.xlu0 0
  %59 = vperm.xlu0 %58, %v54
  %v60 = vpop.permute.xlu0 %59
  %63 = vset.pattern.permute.xlu0 0
  %64 = vperm.xlu0 %63, %v55
  %v65 = vpop.permute.xlu0 %64
  %68 = vset.pattern.permute.xlu0 0
  %69 = vperm.xlu0 %68, %v56
  %v70 = vpop.permute.xlu0 %69
  %v75 = vunpack.c.l.b16 %v15
  %v76 = vunpack.c.h.b16 %v15
  %v77 = vunpack.c.l.b16 %v16
  %v78 = vunpack.c.h.b16 %v16
  %v79 = vunpack.c.l.b16 %v17
  %v80 = vunpack.c.h.b16 %v17
  %v81 = vpack.c.b16 %v77, %v75
  %v82 = vpack.c.b16 %v78, %v76
  %v83 = vpack.c.b16 %v79, %v79
  %v84 = vpack.c.b16 %v80, %v80
  %v123 = vunpack.c.l.b16 %v18
  %v124 = vunpack.c.h.b16 %v18
  %v125 = vunpack.c.l.b16 %v19
  %v126 = vunpack.c.h.b16 %v19
  %v127 = vunpack.c.l.b16 %v20
  %v128 = vunpack.c.h.b16 %v20
  %v129 = vunpack.c.l.b16 %v21
  %v130 = vunpack.c.h.b16 %v21
  %v131 = vunpack.c.l.b16 %v22
  %v132 = vunpack.c.h.b16 %v22
  %v133 = vunpack.c.l.b16 %v23
  %v134 = vunpack.c.h.b16 %v23
  %v135 = vunpack.c.l.b16 %v24
  %v136 = vunpack.c.h.b16 %v24
  %v137 = vunpack.c.l.b16 %v25
  %v138 = vunpack.c.h.b16 %v25
  %v139 = vunpack.c.l.b16 %v26
  %v140 = vunpack.c.h.b16 %v26
  %v141 = vunpack.c.l.b16 %v27
  %v142 = vunpack.c.h.b16 %v27
  %v143 = vunpack.c.l.b16 %v28
  %v144 = vunpack.c.h.b16 %v28
  %v145 = vunpack.c.l.b16 %v29
  %v146 = vunpack.c.h.b16 %v29
  %v147 = vunpack.c.l.b16 %v30
  %v148 = vunpack.c.h.b16 %v30
  %v149 = vunpack.c.l.b16 %v31
  %v150 = vunpack.c.h.b16 %v31
  %v151 = vunpack.c.l.b16 %v32
  %v152 = vunpack.c.h.b16 %v32
  %v153 = vunpack.c.l.b16 %v33
  %v154 = vunpack.c.h.b16 %v33
  %v155 = vunpack.c.l.b16 %v34
  %v156 = vunpack.c.h.b16 %v34
  %v157 = vunpack.c.l.b16 %v35
  %v158 = vunpack.c.h.b16 %v35
  %v159 = vunpack.c.l.b16 %v36
  %v160 = vunpack.c.h.b16 %v36
  %v161 = vunpack.c.l.b16 %v37
  %v162 = vunpack.c.h.b16 %v37
  %v163 = vunpack.c.l.b16 %v38
  %v164 = vunpack.c.h.b16 %v38
  %v165 = vunpack.c.l.b16 %v39
  %v166 = vunpack.c.h.b16 %v39
  %v167 = vunpack.c.l.b16 %v40
  %v168 = vunpack.c.h.b16 %v40
  %v169 = vunpack.c.l.b16 %v41
  %v170 = vunpack.c.h.b16 %v41
  %v171 = vunpack.c.l.b16 %v42
  %v172 = vunpack.c.h.b16 %v42
  %v173 = vunpack.c.l.b16 %v43
  %v174 = vunpack.c.h.b16 %v43
  %v175 = vunpack.c.l.b16 %v44
  %v176 = vunpack.c.h.b16 %v44
  %v177 = vunpack.c.l.b16 %v45
  %v178 = vunpack.c.h.b16 %v45
  %v179 = vunpack.c.l.b16 %v46
  %v180 = vunpack.c.h.b16 %v46
  %v181 = vunpack.c.l.b16 %v47
  %v182 = vunpack.c.h.b16 %v47
  %v183 = vunpack.c.l.b16 %v48
  %v184 = vunpack.c.h.b16 %v48
  %v185 = vunpack.c.l.b16 %v49
  %v186 = vunpack.c.h.b16 %v49
  %v187 = vunpack.c.l.b16 %v50
  %v188 = vunpack.c.h.b16 %v50
  %v189 = vunpack.c.l.b16 %v51
  %v190 = vunpack.c.h.b16 %v51
  %v191 = vunpack.c.l.b16 %v52
  %v192 = vunpack.c.h.b16 %v52
  %v193 = vunpack.c.l.b16 %v53
  %v194 = vunpack.c.h.b16 %v53
  %v195 = vpack.c.b16 %v127, %v123
  %v196 = vpack.c.b16 %v128, %v124
  %v197 = vpack.c.b16 %v129, %v125
  %v198 = vpack.c.b16 %v130, %v126
  %v199 = vpack.c.b16 %v135, %v131
  %v200 = vpack.c.b16 %v136, %v132
  %v201 = vpack.c.b16 %v137, %v133
  %v202 = vpack.c.b16 %v138, %v134
  %v203 = vpack.c.b16 %v143, %v139
  %v204 = vpack.c.b16 %v144, %v140
  %v205 = vpack.c.b16 %v145, %v141
  %v206 = vpack.c.b16 %v146, %v142
  %v207 = vpack.c.b16 %v151, %v147
  %v208 = vpack.c.b16 %v152, %v148
  %v209 = vpack.c.b16 %v153, %v149
  %v210 = vpack.c.b16 %v154, %v150
  %v211 = vpack.c.b16 %v159, %v155
  %v212 = vpack.c.b16 %v160, %v156
  %v213 = vpack.c.b16 %v161, %v157
  %v214 = vpack.c.b16 %v162, %v158
  %v215 = vpack.c.b16 %v167, %v163
  %v216 = vpack.c.b16 %v168, %v164
  %v217 = vpack.c.b16 %v169, %v165
  %v218 = vpack.c.b16 %v170, %v166
  %v219 = vpack.c.b16 %v175, %v171
  %v220 = vpack.c.b16 %v176, %v172
  %v221 = vpack.c.b16 %v177, %v173
  %v222 = vpack.c.b16 %v178, %v174
  %v223 = vpack.c.b16 %v183, %v179
  %v224 = vpack.c.b16 %v184, %v180
  %v225 = vpack.c.b16 %v185, %v181
  %v226 = vpack.c.b16 %v186, %v182
  %v227 = vpack.c.b16 %v191, %v187
  %v228 = vpack.c.b16 %v192, %v188
  %v229 = vpack.c.b16 %v193, %v189
  %v230 = vpack.c.b16 %v194, %v190
  %vm267 = vcmask 130048
  %v269 = vsel %vm267, %v82, 0
  %v272 = vsel %vm267, %v84, 0
  %274 = vmatprep.subr.bf16.mxu0 %v224
  %275 = vmatpush1.bf16.msra.mxu0 %v223
  %276 = vmatprep.subr.bf16.mxu0 %v220
  %277 = vmatpush1.bf16.msra.mxu0 %v219
  %278 = vmatprep.subr.bf16.mxu0 %v216
  %279 = vmatpush1.bf16.msra.mxu0 %v215
  %280 = vmatprep.subr.bf16.mxu0 %v212
  %281 = vmatpush1.bf16.msra.mxu0 %v211
  %282 = vmatprep.subr.bf16.mxu0 %v208
  %283 = vmatpush1.bf16.msra.mxu0 %v207
  %284 = vmatprep.subr.bf16.mxu0 %v204
  %285 = vmatpush1.bf16.msra.mxu0 %v203
  %286 = vmatprep.subr.bf16.mxu0 %v200
  %287 = vmatpush1.bf16.msra.mxu0 %v199
  %288 = vmatprep.subr.bf16.mxu0 %v196
  %289 = vmatpush1.bf16.msra.mxu0 %v195
  %290 = vmatprep.subr.bf16.mxu0 0
  %291 = vmatpush2.bf16.msra.mxu0 0
  %292 = vmatprep.subr.bf16.mxu0 0
  %293 = vmatpush2.bf16.msra.mxu0 0
  %294 = vmatprep.subr.bf16.mxu0 0
  %295 = vmatpush2.bf16.msra.mxu0 0
  %296 = vmatprep.subr.bf16.mxu0 0
  %297 = vmatpush2.bf16.msra.mxu0 0
  %298 = vmatprep.subr.bf16.mxu0 0
  %299 = vmatpush2.bf16.msra.mxu0 0
  %300 = vmatprep.subr.bf16.mxu0 0
  %301 = vmatpush2.bf16.msra.mxu0 0
  %302 = vmatprep.subr.bf16.mxu0 0
  %303 = vmatpush2.bf16.msra.mxu0 0
  %304 = vmatprep.subr.bf16.mxu0 %v228
  %305 = vmatpush2.bf16.msra.mxu0 %v227
  %306 = vmatprep.mubr.bf16.mxu0 %v269
  %307 = vmatmul.mubr.bf16.gmra.mxu0 %v81
  %v308 = vpop.f32.mrf.mxu0
  %v309 = vadd.f32 %v60, %v308
  %v310 = vpop.f32.mrf.mxu0
  %v311 = vadd.f32 %v60, %v310
  %v312 = vpop.f32.mrf.mxu0
  %v313 = vadd.f32 %v65, %v312
  %v314 = vpop.f32.mrf.mxu0
  %v315 = vadd.f32 %v65, %v314
  %316 = vmatprep.mubr.bf16.mxu0 %v272
  %317 = vmatmul.mubr.bf16.gmra.mxu0 %v83
  %v318 = vpop.f32.mrf.mxu0
  %v319 = vadd.f32 %v70, %v318
  %v320 = vpop.f32.mrf.mxu0
  %v321 = vadd.f32 %v70, %v320
  %v322 = vpop.f32.mrf.mxu0
  %v323 = vpop.f32.mrf.mxu0
  %324 = vdwg.mxu0
  %325 = vmatprep.subr.bf16.mxu0 %v226
  %326 = vmatpush1.bf16.msra.mxu0 %v225
  %327 = vmatprep.subr.bf16.mxu0 %v222
  %328 = vmatpush1.bf16.msra.mxu0 %v221
  %329 = vmatprep.subr.bf16.mxu0 %v218
  %330 = vmatpush1.bf16.msra.mxu0 %v217
  %331 = vmatprep.subr.bf16.mxu0 %v214
  %332 = vmatpush1.bf16.msra.mxu0 %v213
  %333 = vmatprep.subr.bf16.mxu0 %v210
  %334 = vmatpush1.bf16.msra.mxu0 %v209
  %335 = vmatprep.subr.bf16.mxu0 %v206
  %336 = vmatpush1.bf16.msra.mxu0 %v205
  %337 = vmatprep.subr.bf16.mxu0 %v202
  %338 = vmatpush1.bf16.msra.mxu0 %v201
  %339 = vmatprep.subr.bf16.mxu0 %v198
  %340 = vmatpush1.bf16.msra.mxu0 %v197
  %341 = vmatprep.subr.bf16.mxu0 0
  %342 = vmatpush2.bf16.msra.mxu0 0
  %343 = vmatprep.subr.bf16.mxu0 0
  %344 = vmatpush2.bf16.msra.mxu0 0
  %345 = vmatprep.subr.bf16.mxu0 0
  %346 = vmatpush2.bf16.msra.mxu0 0
  %347 = vmatprep.subr.bf16.mxu0 0
  %348 = vmatpush2.bf16.msra.mxu0 0
  %349 = vmatprep.subr.bf16.mxu0 0
  %350 = vmatpush2.bf16.msra.mxu0 0
  %351 = vmatprep.subr.bf16.mxu0 0
  %352 = vmatpush2.bf16.msra.mxu0 0
  %353 = vmatprep.subr.bf16.mxu0 0
  %354 = vmatpush2.bf16.msra.mxu0 0
  %355 = vmatprep.subr.bf16.mxu0 %v230
  %356 = vmatpush2.bf16.msra.mxu0 %v229
  %357 = vmatprep.mubr.bf16.mxu0 %v269
  %358 = vmatmul.mubr.bf16.gmra.mxu0 %v81
  %v359 = vpop.f32.mrf.mxu0
  %v360 = vadd.f32 %v60, %v359
  %v361 = vpop.f32.mrf.mxu0
  %v362 = vadd.f32 %v60, %v361
  %v363 = vpop.f32.mrf.mxu0
  %v364 = vadd.f32 %v65, %v363
  %v365 = vpop.f32.mrf.mxu0
  %v366 = vadd.f32 %v65, %v365
  %367 = vmatprep.mubr.bf16.mxu0 %v272
  %368 = vmatmul.mubr.bf16.gmra.mxu0 %v83
  %v369 = vpop.f32.mrf.mxu0
  %v370 = vadd.f32 %v70, %v369
  %v371 = vpop.f32.mrf.mxu0
  %v372 = vadd.f32 %v70, %v371
  %v373 = vpop.f32.mrf.mxu0
  %v374 = vpop.f32.mrf.mxu0
  %375 = vdwg.mxu0
  %v376 = vmax.f32 %v309, 0.0
  %v377 = vmax.f32 %v311, 0.0
  %v378 = vmax.f32 %v360, 0.0
  %v379 = vmax.f32 %v362, 0.0
  %v380 = vmax.f32 %v313, 0.0
  %v381 = vmax.f32 %v315, 0.0
  %v382 = vmax.f32 %v364, 0.0
  %v383 = vmax.f32 %v366, 0.0
  %v384 = vmax.f32 %v319, 0.0
  %v385 = vmax.f32 %v321, 0.0
  %v386 = vmax.f32 %v370, 0.0
  %v387 = vmax.f32 %v372, 0.0
  %v388 = vpack.c.bf16 %v380, %v376
  %v389 = vpack.c.bf16 %v381, %v377
  %v390 = vpack.c.bf16 %v382, %v378
  %v391 = vpack.c.bf16 %v383, %v379
  %v392 = vpack.c.bf16 %v384, %v384
  %v393 = vpack.c.bf16 %v385, %v385
  %v394 = vpack.c.bf16 %v386, %v386
  %v395 = vpack.c.bf16 %v387, %v387
  %v404 = vunpack.c.l.b16 %v388
  %v405 = vunpack.c.l.b16 %v389
  %v406 = vunpack.c.l.b16 %v390
  %v407 = vunpack.c.l.b16 %v391
  %v408 = vunpack.c.h.b16 %v388
  %v409 = vunpack.c.h.b16 %v389
  %v410 = vunpack.c.h.b16 %v390
  %v411 = vunpack.c.h.b16 %v391
  %v412 = vunpack.c.l.b16 %v392
  %v413 = vunpack.c.l.b16 %v393
  %v414 = vunpack.c.l.b16 %v394
  %v415 = vunpack.c.l.b16 %v395
  %v416 = vpack.c.b16 %v405, %v404
  %v417 = vpack.c.b16 %v407, %v406
  %v418 = vpack.c.b16 %v409, %v408
  %v419 = vpack.c.b16 %v411, %v410
  %v420 = vpack.c.b16 %v413, %v412
  %v421 = vpack.c.b16 %v415, %v414
  %428 = vst [vmem:[%s3] sm:$0xff] %v416
  %429 = vst [vmem:[%s3 + $0x8] sm:$0xff] %v417
  %430 = vst [vmem:[%s3 + $0x10] sm:$0xff] %v418
  %431 = vst [vmem:[%s3 + $0x18] sm:$0xff] %v419
  %432 = vst [vmem:[%s3 + $0x20] sm:$0xff] %v420
  %433 = vst [vmem:[%s3 + $0x28] sm:$0xff] %v421
  // Predicated region
  $region14: #{_lambda_.11} parent=0 // pred_check
    _
  $region15: #{_lambda_.11} parent=0 // pred_check_branch
    %435 = sbr.rel (0) target = $region17
  $region16: #{_lambda_.11} parent=0 // pred_region
    _
  $region17: #{_lambda_.11} parent=0 // pred_fallthru
    _
  // Predicated region
  $region18: #{_lambda_.11} parent=0 // pred_check
    _
  $region19: #{_lambda_.11} parent=0 // pred_check_branch
    %437 = sbr.rel (0) target = $region21
  $region20: #{_lambda_.11} parent=0 // pred_region
    _
  $region21: #{_lambda_.11} parent=0 // pred_fallthru
    _

// kernel: _lambda_.12
$region0: #{_lambda_.12}
  #allocation0 [shape = 'u32[]', space=smem, size = 0x4, offset = 0x4, fixed_abs, tag = 'smem constant byte address 0x4 - core index']
  #allocation1 [shape = 'u32[144,128]{1,0:T(1,128)}', space=vmem, size = 0x12000, scoped, tag = 'internal scratch']
  %s0 = inlined_call_operand.vmem [shape: bf16[32,216], index: 0, kind: input, shape index: {}]
  %s1 = inlined_call_operand.vmem [shape: bf16[216,128], index: 1, kind: input, shape index: {}]
  %s2 = inlined_call_operand.vmem [shape: f32[32,1], index: 2, kind: input, shape index: {}]
  %s3 = inlined_call_operand.vmem [shape: bf16[32,128], index: 3, kind: output, shape index: {}]
  %s4 = sld [smem:[#allocation0]]
  $region22: #{_lambda_.12} parent=0
    _
  %s6 = ssub.s32 1, %s4
  %s7 = scalar_select 0, %s6, %s4
  // Predicated region
  $region2: #{_lambda_.12} parent=0 // pred_check
    _
  $region3: #{_lambda_.12} parent=0 // pred_check_branch
    %9 = sbr.rel (0) target = $region5
  $region4: #{_lambda_.12} parent=0 // pred_region
    _
  $region5: #{_lambda_.12} parent=0 // pred_fallthru
    _
  // Predicated region
  $region6: #{_lambda_.12} parent=0 // pred_check
    _
  $region7: #{_lambda_.12} parent=0 // pred_check_branch
    %11 = sbr.rel (0) target = $region9
  $region8: #{_lambda_.12} parent=0 // pred_region
    _
  $region9: #{_lambda_.12} parent=0 // pred_fallthru
    _
  // Predicated region
  $region10: #{_lambda_.12} parent=0 // pred_check
    _
  $region11: #{_lambda_.12} parent=0 // pred_check_branch
    %13 = sbr.rel (0) target = $region13
  $region12: #{_lambda_.12} parent=0 // pred_region
    _
  $region13: #{_lambda_.12} parent=0 // pred_fallthru
    _
  %v15 = vld [vmem:[%s0] sm:$0xff]
  %v16 = vld [vmem:[%s0 + $0x8] sm:$0xff]
  %v17 = vld [vmem:[%s0 + $0x10] sm:$0xff]
  %v18 = vld [vmem:[%s0 + $0x18] sm:$0xff]
  %v19 = vld [vmem:[%s1] sm:$0xf]
  %v20 = vld [vmem:[%s1 + $0x4] sm:$0xf]
  %v21 = vld [vmem:[%s1 + $0x8] sm:$0xf]
  %v22 = vld [vmem:[%s1 + $0xc] sm:$0xf]
  %v23 = vld [vmem:[%s1 + $0x10] sm:$0xf]
  %v24 = vld [vmem:[%s1 + $0x14] sm:$0xf]
  %v25 = vld [vmem:[%s1 + $0x18] sm:$0xf]
  %v26 = vld [vmem:[%s1 + $0x1c] sm:$0xf]
  %v27 = vld [vmem:[%s1 + $0x20] sm:$0xf]
  %v28 = vld [vmem:[%s1 + $0x24] sm:$0xf]
  %v29 = vld [vmem:[%s1 + $0x28] sm:$0xf]
  %v30 = vld [vmem:[%s1 + $0x2c] sm:$0xf]
  %v31 = vld [vmem:[%s1 + $0x30] sm:$0xf]
  %v32 = vld [vmem:[%s1 + $0x34] sm:$0xf]
  %v33 = vld [vmem:[%s1 + $0x38] sm:$0xf]
  %v34 = vld [vmem:[%s1 + $0x3c] sm:$0xf]
  %v35 = vld [vmem:[%s1 + $0x40] sm:$0xf]
  %v36 = vld [vmem:[%s1 + $0x44] sm:$0xf]
  %v37 = vld [vmem:[%s1 + $0x48] sm:$0xf]
  %v38 = vld [vmem:[%s1 + $0x4c] sm:$0xf]
  %v39 = vld [vmem:[%s1 + $0x50] sm:$0xf]
  %v40 = vld [vmem:[%s1 + $0x54] sm:$0xf]
  %v41 = vld [vmem:[%s1 + $0x58] sm:$0xf]
  %v42 = vld [vmem:[%s1 + $0x5c] sm:$0xf]
  %v43 = vld [vmem:[%s1 + $0x60] sm:$0xf]
  %v44 = vld [vmem:[%s1 + $0x64] sm:$0xf]
  %v45 = vld [vmem:[%s1 + $0x68] sm:$0xf]
  %v46 = vld [vmem:[%s2] sm:$0xff]
  %v47 = vld [vmem:[%s2 + $0x8] sm:$0xff]
  %v48 = vld [vmem:[%s2 + $0x10] sm:$0xff]
  %v49 = vld [vmem:[%s2 + $0x18] sm:$0xff]
  %51 = vset.pattern.permute.xlu0 0
  %52 = vperm.xlu0 %51, %v46
  %v53 = vpop.permute.xlu0 %52
  %56 = vset.pattern.permute.xlu0 0
  %57 = vperm.xlu0 %56, %v47
  %v58 = vpop.permute.xlu0 %57
  %61 = vset.pattern.permute.xlu0 0
  %62 = vperm.xlu0 %61, %v48
  %v63 = vpop.permute.xlu0 %62
  %66 = vset.pattern.permute.xlu0 0
  %67 = vperm.xlu0 %66, %v49
  %v68 = vpop.permute.xlu0 %67
  %v74 = vunpack.c.l.b16 %v15
  %v75 = vunpack.c.h.b16 %v15
  %v76 = vunpack.c.l.b16 %v16
  %v77 = vunpack.c.h.b16 %v16
  %v78 = vunpack.c.l.b16 %v17
  %v79 = vunpack.c.h.b16 %v17
  %v80 = vunpack.c.l.b16 %v18
  %v81 = vunpack.c.h.b16 %v18
  %v82 = vpack.c.b16 %v76, %v74
  %v83 = vpack.c.b16 %v77, %v75
  %v84 = vpack.c.b16 %v80, %v78
  %v85 = vpack.c.b16 %v81, %v79
  %v115 = vunpack.c.l.b16 %v19
  %v116 = vunpack.c.l.b16 %v20
  %v117 = vunpack.c.l.b16 %v21
  %v118 = vunpack.c.l.b16 %v22
  %v119 = vunpack.c.l.b16 %v23
  %v120 = vunpack.c.l.b16 %v24
  %v121 = vunpack.c.l.b16 %v25
  %v122 = vunpack.c.l.b16 %v26
  %v123 = vunpack.c.l.b16 %v27
  %v124 = vunpack.c.l.b16 %v28
  %v125 = vunpack.c.l.b16 %v29
  %v126 = vunpack.c.l.b16 %v30
  %v127 = vunpack.c.l.b16 %v31
  %v128 = vunpack.c.l.b16 %v32
  %v129 = vunpack.c.l.b16 %v33
  %v130 = vunpack.c.l.b16 %v34
  %v131 = vunpack.c.l.b16 %v35
  %v132 = vunpack.c.l.b16 %v36
  %v133 = vunpack.c.l.b16 %v37
  %v134 = vunpack.c.l.b16 %v38
  %v135 = vunpack.c.l.b16 %v39
  %v136 = vunpack.c.l.b16 %v40
  %v137 = vunpack.c.l.b16 %v41
  %v138 = vunpack.c.l.b16 %v42
  %v139 = vunpack.c.l.b16 %v43
  %v140 = vunpack.c.l.b16 %v44
  %v141 = vunpack.c.l.b16 %v45
  %v142 = vpack.c.b16 %v116, %v115
  %v143 = vpack.c.b16 %v118, %v117
  %v144 = vpack.c.b16 %v120, %v119
  %v145 = vpack.c.b16 %v122, %v121
  %v146 = vpack.c.b16 %v124, %v123
  %v147 = vpack.c.b16 %v126, %v125
  %v148 = vpack.c.b16 %v128, %v127
  %v149 = vpack.c.b16 %v130, %v129
  %v150 = vpack.c.b16 %v132, %v131
  %v151 = vpack.c.b16 %v134, %v133
  %v152 = vpack.c.b16 %v136, %v135
  %v153 = vpack.c.b16 %v138, %v137
  %v154 = vpack.c.b16 %v140, %v139
  %v155 = vpack.c.b16 %v141, %v141
  %vm169 = vcmask 719872
  %v171 = vsel %vm169, %v83, 0
  %v174 = vsel %vm169, %v85, 0
  %vm176 = vcmask 1043456
  %v178 = vsel %vm176, %v155, 0
  %180 = vmatprep.subr.bf16.mxu0 0
  %181 = vmatpush1.bf16.msra.mxu0 %v149
  %182 = vmatprep.subr.bf16.mxu0 0
  %183 = vmatpush1.bf16.msra.mxu0 %v148
  %184 = vmatprep.subr.bf16.mxu0 0
  %185 = vmatpush1.bf16.msra.mxu0 %v147
  %186 = vmatprep.subr.bf16.mxu0 0
  %187 = vmatpush1.bf16.msra.mxu0 %v146
  %188 = vmatprep.subr.bf16.mxu0 0
  %189 = vmatpush1.bf16.msra.mxu0 %v145
  %190 = vmatprep.subr.bf16.mxu0 0
  %191 = vmatpush1.bf16.msra.mxu0 %v144
  %192 = vmatprep.subr.bf16.mxu0 0
  %193 = vmatpush1.bf16.msra.mxu0 %v143
  %194 = vmatprep.subr.bf16.mxu0 0
  %195 = vmatpush1.bf16.msra.mxu0 %v142
  %196 = vmatprep.subr.bf16.mxu0 0
  %197 = vmatpush2.bf16.msra.mxu0 0
  %198 = vmatprep.subr.bf16.mxu0 0
  %199 = vmatpush2.bf16.msra.mxu0 0
  %200 = vmatprep.subr.bf16.mxu0 0
  %201 = vmatpush2.bf16.msra.mxu0 %v178
  %202 = vmatprep.subr.bf16.mxu0 0
  %203 = vmatpush2.bf16.msra.mxu0 %v154
  %204 = vmatprep.subr.bf16.mxu0 0
  %205 = vmatpush2.bf16.msra.mxu0 %v153
  %206 = vmatprep.subr.bf16.mxu0 0
  %207 = vmatpush2.bf16.msra.mxu0 %v152
  %208 = vmatprep.subr.bf16.mxu0 0
  %209 = vmatpush2.bf16.msra.mxu0 %v151
  %210 = vmatprep.subr.bf16.mxu0 0
  %211 = vmatpush2.bf16.msra.mxu0 %v150
  %212 = vmatprep.mubr.bf16.mxu0 %v171
  %213 = vmatmul.mubr.bf16.gmra.mxu0 %v82
  %v214 = vpop.f32.mrf.mxu0
  %v215 = vadd.f32 %v53, %v214
  %v216 = vpop.f32.mrf.mxu0
  %v217 = vpop.f32.mrf.mxu0
  %v218 = vadd.f32 %v58, %v217
  %v219 = vpop.f32.mrf.mxu0
  %220 = vmatprep.mubr.bf16.mxu0 %v174
  %221 = vmatmul.mubr.bf16.gmra.mxu0 %v84
  %v222 = vpop.f32.mrf.mxu0
  %v223 = vadd.f32 %v63, %v222
  %v224 = vpop.f32.mrf.mxu0
  %v225 = vpop.f32.mrf.mxu0
  %v226 = vadd.f32 %v68, %v225
  %v227 = vpop.f32.mrf.mxu0
  %228 = vdwg.mxu0
  %v229 = vmax.f32 %v215, 0.0
  %v230 = vmax.f32 %v218, 0.0
  %v231 = vmax.f32 %v223, 0.0
  %v232 = vmax.f32 %v226, 0.0
  %v233 = vpack.c.bf16 %v230, %v229
  %v234 = vpack.c.bf16 %v232, %v231
  %v237 = vunpack.c.l.b16 %v233
  %v238 = vunpack.c.h.b16 %v233
  %v239 = vunpack.c.l.b16 %v234
  %v240 = vunpack.c.h.b16 %v234
  %v241 = vpack.c.b16 %v237, %v237
  %v242 = vpack.c.b16 %v238, %v238
  %v243 = vpack.c.b16 %v239, %v239
  %v244 = vpack.c.b16 %v240, %v240
  %249 = vst [vmem:[%s3] sm:$0xf] %v241
  %250 = vst [vmem:[%s3 + $0x4] sm:$0xf] %v242
  %251 = vst [vmem:[%s3 + $0x8] sm:$0xf] %v243
  %252 = vst [vmem:[%s3 + $0xc] sm:$0xf] %v244
  // Predicated region
  $region14: #{_lambda_.12} parent=0 // pred_check
    _
  $region15: #{_lambda_.12} parent=0 // pred_check_branch
    %254 = sbr.rel (0) target = $region17
  $region16: #{_lambda_.12} parent=0 // pred_region
    _
  $region17: #{_lambda_.12} parent=0 // pred_fallthru
    _
  // Predicated region
  $region18: #{_lambda_.12} parent=0 // pred_check
    _
  $region19: #{_lambda_.12} parent=0 // pred_check_branch
    %256 = sbr.rel (0) target = $region21
  $region20: #{_lambda_.12} parent=0 // pred_region
    _
  $region21: #{_lambda_.12} parent=0 // pred_fallthru
    _

// kernel: _lambda_.13
$region0: #{_lambda_.13}
  #allocation0 [shape = 'u32[]', space=smem, size = 0x4, offset = 0x4, fixed_abs, tag = 'smem constant byte address 0x4 - core index']
  #allocation1 [shape = 'u32[144,128]{1,0:T(1,128)}', space=vmem, size = 0x12000, scoped, tag = 'internal scratch']
  %s0 = inlined_call_operand.vmem [shape: bf16[48,288], index: 0, kind: input, shape index: {}]
  %s1 = inlined_call_operand.vmem [shape: bf16[288,32], index: 1, kind: input, shape index: {}]
  %s2 = inlined_call_operand.vmem [shape: f32[48,1], index: 2, kind: input, shape index: {}]
  %s3 = inlined_call_operand.vmem [shape: bf16[48,32], index: 3, kind: output, shape index: {}]
  %s4 = sld [smem:[#allocation0]]
  $region22: #{_lambda_.13} parent=0
    _
  %s6 = ssub.s32 1, %s4
  %s7 = scalar_select 0, %s6, %s4
  // Predicated region
  $region2: #{_lambda_.13} parent=0 // pred_check
    _
  $region3: #{_lambda_.13} parent=0 // pred_check_branch
    %9 = sbr.rel (0) target = $region5
  $region4: #{_lambda_.13} parent=0 // pred_region
    _
  $region5: #{_lambda_.13} parent=0 // pred_fallthru
    _
  // Predicated region
  $region6: #{_lambda_.13} parent=0 // pred_check
    _
  $region7: #{_lambda_.13} parent=0 // pred_check_branch
    %11 = sbr.rel (0) target = $region9
  $region8: #{_lambda_.13} parent=0 // pred_region
    _
  $region9: #{_lambda_.13} parent=0 // pred_fallthru
    _
  // Predicated region
  $region10: #{_lambda_.13} parent=0 // pred_check
    _
  $region11: #{_lambda_.13} parent=0 // pred_check_branch
    %13 = sbr.rel (0) target = $region13
  $region12: #{_lambda_.13} parent=0 // pred_region
    _
  $region13: #{_lambda_.13} parent=0 // pred_fallthru
    _
  %v15 = vld [vmem:[%s0] sm:$0xff]
  %v16 = vld [vmem:[%s0 + $0x8] sm:$0xf]
  %v17 = vld [vmem:[%s0 + $0xc] sm:$0xff]
  %v18 = vld [vmem:[%s0 + $0x14] sm:$0xf]
  %v19 = vld [vmem:[%s0 + $0x18] sm:$0xff]
  %v20 = vld [vmem:[%s0 + $0x20] sm:$0xf]
  %v21 = vld [vmem:[%s0 + $0x24] sm:$0xff]
  %v22 = vld [vmem:[%s0 + $0x2c] sm:$0xf]
  %v23 = vld [vmem:[%s0 + $0x30] sm:$0xff]
  %v24 = vld [vmem:[%s0 + $0x38] sm:$0xf]
  %v25 = vld [vmem:[%s0 + $0x3c] sm:$0xff]
  %v26 = vld [vmem:[%s0 + $0x44] sm:$0xf]
  %v27 = vld [vmem:[%s1] sm:$0xf]
  %v28 = vld [vmem:[%s1 + $0x4] sm:$0xf]
  %v29 = vld [vmem:[%s1 + $0x8] sm:$0xf]
  %v30 = vld [vmem:[%s1 + $0xc] sm:$0xf]
  %v31 = vld [vmem:[%s1 + $0x10] sm:$0xf]
  %v32 = vld [vmem:[%s1 + $0x14] sm:$0xf]
  %v33 = vld [vmem:[%s1 + $0x18] sm:$0xf]
  %v34 = vld [vmem:[%s1 + $0x1c] sm:$0xf]
  %v35 = vld [vmem:[%s1 + $0x20] sm:$0xf]
  %v36 = vld [vmem:[%s1 + $0x24] sm:$0xf]
  %v37 = vld [vmem:[%s1 + $0x28] sm:$0xf]
  %v38 = vld [vmem:[%s1 + $0x2c] sm:$0xf]
  %v39 = vld [vmem:[%s1 + $0x30] sm:$0xf]
  %v40 = vld [vmem:[%s1 + $0x34] sm:$0xf]
  %v41 = vld [vmem:[%s1 + $0x38] sm:$0xf]
  %v42 = vld [vmem:[%s1 + $0x3c] sm:$0xf]
  %v43 = vld [vmem:[%s1 + $0x40] sm:$0xf]
  %v44 = vld [vmem:[%s1 + $0x44] sm:$0xf]
  %v45 = vld [vmem:[%s1 + $0x48] sm:$0xf]
  %v46 = vld [vmem:[%s1 + $0x4c] sm:$0xf]
  %v47 = vld [vmem:[%s1 + $0x50] sm:$0xf]
  %v48 = vld [vmem:[%s1 + $0x54] sm:$0xf]
  %v49 = vld [vmem:[%s1 + $0x58] sm:$0xf]
  %v50 = vld [vmem:[%s1 + $0x5c] sm:$0xf]
  %v51 = vld [vmem:[%s1 + $0x60] sm:$0xf]
  %v52 = vld [vmem:[%s1 + $0x64] sm:$0xf]
  %v53 = vld [vmem:[%s1 + $0x68] sm:$0xf]
  %v54 = vld [vmem:[%s1 + $0x6c] sm:$0xf]
  %v55 = vld [vmem:[%s1 + $0x70] sm:$0xf]
  %v56 = vld [vmem:[%s1 + $0x74] sm:$0xf]
  %v57 = vld [vmem:[%s1 + $0x78] sm:$0xf]
  %v58 = vld [vmem:[%s1 + $0x7c] sm:$0xf]
  %v59 = vld [vmem:[%s1 + $0x80] sm:$0xf]
  %v60 = vld [vmem:[%s1 + $0x84] sm:$0xf]
  %v61 = vld [vmem:[%s1 + $0x88] sm:$0xf]
  %v62 = vld [vmem:[%s1 + $0x8c] sm:$0xf]
  %v63 = vld [vmem:[%s2] sm:$0xff]
  %v64 = vld [vmem:[%s2 + $0x8] sm:$0xff]
  %v65 = vld [vmem:[%s2 + $0x10] sm:$0xff]
  %v66 = vld [vmem:[%s2 + $0x18] sm:$0xff]
  %v67 = vld [vmem:[%s2 + $0x20] sm:$0xff]
  %v68 = vld [vmem:[%s2 + $0x28] sm:$0xff]
  %70 = vset.pattern.permute.xlu0 0
  %71 = vperm.xlu0 %70, %v63
  %v72 = vpop.permute.xlu0 %71
  %75 = vset.pattern.permute.xlu0 0
  %76 = vperm.xlu0 %75, %v64
  %v77 = vpop.permute.xlu0 %76
  %80 = vset.pattern.permute.xlu0 0
  %81 = vperm.xlu0 %80, %v65
  %v82 = vpop.permute.xlu0 %81
  %85 = vset.pattern.permute.xlu0 0
  %86 = vperm.xlu0 %85, %v66
  %v87 = vpop.permute.xlu0 %86
  %90 = vset.pattern.permute.xlu0 0
  %91 = vperm.xlu0 %90, %v67
  %v92 = vpop.permute.xlu0 %91
  %95 = vset.pattern.permute.xlu0 0
  %96 = vperm.xlu0 %95, %v68
  %v97 = vpop.permute.xlu0 %96
  %v111 = vunpack.c.l.b16 %v15
  %v112 = vunpack.c.h.b16 %v15
  %v113 = vunpack.c.l.b16 %v16
  %v114 = vunpack.c.l.b16 %v17
  %v115 = vunpack.c.h.b16 %v17
  %v116 = vunpack.c.l.b16 %v18
  %v117 = vunpack.c.l.b16 %v19
  %v118 = vunpack.c.h.b16 %v19
  %v119 = vunpack.c.l.b16 %v20
  %v120 = vunpack.c.l.b16 %v21
  %v121 = vunpack.c.h.b16 %v21
  %v122 = vunpack.c.l.b16 %v22
  %v123 = vunpack.c.l.b16 %v23
  %v124 = vunpack.c.h.b16 %v23
  %v125 = vunpack.c.l.b16 %v24
  %v126 = vunpack.c.l.b16 %v25
  %v127 = vunpack.c.h.b16 %v25
  %v128 = vunpack.c.l.b16 %v26
  %v129 = vpack.c.b16 %v114, %v111
  %v130 = vpack.c.b16 %v115, %v112
  %v131 = vpack.c.b16 %v116, %v113
  %v132 = vpack.c.b16 %v120, %v117
  %v133 = vpack.c.b16 %v121, %v118
  %v134 = vpack.c.b16 %v122, %v119
  %v135 = vpack.c.b16 %v126, %v123
  %v136 = vpack.c.b16 %v127, %v124
  %v137 = vpack.c.b16 %v128, %v125
  %v180 = vunpack.c.l.b16 %v27
  %v181 = vunpack.c.l.b16 %v28
  %v182 = vunpack.c.l.b16 %v29
  %v183 = vunpack.c.l.b16 %v30
  %v184 = vunpack.c.l.b16 %v31
  %v185 = vunpack.c.l.b16 %v32
  %v186 = vunpack.c.l.b16 %v33
  %v187 = vunpack.c.l.b16 %v34
  %v188 = vunpack.c.l.b16 %v35
  %v189 = vunpack.c.l.b16 %v36
  %v190 = vunpack.c.l.b16 %v37
  %v191 = vunpack.c.l.b16 %v38
  %v192 = vunpack.c.l.b16 %v39
  %v193 = vunpack.c.l.b16 %v40
  %v194 = vunpack.c.l.b16 %v41
  %v195 = vunpack.c.l.b16 %v42
  %v196 = vunpack.c.l.b16 %v43
  %v197 = vunpack.c.l.b16 %v44
  %v198 = vunpack.c.l.b16 %v45
  %v199 = vunpack.c.l.b16 %v46
  %v200 = vunpack.c.l.b16 %v47
  %v201 = vunpack.c.l.b16 %v48
  %v202 = vunpack.c.l.b16 %v49
  %v203 = vunpack.c.l.b16 %v50
  %v204 = vunpack.c.l.b16 %v51
  %v205 = vunpack.c.l.b16 %v52
  %v206 = vunpack.c.l.b16 %v53
  %v207 = vunpack.c.l.b16 %v54
  %v208 = vunpack.c.l.b16 %v55
  %v209 = vunpack.c.l.b16 %v56
  %v210 = vunpack.c.l.b16 %v57
  %v211 = vunpack.c.l.b16 %v58
  %v212 = vunpack.c.l.b16 %v59
  %v213 = vunpack.c.l.b16 %v60
  %v214 = vunpack.c.l.b16 %v61
  %v215 = vunpack.c.l.b16 %v62
  %v216 = vpack.c.b16 %v181, %v180
  %v217 = vpack.c.b16 %v183, %v182
  %v218 = vpack.c.b16 %v185, %v184
  %v219 = vpack.c.b16 %v187, %v186
  %v220 = vpack.c.b16 %v189, %v188
  %v221 = vpack.c.b16 %v191, %v190
  %v222 = vpack.c.b16 %v193, %v192
  %v223 = vpack.c.b16 %v195, %v194
  %v224 = vpack.c.b16 %v197, %v196
  %v225 = vpack.c.b16 %v199, %v198
  %v226 = vpack.c.b16 %v201, %v200
  %v227 = vpack.c.b16 %v203, %v202
  %v228 = vpack.c.b16 %v205, %v204
  %v229 = vpack.c.b16 %v207, %v206
  %v230 = vpack.c.b16 %v209, %v208
  %v231 = vpack.c.b16 %v211, %v210
  %v232 = vpack.c.b16 %v213, %v212
  %v233 = vpack.c.b16 %v215, %v214
  %vm252 = vcmask 261120
  %v254 = vsel %vm252, %v131, 0
  %v257 = vsel %vm252, %v134, 0
  %v260 = vsel %vm252, %v137, 0
  %262 = vmatprep.subr.bf16.mxu0 0
  %263 = vmatpush1.bf16.msra.mxu0 %v223
  %264 = vmatprep.subr.bf16.mxu0 0
  %265 = vmatpush1.bf16.msra.mxu0 %v222
  %266 = vmatprep.subr.bf16.mxu0 0
  %267 = vmatpush1.bf16.msra.mxu0 %v221
  %268 = vmatprep.subr.bf16.mxu0 0
  %269 = vmatpush1.bf16.msra.mxu0 %v220
  %270 = vmatprep.subr.bf16.mxu0 0
  %271 = vmatpush1.bf16.msra.mxu0 %v219
  %272 = vmatprep.subr.bf16.mxu0 0
  %273 = vmatpush1.bf16.msra.mxu0 %v218
  %274 = vmatprep.subr.bf16.mxu0 0
  %275 = vmatpush1.bf16.msra.mxu0 %v217
  %276 = vmatprep.subr.bf16.mxu0 0
  %277 = vmatpush1.bf16.msra.mxu0 %v216
  %278 = vmatprep.subr.bf16.mxu0 0
  %279 = vmatpush2.bf16.msra.mxu0 %v231
  %280 = vmatprep.subr.bf16.mxu0 0
  %281 = vmatpush2.bf16.msra.mxu0 %v230
  %282 = vmatprep.subr.bf16.mxu0 0
  %283 = vmatpush2.bf16.msra.mxu0 %v229
  %284 = vmatprep.subr.bf16.mxu0 0
  %285 = vmatpush2.bf16.msra.mxu0 %v228
  %286 = vmatprep.subr.bf16.mxu0 0
  %287 = vmatpush2.bf16.msra.mxu0 %v227
  %288 = vmatprep.subr.bf16.mxu0 0
  %289 = vmatpush2.bf16.msra.mxu0 %v226
  %290 = vmatprep.subr.bf16.mxu0 0
  %291 = vmatpush2.bf16.msra.mxu0 %v225
  %292 = vmatprep.subr.bf16.mxu0 0
  %293 = vmatpush2.bf16.msra.mxu0 %v224
  %294 = vmatprep.mubr.bf16.mxu0 %v130
  %295 = vmatmul.mubr.bf16.gmra.mxu0 %v129
  %v296 = vpop.f32.mrf.mxu0
  %v297 = vadd.f32 %v72, %v296
  %v298 = vpop.f32.mrf.mxu0
  %v299 = vpop.f32.mrf.mxu0
  %v300 = vadd.f32 %v77, %v299
  %v301 = vpop.f32.mrf.mxu0
  %302 = vmatprep.mubr.bf16.mxu0 %v133
  %303 = vmatmul.mubr.bf16.gmra.mxu0 %v132
  %v304 = vpop.f32.mrf.mxu0
  %v305 = vadd.f32 %v82, %v304
  %v306 = vpop.f32.mrf.mxu0
  %v307 = vpop.f32.mrf.mxu0
  %v308 = vadd.f32 %v87, %v307
  %v309 = vpop.f32.mrf.mxu0
  %310 = vmatprep.mubr.bf16.mxu0 %v136
  %311 = vmatmul.mubr.bf16.gmra.mxu0 %v135
  %v312 = vpop.f32.mrf.mxu0
  %v313 = vadd.f32 %v92, %v312
  %v314 = vpop.f32.mrf.mxu0
  %v315 = vpop.f32.mrf.mxu0
  %v316 = vadd.f32 %v97, %v315
  %v317 = vpop.f32.mrf.mxu0
  %318 = vdwg.mxu0
  %319 = vmatprep.subr.bf16.mxu0 0
  %320 = vmatpush1.bf16.msra.mxu0 0
  %321 = vmatprep.subr.bf16.mxu0 0
  %322 = vmatpush1.bf16.msra.mxu0 0
  %323 = vmatprep.subr.bf16.mxu0 0
  %324 = vmatpush1.bf16.msra.mxu0 0
  %325 = vmatprep.subr.bf16.mxu0 0
  %326 = vmatpush1.bf16.msra.mxu0 0
  %327 = vmatprep.subr.bf16.mxu0 0
  %328 = vmatpush1.bf16.msra.mxu0 0
  %329 = vmatprep.subr.bf16.mxu0 0
  %330 = vmatpush1.bf16.msra.mxu0 0
  %331 = vmatprep.subr.bf16.mxu0 0
  %332 = vmatpush1.bf16.msra.mxu0 %v233
  %333 = vmatprep.subr.bf16.mxu0 0
  %334 = vmatpush1.bf16.msra.mxu0 %v232
  %335 = vmatprep.subr.bf16.mxu0 0
  %336 = vmatpush2.bf16.msra.mxu0 0
  %337 = vmatprep.subr.bf16.mxu0 0
  %338 = vmatpush2.bf16.msra.mxu0 0
  %339 = vmatprep.subr.bf16.mxu0 0
  %340 = vmatpush2.bf16.msra.mxu0 0
  %341 = vmatprep.subr.bf16.mxu0 0
  %342 = vmatpush2.bf16.msra.mxu0 0
  %343 = vmatprep.subr.bf16.mxu0 0
  %344 = vmatpush2.bf16.msra.mxu0 0
  %345 = vmatprep.subr.bf16.mxu0 0
  %346 = vmatpush2.bf16.msra.mxu0 0
  %347 = vmatprep.subr.bf16.mxu0 0
  %348 = vmatpush2.bf16.msra.mxu0 0
  %349 = vmatprep.subr.bf16.mxu0 0
  %350 = vmatpush2.bf16.msra.mxu0 0
  %351 = vmatprep.mubr.bf16.mxu0 0
  %352 = vmatmul.mubr.bf16.gmra.mxu0 %v254
  %v353 = vpop.f32.mrf.mxu0
  %v354 = vadd.f32 %v297, %v353
  %v355 = vpop.f32.mrf.mxu0
  %v356 = vpop.f32.mrf.mxu0
  %v357 = vadd.f32 %v300, %v356
  %v358 = vpop.f32.mrf.mxu0
  %359 = vmatprep.mubr.bf16.mxu0 0
  %360 = vmatmul.mubr.bf16.gmra.mxu0 %v257
  %v361 = vpop.f32.mrf.mxu0
  %v362 = vadd.f32 %v305, %v361
  %v363 = vpop.f32.mrf.mxu0
  %v364 = vpop.f32.mrf.mxu0
  %v365 = vadd.f32 %v308, %v364
  %v366 = vpop.f32.mrf.mxu0
  %367 = vmatprep.mubr.bf16.mxu0 0
  %368 = vmatmul.mubr.bf16.gmra.mxu0 %v260
  %v369 = vpop.f32.mrf.mxu0
  %v370 = vadd.f32 %v313, %v369
  %v371 = vpop.f32.mrf.mxu0
  %v372 = vpop.f32.mrf.mxu0
  %v373 = vadd.f32 %v316, %v372
  %v374 = vpop.f32.mrf.mxu0
  %375 = vdwg.mxu0
  %v376 = vmax.f32 %v354, 0.0
  %v377 = vmax.f32 %v357, 0.0
  %v378 = vmax.f32 %v362, 0.0
  %v379 = vmax.f32 %v365, 0.0
  %v380 = vmax.f32 %v370, 0.0
  %v381 = vmax.f32 %v373, 0.0
  %v382 = vpack.c.bf16 %v377, %v376
  %v383 = vpack.c.bf16 %v379, %v378
  %v384 = vpack.c.bf16 %v381, %v380
  %v388 = vunpack.c.l.b16 %v382
  %v389 = vunpack.c.h.b16 %v382
  %v390 = vunpack.c.l.b16 %v383
  %v391 = vunpack.c.h.b16 %v383
  %v392 = vunpack.c.l.b16 %v384
  %v393 = vunpack.c.h.b16 %v384
  %v394 = vpack.c.b16 %v388, %v388
  %v395 = vpack.c.b16 %v389, %v389
  %v396 = vpack.c.b16 %v390, %v390
  %v397 = vpack.c.b16 %v391, %v391
  %v398 = vpack.c.b16 %v392, %v392
  %v399 = vpack.c.b16 %v393, %v393
  %vm406 = vcmask 257024
  %407 = vst.msk [vmem:[%s3] sm:$0xf] %vm406, %v394
  %408 = vst.msk [vmem:[%s3 + $0x4] sm:$0xf] %vm406, %v395
  %409 = vst.msk [vmem:[%s3 + $0x8] sm:$0xf] %vm406, %v396
  %410 = vst.msk [vmem:[%s3 + $0xc] sm:$0xf] %vm406, %v397
  %411 = vst.msk [vmem:[%s3 + $0x10] sm:$0xf] %vm406, %v398
  %412 = vst.msk [vmem:[%s3 + $0x14] sm:$0xf] %vm406, %v399
  // Predicated region
  $region14: #{_lambda_.13} parent=0 // pred_check
    _
  $region15: #{_lambda_.13} parent=0 // pred_check_branch
    %414 = sbr.rel (0) target = $region17
  $region16: #{_lambda_.13} parent=0 // pred_region
    _
  $region17: #{_lambda_.13} parent=0 // pred_fallthru
    _
  // Predicated region
  $region18: #{_lambda_.13} parent=0 // pred_check
    _
  $region19: #{_lambda_.13} parent=0 // pred_check_branch
    %416 = sbr.rel (0) target = $region21
  $region20: #{_lambda_.13} parent=0 // pred_region
    _
  $region21: #{_lambda_.13} parent=0 // pred_fallthru
    _

// kernel: _lambda_.14
$region0: #{_lambda_.14}
  #allocation0 [shape = 'u32[]', space=smem, size = 0x4, offset = 0x4, fixed_abs, tag = 'smem constant byte address 0x4 - core index']
  #allocation1 [shape = 'u32[144,128]{1,0:T(1,128)}', space=vmem, size = 0x12000, scoped, tag = 'internal scratch']
  %s0 = inlined_call_operand.vmem [shape: bf16[64,432], index: 0, kind: input, shape index: {}]
  %s1 = inlined_call_operand.vmem [shape: bf16[432,32], index: 1, kind: input, shape index: {}]
  %s2 = inlined_call_operand.vmem [shape: f32[64,1], index: 2, kind: input, shape index: {}]
  %s3 = inlined_call_operand.vmem [shape: bf16[64,32], index: 3, kind: output, shape index: {}]
  %s4 = sld [smem:[#allocation0]]
  $region22: #{_lambda_.14} parent=0
    _
  %s6 = ssub.s32 1, %s4
  %s7 = scalar_select 0, %s6, %s4
  // Predicated region
  $region2: #{_lambda_.14} parent=0 // pred_check
    _
  $region3: #{_lambda_.14} parent=0 // pred_check_branch
    %9 = sbr.rel (0) target = $region5
  $region4: #{_lambda_.14} parent=0 // pred_region
    _
  $region5: #{_lambda_.14} parent=0 // pred_fallthru
    _
  // Predicated region
  $region6: #{_lambda_.14} parent=0 // pred_check
    _
  $region7: #{_lambda_.14} parent=0 // pred_check_branch
    %11 = sbr.rel (0) target = $region9
  $region8: #{_lambda_.14} parent=0 // pred_region
    _
  $region9: #{_lambda_.14} parent=0 // pred_fallthru
    _
  // Predicated region
  $region10: #{_lambda_.14} parent=0 // pred_check
    _
  $region11: #{_lambda_.14} parent=0 // pred_check_branch
    %13 = sbr.rel (0) target = $region13
  $region12: #{_lambda_.14} parent=0 // pred_region
    _
  $region13: #{_lambda_.14} parent=0 // pred_fallthru
    _
  %v15 = vld [vmem:[%s0] sm:$0xff]
  %v16 = vld [vmem:[%s0 + $0x8] sm:$0xff]
  %v17 = vld [vmem:[%s0 + $0x10] sm:$0xff]
  %v18 = vld [vmem:[%s0 + $0x18] sm:$0xff]
  %v19 = vld [vmem:[%s0 + $0x20] sm:$0xff]
  %v20 = vld [vmem:[%s0 + $0x28] sm:$0xff]
  %v21 = vld [vmem:[%s0 + $0x30] sm:$0xff]
  %v22 = vld [vmem:[%s0 + $0x38] sm:$0xff]
  %v23 = vld [vmem:[%s0 + $0x40] sm:$0xff]
  %v24 = vld [vmem:[%s0 + $0x48] sm:$0xff]
  %v25 = vld [vmem:[%s0 + $0x50] sm:$0xff]
  %v26 = vld [vmem:[%s0 + $0x58] sm:$0xff]
  %v27 = vld [vmem:[%s0 + $0x60] sm:$0xff]
  %v28 = vld [vmem:[%s0 + $0x68] sm:$0xff]
  %v29 = vld [vmem:[%s0 + $0x70] sm:$0xff]
  %v30 = vld [vmem:[%s0 + $0x78] sm:$0xff]
  %v31 = vld [vmem:[%s1] sm:$0xf]
  %v32 = vld [vmem:[%s1 + $0x4] sm:$0xf]
  %v33 = vld [vmem:[%s1 + $0x8] sm:$0xf]
  %v34 = vld [vmem:[%s1 + $0xc] sm:$0xf]
  %v35 = vld [vmem:[%s1 + $0x10] sm:$0xf]
  %v36 = vld [vmem:[%s1 + $0x14] sm:$0xf]
  %v37 = vld [vmem:[%s1 + $0x18] sm:$0xf]
  %v38 = vld [vmem:[%s1 + $0x1c] sm:$0xf]
  %v39 = vld [vmem:[%s1 + $0x20] sm:$0xf]
  %v40 = vld [vmem:[%s1 + $0x24] sm:$0xf]
  %v41 = vld [vmem:[%s1 + $0x28] sm:$0xf]
  %v42 = vld [vmem:[%s1 + $0x2c] sm:$0xf]
  %v43 = vld [vmem:[%s1 + $0x30] sm:$0xf]
  %v44 = vld [vmem:[%s1 + $0x34] sm:$0xf]
  %v45 = vld [vmem:[%s1 + $0x38] sm:$0xf]
  %v46 = vld [vmem:[%s1 + $0x3c] sm:$0xf]
  %v47 = vld [vmem:[%s1 + $0x40] sm:$0xf]
  %v48 = vld [vmem:[%s1 + $0x44] sm:$0xf]
  %v49 = vld [vmem:[%s1 + $0x48] sm:$0xf]
  %v50 = vld [vmem:[%s1 + $0x4c] sm:$0xf]
  %v51 = vld [vmem:[%s1 + $0x50] sm:$0xf]
  %v52 = vld [vmem:[%s1 + $0x54] sm:$0xf]
  %v53 = vld [vmem:[%s1 + $0x58] sm:$0xf]
  %v54 = vld [vmem:[%s1 + $0x5c] sm:$0xf]
  %v55 = vld [vmem:[%s1 + $0x60] sm:$0xf]
  %v56 = vld [vmem:[%s1 + $0x64] sm:$0xf]
  %v57 = vld [vmem:[%s1 + $0x68] sm:$0xf]
  %v58 = vld [vmem:[%s1 + $0x6c] sm:$0xf]
  %v59 = vld [vmem:[%s1 + $0x70] sm:$0xf]
  %v60 = vld [vmem:[%s1 + $0x74] sm:$0xf]
  %v61 = vld [vmem:[%s1 + $0x78] sm:$0xf]
  %v62 = vld [vmem:[%s1 + $0x7c] sm:$0xf]
  %v63 = vld [vmem:[%s1 + $0x80] sm:$0xf]
  %v64 = vld [vmem:[%s1 + $0x84] sm:$0xf]
  %v65 = vld [vmem:[%s1 + $0x88] sm:$0xf]
  %v66 = vld [vmem:[%s1 + $0x8c] sm:$0xf]
  %v67 = vld [vmem:[%s1 + $0x90] sm:$0xf]
  %v68 = vld [vmem:[%s1 + $0x94] sm:$0xf]
  %v69 = vld [vmem:[%s1 + $0x98] sm:$0xf]
  %v70 = vld [vmem:[%s1 + $0x9c] sm:$0xf]
  %v71 = vld [vmem:[%s1 + $0xa0] sm:$0xf]
  %v72 = vld [vmem:[%s1 + $0xa4] sm:$0xf]
  %v73 = vld [vmem:[%s1 + $0xa8] sm:$0xf]
  %v74 = vld [vmem:[%s1 + $0xac] sm:$0xf]
  %v75 = vld [vmem:[%s1 + $0xb0] sm:$0xf]
  %v76 = vld [vmem:[%s1 + $0xb4] sm:$0xf]
  %v77 = vld [vmem:[%s1 + $0xb8] sm:$0xf]
  %v78 = vld [vmem:[%s1 + $0xbc] sm:$0xf]
  %v79 = vld [vmem:[%s1 + $0xc0] sm:$0xf]
  %v80 = vld [vmem:[%s1 + $0xc4] sm:$0xf]
  %v81 = vld [vmem:[%s1 + $0xc8] sm:$0xf]
  %v82 = vld [vmem:[%s1 + $0xcc] sm:$0xf]
  %v83 = vld [vmem:[%s1 + $0xd0] sm:$0xf]
  %v84 = vld [vmem:[%s1 + $0xd4] sm:$0xf]
  %v85 = vld [vmem:[%s2] sm:$0xff]
  %v86 = vld [vmem:[%s2 + $0x8] sm:$0xff]
  %v87 = vld [vmem:[%s2 + $0x10] sm:$0xff]
  %v88 = vld [vmem:[%s2 + $0x18] sm:$0xff]
  %v89 = vld [vmem:[%s2 + $0x20] sm:$0xff]
  %v90 = vld [vmem:[%s2 + $0x28] sm:$0xff]
  %v91 = vld [vmem:[%s2 + $0x30] sm:$0xff]
  %v92 = vld [vmem:[%s2 + $0x38] sm:$0xff]
  %94 = vset.pattern.permute.xlu0 0
  %95 = vperm.xlu0 %94, %v85
  %v96 = vpop.permute.xlu0 %95
  %99 = vset.pattern.permute.xlu0 0
  %100 = vperm.xlu0 %99, %v86
  %v101 = vpop.permute.xlu0 %100
  %104 = vset.pattern.permute.xlu0 0
  %105 = vperm.xlu0 %104, %v87
  %v106 = vpop.permute.xlu0 %105
  %109 = vset.pattern.permute.xlu0 0
  %110 = vperm.xlu0 %109, %v88
  %v111 = vpop.permute.xlu0 %110
  %114 = vset.pattern.permute.xlu0 0
  %115 = vperm.xlu0 %114, %v89
  %v116 = vpop.permute.xlu0 %115
  %119 = vset.pattern.permute.xlu0 0
  %120 = vperm.xlu0 %119, %v90
  %v121 = vpop.permute.xlu0 %120
  %124 = vset.pattern.permute.xlu0 0
  %125 = vperm.xlu0 %124, %v91
  %v126 = vpop.permute.xlu0 %125
  %129 = vset.pattern.permute.xlu0 0
  %130 = vperm.xlu0 %129, %v92
  %v131 = vpop.permute.xlu0 %130
  %v149 = vunpack.c.l.b16 %v15
  %v150 = vunpack.c.h.b16 %v15
  %v151 = vunpack.c.l.b16 %v16
  %v152 = vunpack.c.h.b16 %v16
  %v153 = vunpack.c.l.b16 %v17
  %v154 = vunpack.c.h.b16 %v17
  %v155 = vunpack.c.l.b16 %v18
  %v156 = vunpack.c.h.b16 %v18
  %v157 = vunpack.c.l.b16 %v19
  %v158 = vunpack.c.h.b16 %v19
  %v159 = vunpack.c.l.b16 %v20
  %v160 = vunpack.c.h.b16 %v20
  %v161 = vunpack.c.l.b16 %v21
  %v162 = vunpack.c.h.b16 %v21
  %v163 = vunpack.c.l.b16 %v22
  %v164 = vunpack.c.h.b16 %v22
  %v165 = vunpack.c.l.b16 %v23
  %v166 = vunpack.c.h.b16 %v23
  %v167 = vunpack.c.l.b16 %v24
  %v168 = vunpack.c.h.b16 %v24
  %v169 = vunpack.c.l.b16 %v25
  %v170 = vunpack.c.h.b16 %v25
  %v171 = vunpack.c.l.b16 %v26
  %v172 = vunpack.c.h.b16 %v26
  %v173 = vunpack.c.l.b16 %v27
  %v174 = vunpack.c.h.b16 %v27
  %v175 = vunpack.c.l.b16 %v28
  %v176 = vunpack.c.h.b16 %v28
  %v177 = vunpack.c.l.b16 %v29
  %v178 = vunpack.c.h.b16 %v29
  %v179 = vunpack.c.l.b16 %v30
  %v180 = vunpack.c.h.b16 %v30
  %v181 = vpack.c.b16 %v153, %v149
  %v182 = vpack.c.b16 %v154, %v150
  %v183 = vpack.c.b16 %v155, %v151
  %v184 = vpack.c.b16 %v156, %v152
  %v185 = vpack.c.b16 %v161, %v157
  %v186 = vpack.c.b16 %v162, %v158
  %v187 = vpack.c.b16 %v163, %v159
  %v188 = vpack.c.b16 %v164, %v160
  %v189 = vpack.c.b16 %v169, %v165
  %v190 = vpack.c.b16 %v170, %v166
  %v191 = vpack.c.b16 %v171, %v167
  %v192 = vpack.c.b16 %v172, %v168
  %v193 = vpack.c.b16 %v177, %v173
  %v194 = vpack.c.b16 %v178, %v174
  %v195 = vpack.c.b16 %v179, %v175
  %v196 = vpack.c.b16 %v180, %v176
  %v263 = vunpack.c.l.b16 %v31
  %v264 = vunpack.c.l.b16 %v32
  %v265 = vunpack.c.l.b16 %v33
  %v266 = vunpack.c.l.b16 %v34
  %v267 = vunpack.c.l.b16 %v35
  %v268 = vunpack.c.l.b16 %v36
  %v269 = vunpack.c.l.b16 %v37
  %v270 = vunpack.c.l.b16 %v38
  %v271 = vunpack.c.l.b16 %v39
  %v272 = vunpack.c.l.b16 %v40
  %v273 = vunpack.c.l.b16 %v41
  %v274 = vunpack.c.l.b16 %v42
  %v275 = vunpack.c.l.b16 %v43
  %v276 = vunpack.c.l.b16 %v44
  %v277 = vunpack.c.l.b16 %v45
  %v278 = vunpack.c.l.b16 %v46
  %v279 = vunpack.c.l.b16 %v47
  %v280 = vunpack.c.l.b16 %v48
  %v281 = vunpack.c.l.b16 %v49
  %v282 = vunpack.c.l.b16 %v50
  %v283 = vunpack.c.l.b16 %v51
  %v284 = vunpack.c.l.b16 %v52
  %v285 = vunpack.c.l.b16 %v53
  %v286 = vunpack.c.l.b16 %v54
  %v287 = vunpack.c.l.b16 %v55
  %v288 = vunpack.c.l.b16 %v56
  %v289 = vunpack.c.l.b16 %v57
  %v290 = vunpack.c.l.b16 %v58
  %v291 = vunpack.c.l.b16 %v59
  %v292 = vunpack.c.l.b16 %v60
  %v293 = vunpack.c.l.b16 %v61
  %v294 = vunpack.c.l.b16 %v62
  %v295 = vunpack.c.l.b16 %v63
  %v296 = vunpack.c.l.b16 %v64
  %v297 = vunpack.c.l.b16 %v65
  %v298 = vunpack.c.l.b16 %v66
  %v299 = vunpack.c.l.b16 %v67
  %v300 = vunpack.c.l.b16 %v68
  %v301 = vunpack.c.l.b16 %v69
  %v302 = vunpack.c.l.b16 %v70
  %v303 = vunpack.c.l.b16 %v71
  %v304 = vunpack.c.l.b16 %v72
  %v305 = vunpack.c.l.b16 %v73
  %v306 = vunpack.c.l.b16 %v74
  %v307 = vunpack.c.l.b16 %v75
  %v308 = vunpack.c.l.b16 %v76
  %v309 = vunpack.c.l.b16 %v77
  %v310 = vunpack.c.l.b16 %v78
  %v311 = vunpack.c.l.b16 %v79
  %v312 = vunpack.c.l.b16 %v80
  %v313 = vunpack.c.l.b16 %v81
  %v314 = vunpack.c.l.b16 %v82
  %v315 = vunpack.c.l.b16 %v83
  %v316 = vunpack.c.l.b16 %v84
  %v317 = vpack.c.b16 %v264, %v263
  %v318 = vpack.c.b16 %v266, %v265
  %v319 = vpack.c.b16 %v268, %v267
  %v320 = vpack.c.b16 %v270, %v269
  %v321 = vpack.c.b16 %v272, %v271
  %v322 = vpack.c.b16 %v274, %v273
  %v323 = vpack.c.b16 %v276, %v275
  %v324 = vpack.c.b16 %v278, %v277
  %v325 = vpack.c.b16 %v280, %v279
  %v326 = vpack.c.b16 %v282, %v281
  %v327 = vpack.c.b16 %v284, %v283
  %v328 = vpack.c.b16 %v286, %v285
  %v329 = vpack.c.b16 %v288, %v287
  %v330 = vpack.c.b16 %v290, %v289
  %v331 = vpack.c.b16 %v292, %v291
  %v332 = vpack.c.b16 %v294, %v293
  %v333 = vpack.c.b16 %v296, %v295
  %v334 = vpack.c.b16 %v298, %v297
  %v335 = vpack.c.b16 %v300, %v299
  %v336 = vpack.c.b16 %v302, %v301
  %v337 = vpack.c.b16 %v304, %v303
  %v338 = vpack.c.b16 %v306, %v305
  %v339 = vpack.c.b16 %v308, %v307
  %v340 = vpack.c.b16 %v310, %v309
  %v341 = vpack.c.b16 %v312, %v311
  %v342 = vpack.c.b16 %v314, %v313
  %v343 = vpack.c.b16 %v316, %v315
  %vm371 = vcmask 392192
  %v373 = vsel %vm371, %v184, 0
  %v376 = vsel %vm371, %v188, 0
  %v379 = vsel %vm371, %v192, 0
  %v382 = vsel %vm371, %v196, 0
  %384 = vmatprep.subr.bf16.mxu0 0
  %385 = vmatpush1.bf16.msra.mxu0 %v324
  %386 = vmatprep.subr.bf16.mxu0 0
  %387 = vmatpush1.bf16.msra.mxu0 %v323
  %388 = vmatprep.subr.bf16.mxu0 0
  %389 = vmatpush1.bf16.msra.mxu0 %v322
  %390 = vmatprep.subr.bf16.mxu0 0
  %391 = vmatpush1.bf16.msra.mxu0 %v321
  %392 = vmatprep.subr.bf16.mxu0 0
  %393 = vmatpush1.bf16.msra.mxu0 %v320
  %394 = vmatprep.subr.bf16.mxu0 0
  %395 = vmatpush1.bf16.msra.mxu0 %v319
  %396 = vmatprep.subr.bf16.mxu0 0
  %397 = vmatpush1.bf16.msra.mxu0 %v318
  %398 = vmatprep.subr.bf16.mxu0 0
  %399 = vmatpush1.bf16.msra.mxu0 %v317
  %400 = vmatprep.subr.bf16.mxu0 0
  %401 = vmatpush2.bf16.msra.mxu0 %v332
  %402 = vmatprep.subr.bf16.mxu0 0
  %403 = vmatpush2.bf16.msra.mxu0 %v331
  %404 = vmatprep.subr.bf16.mxu0 0
  %405 = vmatpush2.bf16.msra.mxu0 %v330
  %406 = vmatprep.subr.bf16.mxu0 0
  %407 = vmatpush2.bf16.msra.mxu0 %v329
  %408 = vmatprep.subr.bf16.mxu0 0
  %409 = vmatpush2.bf16.msra.mxu0 %v328
  %410 = vmatprep.subr.bf16.mxu0 0
  %411 = vmatpush2.bf16.msra.mxu0 %v327
  %412 = vmatprep.subr.bf16.mxu0 0
  %413 = vmatpush2.bf16.msra.mxu0 %v326
  %414 = vmatprep.subr.bf16.mxu0 0
  %415 = vmatpush2.bf16.msra.mxu0 %v325
  %416 = vmatprep.mubr.bf16.mxu0 %v182
  %417 = vmatmul.mubr.bf16.gmra.mxu0 %v181
  %v418 = vpop.f32.mrf.mxu0
  %v419 = vadd.f32 %v96, %v418
  %v420 = vpop.f32.mrf.mxu0
  %v421 = vpop.f32.mrf.mxu0
  %v422 = vadd.f32 %v101, %v421
  %v423 = vpop.f32.mrf.mxu0
  %424 = vmatprep.mubr.bf16.mxu0 %v186
  %425 = vmatmul.mubr.bf16.gmra.mxu0 %v185
  %v426 = vpop.f32.mrf.mxu0
  %v427 = vadd.f32 %v106, %v426
  %v428 = vpop.f32.mrf.mxu0
  %v429 = vpop.f32.mrf.mxu0
  %v430 = vadd.f32 %v111, %v429
  %v431 = vpop.f32.mrf.mxu0
  %432 = vmatprep.mubr.bf16.mxu0 %v190
  %433 = vmatmul.mubr.bf16.gmra.mxu0 %v189
  %v434 = vpop.f32.mrf.mxu0
  %v435 = vadd.f32 %v116, %v434
  %v436 = vpop.f32.mrf.mxu0
  %v437 = vpop.f32.mrf.mxu0
  %v438 = vadd.f32 %v121, %v437
  %v439 = vpop.f32.mrf.mxu0
  %440 = vmatprep.mubr.bf16.mxu0 %v194
  %441 = vmatmul.mubr.bf16.gmra.mxu0 %v193
  %v442 = vpop.f32.mrf.mxu0
  %v443 = vadd.f32 %v126, %v442
  %v444 = vpop.f32.mrf.mxu0
  %v445 = vpop.f32.mrf.mxu0
  %v446 = vadd.f32 %v131, %v445
  %v447 = vpop.f32.mrf.mxu0
  %448 = vdwg.mxu0
  %449 = vmatprep.subr.bf16.mxu0 0
  %450 = vmatpush1.bf16.msra.mxu0 %v340
  %451 = vmatprep.subr.bf16.mxu0 0
  %452 = vmatpush1.bf16.msra.mxu0 %v339
  %453 = vmatprep.subr.bf16.mxu0 0
  %454 = vmatpush1.bf16.msra.mxu0 %v338
  %455 = vmatprep.subr.bf16.mxu0 0
  %456 = vmatpush1.bf16.msra.mxu0 %v337
  %457 = vmatprep.subr.bf16.mxu0 0
  %458 = vmatpush1.bf16.msra.mxu0 %v336
  %459 = vmatprep.subr.bf16.mxu0 0
  %460 = vmatpush1.bf16.msra.mxu0 %v335
  %461 = vmatprep.subr.bf16.mxu0 0
  %462 = vmatpush1.bf16.msra.mxu0 %v334
  %463 = vmatprep.subr.bf16.mxu0 0
  %464 = vmatpush1.bf16.msra.mxu0 %v333
  %465 = vmatprep.subr.bf16.mxu0 0
  %466 = vmatpush2.bf16.msra.mxu0 0
  %467 = vmatprep.subr.bf16.mxu0 0
  %468 = vmatpush2.bf16.msra.mxu0 0
  %469 = vmatprep.subr.bf16.mxu0 0
  %470 = vmatpush2.bf16.msra.mxu0 0
  %471 = vmatprep.subr.bf16.mxu0 0
  %472 = vmatpush2.bf16.msra.mxu0 0
  %473 = vmatprep.subr.bf16.mxu0 0
  %474 = vmatpush2.bf16.msra.mxu0 0
  %475 = vmatprep.subr.bf16.mxu0 0
  %476 = vmatpush2.bf16.msra.mxu0 %v343
  %477 = vmatprep.subr.bf16.mxu0 0
  %478 = vmatpush2.bf16.msra.mxu0 %v342
  %479 = vmatprep.subr.bf16.mxu0 0
  %480 = vmatpush2.bf16.msra.mxu0 %v341
  %481 = vmatprep.mubr.bf16.mxu0 %v373
  %482 = vmatmul.mubr.bf16.gmra.mxu0 %v183
  %v483 = vpop.f32.mrf.mxu0
  %v484 = vadd.f32 %v419, %v483
  %v485 = vpop.f32.mrf.mxu0
  %v486 = vpop.f32.mrf.mxu0
  %v487 = vadd.f32 %v422, %v486
  %v488 = vpop.f32.mrf.mxu0
  %489 = vmatprep.mubr.bf16.mxu0 %v376
  %490 = vmatmul.mubr.bf16.gmra.mxu0 %v187
  %v491 = vpop.f32.mrf.mxu0
  %v492 = vadd.f32 %v427, %v491
  %v493 = vpop.f32.mrf.mxu0
  %v494 = vpop.f32.mrf.mxu0
  %v495 = vadd.f32 %v430, %v494
  %v496 = vpop.f32.mrf.mxu0
  %497 = vmatprep.mubr.bf16.mxu0 %v379
  %498 = vmatmul.mubr.bf16.gmra.mxu0 %v191
  %v499 = vpop.f32.mrf.mxu0
  %v500 = vadd.f32 %v435, %v499
  %v501 = vpop.f32.mrf.mxu0
  %v502 = vpop.f32.mrf.mxu0
  %v503 = vadd.f32 %v438, %v502
  %v504 = vpop.f32.mrf.mxu0
  %505 = vmatprep.mubr.bf16.mxu0 %v382
  %506 = vmatmul.mubr.bf16.gmra.mxu0 %v195
  %v507 = vpop.f32.mrf.mxu0
  %v508 = vadd.f32 %v443, %v507
  %v509 = vpop.f32.mrf.mxu0
  %v510 = vpop.f32.mrf.mxu0
  %v511 = vadd.f32 %v446, %v510
  %v512 = vpop.f32.mrf.mxu0
  %513 = vdwg.mxu0
  %v514 = vmax.f32 %v484, 0.0
  %v515 = vmax.f32 %v487, 0.0
  %v516 = vmax.f32 %v492, 0.0
  %v517 = vmax.f32 %v495, 0.0
  %v518 = vmax.f32 %v500, 0.0
  %v519 = vmax.f32 %v503, 0.0
  %v520 = vmax.f32 %v508, 0.0
  %v521 = vmax.f32 %v511, 0.0
  %v522 = vpack.c.bf16 %v515, %v514
  %v523 = vpack.c.bf16 %v517, %v516
  %v524 = vpack.c.bf16 %v519, %v518
  %v525 = vpack.c.bf16 %v521, %v520
  %v530 = vunpack.c.l.b16 %v522
  %v531 = vunpack.c.h.b16 %v522
  %v532 = vunpack.c.l.b16 %v523
  %v533 = vunpack.c.h.b16 %v523
  %v534 = vunpack.c.l.b16 %v524
  %v535 = vunpack.c.h.b16 %v524
  %v536 = vunpack.c.l.b16 %v525
  %v537 = vunpack.c.h.b16 %v525
  %v538 = vpack.c.b16 %v530, %v530
  %v539 = vpack.c.b16 %v531, %v531
  %v540 = vpack.c.b16 %v532, %v532
  %v541 = vpack.c.b16 %v533, %v533
  %v542 = vpack.c.b16 %v534, %v534
  %v543 = vpack.c.b16 %v535, %v535
  %v544 = vpack.c.b16 %v536, %v536
  %v545 = vpack.c.b16 %v537, %v537
  %vm554 = vcmask 257024
  %555 = vst.msk [vmem:[%s3] sm:$0xf] %vm554, %v538
  %556 = vst.msk [vmem:[%s3 + $0x4] sm:$0xf] %vm554, %v539
  %557 = vst.msk [vmem:[%s3 + $0x8] sm:$0xf] %vm554, %v540
  %558 = vst.msk [vmem:[%s3 + $0xc] sm:$0xf] %vm554, %v541
  %559 = vst.msk [vmem:[%s3 + $0x10] sm:$0xf] %vm554, %v542
  %560 = vst.msk [vmem:[%s3 + $0x14] sm:$0xf] %vm554, %v543
  %561 = vst.msk [vmem:[%s3 + $0x18] sm:$0xf] %vm554, %v544
  %562 = vst.msk [vmem:[%s3 + $0x1c] sm:$0xf] %vm554, %v545
  // Predicated region
  $region14: #{_lambda_.14} parent=0 // pred_check
    _
  $region15: #{_lambda_.14} parent=0 // pred_check_branch
    %564 = sbr.rel (0) target = $region17
  $region16: #{_lambda_.14} parent=0 // pred_region
    _
  $region17: #{_lambda_.14} parent=0 // pred_fallthru
    _
  // Predicated region
  $region18: #{_lambda_.14} parent=0 // pred_check
    _
  $region19: #{_lambda_.14} parent=0 // pred_check_branch
    %566 = sbr.rel (0) target = $region21
  $region20: #{_lambda_.14} parent=0 // pred_region
    _
  $region21: #{_lambda_.14} parent=0 // pred_fallthru
    _

// kernel: _lambda_.16
$region0: #{_lambda_.16}
  #allocation0 [shape = 'u32[]', space=smem, size = 0x4, offset = 0x4, fixed_abs, tag = 'smem constant byte address 0x4 - core index']
  #allocation1 [shape = 'u32[144,128]{1,0:T(1,128)}', space=vmem, size = 0x12000, scoped, tag = 'internal scratch']
  %s0 = inlined_call_operand.vmem [shape: bf16[16,4], index: 0, kind: input, shape index: {}]
  %s1 = inlined_call_operand.vmem [shape: bf16[4,512], index: 1, kind: input, shape index: {}]
  %s2 = inlined_call_operand.vmem [shape: f32[16,1], index: 2, kind: input, shape index: {}]
  %s3 = inlined_call_operand.vmem [shape: bf16[16,512], index: 3, kind: output, shape index: {}]
  %s4 = sld [smem:[#allocation0]]
  $region22: #{_lambda_.16} parent=0
    _
  %s6 = ssub.s32 1, %s4
  %s7 = scalar_select 0, %s6, %s4
  // Predicated region
  $region2: #{_lambda_.16} parent=0 // pred_check
    _
  $region3: #{_lambda_.16} parent=0 // pred_check_branch
    %9 = sbr.rel (0) target = $region5
  $region4: #{_lambda_.16} parent=0 // pred_region
    _
  $region5: #{_lambda_.16} parent=0 // pred_fallthru
    _
  // Predicated region
  $region6: #{_lambda_.16} parent=0 // pred_check
    _
  $region7: #{_lambda_.16} parent=0 // pred_check_branch
    %11 = sbr.rel (0) target = $region9
  $region8: #{_lambda_.16} parent=0 // pred_region
    _
  $region9: #{_lambda_.16} parent=0 // pred_fallthru
    _
  // Predicated region
  $region10: #{_lambda_.16} parent=0 // pred_check
    _
  $region11: #{_lambda_.16} parent=0 // pred_check_branch
    %13 = sbr.rel (0) target = $region13
  $region12: #{_lambda_.16} parent=0 // pred_region
    _
  $region13: #{_lambda_.16} parent=0 // pred_fallthru
    _
  %v15 = vld [vmem:[%s0] sm:$0xf]
  %v16 = vld [vmem:[%s0 + $0x4] sm:$0xf]
  %v17 = vld [vmem:[%s1] sm:$0xff]
  %v18 = vld [vmem:[%s2] sm:$0xff]
  %v19 = vld [vmem:[%s2 + $0x8] sm:$0xff]
  %21 = vset.pattern.permute.xlu0 0
  %22 = vperm.xlu0 %21, %v18
  %v23 = vpop.permute.xlu0 %22
  %26 = vset.pattern.permute.xlu0 0
  %27 = vperm.xlu0 %26, %v19
  %v28 = vpop.permute.xlu0 %27
  %v32 = vunpack.c.l.b16 %v15
  %v33 = vunpack.c.l.b16 %v16
  %v34 = vpack.c.b16 %v33, %v32
  %v36 = vcombine.high %v17, %v17
  %v38 = vunpack.c.l.s4 1983009808
  %v39 = vunpack.c.0.s8 %v38
  %v40 = vlaneseq
  %v41 = vshrl.u32 %v40, 7
  %v42 = vsub.s32 %v39, %v41
  %v43 = vrot.slane %v17, %v42
  %v45 = vunpack.c.l.s4 1983009808
  %v46 = vunpack.c.0.s8 %v45
  %v47 = vlaneseq
  %v48 = vshrl.u32 %v47, 7
  %v49 = vsub.s32 %v46, %v48
  %v50 = vrot.slane %v36, %v49
  %v51 = vcombine.high %v43, %v43
  %v52 = vcombine.high %v50, %v50
  %vm53 = vcmask 31744
  %v55 = vsel %vm53, %v34, 0
  %vm57 = vcmask 1041408
  %v59 = vsel %vm57, %v43, 0
  %v62 = vsel %vm57, %v51, 0
  %v65 = vsel %vm57, %v50, 0
  %v68 = vsel %vm57, %v52, 0
  %70 = vmatprep.subr.bf16.mxu0 0
  %71 = vmatpush1.bf16.msra.mxu0 0
  %72 = vmatprep.subr.bf16.mxu0 0
  %73 = vmatpush1.bf16.msra.mxu0 0
  %74 = vmatprep.subr.bf16.mxu0 0
  %75 = vmatpush1.bf16.msra.mxu0 0
  %76 = vmatprep.subr.bf16.mxu0 0
  %77 = vmatpush1.bf16.msra.mxu0 0
  %78 = vmatprep.subr.bf16.mxu0 0
  %79 = vmatpush1.bf16.msra.mxu0 0
  %80 = vmatprep.subr.bf16.mxu0 0
  %81 = vmatpush1.bf16.msra.mxu0 0
  %82 = vmatprep.subr.bf16.mxu0 0
  %83 = vmatpush1.bf16.msra.mxu0 0
  %84 = vmatprep.subr.bf16.mxu0 %v62
  %85 = vmatpush1.bf16.msra.mxu0 %v59
  %86 = vmatprep.subr.bf16.mxu0 0
  %87 = vmatpush2.bf16.msra.mxu0 0
  %88 = vmatprep.subr.bf16.mxu0 0
  %89 = vmatpush2.bf16.msra.mxu0 0
  %90 = vmatprep.subr.bf16.mxu0 0
  %91 = vmatpush2.bf16.msra.mxu0 0
  %92 = vmatprep.subr.bf16.mxu0 0
  %93 = vmatpush2.bf16.msra.mxu0 0
  %94 = vmatprep.subr.bf16.mxu0 0
  %95 = vmatpush2.bf16.msra.mxu0 0
  %96 = vmatprep.subr.bf16.mxu0 0
  %97 = vmatpush2.bf16.msra.mxu0 0
  %98 = vmatprep.subr.bf16.mxu0 0
  %99 = vmatpush2.bf16.msra.mxu0 0
  %100 = vmatprep.subr.bf16.mxu0 0
  %101 = vmatpush2.bf16.msra.mxu0 0
  %102 = vmatprep.mubr.bf16.mxu0 0
  %103 = vmatmul.mubr.bf16.gmra.mxu0 %v55
  %v104 = vpop.f32.mrf.mxu0
  %v105 = vadd.f32 %v23, %v104
  %v106 = vpop.f32.mrf.mxu0
  %v107 = vadd.f32 %v23, %v106
  %v108 = vpop.f32.mrf.mxu0
  %v109 = vadd.f32 %v28, %v108
  %v110 = vpop.f32.mrf.mxu0
  %v111 = vadd.f32 %v28, %v110
  %112 = vdwg.mxu0
  %113 = vmatprep.subr.bf16.mxu0 0
  %114 = vmatpush1.bf16.msra.mxu0 0
  %115 = vmatprep.subr.bf16.mxu0 0
  %116 = vmatpush1.bf16.msra.mxu0 0
  %117 = vmatprep.subr.bf16.mxu0 0
  %118 = vmatpush1.bf16.msra.mxu0 0
  %119 = vmatprep.subr.bf16.mxu0 0
  %120 = vmatpush1.bf16.msra.mxu0 0
  %121 = vmatprep.subr.bf16.mxu0 0
  %122 = vmatpush1.bf16.msra.mxu0 0
  %123 = vmatprep.subr.bf16.mxu0 0
  %124 = vmatpush1.bf16.msra.mxu0 0
  %125 = vmatprep.subr.bf16.mxu0 0
  %126 = vmatpush1.bf16.msra.mxu0 0
  %127 = vmatprep.subr.bf16.mxu0 %v68
  %128 = vmatpush1.bf16.msra.mxu0 %v65
  %129 = vmatprep.subr.bf16.mxu0 0
  %130 = vmatpush2.bf16.msra.mxu0 0
  %131 = vmatprep.subr.bf16.mxu0 0
  %132 = vmatpush2.bf16.msra.mxu0 0
  %133 = vmatprep.subr.bf16.mxu0 0
  %134 = vmatpush2.bf16.msra.mxu0 0
  %135 = vmatprep.subr.bf16.mxu0 0
  %136 = vmatpush2.bf16.msra.mxu0 0
  %137 = vmatprep.subr.bf16.mxu0 0
  %138 = vmatpush2.bf16.msra.mxu0 0
  %139 = vmatprep.subr.bf16.mxu0 0
  %140 = vmatpush2.bf16.msra.mxu0 0
  %141 = vmatprep.subr.bf16.mxu0 0
  %142 = vmatpush2.bf16.msra.mxu0 0
  %143 = vmatprep.subr.bf16.mxu0 0
  %144 = vmatpush2.bf16.msra.mxu0 0
  %145 = vmatprep.mubr.bf16.mxu0 0
  %146 = vmatmul.mubr.bf16.gmra.mxu0 %v55
  %v147 = vpop.f32.mrf.mxu0
  %v148 = vadd.f32 %v23, %v147
  %v149 = vpop.f32.mrf.mxu0
  %v150 = vadd.f32 %v23, %v149
  %v151 = vpop.f32.mrf.mxu0
  %v152 = vadd.f32 %v28, %v151
  %v153 = vpop.f32.mrf.mxu0
  %v154 = vadd.f32 %v28, %v153
  %155 = vdwg.mxu0
  %v156 = vpack.c.bf16 %v109, %v105
  %v157 = vpack.c.bf16 %v111, %v107
  %v158 = vpack.c.bf16 %v152, %v148
  %v159 = vpack.c.bf16 %v154, %v150
  %v164 = vunpack.c.l.b16 %v156
  %v165 = vunpack.c.l.b16 %v157
  %v166 = vunpack.c.l.b16 %v158
  %v167 = vunpack.c.l.b16 %v159
  %v168 = vunpack.c.h.b16 %v156
  %v169 = vunpack.c.h.b16 %v157
  %v170 = vunpack.c.h.b16 %v158
  %v171 = vunpack.c.h.b16 %v159
  %v172 = vpack.c.b16 %v165, %v164
  %v173 = vpack.c.b16 %v167, %v166
  %v174 = vpack.c.b16 %v169, %v168
  %v175 = vpack.c.b16 %v171, %v170
  %180 = vst [vmem:[%s3] sm:$0xff] %v172
  %181 = vst [vmem:[%s3 + $0x8] sm:$0xff] %v173
  %182 = vst [vmem:[%s3 + $0x10] sm:$0xff] %v174
  %183 = vst [vmem:[%s3 + $0x18] sm:$0xff] %v175
  // Predicated region
  $region14: #{_lambda_.16} parent=0 // pred_check
    _
  $region15: #{_lambda_.16} parent=0 // pred_check_branch
    %185 = sbr.rel (0) target = $region17
  $region16: #{_lambda_.16} parent=0 // pred_region
    _
  $region17: #{_lambda_.16} parent=0 // pred_fallthru
    _
  // Predicated region
  $region18: #{_lambda_.16} parent=0 // pred_check
    _
  $region19: #{_lambda_.16} parent=0 // pred_check_branch
    %187 = sbr.rel (0) target = $region21
  $region20: #{_lambda_.16} parent=0 // pred_region
    _
  $region21: #{_lambda_.16} parent=0 // pred_fallthru
    _

// kernel: _lambda_.15
$region0: #{_lambda_.15}
  #allocation0 [shape = 'u32[]', space=smem, size = 0x4, offset = 0x4, fixed_abs, tag = 'smem constant byte address 0x4 - core index']
  #allocation1 [shape = 'u32[144,128]{1,0:T(1,128)}', space=vmem, size = 0x12000, scoped, tag = 'internal scratch']
  %s0 = inlined_call_operand.vmem [shape: bf16[64,32], index: 0, kind: input, shape index: {}]
  %s1 = inlined_call_operand.vmem [shape: bf16[3,576,32], index: 1, kind: input, shape index: {}]
  %s2 = inlined_call_operand.vmem [shape: bf16[64,64], index: 2, kind: input, shape index: {}]
  %s3 = inlined_call_operand.vmem [shape: f32[64,1], index: 3, kind: input, shape index: {}]
  %s4 = inlined_call_operand.vmem [shape: bf16[3,64,576], index: 4, kind: input, shape index: {}]
  %s5 = inlined_call_operand.vmem [shape: f32[3,64,1], index: 5, kind: input, shape index: {}]
  %s6 = inlined_call_operand.vmem [shape: bf16[4,64,64], index: 6, kind: input, shape index: {}]
  %s7 = inlined_call_operand.vmem [shape: f32[64,1], index: 7, kind: input, shape index: {}]
  %s8 = inlined_call_operand.vmem [shape: f32[64,64], index: 8, kind: input, shape index: {}]
  %s9 = inlined_call_operand.vmem [shape: f32[64,1], index: 9, kind: input, shape index: {}]
  %s10 = inlined_call_operand.vmem [shape: f32[64,64], index: 10, kind: input, shape index: {}]
  %s11 = inlined_call_operand.vmem [shape: f32[32,2], index: 11, kind: input, shape index: {}]
  %s12 = inlined_call_operand.vmem [shape: f32[2,32], index: 12, kind: input, shape index: {}]
  %s13 = inlined_call_operand.vmem [shape: bf16[24,512], index: 13, kind: input, shape index: {}]
  %s14 = inlined_call_operand.vmem [shape: bf16[48,24], index: 14, kind: input, shape index: {}]
  %s15 = inlined_call_operand.vmem [shape: f32[48,1], index: 15, kind: input, shape index: {}]
  %s16 = inlined_call_operand.vmem [shape: bf16[64,32], index: 16, kind: output, shape index: {0}]
  %s17 = inlined_call_operand.vmem [shape: bf16[48,512], index: 17, kind: output, shape index: {1}]
  %18 = xla_tuple %s16, %s17
  %s19 = sld [smem:[#allocation0]]
  $region82: #{_lambda_.15} parent=0
    _
  %s21 = ssub.s32 1, %s19
  %s22 = scalar_select 0, %s21, %s19
  // Predicated region
  $region2: #{_lambda_.15} parent=0 // pred_check
    _
  $region3: #{_lambda_.15} parent=0 // pred_check_branch
    %24 = sbr.rel (0) target = $region5
  $region4: #{_lambda_.15} parent=0 // pred_region
    _
  $region5: #{_lambda_.15} parent=0 // pred_fallthru
    _
  // Predicated region
  $region6: #{_lambda_.15} parent=0 // pred_check
    _
  $region7: #{_lambda_.15} parent=0 // pred_check_branch
    %26 = sbr.rel (0) target = $region9
  $region8: #{_lambda_.15} parent=0 // pred_region
    _
  $region9: #{_lambda_.15} parent=0 // pred_fallthru
    _
  // Predicated region
  $region10: #{_lambda_.15} parent=0 // pred_check
    _
  $region11: #{_lambda_.15} parent=0 // pred_check_branch
    %28 = sbr.rel (0) target = $region13
  $region12: #{_lambda_.15} parent=0 // pred_region
    _
  $region13: #{_lambda_.15} parent=0 // pred_fallthru
    _
  // Predicated region
  $region14: #{_lambda_.15} parent=0 // pred_check
    _
  $region15: #{_lambda_.15} parent=0 // pred_check_branch
    %30 = sbr.rel (0) target = $region17
  $region16: #{_lambda_.15} parent=0 // pred_region
    _
  $region17: #{_lambda_.15} parent=0 // pred_fallthru
    _
  // Predicated region
  $region18: #{_lambda_.15} parent=0 // pred_check
    _
  $region19: #{_lambda_.15} parent=0 // pred_check_branch
    %32 = sbr.rel (0) target = $region21
  $region20: #{_lambda_.15} parent=0 // pred_region
    _
  $region21: #{_lambda_.15} parent=0 // pred_fallthru
    _
  // Predicated region
  $region22: #{_lambda_.15} parent=0 // pred_check
    _
  $region23: #{_lambda_.15} parent=0 // pred_check_branch
    %34 = sbr.rel (0) target = $region25
  $region24: #{_lambda_.15} parent=0 // pred_region
    _
  $region25: #{_lambda_.15} parent=0 // pred_fallthru
    _
  // Predicated region
  $region26: #{_lambda_.15} parent=0 // pred_check
    _
  $region27: #{_lambda_.15} parent=0 // pred_check_branch
    %36 = sbr.rel (0) target = $region29
  $region28: #{_lambda_.15} parent=0 // pred_region
    _
  $region29: #{_lambda_.15} parent=0 // pred_fallthru
    _
  // Predicated region
  $region30: #{_lambda_.15} parent=0 // pred_check
    _
  $region31: #{_lambda_.15} parent=0 // pred_check_branch
    %38 = sbr.rel (0) target = $region33
  $region32: #{_lambda_.15} parent=0 // pred_region
    _
  $region33: #{_lambda_.15} parent=0 // pred_fallthru
    _
  // Predicated region
  $region34: #{_lambda_.15} parent=0 // pred_check
    _
  $region35: #{_lambda_.15} parent=0 // pred_check_branch
    %40 = sbr.rel (0) target = $region37
  $region36: #{_lambda_.15} parent=0 // pred_region
    _
  $region37: #{_lambda_.15} parent=0 // pred_fallthru
    _
  // Predicated region
  $region38: #{_lambda_.15} parent=0 // pred_check
    _
  $region39: #{_lambda_.15} parent=0 // pred_check_branch
    %42 = sbr.rel (0) target = $region41
  $region40: #{_lambda_.15} parent=0 // pred_region
    _
  $region41: #{_lambda_.15} parent=0 // pred_fallthru
    _
  // Predicated region
  $region42: #{_lambda_.15} parent=0 // pred_check
    _
  $region43: #{_lambda_.15} parent=0 // pred_check_branch
    %44 = sbr.rel (0) target = $region45
  $region44: #{_lambda_.15} parent=0 // pred_region
    _
  $region45: #{_lambda_.15} parent=0 // pred_fallthru
    _
  // Predicated region
  $region46: #{_lambda_.15} parent=0 // pred_check
    _
  $region47: #{_lambda_.15} parent=0 // pred_check_branch
    %46 = sbr.rel (0) target = $region49
  $region48: #{_lambda_.15} parent=0 // pred_region
    _
  $region49: #{_lambda_.15} parent=0 // pred_fallthru
    _
  // Predicated region
  $region50: #{_lambda_.15} parent=0 // pred_check
    _
  $region51: #{_lambda_.15} parent=0 // pred_check_branch
    %48 = sbr.rel (0) target = $region53
  $region52: #{_lambda_.15} parent=0 // pred_region
    _
  $region53: #{_lambda_.15} parent=0 // pred_fallthru
    _
  // Predicated region
  $region54: #{_lambda_.15} parent=0 // pred_check
    _
  $region55: #{_lambda_.15} parent=0 // pred_check_branch
    %50 = sbr.rel (0) target = $region57
  $region56: #{_lambda_.15} parent=0 // pred_region
    _
  $region57: #{_lambda_.15} parent=0 // pred_fallthru
    _
  // Predicated region
  $region58: #{_lambda_.15} parent=0 // pred_check
    _
  $region59: #{_lambda_.15} parent=0 // pred_check_branch
    %52 = sbr.rel (0) target = $region61
  $region60: #{_lambda_.15} parent=0 // pred_region
    _
  $region61: #{_lambda_.15} parent=0 // pred_fallthru
    _
  // Predicated region
  $region62: #{_lambda_.15} parent=0 // pred_check
    _
  $region63: #{_lambda_.15} parent=0 // pred_check_branch
    %54 = sbr.rel (0) target = $region65
  $region64: #{_lambda_.15} parent=0 // pred_region
    _
  $region65: #{_lambda_.15} parent=0 // pred_fallthru
    _
  %v56 = vld [vmem:[%s0] sm:$0xf]
  %v57 = vld [vmem:[%s0 + $0x4] sm:$0xf]
  %v58 = vld [vmem:[%s0 + $0x8] sm:$0xf]
  %v59 = vld [vmem:[%s0 + $0xc] sm:$0xf]
  %v60 = vld [vmem:[%s0 + $0x10] sm:$0xf]
  %v61 = vld [vmem:[%s0 + $0x14] sm:$0xf]
  %v62 = vld [vmem:[%s0 + $0x18] sm:$0xf]
  %v63 = vld [vmem:[%s0 + $0x1c] sm:$0xf]
  %v64 = vld [vmem:[%s2] sm:$0xf]
  %v65 = vld [vmem:[%s2 + $0x4] sm:$0xf]
  %v66 = vld [vmem:[%s2 + $0x8] sm:$0xf]
  %v67 = vld [vmem:[%s2 + $0xc] sm:$0xf]
  %v68 = vld [vmem:[%s2 + $0x10] sm:$0xf]
  %v69 = vld [vmem:[%s2 + $0x14] sm:$0xf]
  %v70 = vld [vmem:[%s2 + $0x18] sm:$0xf]
  %v71 = vld [vmem:[%s2 + $0x1c] sm:$0xf]
  %v72 = vld [vmem:[%s3] sm:$0xff]
  %v73 = vld [vmem:[%s3 + $0x8] sm:$0xff]
  %v74 = vld [vmem:[%s3 + $0x10] sm:$0xff]
  %v75 = vld [vmem:[%s3 + $0x18] sm:$0xff]
  %v76 = vld [vmem:[%s3 + $0x20] sm:$0xff]
  %v77 = vld [vmem:[%s3 + $0x28] sm:$0xff]
  %v78 = vld [vmem:[%s3 + $0x30] sm:$0xff]
  %v79 = vld [vmem:[%s3 + $0x38] sm:$0xff]
  %81 = vset.pattern.permute.xlu0 0
  %82 = vperm.xlu0 %81, %v72
  %v83 = vpop.permute.xlu0 %82
  %86 = vset.pattern.permute.xlu0 0
  %87 = vperm.xlu0 %86, %v73
  %v88 = vpop.permute.xlu0 %87
  %91 = vset.pattern.permute.xlu0 0
  %92 = vperm.xlu0 %91, %v74
  %v93 = vpop.permute.xlu0 %92
  %96 = vset.pattern.permute.xlu0 0
  %97 = vperm.xlu0 %96, %v75
  %v98 = vpop.permute.xlu0 %97
  %101 = vset.pattern.permute.xlu0 0
  %102 = vperm.xlu0 %101, %v76
  %v103 = vpop.permute.xlu0 %102
  %106 = vset.pattern.permute.xlu0 0
  %107 = vperm.xlu0 %106, %v77
  %v108 = vpop.permute.xlu0 %107
  %111 = vset.pattern.permute.xlu0 0
  %112 = vperm.xlu0 %111, %v78
  %v113 = vpop.permute.xlu0 %112
  %116 = vset.pattern.permute.xlu0 0
  %117 = vperm.xlu0 %116, %v79
  %v118 = vpop.permute.xlu0 %117
  %v128 = vunpack.c.l.b16 %v64
  %v129 = vunpack.c.l.b16 %v65
  %v130 = vunpack.c.l.b16 %v66
  %v131 = vunpack.c.l.b16 %v67
  %v132 = vunpack.c.l.b16 %v68
  %v133 = vunpack.c.l.b16 %v69
  %v134 = vunpack.c.l.b16 %v70
  %v135 = vunpack.c.l.b16 %v71
  %v136 = vpack.c.b16 %v129, %v128
  %v137 = vpack.c.b16 %v131, %v130
  %v138 = vpack.c.b16 %v133, %v132
  %v139 = vpack.c.b16 %v135, %v134
  %v148 = vunpack.c.l.b16 %v56
  %v149 = vunpack.c.l.b16 %v57
  %v150 = vunpack.c.l.b16 %v58
  %v151 = vunpack.c.l.b16 %v59
  %v152 = vunpack.c.l.b16 %v60
  %v153 = vunpack.c.l.b16 %v61
  %v154 = vunpack.c.l.b16 %v62
  %v155 = vunpack.c.l.b16 %v63
  %v156 = vpack.c.b16 %v149, %v148
  %v157 = vpack.c.b16 %v151, %v150
  %v158 = vpack.c.b16 %v153, %v152
  %v159 = vpack.c.b16 %v155, %v154
  %vm164 = vcmask 523264
  %v166 = vsel %vm164, %v136, 0
  %v169 = vsel %vm164, %v137, 0
  %v172 = vsel %vm164, %v138, 0
  %v175 = vsel %vm164, %v139, 0
  %177 = vmatprep.subr.bf16.mxu0 0
  %178 = vmatpush1.bf16.msra.mxu0 0
  %179 = vmatprep.subr.bf16.mxu0 0
  %180 = vmatpush1.bf16.msra.mxu0 0
  %181 = vmatprep.subr.bf16.mxu0 0
  %182 = vmatpush1.bf16.msra.mxu0 0
  %183 = vmatprep.subr.bf16.mxu0 0
  %184 = vmatpush1.bf16.msra.mxu0 0
  %185 = vmatprep.subr.bf16.mxu0 0
  %186 = vmatpush1.bf16.msra.mxu0 %v159
  %187 = vmatprep.subr.bf16.mxu0 0
  %188 = vmatpush1.bf16.msra.mxu0 %v158
  %189 = vmatprep.subr.bf16.mxu0 0
  %190 = vmatpush1.bf16.msra.mxu0 %v157
  %191 = vmatprep.subr.bf16.mxu0 0
  %192 = vmatpush1.bf16.msra.mxu0 %v156
  %193 = vmatprep.subr.bf16.mxu0 0
  %194 = vmatpush2.bf16.msra.mxu0 0
  %195 = vmatprep.subr.bf16.mxu0 0
  %196 = vmatpush2.bf16.msra.mxu0 0
  %197 = vmatprep.subr.bf16.mxu0 0
  %198 = vmatpush2.bf16.msra.mxu0 0
  %199 = vmatprep.subr.bf16.mxu0 0
  %200 = vmatpush2.bf16.msra.mxu0 0
  %201 = vmatprep.subr.bf16.mxu0 0
  %202 = vmatpush2.bf16.msra.mxu0 0
  %203 = vmatprep.subr.bf16.mxu0 0
  %204 = vmatpush2.bf16.msra.mxu0 0
  %205 = vmatprep.subr.bf16.mxu0 0
  %206 = vmatpush2.bf16.msra.mxu0 0
  %207 = vmatprep.subr.bf16.mxu0 0
  %208 = vmatpush2.bf16.msra.mxu0 0
  %209 = vmatprep.mubr.bf16.mxu0 0
  %210 = vmatmul.mubr.bf16.gmra.mxu0 %v166
  %v211 = vpop.f32.mrf.mxu0
  %v212 = vadd.f32 %v83, %v211
  %v213 = vpop.f32.mrf.mxu0
  %v214 = vpop.f32.mrf.mxu0
  %v215 = vadd.f32 %v88, %v214
  %v216 = vpop.f32.mrf.mxu0
  %217 = vmatprep.mubr.bf16.mxu0 0
  %218 = vmatmul.mubr.bf16.gmra.mxu0 %v169
  %v219 = vpop.f32.mrf.mxu0
  %v220 = vadd.f32 %v93, %v219
  %v221 = vpop.f32.mrf.mxu0
  %v222 = vpop.f32.mrf.mxu0
  %v223 = vadd.f32 %v98, %v222
  %v224 = vpop.f32.mrf.mxu0
  %225 = vmatprep.mubr.bf16.mxu0 0
  %226 = vmatmul.mubr.bf16.gmra.mxu0 %v172
  %v227 = vpop.f32.mrf.mxu0
  %v228 = vadd.f32 %v103, %v227
  %v229 = vpop.f32.mrf.mxu0
  %v230 = vpop.f32.mrf.mxu0
  %v231 = vadd.f32 %v108, %v230
  %v232 = vpop.f32.mrf.mxu0
  %233 = vmatprep.mubr.bf16.mxu0 0
  %234 = vmatmul.mubr.bf16.gmra.mxu0 %v175
  %v235 = vpop.f32.mrf.mxu0
  %v236 = vadd.f32 %v113, %v235
  %v237 = vpop.f32.mrf.mxu0
  %v238 = vpop.f32.mrf.mxu0
  %v239 = vadd.f32 %v118, %v238
  %v240 = vpop.f32.mrf.mxu0
  %241 = vdwg.mxu0
  %v242 = vmax.f32 %v212, 0.0
  %v243 = vmax.f32 %v215, 0.0
  %v244 = vmax.f32 %v220, 0.0
  %v245 = vmax.f32 %v223, 0.0
  %v246 = vmax.f32 %v228, 0.0
  %v247 = vmax.f32 %v231, 0.0
  %v248 = vmax.f32 %v236, 0.0
  %v249 = vmax.f32 %v239, 0.0
  %v250 = vld [vmem:[%s6] sm:$0xf]
  %v251 = vld [vmem:[%s6 + $0x4] sm:$0xf]
  %v252 = vld [vmem:[%s6 + $0x8] sm:$0xf]
  %v253 = vld [vmem:[%s6 + $0xc] sm:$0xf]
  %v254 = vld [vmem:[%s6 + $0x10] sm:$0xf]
  %v255 = vld [vmem:[%s6 + $0x14] sm:$0xf]
  %v256 = vld [vmem:[%s6 + $0x18] sm:$0xf]
  %v257 = vld [vmem:[%s6 + $0x1c] sm:$0xf]
  %v258 = vpack.c.bf16 %v243, %v242
  %v259 = vpack.c.bf16 %v245, %v244
  %v260 = vpack.c.bf16 %v247, %v246
  %v261 = vpack.c.bf16 %v249, %v248
  %v262 = vld [vmem:[%s4] sm:$0xff]
  %v263 = vld [vmem:[%s4 + $0x8] sm:$0xff]
  %v264 = vld [vmem:[%s4 + $0x10] sm:$0xf]
  %v265 = vld [vmem:[%s4 + $0x14] sm:$0xff]
  %v266 = vld [vmem:[%s4 + $0x1c] sm:$0xff]
  %v267 = vld [vmem:[%s4 + $0x24] sm:$0xf]
  %v268 = vld [vmem:[%s4 + $0x28] sm:$0xff]
  %v269 = vld [vmem:[%s4 + $0x30] sm:$0xff]
  %v270 = vld [vmem:[%s4 + $0x38] sm:$0xf]
  %v271 = vld [vmem:[%s4 + $0x3c] sm:$0xff]
  %v272 = vld [vmem:[%s4 + $0x44] sm:$0xff]
  %v273 = vld [vmem:[%s4 + $0x4c] sm:$0xf]
  %v274 = vld [vmem:[%s4 + $0x50] sm:$0xff]
  %v275 = vld [vmem:[%s4 + $0x58] sm:$0xff]
  %v276 = vld [vmem:[%s4 + $0x60] sm:$0xf]
  %v277 = vld [vmem:[%s4 + $0x64] sm:$0xff]
  %v278 = vld [vmem:[%s4 + $0x6c] sm:$0xff]
  %v279 = vld [vmem:[%s4 + $0x74] sm:$0xf]
  %v280 = vld [vmem:[%s4 + $0x78] sm:$0xff]
  %v281 = vld [vmem:[%s4 + $0x80] sm:$0xff]
  %v282 = vld [vmem:[%s4 + $0x88] sm:$0xf]
  %v283 = vld [vmem:[%s4 + $0x8c] sm:$0xff]
  %v284 = vld [vmem:[%s4 + $0x94] sm:$0xff]
  %v285 = vld [vmem:[%s4 + $0x9c] sm:$0xf]
  %v286 = vld [vmem:[%s1] sm:$0xf]
  %v287 = vld [vmem:[%s1 + $0x4] sm:$0xf]
  %v288 = vld [vmem:[%s1 + $0x8] sm:$0xf]
  %v289 = vld [vmem:[%s1 + $0xc] sm:$0xf]
  %v290 = vld [vmem:[%s1 + $0x10] sm:$0xf]
  %v291 = vld [vmem:[%s1 + $0x14] sm:$0xf]
  %v292 = vld [vmem:[%s1 + $0x18] sm:$0xf]
  %v293 = vld [vmem:[%s1 + $0x1c] sm:$0xf]
  %v294 = vld [vmem:[%s1 + $0x20] sm:$0xf]
  %v295 = vld [vmem:[%s1 + $0x24] sm:$0xf]
  %v296 = vld [vmem:[%s1 + $0x28] sm:$0xf]
  %v297 = vld [vmem:[%s1 + $0x2c] sm:$0xf]
  %v298 = vld [vmem:[%s1 + $0x30] sm:$0xf]
  %v299 = vld [vmem:[%s1 + $0x34] sm:$0xf]
  %v300 = vld [vmem:[%s1 + $0x38] sm:$0xf]
  %v301 = vld [vmem:[%s1 + $0x3c] sm:$0xf]
  %v302 = vld [vmem:[%s1 + $0x40] sm:$0xf]
  %v303 = vld [vmem:[%s1 + $0x44] sm:$0xf]
  %v304 = vld [vmem:[%s1 + $0x48] sm:$0xf]
  %v305 = vld [vmem:[%s1 + $0x4c] sm:$0xf]
  %v306 = vld [vmem:[%s1 + $0x50] sm:$0xf]
  %v307 = vld [vmem:[%s1 + $0x54] sm:$0xf]
  %v308 = vld [vmem:[%s1 + $0x58] sm:$0xf]
  %v309 = vld [vmem:[%s1 + $0x5c] sm:$0xf]
  %v310 = vld [vmem:[%s1 + $0x60] sm:$0xf]
  %v311 = vld [vmem:[%s1 + $0x64] sm:$0xf]
  %v312 = vld [vmem:[%s1 + $0x68] sm:$0xf]
  %v313 = vld [vmem:[%s1 + $0x6c] sm:$0xf]
  %v314 = vld [vmem:[%s1 + $0x70] sm:$0xf]
  %v315 = vld [vmem:[%s1 + $0x74] sm:$0xf]
  %v316 = vld [vmem:[%s1 + $0x78] sm:$0xf]
  %v317 = vld [vmem:[%s1 + $0x7c] sm:$0xf]
  %v318 = vld [vmem:[%s1 + $0x80] sm:$0xf]
  %v319 = vld [vmem:[%s1 + $0x84] sm:$0xf]
  %v320 = vld [vmem:[%s1 + $0x88] sm:$0xf]
  %v321 = vld [vmem:[%s1 + $0x8c] sm:$0xf]
  %v322 = vld [vmem:[%s1 + $0x90] sm:$0xf]
  %v323 = vld [vmem:[%s1 + $0x94] sm:$0xf]
  %v324 = vld [vmem:[%s1 + $0x98] sm:$0xf]
  %v325 = vld [vmem:[%s1 + $0x9c] sm:$0xf]
  %v326 = vld [vmem:[%s1 + $0xa0] sm:$0xf]
  %v327 = vld [vmem:[%s1 + $0xa4] sm:$0xf]
  %v328 = vld [vmem:[%s1 + $0xa8] sm:$0xf]
  %v329 = vld [vmem:[%s1 + $0xac] sm:$0xf]
  %v330 = vld [vmem:[%s1 + $0xb0] sm:$0xf]
  %v331 = vld [vmem:[%s1 + $0xb4] sm:$0xf]
  %v332 = vld [vmem:[%s1 + $0xb8] sm:$0xf]
  %v333 = vld [vmem:[%s1 + $0xbc] sm:$0xf]
  %v334 = vld [vmem:[%s1 + $0xc0] sm:$0xf]
  %v335 = vld [vmem:[%s1 + $0xc4] sm:$0xf]
  %v336 = vld [vmem:[%s1 + $0xc8] sm:$0xf]
  %v337 = vld [vmem:[%s1 + $0xcc] sm:$0xf]
  %v338 = vld [vmem:[%s1 + $0xd0] sm:$0xf]
  %v339 = vld [vmem:[%s1 + $0xd4] sm:$0xf]
  %v340 = vld [vmem:[%s1 + $0xd8] sm:$0xf]
  %v341 = vld [vmem:[%s1 + $0xdc] sm:$0xf]
  %v342 = vld [vmem:[%s1 + $0xe0] sm:$0xf]
  %v343 = vld [vmem:[%s1 + $0xe4] sm:$0xf]
  %v344 = vld [vmem:[%s1 + $0xe8] sm:$0xf]
  %v345 = vld [vmem:[%s1 + $0xec] sm:$0xf]
  %v346 = vld [vmem:[%s1 + $0xf0] sm:$0xf]
  %v347 = vld [vmem:[%s1 + $0xf4] sm:$0xf]
  %v348 = vld [vmem:[%s1 + $0xf8] sm:$0xf]
  %v349 = vld [vmem:[%s1 + $0xfc] sm:$0xf]
  %v350 = vld [vmem:[%s1 + $0x100] sm:$0xf]
  %v351 = vld [vmem:[%s1 + $0x104] sm:$0xf]
  %v352 = vld [vmem:[%s1 + $0x108] sm:$0xf]
  %v353 = vld [vmem:[%s1 + $0x10c] sm:$0xf]
  %v354 = vld [vmem:[%s1 + $0x110] sm:$0xf]
  %v355 = vld [vmem:[%s1 + $0x114] sm:$0xf]
  %v356 = vld [vmem:[%s1 + $0x118] sm:$0xf]
  %v357 = vld [vmem:[%s1 + $0x11c] sm:$0xf]
  %v358 = vld [vmem:[%s5] sm:$0xff]
  %v359 = vld [vmem:[%s5 + $0x8] sm:$0xff]
  %v360 = vld [vmem:[%s5 + $0x10] sm:$0xff]
  %v361 = vld [vmem:[%s5 + $0x18] sm:$0xff]
  %v362 = vld [vmem:[%s5 + $0x20] sm:$0xff]
  %v363 = vld [vmem:[%s5 + $0x28] sm:$0xff]
  %v364 = vld [vmem:[%s5 + $0x30] sm:$0xff]
  %v365 = vld [vmem:[%s5 + $0x38] sm:$0xff]
  %367 = vset.pattern.permute.xlu0 0
  %368 = vperm.xlu0 %367, %v358
  %v369 = vpop.permute.xlu0 %368
  %372 = vset.pattern.permute.xlu0 0
  %373 = vperm.xlu0 %372, %v359
  %v374 = vpop.permute.xlu0 %373
  %377 = vset.pattern.permute.xlu0 0
  %378 = vperm.xlu0 %377, %v360
  %v379 = vpop.permute.xlu0 %378
  %382 = vset.pattern.permute.xlu0 0
  %383 = vperm.xlu0 %382, %v361
  %v384 = vpop.permute.xlu0 %383
  %387 = vset.pattern.permute.xlu0 0
  %388 = vperm.xlu0 %387, %v362
  %v389 = vpop.permute.xlu0 %388
  %392 = vset.pattern.permute.xlu0 0
  %393 = vperm.xlu0 %392, %v363
  %v394 = vpop.permute.xlu0 %393
  %397 = vset.pattern.permute.xlu0 0
  %398 = vperm.xlu0 %397, %v364
  %v399 = vpop.permute.xlu0 %398
  %402 = vset.pattern.permute.xlu0 0
  %403 = vperm.xlu0 %402, %v365
  %v404 = vpop.permute.xlu0 %403
  %v430 = vunpack.c.l.b16 %v262
  %v431 = vunpack.c.h.b16 %v262
  %v432 = vunpack.c.l.b16 %v263
  %v433 = vunpack.c.h.b16 %v263
  %v434 = vunpack.c.l.b16 %v264
  %v435 = vunpack.c.l.b16 %v265
  %v436 = vunpack.c.h.b16 %v265
  %v437 = vunpack.c.l.b16 %v266
  %v438 = vunpack.c.h.b16 %v266
  %v439 = vunpack.c.l.b16 %v267
  %v440 = vunpack.c.l.b16 %v268
  %v441 = vunpack.c.h.b16 %v268
  %v442 = vunpack.c.l.b16 %v269
  %v443 = vunpack.c.h.b16 %v269
  %v444 = vunpack.c.l.b16 %v270
  %v445 = vunpack.c.l.b16 %v271
  %v446 = vunpack.c.h.b16 %v271
  %v447 = vunpack.c.l.b16 %v272
  %v448 = vunpack.c.h.b16 %v272
  %v449 = vunpack.c.l.b16 %v273
  %v450 = vunpack.c.l.b16 %v274
  %v451 = vunpack.c.h.b16 %v274
  %v452 = vunpack.c.l.b16 %v275
  %v453 = vunpack.c.h.b16 %v275
  %v454 = vunpack.c.l.b16 %v276
  %v455 = vunpack.c.l.b16 %v277
  %v456 = vunpack.c.h.b16 %v277
  %v457 = vunpack.c.l.b16 %v278
  %v458 = vunpack.c.h.b16 %v278
  %v459 = vunpack.c.l.b16 %v279
  %v460 = vunpack.c.l.b16 %v280
  %v461 = vunpack.c.h.b16 %v280
  %v462 = vunpack.c.l.b16 %v281
  %v463 = vunpack.c.h.b16 %v281
  %v464 = vunpack.c.l.b16 %v282
  %v465 = vunpack.c.l.b16 %v283
  %v466 = vunpack.c.h.b16 %v283
  %v467 = vunpack.c.l.b16 %v284
  %v468 = vunpack.c.h.b16 %v284
  %v469 = vunpack.c.l.b16 %v285
  %v470 = vpack.c.b16 %v435, %v430
  %v471 = vpack.c.b16 %v436, %v431
  %v472 = vpack.c.b16 %v437, %v432
  %v473 = vpack.c.b16 %v438, %v433
  %v474 = vpack.c.b16 %v439, %v434
  %v475 = vpack.c.b16 %v445, %v440
  %v476 = vpack.c.b16 %v446, %v441
  %v477 = vpack.c.b16 %v447, %v442
  %v478 = vpack.c.b16 %v448, %v443
  %v479 = vpack.c.b16 %v449, %v444
  %v480 = vpack.c.b16 %v455, %v450
  %v481 = vpack.c.b16 %v456, %v451
  %v482 = vpack.c.b16 %v457, %v452
  %v483 = vpack.c.b16 %v458, %v453
  %v484 = vpack.c.b16 %v459, %v454
  %v485 = vpack.c.b16 %v465, %v460
  %v486 = vpack.c.b16 %v466, %v461
  %v487 = vpack.c.b16 %v467, %v462
  %v488 = vpack.c.b16 %v468, %v463
  %v489 = vpack.c.b16 %v469, %v464
  %v578 = vunpack.c.l.b16 %v286
  %v579 = vunpack.c.l.b16 %v287
  %v580 = vunpack.c.l.b16 %v288
  %v581 = vunpack.c.l.b16 %v289
  %v582 = vunpack.c.l.b16 %v290
  %v583 = vunpack.c.l.b16 %v291
  %v584 = vunpack.c.l.b16 %v292
  %v585 = vunpack.c.l.b16 %v293
  %v586 = vunpack.c.l.b16 %v294
  %v587 = vunpack.c.l.b16 %v295
  %v588 = vunpack.c.l.b16 %v296
  %v589 = vunpack.c.l.b16 %v297
  %v590 = vunpack.c.l.b16 %v298
  %v591 = vunpack.c.l.b16 %v299
  %v592 = vunpack.c.l.b16 %v300
  %v593 = vunpack.c.l.b16 %v301
  %v594 = vunpack.c.l.b16 %v302
  %v595 = vunpack.c.l.b16 %v303
  %v596 = vunpack.c.l.b16 %v304
  %v597 = vunpack.c.l.b16 %v305
  %v598 = vunpack.c.l.b16 %v306
  %v599 = vunpack.c.l.b16 %v307
  %v600 = vunpack.c.l.b16 %v308
  %v601 = vunpack.c.l.b16 %v309
  %v602 = vunpack.c.l.b16 %v310
  %v603 = vunpack.c.l.b16 %v311
  %v604 = vunpack.c.l.b16 %v312
  %v605 = vunpack.c.l.b16 %v313
  %v606 = vunpack.c.l.b16 %v314
  %v607 = vunpack.c.l.b16 %v315
  %v608 = vunpack.c.l.b16 %v316
  %v609 = vunpack.c.l.b16 %v317
  %v610 = vunpack.c.l.b16 %v318
  %v611 = vunpack.c.l.b16 %v319
  %v612 = vunpack.c.l.b16 %v320
  %v613 = vunpack.c.l.b16 %v321
  %v614 = vunpack.c.l.b16 %v322
  %v615 = vunpack.c.l.b16 %v323
  %v616 = vunpack.c.l.b16 %v324
  %v617 = vunpack.c.l.b16 %v325
  %v618 = vunpack.c.l.b16 %v326
  %v619 = vunpack.c.l.b16 %v327
  %v620 = vunpack.c.l.b16 %v328
  %v621 = vunpack.c.l.b16 %v329
  %v622 = vunpack.c.l.b16 %v330
  %v623 = vunpack.c.l.b16 %v331
  %v624 = vunpack.c.l.b16 %v332
  %v625 = vunpack.c.l.b16 %v333
  %v626 = vunpack.c.l.b16 %v334
  %v627 = vunpack.c.l.b16 %v335
  %v628 = vunpack.c.l.b16 %v336
  %v629 = vunpack.c.l.b16 %v337
  %v630 = vunpack.c.l.b16 %v338
  %v631 = vunpack.c.l.b16 %v339
  %v632 = vunpack.c.l.b16 %v340
  %v633 = vunpack.c.l.b16 %v341
  %v634 = vunpack.c.l.b16 %v342
  %v635 = vunpack.c.l.b16 %v343
  %v636 = vunpack.c.l.b16 %v344
  %v637 = vunpack.c.l.b16 %v345
  %v638 = vunpack.c.l.b16 %v346
  %v639 = vunpack.c.l.b16 %v347
  %v640 = vunpack.c.l.b16 %v348
  %v641 = vunpack.c.l.b16 %v349
  %v642 = vunpack.c.l.b16 %v350
  %v643 = vunpack.c.l.b16 %v351
  %v644 = vunpack.c.l.b16 %v352
  %v645 = vunpack.c.l.b16 %v353
  %v646 = vunpack.c.l.b16 %v354
  %v647 = vunpack.c.l.b16 %v355
  %v648 = vunpack.c.l.b16 %v356
  %v649 = vunpack.c.l.b16 %v357
  %v650 = vpack.c.b16 %v579, %v578
  %v651 = vpack.c.b16 %v581, %v580
  %v652 = vpack.c.b16 %v583, %v582
  %v653 = vpack.c.b16 %v585, %v584
  %v654 = vpack.c.b16 %v587, %v586
  %v655 = vpack.c.b16 %v589, %v588
  %v656 = vpack.c.b16 %v591, %v590
  %v657 = vpack.c.b16 %v593, %v592
  %v658 = vpack.c.b16 %v595, %v594
  %v659 = vpack.c.b16 %v597, %v596
  %v660 = vpack.c.b16 %v599, %v598
  %v661 = vpack.c.b16 %v601, %v600
  %v662 = vpack.c.b16 %v603, %v602
  %v663 = vpack.c.b16 %v605, %v604
  %v664 = vpack.c.b16 %v607, %v606
  %v665 = vpack.c.b16 %v609, %v608
  %v666 = vpack.c.b16 %v611, %v610
  %v667 = vpack.c.b16 %v613, %v612
  %v668 = vpack.c.b16 %v615, %v614
  %v669 = vpack.c.b16 %v617, %v616
  %v670 = vpack.c.b16 %v619, %v618
  %v671 = vpack.c.b16 %v621, %v620
  %v672 = vpack.c.b16 %v623, %v622
  %v673 = vpack.c.b16 %v625, %v624
  %v674 = vpack.c.b16 %v627, %v626
  %v675 = vpack.c.b16 %v629, %v628
  %v676 = vpack.c.b16 %v631, %v630
  %v677 = vpack.c.b16 %v633, %v632
  %v678 = vpack.c.b16 %v635, %v634
  %v679 = vpack.c.b16 %v637, %v636
  %v680 = vpack.c.b16 %v639, %v638
  %v681 = vpack.c.b16 %v641, %v640
  %v682 = vpack.c.b16 %v643, %v642
  %v683 = vpack.c.b16 %v645, %v644
  %v684 = vpack.c.b16 %v647, %v646
  %v685 = vpack.c.b16 %v649, %v648
  %v723 = vsel %vm164, %v474, 0
  %v726 = vsel %vm164, %v479, 0
  %v729 = vsel %vm164, %v484, 0
  %v732 = vsel %vm164, %v489, 0
  %734 = vmatprep.subr.bf16.mxu0 0
  %735 = vmatpush1.bf16.msra.mxu0 %v657
  %736 = vmatprep.subr.bf16.mxu0 0
  %737 = vmatpush1.bf16.msra.mxu0 %v656
  %738 = vmatprep.subr.bf16.mxu0 0
  %739 = vmatpush1.bf16.msra.mxu0 %v655
  %740 = vmatprep.subr.bf16.mxu0 0
  %741 = vmatpush1.bf16.msra.mxu0 %v654
  %742 = vmatprep.subr.bf16.mxu0 0
  %743 = vmatpush1.bf16.msra.mxu0 %v653
  %744 = vmatprep.subr.bf16.mxu0 0
  %745 = vmatpush1.bf16.msra.mxu0 %v652
  %746 = vmatprep.subr.bf16.mxu0 0
  %747 = vmatpush1.bf16.msra.mxu0 %v651
  %748 = vmatprep.subr.bf16.mxu0 0
  %749 = vmatpush1.bf16.msra.mxu0 %v650
  %750 = vmatprep.subr.bf16.mxu0 0
  %751 = vmatpush2.bf16.msra.mxu0 %v665
  %752 = vmatprep.subr.bf16.mxu0 0
  %753 = vmatpush2.bf16.msra.mxu0 %v664
  %754 = vmatprep.subr.bf16.mxu0 0
  %755 = vmatpush2.bf16.msra.mxu0 %v663
  %756 = vmatprep.subr.bf16.mxu0 0
  %757 = vmatpush2.bf16.msra.mxu0 %v662
  %758 = vmatprep.subr.bf16.mxu0 0
  %759 = vmatpush2.bf16.msra.mxu0 %v661
  %760 = vmatprep.subr.bf16.mxu0 0
  %761 = vmatpush2.bf16.msra.mxu0 %v660
  %762 = vmatprep.subr.bf16.mxu0 0
  %763 = vmatpush2.bf16.msra.mxu0 %v659
  %764 = vmatprep.subr.bf16.mxu0 0
  %765 = vmatpush2.bf16.msra.mxu0 %v658
  %766 = vmatprep.mubr.bf16.mxu0 %v471
  %767 = vmatmul.mubr.bf16.gmra.mxu0 %v470
  %v768 = vpop.f32.mrf.mxu0
  %v769 = vadd.f32 %v369, %v768
  %v770 = vpop.f32.mrf.mxu0
  %v771 = vpop.f32.mrf.mxu0
  %v772 = vadd.f32 %v374, %v771
  %v773 = vpop.f32.mrf.mxu0
  %774 = vmatprep.mubr.bf16.mxu0 %v476
  %775 = vmatmul.mubr.bf16.gmra.mxu0 %v475
  %v776 = vpop.f32.mrf.mxu0
  %v777 = vadd.f32 %v379, %v776
  %v778 = vpop.f32.mrf.mxu0
  %v779 = vpop.f32.mrf.mxu0
  %v780 = vadd.f32 %v384, %v779
  %v781 = vpop.f32.mrf.mxu0
  %782 = vmatprep.mubr.bf16.mxu0 %v481
  %783 = vmatmul.mubr.bf16.gmra.mxu0 %v480
  %v784 = vpop.f32.mrf.mxu0
  %v785 = vadd.f32 %v389, %v784
  %v786 = vpop.f32.mrf.mxu0
  %v787 = vpop.f32.mrf.mxu0
  %v788 = vadd.f32 %v394, %v787
  %v789 = vpop.f32.mrf.mxu0
  %790 = vmatprep.mubr.bf16.mxu0 %v486
  %791 = vmatmul.mubr.bf16.gmra.mxu0 %v485
  %v792 = vpop.f32.mrf.mxu0
  %v793 = vadd.f32 %v399, %v792
  %v794 = vpop.f32.mrf.mxu0
  %v795 = vpop.f32.mrf.mxu0
  %v796 = vadd.f32 %v404, %v795
  %v797 = vpop.f32.mrf.mxu0
  %798 = vdwg.mxu0
  %799 = vmatprep.subr.bf16.mxu0 0
  %800 = vmatpush1.bf16.msra.mxu0 %v673
  %801 = vmatprep.subr.bf16.mxu0 0
  %802 = vmatpush1.bf16.msra.mxu0 %v672
  %803 = vmatprep.subr.bf16.mxu0 0
  %804 = vmatpush1.bf16.msra.mxu0 %v671
  %805 = vmatprep.subr.bf16.mxu0 0
  %806 = vmatpush1.bf16.msra.mxu0 %v670
  %807 = vmatprep.subr.bf16.mxu0 0
  %808 = vmatpush1.bf16.msra.mxu0 %v669
  %809 = vmatprep.subr.bf16.mxu0 0
  %810 = vmatpush1.bf16.msra.mxu0 %v668
  %811 = vmatprep.subr.bf16.mxu0 0
  %812 = vmatpush1.bf16.msra.mxu0 %v667
  %813 = vmatprep.subr.bf16.mxu0 0
  %814 = vmatpush1.bf16.msra.mxu0 %v666
  %815 = vmatprep.subr.bf16.mxu0 0
  %816 = vmatpush2.bf16.msra.mxu0 %v681
  %817 = vmatprep.subr.bf16.mxu0 0
  %818 = vmatpush2.bf16.msra.mxu0 %v680
  %819 = vmatprep.subr.bf16.mxu0 0
  %820 = vmatpush2.bf16.msra.mxu0 %v679
  %821 = vmatprep.subr.bf16.mxu0 0
  %822 = vmatpush2.bf16.msra.mxu0 %v678
  %823 = vmatprep.subr.bf16.mxu0 0
  %824 = vmatpush2.bf16.msra.mxu0 %v677
  %825 = vmatprep.subr.bf16.mxu0 0
  %826 = vmatpush2.bf16.msra.mxu0 %v676
  %827 = vmatprep.subr.bf16.mxu0 0
  %828 = vmatpush2.bf16.msra.mxu0 %v675
  %829 = vmatprep.subr.bf16.mxu0 0
  %830 = vmatpush2.bf16.msra.mxu0 %v674
  %831 = vmatprep.mubr.bf16.mxu0 %v473
  %832 = vmatmul.mubr.bf16.gmra.mxu0 %v472
  %v833 = vpop.f32.mrf.mxu0
  %v834 = vadd.f32 %v769, %v833
  %v835 = vpop.f32.mrf.mxu0
  %v836 = vpop.f32.mrf.mxu0
  %v837 = vadd.f32 %v772, %v836
  %v838 = vpop.f32.mrf.mxu0
  %839 = vmatprep.mubr.bf16.mxu0 %v478
  %840 = vmatmul.mubr.bf16.gmra.mxu0 %v477
  %v841 = vpop.f32.mrf.mxu0
  %v842 = vadd.f32 %v777, %v841
  %v843 = vpop.f32.mrf.mxu0
  %v844 = vpop.f32.mrf.mxu0
  %v845 = vadd.f32 %v780, %v844
  %v846 = vpop.f32.mrf.mxu0
  %847 = vmatprep.mubr.bf16.mxu0 %v483
  %848 = vmatmul.mubr.bf16.gmra.mxu0 %v482
  %v849 = vpop.f32.mrf.mxu0
  %v850 = vadd.f32 %v785, %v849
  %v851 = vpop.f32.mrf.mxu0
  %v852 = vpop.f32.mrf.mxu0
  %v853 = vadd.f32 %v788, %v852
  %v854 = vpop.f32.mrf.mxu0
  %855 = vmatprep.mubr.bf16.mxu0 %v488
  %856 = vmatmul.mubr.bf16.gmra.mxu0 %v487
  %v857 = vpop.f32.mrf.mxu0
  %v858 = vadd.f32 %v793, %v857
  %v859 = vpop.f32.mrf.mxu0
  %v860 = vpop.f32.mrf.mxu0
  %v861 = vadd.f32 %v796, %v860
  %v862 = vpop.f32.mrf.mxu0
  %863 = vdwg.mxu0
  %864 = vmatprep.subr.bf16.mxu0 0
  %865 = vmatpush1.bf16.msra.mxu0 0
  %866 = vmatprep.subr.bf16.mxu0 0
  %867 = vmatpush1.bf16.msra.mxu0 0
  %868 = vmatprep.subr.bf16.mxu0 0
  %869 = vmatpush1.bf16.msra.mxu0 0
  %870 = vmatprep.subr.bf16.mxu0 0
  %871 = vmatpush1.bf16.msra.mxu0 0
  %872 = vmatprep.subr.bf16.mxu0 0
  %873 = vmatpush1.bf16.msra.mxu0 %v685
  %874 = vmatprep.subr.bf16.mxu0 0
  %875 = vmatpush1.bf16.msra.mxu0 %v684
  %876 = vmatprep.subr.bf16.mxu0 0
  %877 = vmatpush1.bf16.msra.mxu0 %v683
  %878 = vmatprep.subr.bf16.mxu0 0
  %879 = vmatpush1.bf16.msra.mxu0 %v682
  %880 = vmatprep.subr.bf16.mxu0 0
  %881 = vmatpush2.bf16.msra.mxu0 0
  %882 = vmatprep.subr.bf16.mxu0 0
  %883 = vmatpush2.bf16.msra.mxu0 0
  %884 = vmatprep.subr.bf16.mxu0 0
  %885 = vmatpush2.bf16.msra.mxu0 0
  %886 = vmatprep.subr.bf16.mxu0 0
  %887 = vmatpush2.bf16.msra.mxu0 0
  %888 = vmatprep.subr.bf16.mxu0 0
  %889 = vmatpush2.bf16.msra.mxu0 0
  %890 = vmatprep.subr.bf16.mxu0 0
  %891 = vmatpush2.bf16.msra.mxu0 0
  %892 = vmatprep.subr.bf16.mxu0 0
  %893 = vmatpush2.bf16.msra.mxu0 0
  %894 = vmatprep.subr.bf16.mxu0 0
  %895 = vmatpush2.bf16.msra.mxu0 0
  %896 = vmatprep.mubr.bf16.mxu0 0
  %897 = vmatmul.mubr.bf16.gmra.mxu0 %v723
  %v898 = vpop.f32.mrf.mxu0
  %v899 = vadd.f32 %v834, %v898
  %v900 = vpop.f32.mrf.mxu0
  %v901 = vpop.f32.mrf.mxu0
  %v902 = vadd.f32 %v837, %v901
  %v903 = vpop.f32.mrf.mxu0
  %904 = vmatprep.mubr.bf16.mxu0 0
  %905 = vmatmul.mubr.bf16.gmra.mxu0 %v726
  %v906 = vpop.f32.mrf.mxu0
  %v907 = vadd.f32 %v842, %v906
  %v908 = vpop.f32.mrf.mxu0
  %v909 = vpop.f32.mrf.mxu0
  %v910 = vadd.f32 %v845, %v909
  %v911 = vpop.f32.mrf.mxu0
  %912 = vmatprep.mubr.bf16.mxu0 0
  %913 = vmatmul.mubr.bf16.gmra.mxu0 %v729
  %v914 = vpop.f32.mrf.mxu0
  %v915 = vadd.f32 %v850, %v914
  %v916 = vpop.f32.mrf.mxu0
  %v917 = vpop.f32.mrf.mxu0
  %v918 = vadd.f32 %v853, %v917
  %v919 = vpop.f32.mrf.mxu0
  %920 = vmatprep.mubr.bf16.mxu0 0
  %921 = vmatmul.mubr.bf16.gmra.mxu0 %v732
  %v922 = vpop.f32.mrf.mxu0
  %v923 = vadd.f32 %v858, %v922
  %v924 = vpop.f32.mrf.mxu0
  %v925 = vpop.f32.mrf.mxu0
  %v926 = vadd.f32 %v861, %v925
  %v927 = vpop.f32.mrf.mxu0
  %928 = vdwg.mxu0
  %v929 = vmax.f32 %v899, 0.0
  %v930 = vmax.f32 %v902, 0.0
  %v931 = vmax.f32 %v907, 0.0
  %v932 = vmax.f32 %v910, 0.0
  %v933 = vmax.f32 %v915, 0.0
  %v934 = vmax.f32 %v918, 0.0
  %v935 = vmax.f32 %v923, 0.0
  %v936 = vmax.f32 %v926, 0.0
  %s937 = scalar_lea.vmem %s6, 32
  %v938 = vld [vmem:[%s937] sm:$0xf]
  %v939 = vld [vmem:[%s937 + $0x4] sm:$0xf]
  %v940 = vld [vmem:[%s937 + $0x8] sm:$0xf]
  %v941 = vld [vmem:[%s937 + $0xc] sm:$0xf]
  %v942 = vld [vmem:[%s937 + $0x10] sm:$0xf]
  %v943 = vld [vmem:[%s937 + $0x14] sm:$0xf]
  %v944 = vld [vmem:[%s937 + $0x18] sm:$0xf]
  %v945 = vld [vmem:[%s937 + $0x1c] sm:$0xf]
  %v946 = vpack.c.bf16 %v930, %v929
  %v947 = vpack.c.bf16 %v932, %v931
  %v948 = vpack.c.bf16 %v934, %v933
  %v949 = vpack.c.bf16 %v936, %v935
  %v958 = vunpack.c.l.b16 %v938
  %v959 = vunpack.c.l.b16 %v939
  %v960 = vunpack.c.l.b16 %v940
  %v961 = vunpack.c.l.b16 %v941
  %v962 = vunpack.c.l.b16 %v942
  %v963 = vunpack.c.l.b16 %v943
  %v964 = vunpack.c.l.b16 %v944
  %v965 = vunpack.c.l.b16 %v945
  %v966 = vpack.c.b16 %v959, %v958
  %v967 = vpack.c.b16 %v961, %v960
  %v968 = vpack.c.b16 %v963, %v962
  %v969 = vpack.c.b16 %v965, %v964
  %v971 = vsel %vm164, %v966, 0
  %v974 = vsel %vm164, %v967, 0
  %v977 = vsel %vm164, %v968, 0
  %v980 = vsel %vm164, %v969, 0
  %982 = vmatprep.subr.bf16.mxu0 0
  %983 = vmatpush1.bf16.msra.mxu0 0
  %984 = vmatprep.subr.bf16.mxu0 0
  %985 = vmatpush1.bf16.msra.mxu0 0
  %986 = vmatprep.subr.bf16.mxu0 0
  %987 = vmatpush1.bf16.msra.mxu0 0
  %988 = vmatprep.subr.bf16.mxu0 0
  %989 = vmatpush1.bf16.msra.mxu0 0
  %990 = vmatprep.subr.bf16.mxu0 0
  %991 = vmatpush1.bf16.msra.mxu0 %v949
  %992 = vmatprep.subr.bf16.mxu0 0
  %993 = vmatpush1.bf16.msra.mxu0 %v948
  %994 = vmatprep.subr.bf16.mxu0 0
  %995 = vmatpush1.bf16.msra.mxu0 %v947
  %996 = vmatprep.subr.bf16.mxu0 0
  %997 = vmatpush1.bf16.msra.mxu0 %v946
  %998 = vmatprep.subr.bf16.mxu0 0
  %999 = vmatpush2.bf16.msra.mxu0 0
  %1000 = vmatprep.subr.bf16.mxu0 0
  %1001 = vmatpush2.bf16.msra.mxu0 0
  %1002 = vmatprep.subr.bf16.mxu0 0
  %1003 = vmatpush2.bf16.msra.mxu0 0
  %1004 = vmatprep.subr.bf16.mxu0 0
  %1005 = vmatpush2.bf16.msra.mxu0 0
  %1006 = vmatprep.subr.bf16.mxu0 0
  %1007 = vmatpush2.bf16.msra.mxu0 0
  %1008 = vmatprep.subr.bf16.mxu0 0
  %1009 = vmatpush2.bf16.msra.mxu0 0
  %1010 = vmatprep.subr.bf16.mxu0 0
  %1011 = vmatpush2.bf16.msra.mxu0 0
  %1012 = vmatprep.subr.bf16.mxu0 0
  %1013 = vmatpush2.bf16.msra.mxu0 0
  %1014 = vmatprep.mubr.bf16.mxu0 0
  %1015 = vmatmul.mubr.bf16.gmra.mxu0 %v971
  %v1016 = vpop.f32.mrf.mxu0
  %v1017 = vadd.f32 0.0, %v1016
  %v1018 = vpop.f32.mrf.mxu0
  %v1019 = vpop.f32.mrf.mxu0
  %v1020 = vadd.f32 0.0, %v1019
  %v1021 = vpop.f32.mrf.mxu0
  %1022 = vmatprep.mubr.bf16.mxu0 0
  %1023 = vmatmul.mubr.bf16.gmra.mxu0 %v974
  %v1024 = vpop.f32.mrf.mxu0
  %v1025 = vadd.f32 0.0, %v1024
  %v1026 = vpop.f32.mrf.mxu0
  %v1027 = vpop.f32.mrf.mxu0
  %v1028 = vadd.f32 0.0, %v1027
  %v1029 = vpop.f32.mrf.mxu0
  %1030 = vmatprep.mubr.bf16.mxu0 0
  %1031 = vmatmul.mubr.bf16.gmra.mxu0 %v977
  %v1032 = vpop.f32.mrf.mxu0
  %v1033 = vadd.f32 0.0, %v1032
  %v1034 = vpop.f32.mrf.mxu0
  %v1035 = vpop.f32.mrf.mxu0
  %v1036 = vadd.f32 0.0, %v1035
  %v1037 = vpop.f32.mrf.mxu0
  %1038 = vmatprep.mubr.bf16.mxu0 0
  %1039 = vmatmul.mubr.bf16.gmra.mxu0 %v980
  %v1040 = vpop.f32.mrf.mxu0
  %v1041 = vadd.f32 0.0, %v1040
  %v1042 = vpop.f32.mrf.mxu0
  %v1043 = vpop.f32.mrf.mxu0
  %v1044 = vadd.f32 0.0, %v1043
  %v1045 = vpop.f32.mrf.mxu0
  %1046 = vdwg.mxu0
  %v1055 = vunpack.c.l.b16 %v250
  %v1056 = vunpack.c.l.b16 %v251
  %v1057 = vunpack.c.l.b16 %v252
  %v1058 = vunpack.c.l.b16 %v253
  %v1059 = vunpack.c.l.b16 %v254
  %v1060 = vunpack.c.l.b16 %v255
  %v1061 = vunpack.c.l.b16 %v256
  %v1062 = vunpack.c.l.b16 %v257
  %v1063 = vpack.c.b16 %v1056, %v1055
  %v1064 = vpack.c.b16 %v1058, %v1057
  %v1065 = vpack.c.b16 %v1060, %v1059
  %v1066 = vpack.c.b16 %v1062, %v1061
  %v1068 = vsel %vm164, %v1063, 0
  %v1071 = vsel %vm164, %v1064, 0
  %v1074 = vsel %vm164, %v1065, 0
  %v1077 = vsel %vm164, %v1066, 0
  %1079 = vmatprep.subr.bf16.mxu0 0
  %1080 = vmatpush1.bf16.msra.mxu0 0
  %1081 = vmatprep.subr.bf16.mxu0 0
  %1082 = vmatpush1.bf16.msra.mxu0 0
  %1083 = vmatprep.subr.bf16.mxu0 0
  %1084 = vmatpush1.bf16.msra.mxu0 0
  %1085 = vmatprep.subr.bf16.mxu0 0
  %1086 = vmatpush1.bf16.msra.mxu0 0
  %1087 = vmatprep.subr.bf16.mxu0 0
  %1088 = vmatpush1.bf16.msra.mxu0 %v261
  %1089 = vmatprep.subr.bf16.mxu0 0
  %1090 = vmatpush1.bf16.msra.mxu0 %v260
  %1091 = vmatprep.subr.bf16.mxu0 0
  %1092 = vmatpush1.bf16.msra.mxu0 %v259
  %1093 = vmatprep.subr.bf16.mxu0 0
  %1094 = vmatpush1.bf16.msra.mxu0 %v258
  %1095 = vmatprep.subr.bf16.mxu0 0
  %1096 = vmatpush2.bf16.msra.mxu0 0
  %1097 = vmatprep.subr.bf16.mxu0 0
  %1098 = vmatpush2.bf16.msra.mxu0 0
  %1099 = vmatprep.subr.bf16.mxu0 0
  %1100 = vmatpush2.bf16.msra.mxu0 0
  %1101 = vmatprep.subr.bf16.mxu0 0
  %1102 = vmatpush2.bf16.msra.mxu0 0
  %1103 = vmatprep.subr.bf16.mxu0 0
  %1104 = vmatpush2.bf16.msra.mxu0 0
  %1105 = vmatprep.subr.bf16.mxu0 0
  %1106 = vmatpush2.bf16.msra.mxu0 0
  %1107 = vmatprep.subr.bf16.mxu0 0
  %1108 = vmatpush2.bf16.msra.mxu0 0
  %1109 = vmatprep.subr.bf16.mxu0 0
  %1110 = vmatpush2.bf16.msra.mxu0 0
  %1111 = vmatprep.mubr.bf16.mxu0 0
  %1112 = vmatmul.mubr.bf16.gmra.mxu0 %v1068
  %v1113 = vpop.f32.mrf.mxu0
  %v1114 = vadd.f32 %v1017, %v1113
  %v1115 = vpop.f32.mrf.mxu0
  %v1116 = vpop.f32.mrf.mxu0
  %v1117 = vadd.f32 %v1020, %v1116
  %v1118 = vpop.f32.mrf.mxu0
  %1119 = vmatprep.mubr.bf16.mxu0 0
  %1120 = vmatmul.mubr.bf16.gmra.mxu0 %v1071
  %v1121 = vpop.f32.mrf.mxu0
  %v1122 = vadd.f32 %v1025, %v1121
  %v1123 = vpop.f32.mrf.mxu0
  %v1124 = vpop.f32.mrf.mxu0
  %v1125 = vadd.f32 %v1028, %v1124
  %v1126 = vpop.f32.mrf.mxu0
  %1127 = vmatprep.mubr.bf16.mxu0 0
  %1128 = vmatmul.mubr.bf16.gmra.mxu0 %v1074
  %v1129 = vpop.f32.mrf.mxu0
  %v1130 = vadd.f32 %v1033, %v1129
  %v1131 = vpop.f32.mrf.mxu0
  %v1132 = vpop.f32.mrf.mxu0
  %v1133 = vadd.f32 %v1036, %v1132
  %v1134 = vpop.f32.mrf.mxu0
  %1135 = vmatprep.mubr.bf16.mxu0 0
  %1136 = vmatmul.mubr.bf16.gmra.mxu0 %v1077
  %v1137 = vpop.f32.mrf.mxu0
  %v1138 = vadd.f32 %v1041, %v1137
  %v1139 = vpop.f32.mrf.mxu0
  %v1140 = vpop.f32.mrf.mxu0
  %v1141 = vadd.f32 %v1044, %v1140
  %v1142 = vpop.f32.mrf.mxu0
  %1143 = vdwg.mxu0
  %s1144 = scalar_lea.vmem %s4, 160
  %v1145 = vld [vmem:[%s1144] sm:$0xff]
  %v1146 = vld [vmem:[%s1144 + $0x8] sm:$0xff]
  %v1147 = vld [vmem:[%s1144 + $0x10] sm:$0xf]
  %v1148 = vld [vmem:[%s1144 + $0x14] sm:$0xff]
  %v1149 = vld [vmem:[%s1144 + $0x1c] sm:$0xff]
  %v1150 = vld [vmem:[%s1144 + $0x24] sm:$0xf]
  %v1151 = vld [vmem:[%s1144 + $0x28] sm:$0xff]
  %v1152 = vld [vmem:[%s1144 + $0x30] sm:$0xff]
  %v1153 = vld [vmem:[%s1144 + $0x38] sm:$0xf]
  %v1154 = vld [vmem:[%s1144 + $0x3c] sm:$0xff]
  %v1155 = vld [vmem:[%s1144 + $0x44] sm:$0xff]
  %v1156 = vld [vmem:[%s1144 + $0x4c] sm:$0xf]
  %v1157 = vld [vmem:[%s1144 + $0x50] sm:$0xff]
  %v1158 = vld [vmem:[%s1144 + $0x58] sm:$0xff]
  %v1159 = vld [vmem:[%s1144 + $0x60] sm:$0xf]
  %v1160 = vld [vmem:[%s1144 + $0x64] sm:$0xff]
  %v1161 = vld [vmem:[%s1144 + $0x6c] sm:$0xff]
  %v1162 = vld [vmem:[%s1144 + $0x74] sm:$0xf]
  %v1163 = vld [vmem:[%s1144 + $0x78] sm:$0xff]
  %v1164 = vld [vmem:[%s1144 + $0x80] sm:$0xff]
  %v1165 = vld [vmem:[%s1144 + $0x88] sm:$0xf]
  %v1166 = vld [vmem:[%s1144 + $0x8c] sm:$0xff]
  %v1167 = vld [vmem:[%s1144 + $0x94] sm:$0xff]
  %v1168 = vld [vmem:[%s1144 + $0x9c] sm:$0xf]
  %s1169 = scalar_lea.vmem %s1, 288
  %v1170 = vld [vmem:[%s1169] sm:$0xf]
  %v1171 = vld [vmem:[%s1169 + $0x4] sm:$0xf]
  %v1172 = vld [vmem:[%s1169 + $0x8] sm:$0xf]
  %v1173 = vld [vmem:[%s1169 + $0xc] sm:$0xf]
  %v1174 = vld [vmem:[%s1169 + $0x10] sm:$0xf]
  %v1175 = vld [vmem:[%s1169 + $0x14] sm:$0xf]
  %v1176 = vld [vmem:[%s1169 + $0x18] sm:$0xf]
  %v1177 = vld [vmem:[%s1169 + $0x1c] sm:$0xf]
  %v1178 = vld [vmem:[%s1169 + $0x20] sm:$0xf]
  %v1179 = vld [vmem:[%s1169 + $0x24] sm:$0xf]
  %v1180 = vld [vmem:[%s1169 + $0x28] sm:$0xf]
  %v1181 = vld [vmem:[%s1169 + $0x2c] sm:$0xf]
  %v1182 = vld [vmem:[%s1169 + $0x30] sm:$0xf]
  %v1183 = vld [vmem:[%s1169 + $0x34] sm:$0xf]
  %v1184 = vld [vmem:[%s1169 + $0x38] sm:$0xf]
  %v1185 = vld [vmem:[%s1169 + $0x3c] sm:$0xf]
  %v1186 = vld [vmem:[%s1169 + $0x40] sm:$0xf]
  %v1187 = vld [vmem:[%s1169 + $0x44] sm:$0xf]
  %v1188 = vld [vmem:[%s1169 + $0x48] sm:$0xf]
  %v1189 = vld [vmem:[%s1169 + $0x4c] sm:$0xf]
  %v1190 = vld [vmem:[%s1169 + $0x50] sm:$0xf]
  %v1191 = vld [vmem:[%s1169 + $0x54] sm:$0xf]
  %v1192 = vld [vmem:[%s1169 + $0x58] sm:$0xf]
  %v1193 = vld [vmem:[%s1169 + $0x5c] sm:$0xf]
  %v1194 = vld [vmem:[%s1169 + $0x60] sm:$0xf]
  %v1195 = vld [vmem:[%s1169 + $0x64] sm:$0xf]
  %v1196 = vld [vmem:[%s1169 + $0x68] sm:$0xf]
  %v1197 = vld [vmem:[%s1169 + $0x6c] sm:$0xf]
  %v1198 = vld [vmem:[%s1169 + $0x70] sm:$0xf]
  %v1199 = vld [vmem:[%s1169 + $0x74] sm:$0xf]
  %v1200 = vld [vmem:[%s1169 + $0x78] sm:$0xf]
  %v1201 = vld [vmem:[%s1169 + $0x7c] sm:$0xf]
  %v1202 = vld [vmem:[%s1169 + $0x80] sm:$0xf]
  %v1203 = vld [vmem:[%s1169 + $0x84] sm:$0xf]
  %v1204 = vld [vmem:[%s1169 + $0x88] sm:$0xf]
  %v1205 = vld [vmem:[%s1169 + $0x8c] sm:$0xf]
  %v1206 = vld [vmem:[%s1169 + $0x90] sm:$0xf]
  %v1207 = vld [vmem:[%s1169 + $0x94] sm:$0xf]
  %v1208 = vld [vmem:[%s1169 + $0x98] sm:$0xf]
  %v1209 = vld [vmem:[%s1169 + $0x9c] sm:$0xf]
  %v1210 = vld [vmem:[%s1169 + $0xa0] sm:$0xf]
  %v1211 = vld [vmem:[%s1169 + $0xa4] sm:$0xf]
  %v1212 = vld [vmem:[%s1169 + $0xa8] sm:$0xf]
  %v1213 = vld [vmem:[%s1169 + $0xac] sm:$0xf]
  %v1214 = vld [vmem:[%s1169 + $0xb0] sm:$0xf]
  %v1215 = vld [vmem:[%s1169 + $0xb4] sm:$0xf]
  %v1216 = vld [vmem:[%s1169 + $0xb8] sm:$0xf]
  %v1217 = vld [vmem:[%s1169 + $0xbc] sm:$0xf]
  %v1218 = vld [vmem:[%s1169 + $0xc0] sm:$0xf]
  %v1219 = vld [vmem:[%s1169 + $0xc4] sm:$0xf]
  %v1220 = vld [vmem:[%s1169 + $0xc8] sm:$0xf]
  %v1221 = vld [vmem:[%s1169 + $0xcc] sm:$0xf]
  %v1222 = vld [vmem:[%s1169 + $0xd0] sm:$0xf]
  %v1223 = vld [vmem:[%s1169 + $0xd4] sm:$0xf]
  %v1224 = vld [vmem:[%s1169 + $0xd8] sm:$0xf]
  %v1225 = vld [vmem:[%s1169 + $0xdc] sm:$0xf]
  %v1226 = vld [vmem:[%s1169 + $0xe0] sm:$0xf]
  %v1227 = vld [vmem:[%s1169 + $0xe4] sm:$0xf]
  %v1228 = vld [vmem:[%s1169 + $0xe8] sm:$0xf]
  %v1229 = vld [vmem:[%s1169 + $0xec] sm:$0xf]
  %v1230 = vld [vmem:[%s1169 + $0xf0] sm:$0xf]
  %v1231 = vld [vmem:[%s1169 + $0xf4] sm:$0xf]
  %v1232 = vld [vmem:[%s1169 + $0xf8] sm:$0xf]
  %v1233 = vld [vmem:[%s1169 + $0xfc] sm:$0xf]
  %v1234 = vld [vmem:[%s1169 + $0x100] sm:$0xf]
  %v1235 = vld [vmem:[%s1169 + $0x104] sm:$0xf]
  %v1236 = vld [vmem:[%s1169 + $0x108] sm:$0xf]
  %v1237 = vld [vmem:[%s1169 + $0x10c] sm:$0xf]
  %v1238 = vld [vmem:[%s1169 + $0x110] sm:$0xf]
  %v1239 = vld [vmem:[%s1169 + $0x114] sm:$0xf]
  %v1240 = vld [vmem:[%s1169 + $0x118] sm:$0xf]
  %v1241 = vld [vmem:[%s1169 + $0x11c] sm:$0xf]
  %s1242 = scalar_lea.vmem %s5, 64
  %v1243 = vld [vmem:[%s1242] sm:$0xff]
  %v1244 = vld [vmem:[%s1242 + $0x8] sm:$0xff]
  %v1245 = vld [vmem:[%s1242 + $0x10] sm:$0xff]
  %v1246 = vld [vmem:[%s1242 + $0x18] sm:$0xff]
  %v1247 = vld [vmem:[%s1242 + $0x20] sm:$0xff]
  %v1248 = vld [vmem:[%s1242 + $0x28] sm:$0xff]
  %v1249 = vld [vmem:[%s1242 + $0x30] sm:$0xff]
  %v1250 = vld [vmem:[%s1242 + $0x38] sm:$0xff]
  %1252 = vset.pattern.permute.xlu0 0
  %1253 = vperm.xlu0 %1252, %v1243
  %v1254 = vpop.permute.xlu0 %1253
  %1257 = vset.pattern.permute.xlu0 0
  %1258 = vperm.xlu0 %1257, %v1244
  %v1259 = vpop.permute.xlu0 %1258
  %1262 = vset.pattern.permute.xlu0 0
  %1263 = vperm.xlu0 %1262, %v1245
  %v1264 = vpop.permute.xlu0 %1263
  %1267 = vset.pattern.permute.xlu0 0
  %1268 = vperm.xlu0 %1267, %v1246
  %v1269 = vpop.permute.xlu0 %1268
  %1272 = vset.pattern.permute.xlu0 0
  %1273 = vperm.xlu0 %1272, %v1247
  %v1274 = vpop.permute.xlu0 %1273
  %1277 = vset.pattern.permute.xlu0 0
  %1278 = vperm.xlu0 %1277, %v1248
  %v1279 = vpop.permute.xlu0 %1278
  %1282 = vset.pattern.permute.xlu0 0
  %1283 = vperm.xlu0 %1282, %v1249
  %v1284 = vpop.permute.xlu0 %1283
  %1287 = vset.pattern.permute.xlu0 0
  %1288 = vperm.xlu0 %1287, %v1250
  %v1289 = vpop.permute.xlu0 %1288
  %v1315 = vunpack.c.l.b16 %v1145
  %v1316 = vunpack.c.h.b16 %v1145
  %v1317 = vunpack.c.l.b16 %v1146
  %v1318 = vunpack.c.h.b16 %v1146
  %v1319 = vunpack.c.l.b16 %v1147
  %v1320 = vunpack.c.l.b16 %v1148
  %v1321 = vunpack.c.h.b16 %v1148
  %v1322 = vunpack.c.l.b16 %v1149
  %v1323 = vunpack.c.h.b16 %v1149
  %v1324 = vunpack.c.l.b16 %v1150
  %v1325 = vunpack.c.l.b16 %v1151
  %v1326 = vunpack.c.h.b16 %v1151
  %v1327 = vunpack.c.l.b16 %v1152
  %v1328 = vunpack.c.h.b16 %v1152
  %v1329 = vunpack.c.l.b16 %v1153
  %v1330 = vunpack.c.l.b16 %v1154
  %v1331 = vunpack.c.h.b16 %v1154
  %v1332 = vunpack.c.l.b16 %v1155
  %v1333 = vunpack.c.h.b16 %v1155
  %v1334 = vunpack.c.l.b16 %v1156
  %v1335 = vunpack.c.l.b16 %v1157
  %v1336 = vunpack.c.h.b16 %v1157
  %v1337 = vunpack.c.l.b16 %v1158
  %v1338 = vunpack.c.h.b16 %v1158
  %v1339 = vunpack.c.l.b16 %v1159
  %v1340 = vunpack.c.l.b16 %v1160
  %v1341 = vunpack.c.h.b16 %v1160
  %v1342 = vunpack.c.l.b16 %v1161
  %v1343 = vunpack.c.h.b16 %v1161
  %v1344 = vunpack.c.l.b16 %v1162
  %v1345 = vunpack.c.l.b16 %v1163
  %v1346 = vunpack.c.h.b16 %v1163
  %v1347 = vunpack.c.l.b16 %v1164
  %v1348 = vunpack.c.h.b16 %v1164
  %v1349 = vunpack.c.l.b16 %v1165
  %v1350 = vunpack.c.l.b16 %v1166
  %v1351 = vunpack.c.h.b16 %v1166
  %v1352 = vunpack.c.l.b16 %v1167
  %v1353 = vunpack.c.h.b16 %v1167
  %v1354 = vunpack.c.l.b16 %v1168
  %v1355 = vpack.c.b16 %v1320, %v1315
  %v1356 = vpack.c.b16 %v1321, %v1316
  %v1357 = vpack.c.b16 %v1322, %v1317
  %v1358 = vpack.c.b16 %v1323, %v1318
  %v1359 = vpack.c.b16 %v1324, %v1319
  %v1360 = vpack.c.b16 %v1330, %v1325
  %v1361 = vpack.c.b16 %v1331, %v1326
  %v1362 = vpack.c.b16 %v1332, %v1327
  %v1363 = vpack.c.b16 %v1333, %v1328
  %v1364 = vpack.c.b16 %v1334, %v1329
  %v1365 = vpack.c.b16 %v1340, %v1335
  %v1366 = vpack.c.b16 %v1341, %v1336
  %v1367 = vpack.c.b16 %v1342, %v1337
  %v1368 = vpack.c.b16 %v1343, %v1338
  %v1369 = vpack.c.b16 %v1344, %v1339
  %v1370 = vpack.c.b16 %v1350, %v1345
  %v1371 = vpack.c.b16 %v1351, %v1346
  %v1372 = vpack.c.b16 %v1352, %v1347
  %v1373 = vpack.c.b16 %v1353, %v1348
  %v1374 = vpack.c.b16 %v1354, %v1349
  %v1463 = vunpack.c.l.b16 %v1170
  %v1464 = vunpack.c.l.b16 %v1171
  %v1465 = vunpack.c.l.b16 %v1172
  %v1466 = vunpack.c.l.b16 %v1173
  %v1467 = vunpack.c.l.b16 %v1174
  %v1468 = vunpack.c.l.b16 %v1175
  %v1469 = vunpack.c.l.b16 %v1176
  %v1470 = vunpack.c.l.b16 %v1177
  %v1471 = vunpack.c.l.b16 %v1178
  %v1472 = vunpack.c.l.b16 %v1179
  %v1473 = vunpack.c.l.b16 %v1180
  %v1474 = vunpack.c.l.b16 %v1181
  %v1475 = vunpack.c.l.b16 %v1182
  %v1476 = vunpack.c.l.b16 %v1183
  %v1477 = vunpack.c.l.b16 %v1184
  %v1478 = vunpack.c.l.b16 %v1185
  %v1479 = vunpack.c.l.b16 %v1186
  %v1480 = vunpack.c.l.b16 %v1187
  %v1481 = vunpack.c.l.b16 %v1188
  %v1482 = vunpack.c.l.b16 %v1189
  %v1483 = vunpack.c.l.b16 %v1190
  %v1484 = vunpack.c.l.b16 %v1191
  %v1485 = vunpack.c.l.b16 %v1192
  %v1486 = vunpack.c.l.b16 %v1193
  %v1487 = vunpack.c.l.b16 %v1194
  %v1488 = vunpack.c.l.b16 %v1195
  %v1489 = vunpack.c.l.b16 %v1196
  %v1490 = vunpack.c.l.b16 %v1197
  %v1491 = vunpack.c.l.b16 %v1198
  %v1492 = vunpack.c.l.b16 %v1199
  %v1493 = vunpack.c.l.b16 %v1200
  %v1494 = vunpack.c.l.b16 %v1201
  %v1495 = vunpack.c.l.b16 %v1202
  %v1496 = vunpack.c.l.b16 %v1203
  %v1497 = vunpack.c.l.b16 %v1204
  %v1498 = vunpack.c.l.b16 %v1205
  %v1499 = vunpack.c.l.b16 %v1206
  %v1500 = vunpack.c.l.b16 %v1207
  %v1501 = vunpack.c.l.b16 %v1208
  %v1502 = vunpack.c.l.b16 %v1209
  %v1503 = vunpack.c.l.b16 %v1210
  %v1504 = vunpack.c.l.b16 %v1211
  %v1505 = vunpack.c.l.b16 %v1212
  %v1506 = vunpack.c.l.b16 %v1213
  %v1507 = vunpack.c.l.b16 %v1214
  %v1508 = vunpack.c.l.b16 %v1215
  %v1509 = vunpack.c.l.b16 %v1216
  %v1510 = vunpack.c.l.b16 %v1217
  %v1511 = vunpack.c.l.b16 %v1218
  %v1512 = vunpack.c.l.b16 %v1219
  %v1513 = vunpack.c.l.b16 %v1220
  %v1514 = vunpack.c.l.b16 %v1221
  %v1515 = vunpack.c.l.b16 %v1222
  %v1516 = vunpack.c.l.b16 %v1223
  %v1517 = vunpack.c.l.b16 %v1224
  %v1518 = vunpack.c.l.b16 %v1225
  %v1519 = vunpack.c.l.b16 %v1226
  %v1520 = vunpack.c.l.b16 %v1227
  %v1521 = vunpack.c.l.b16 %v1228
  %v1522 = vunpack.c.l.b16 %v1229
  %v1523 = vunpack.c.l.b16 %v1230
  %v1524 = vunpack.c.l.b16 %v1231
  %v1525 = vunpack.c.l.b16 %v1232
  %v1526 = vunpack.c.l.b16 %v1233
  %v1527 = vunpack.c.l.b16 %v1234
  %v1528 = vunpack.c.l.b16 %v1235
  %v1529 = vunpack.c.l.b16 %v1236
  %v1530 = vunpack.c.l.b16 %v1237
  %v1531 = vunpack.c.l.b16 %v1238
  %v1532 = vunpack.c.l.b16 %v1239
  %v1533 = vunpack.c.l.b16 %v1240
  %v1534 = vunpack.c.l.b16 %v1241
  %v1535 = vpack.c.b16 %v1464, %v1463
  %v1536 = vpack.c.b16 %v1466, %v1465
  %v1537 = vpack.c.b16 %v1468, %v1467
  %v1538 = vpack.c.b16 %v1470, %v1469
  %v1539 = vpack.c.b16 %v1472, %v1471
  %v1540 = vpack.c.b16 %v1474, %v1473
  %v1541 = vpack.c.b16 %v1476, %v1475
  %v1542 = vpack.c.b16 %v1478, %v1477
  %v1543 = vpack.c.b16 %v1480, %v1479
  %v1544 = vpack.c.b16 %v1482, %v1481
  %v1545 = vpack.c.b16 %v1484, %v1483
  %v1546 = vpack.c.b16 %v1486, %v1485
  %v1547 = vpack.c.b16 %v1488, %v1487
  %v1548 = vpack.c.b16 %v1490, %v1489
  %v1549 = vpack.c.b16 %v1492, %v1491
  %v1550 = vpack.c.b16 %v1494, %v1493
  %v1551 = vpack.c.b16 %v1496, %v1495
  %v1552 = vpack.c.b16 %v1498, %v1497
  %v1553 = vpack.c.b16 %v1500, %v1499
  %v1554 = vpack.c.b16 %v1502, %v1501
  %v1555 = vpack.c.b16 %v1504, %v1503
  %v1556 = vpack.c.b16 %v1506, %v1505
  %v1557 = vpack.c.b16 %v1508, %v1507
  %v1558 = vpack.c.b16 %v1510, %v1509
  %v1559 = vpack.c.b16 %v1512, %v1511
  %v1560 = vpack.c.b16 %v1514, %v1513
  %v1561 = vpack.c.b16 %v1516, %v1515
  %v1562 = vpack.c.b16 %v1518, %v1517
  %v1563 = vpack.c.b16 %v1520, %v1519
  %v1564 = vpack.c.b16 %v1522, %v1521
  %v1565 = vpack.c.b16 %v1524, %v1523
  %v1566 = vpack.c.b16 %v1526, %v1525
  %v1567 = vpack.c.b16 %v1528, %v1527
  %v1568 = vpack.c.b16 %v1530, %v1529
  %v1569 = vpack.c.b16 %v1532, %v1531
  %v1570 = vpack.c.b16 %v1534, %v1533
  %v1608 = vsel %vm164, %v1359, 0
  %v1611 = vsel %vm164, %v1364, 0
  %v1614 = vsel %vm164, %v1369, 0
  %v1617 = vsel %vm164, %v1374, 0
  %1619 = vmatprep.subr.bf16.mxu0 0
  %1620 = vmatpush1.bf16.msra.mxu0 %v1542
  %1621 = vmatprep.subr.bf16.mxu0 0
  %1622 = vmatpush1.bf16.msra.mxu0 %v1541
  %1623 = vmatprep.subr.bf16.mxu0 0
  %1624 = vmatpush1.bf16.msra.mxu0 %v1540
  %1625 = vmatprep.subr.bf16.mxu0 0
  %1626 = vmatpush1.bf16.msra.mxu0 %v1539
  %1627 = vmatprep.subr.bf16.mxu0 0
  %1628 = vmatpush1.bf16.msra.mxu0 %v1538
  %1629 = vmatprep.subr.bf16.mxu0 0
  %1630 = vmatpush1.bf16.msra.mxu0 %v1537
  %1631 = vmatprep.subr.bf16.mxu0 0
  %1632 = vmatpush1.bf16.msra.mxu0 %v1536
  %1633 = vmatprep.subr.bf16.mxu0 0
  %1634 = vmatpush1.bf16.msra.mxu0 %v1535
  %1635 = vmatprep.subr.bf16.mxu0 0
  %1636 = vmatpush2.bf16.msra.mxu0 %v1550
  %1637 = vmatprep.subr.bf16.mxu0 0
  %1638 = vmatpush2.bf16.msra.mxu0 %v1549
  %1639 = vmatprep.subr.bf16.mxu0 0
  %1640 = vmatpush2.bf16.msra.mxu0 %v1548
  %1641 = vmatprep.subr.bf16.mxu0 0
  %1642 = vmatpush2.bf16.msra.mxu0 %v1547
  %1643 = vmatprep.subr.bf16.mxu0 0
  %1644 = vmatpush2.bf16.msra.mxu0 %v1546
  %1645 = vmatprep.subr.bf16.mxu0 0
  %1646 = vmatpush2.bf16.msra.mxu0 %v1545
  %1647 = vmatprep.subr.bf16.mxu0 0
  %1648 = vmatpush2.bf16.msra.mxu0 %v1544
  %1649 = vmatprep.subr.bf16.mxu0 0
  %1650 = vmatpush2.bf16.msra.mxu0 %v1543
  %1651 = vmatprep.mubr.bf16.mxu0 %v1356
  %1652 = vmatmul.mubr.bf16.gmra.mxu0 %v1355
  %v1653 = vpop.f32.mrf.mxu0
  %v1654 = vadd.f32 %v1254, %v1653
  %v1655 = vpop.f32.mrf.mxu0
  %v1656 = vpop.f32.mrf.mxu0
  %v1657 = vadd.f32 %v1259, %v1656
  %v1658 = vpop.f32.mrf.mxu0
  %1659 = vmatprep.mubr.bf16.mxu0 %v1361
  %1660 = vmatmul.mubr.bf16.gmra.mxu0 %v1360
  %v1661 = vpop.f32.mrf.mxu0
  %v1662 = vadd.f32 %v1264, %v1661
  %v1663 = vpop.f32.mrf.mxu0
  %v1664 = vpop.f32.mrf.mxu0
  %v1665 = vadd.f32 %v1269, %v1664
  %v1666 = vpop.f32.mrf.mxu0
  %1667 = vmatprep.mubr.bf16.mxu0 %v1366
  %1668 = vmatmul.mubr.bf16.gmra.mxu0 %v1365
  %v1669 = vpop.f32.mrf.mxu0
  %v1670 = vadd.f32 %v1274, %v1669
  %v1671 = vpop.f32.mrf.mxu0
  %v1672 = vpop.f32.mrf.mxu0
  %v1673 = vadd.f32 %v1279, %v1672
  %v1674 = vpop.f32.mrf.mxu0
  %1675 = vmatprep.mubr.bf16.mxu0 %v1371
  %1676 = vmatmul.mubr.bf16.gmra.mxu0 %v1370
  %v1677 = vpop.f32.mrf.mxu0
  %v1678 = vadd.f32 %v1284, %v1677
  %v1679 = vpop.f32.mrf.mxu0
  %v1680 = vpop.f32.mrf.mxu0
  %v1681 = vadd.f32 %v1289, %v1680
  %v1682 = vpop.f32.mrf.mxu0
  %1683 = vdwg.mxu0
  %1684 = vmatprep.subr.bf16.mxu0 0
  %1685 = vmatpush1.bf16.msra.mxu0 %v1558
  %1686 = vmatprep.subr.bf16.mxu0 0
  %1687 = vmatpush1.bf16.msra.mxu0 %v1557
  %1688 = vmatprep.subr.bf16.mxu0 0
  %1689 = vmatpush1.bf16.msra.mxu0 %v1556
  %1690 = vmatprep.subr.bf16.mxu0 0
  %1691 = vmatpush1.bf16.msra.mxu0 %v1555
  %1692 = vmatprep.subr.bf16.mxu0 0
  %1693 = vmatpush1.bf16.msra.mxu0 %v1554
  %1694 = vmatprep.subr.bf16.mxu0 0
  %1695 = vmatpush1.bf16.msra.mxu0 %v1553
  %1696 = vmatprep.subr.bf16.mxu0 0
  %1697 = vmatpush1.bf16.msra.mxu0 %v1552
  %1698 = vmatprep.subr.bf16.mxu0 0
  %1699 = vmatpush1.bf16.msra.mxu0 %v1551
  %1700 = vmatprep.subr.bf16.mxu0 0
  %1701 = vmatpush2.bf16.msra.mxu0 %v1566
  %1702 = vmatprep.subr.bf16.mxu0 0
  %1703 = vmatpush2.bf16.msra.mxu0 %v1565
  %1704 = vmatprep.subr.bf16.mxu0 0
  %1705 = vmatpush2.bf16.msra.mxu0 %v1564
  %1706 = vmatprep.subr.bf16.mxu0 0
  %1707 = vmatpush2.bf16.msra.mxu0 %v1563
  %1708 = vmatprep.subr.bf16.mxu0 0
  %1709 = vmatpush2.bf16.msra.mxu0 %v1562
  %1710 = vmatprep.subr.bf16.mxu0 0
  %1711 = vmatpush2.bf16.msra.mxu0 %v1561
  %1712 = vmatprep.subr.bf16.mxu0 0
  %1713 = vmatpush2.bf16.msra.mxu0 %v1560
  %1714 = vmatprep.subr.bf16.mxu0 0
  %1715 = vmatpush2.bf16.msra.mxu0 %v1559
  %1716 = vmatprep.mubr.bf16.mxu0 %v1358
  %1717 = vmatmul.mubr.bf16.gmra.mxu0 %v1357
  %v1718 = vpop.f32.mrf.mxu0
  %v1719 = vadd.f32 %v1654, %v1718
  %v1720 = vpop.f32.mrf.mxu0
  %v1721 = vpop.f32.mrf.mxu0
  %v1722 = vadd.f32 %v1657, %v1721
  %v1723 = vpop.f32.mrf.mxu0
  %1724 = vmatprep.mubr.bf16.mxu0 %v1363
  %1725 = vmatmul.mubr.bf16.gmra.mxu0 %v1362
  %v1726 = vpop.f32.mrf.mxu0
  %v1727 = vadd.f32 %v1662, %v1726
  %v1728 = vpop.f32.mrf.mxu0
  %v1729 = vpop.f32.mrf.mxu0
  %v1730 = vadd.f32 %v1665, %v1729
  %v1731 = vpop.f32.mrf.mxu0
  %1732 = vmatprep.mubr.bf16.mxu0 %v1368
  %1733 = vmatmul.mubr.bf16.gmra.mxu0 %v1367
  %v1734 = vpop.f32.mrf.mxu0
  %v1735 = vadd.f32 %v1670, %v1734
  %v1736 = vpop.f32.mrf.mxu0
  %v1737 = vpop.f32.mrf.mxu0
  %v1738 = vadd.f32 %v1673, %v1737
  %v1739 = vpop.f32.mrf.mxu0
  %1740 = vmatprep.mubr.bf16.mxu0 %v1373
  %1741 = vmatmul.mubr.bf16.gmra.mxu0 %v1372
  %v1742 = vpop.f32.mrf.mxu0
  %v1743 = vadd.f32 %v1678, %v1742
  %v1744 = vpop.f32.mrf.mxu0
  %v1745 = vpop.f32.mrf.mxu0
  %v1746 = vadd.f32 %v1681, %v1745
  %v1747 = vpop.f32.mrf.mxu0
  %1748 = vdwg.mxu0
  %1749 = vmatprep.subr.bf16.mxu0 0
  %1750 = vmatpush1.bf16.msra.mxu0 0
  %1751 = vmatprep.subr.bf16.mxu0 0
  %1752 = vmatpush1.bf16.msra.mxu0 0
  %1753 = vmatprep.subr.bf16.mxu0 0
  %1754 = vmatpush1.bf16.msra.mxu0 0
  %1755 = vmatprep.subr.bf16.mxu0 0
  %1756 = vmatpush1.bf16.msra.mxu0 0
  %1757 = vmatprep.subr.bf16.mxu0 0
  %1758 = vmatpush1.bf16.msra.mxu0 %v1570
  %1759 = vmatprep.subr.bf16.mxu0 0
  %1760 = vmatpush1.bf16.msra.mxu0 %v1569
  %1761 = vmatprep.subr.bf16.mxu0 0
  %1762 = vmatpush1.bf16.msra.mxu0 %v1568
  %1763 = vmatprep.subr.bf16.mxu0 0
  %1764 = vmatpush1.bf16.msra.mxu0 %v1567
  %1765 = vmatprep.subr.bf16.mxu0 0
  %1766 = vmatpush2.bf16.msra.mxu0 0
  %1767 = vmatprep.subr.bf16.mxu0 0
  %1768 = vmatpush2.bf16.msra.mxu0 0
  %1769 = vmatprep.subr.bf16.mxu0 0
  %1770 = vmatpush2.bf16.msra.mxu0 0
  %1771 = vmatprep.subr.bf16.mxu0 0
  %1772 = vmatpush2.bf16.msra.mxu0 0
  %1773 = vmatprep.subr.bf16.mxu0 0
  %1774 = vmatpush2.bf16.msra.mxu0 0
  %1775 = vmatprep.subr.bf16.mxu0 0
  %1776 = vmatpush2.bf16.msra.mxu0 0
  %1777 = vmatprep.subr.bf16.mxu0 0
  %1778 = vmatpush2.bf16.msra.mxu0 0
  %1779 = vmatprep.subr.bf16.mxu0 0
  %1780 = vmatpush2.bf16.msra.mxu0 0
  %1781 = vmatprep.mubr.bf16.mxu0 0
  %1782 = vmatmul.mubr.bf16.gmra.mxu0 %v1608
  %v1783 = vpop.f32.mrf.mxu0
  %v1784 = vadd.f32 %v1719, %v1783
  %v1785 = vpop.f32.mrf.mxu0
  %v1786 = vpop.f32.mrf.mxu0
  %v1787 = vadd.f32 %v1722, %v1786
  %v1788 = vpop.f32.mrf.mxu0
  %1789 = vmatprep.mubr.bf16.mxu0 0
  %1790 = vmatmul.mubr.bf16.gmra.mxu0 %v1611
  %v1791 = vpop.f32.mrf.mxu0
  %v1792 = vadd.f32 %v1727, %v1791
  %v1793 = vpop.f32.mrf.mxu0
  %v1794 = vpop.f32.mrf.mxu0
  %v1795 = vadd.f32 %v1730, %v1794
  %v1796 = vpop.f32.mrf.mxu0
  %1797 = vmatprep.mubr.bf16.mxu0 0
  %1798 = vmatmul.mubr.bf16.gmra.mxu0 %v1614
  %v1799 = vpop.f32.mrf.mxu0
  %v1800 = vadd.f32 %v1735, %v1799
  %v1801 = vpop.f32.mrf.mxu0
  %v1802 = vpop.f32.mrf.mxu0
  %v1803 = vadd.f32 %v1738, %v1802
  %v1804 = vpop.f32.mrf.mxu0
  %1805 = vmatprep.mubr.bf16.mxu0 0
  %1806 = vmatmul.mubr.bf16.gmra.mxu0 %v1617
  %v1807 = vpop.f32.mrf.mxu0
  %v1808 = vadd.f32 %v1743, %v1807
  %v1809 = vpop.f32.mrf.mxu0
  %v1810 = vpop.f32.mrf.mxu0
  %v1811 = vadd.f32 %v1746, %v1810
  %v1812 = vpop.f32.mrf.mxu0
  %1813 = vdwg.mxu0
  %v1814 = vmax.f32 %v1784, 0.0
  %v1815 = vmax.f32 %v1787, 0.0
  %v1816 = vmax.f32 %v1792, 0.0
  %v1817 = vmax.f32 %v1795, 0.0
  %v1818 = vmax.f32 %v1800, 0.0
  %v1819 = vmax.f32 %v1803, 0.0
  %v1820 = vmax.f32 %v1808, 0.0
  %v1821 = vmax.f32 %v1811, 0.0
  %s1822 = scalar_lea.vmem %s6, 64
  %v1823 = vld [vmem:[%s1822] sm:$0xf]
  %v1824 = vld [vmem:[%s1822 + $0x4] sm:$0xf]
  %v1825 = vld [vmem:[%s1822 + $0x8] sm:$0xf]
  %v1826 = vld [vmem:[%s1822 + $0xc] sm:$0xf]
  %v1827 = vld [vmem:[%s1822 + $0x10] sm:$0xf]
  %v1828 = vld [vmem:[%s1822 + $0x14] sm:$0xf]
  %v1829 = vld [vmem:[%s1822 + $0x18] sm:$0xf]
  %v1830 = vld [vmem:[%s1822 + $0x1c] sm:$0xf]
  %v1831 = vpack.c.bf16 %v1815, %v1814
  %v1832 = vpack.c.bf16 %v1817, %v1816
  %v1833 = vpack.c.bf16 %v1819, %v1818
  %v1834 = vpack.c.bf16 %v1821, %v1820
  %v1843 = vunpack.c.l.b16 %v1823
  %v1844 = vunpack.c.l.b16 %v1824
  %v1845 = vunpack.c.l.b16 %v1825
  %v1846 = vunpack.c.l.b16 %v1826
  %v1847 = vunpack.c.l.b16 %v1827
  %v1848 = vunpack.c.l.b16 %v1828
  %v1849 = vunpack.c.l.b16 %v1829
  %v1850 = vunpack.c.l.b16 %v1830
  %v1851 = vpack.c.b16 %v1844, %v1843
  %v1852 = vpack.c.b16 %v1846, %v1845
  %v1853 = vpack.c.b16 %v1848, %v1847
  %v1854 = vpack.c.b16 %v1850, %v1849
  %v1856 = vsel %vm164, %v1851, 0
  %v1859 = vsel %vm164, %v1852, 0
  %v1862 = vsel %vm164, %v1853, 0
  %v1865 = vsel %vm164, %v1854, 0
  %1867 = vmatprep.subr.bf16.mxu0 0
  %1868 = vmatpush1.bf16.msra.mxu0 0
  %1869 = vmatprep.subr.bf16.mxu0 0
  %1870 = vmatpush1.bf16.msra.mxu0 0
  %1871 = vmatprep.subr.bf16.mxu0 0
  %1872 = vmatpush1.bf16.msra.mxu0 0
  %1873 = vmatprep.subr.bf16.mxu0 0
  %1874 = vmatpush1.bf16.msra.mxu0 0
  %1875 = vmatprep.subr.bf16.mxu0 0
  %1876 = vmatpush1.bf16.msra.mxu0 %v1834
  %1877 = vmatprep.subr.bf16.mxu0 0
  %1878 = vmatpush1.bf16.msra.mxu0 %v1833
  %1879 = vmatprep.subr.bf16.mxu0 0
  %1880 = vmatpush1.bf16.msra.mxu0 %v1832
  %1881 = vmatprep.subr.bf16.mxu0 0
  %1882 = vmatpush1.bf16.msra.mxu0 %v1831
  %1883 = vmatprep.subr.bf16.mxu0 0
  %1884 = vmatpush2.bf16.msra.mxu0 0
  %1885 = vmatprep.subr.bf16.mxu0 0
  %1886 = vmatpush2.bf16.msra.mxu0 0
  %1887 = vmatprep.subr.bf16.mxu0 0
  %1888 = vmatpush2.bf16.msra.mxu0 0
  %1889 = vmatprep.subr.bf16.mxu0 0
  %1890 = vmatpush2.bf16.msra.mxu0 0
  %1891 = vmatprep.subr.bf16.mxu0 0
  %1892 = vmatpush2.bf16.msra.mxu0 0
  %1893 = vmatprep.subr.bf16.mxu0 0
  %1894 = vmatpush2.bf16.msra.mxu0 0
  %1895 = vmatprep.subr.bf16.mxu0 0
  %1896 = vmatpush2.bf16.msra.mxu0 0
  %1897 = vmatprep.subr.bf16.mxu0 0
  %1898 = vmatpush2.bf16.msra.mxu0 0
  %1899 = vmatprep.mubr.bf16.mxu0 0
  %1900 = vmatmul.mubr.bf16.gmra.mxu0 %v1856
  %v1901 = vpop.f32.mrf.mxu0
  %v1902 = vadd.f32 0.0, %v1901
  %v1903 = vpop.f32.mrf.mxu0
  %v1904 = vpop.f32.mrf.mxu0
  %v1905 = vadd.f32 0.0, %v1904
  %v1906 = vpop.f32.mrf.mxu0
  %1907 = vmatprep.mubr.bf16.mxu0 0
  %1908 = vmatmul.mubr.bf16.gmra.mxu0 %v1859
  %v1909 = vpop.f32.mrf.mxu0
  %v1910 = vadd.f32 0.0, %v1909
  %v1911 = vpop.f32.mrf.mxu0
  %v1912 = vpop.f32.mrf.mxu0
  %v1913 = vadd.f32 0.0, %v1912
  %v1914 = vpop.f32.mrf.mxu0
  %1915 = vmatprep.mubr.bf16.mxu0 0
  %1916 = vmatmul.mubr.bf16.gmra.mxu0 %v1862
  %v1917 = vpop.f32.mrf.mxu0
  %v1918 = vadd.f32 0.0, %v1917
  %v1919 = vpop.f32.mrf.mxu0
  %v1920 = vpop.f32.mrf.mxu0
  %v1921 = vadd.f32 0.0, %v1920
  %v1922 = vpop.f32.mrf.mxu0
  %1923 = vmatprep.mubr.bf16.mxu0 0
  %1924 = vmatmul.mubr.bf16.gmra.mxu0 %v1865
  %v1925 = vpop.f32.mrf.mxu0
  %v1926 = vadd.f32 0.0, %v1925
  %v1927 = vpop.f32.mrf.mxu0
  %v1928 = vpop.f32.mrf.mxu0
  %v1929 = vadd.f32 0.0, %v1928
  %v1930 = vpop.f32.mrf.mxu0
  %1931 = vdwg.mxu0
  %v1932 = vadd.f32 %v1114, %v1902
  %v1933 = vadd.f32 %v1117, %v1905
  %v1934 = vadd.f32 %v1122, %v1910
  %v1935 = vadd.f32 %v1125, %v1913
  %v1936 = vadd.f32 %v1130, %v1918
  %v1937 = vadd.f32 %v1133, %v1921
  %v1938 = vadd.f32 %v1138, %v1926
  %v1939 = vadd.f32 %v1141, %v1929
  %s1940 = scalar_lea.vmem %s4, 320
  %v1941 = vld [vmem:[%s1940] sm:$0xff]
  %v1942 = vld [vmem:[%s1940 + $0x8] sm:$0xff]
  %v1943 = vld [vmem:[%s1940 + $0x10] sm:$0xf]
  %v1944 = vld [vmem:[%s1940 + $0x14] sm:$0xff]
  %v1945 = vld [vmem:[%s1940 + $0x1c] sm:$0xff]
  %v1946 = vld [vmem:[%s1940 + $0x24] sm:$0xf]
  %v1947 = vld [vmem:[%s1940 + $0x28] sm:$0xff]
  %v1948 = vld [vmem:[%s1940 + $0x30] sm:$0xff]
  %v1949 = vld [vmem:[%s1940 + $0x38] sm:$0xf]
  %v1950 = vld [vmem:[%s1940 + $0x3c] sm:$0xff]
  %v1951 = vld [vmem:[%s1940 + $0x44] sm:$0xff]
  %v1952 = vld [vmem:[%s1940 + $0x4c] sm:$0xf]
  %v1953 = vld [vmem:[%s1940 + $0x50] sm:$0xff]
  %v1954 = vld [vmem:[%s1940 + $0x58] sm:$0xff]
  %v1955 = vld [vmem:[%s1940 + $0x60] sm:$0xf]
  %v1956 = vld [vmem:[%s1940 + $0x64] sm:$0xff]
  %v1957 = vld [vmem:[%s1940 + $0x6c] sm:$0xff]
  %v1958 = vld [vmem:[%s1940 + $0x74] sm:$0xf]
  %v1959 = vld [vmem:[%s1940 + $0x78] sm:$0xff]
  %v1960 = vld [vmem:[%s1940 + $0x80] sm:$0xff]
  %v1961 = vld [vmem:[%s1940 + $0x88] sm:$0xf]
  %v1962 = vld [vmem:[%s1940 + $0x8c] sm:$0xff]
  %v1963 = vld [vmem:[%s1940 + $0x94] sm:$0xff]
  %v1964 = vld [vmem:[%s1940 + $0x9c] sm:$0xf]
  %s1965 = scalar_lea.vmem %s1, 576
  %v1966 = vld [vmem:[%s1965] sm:$0xf]
  %v1967 = vld [vmem:[%s1965 + $0x4] sm:$0xf]
  %v1968 = vld [vmem:[%s1965 + $0x8] sm:$0xf]
  %v1969 = vld [vmem:[%s1965 + $0xc] sm:$0xf]
  %v1970 = vld [vmem:[%s1965 + $0x10] sm:$0xf]
  %v1971 = vld [vmem:[%s1965 + $0x14] sm:$0xf]
  %v1972 = vld [vmem:[%s1965 + $0x18] sm:$0xf]
  %v1973 = vld [vmem:[%s1965 + $0x1c] sm:$0xf]
  %v1974 = vld [vmem:[%s1965 + $0x20] sm:$0xf]
  %v1975 = vld [vmem:[%s1965 + $0x24] sm:$0xf]
  %v1976 = vld [vmem:[%s1965 + $0x28] sm:$0xf]
  %v1977 = vld [vmem:[%s1965 + $0x2c] sm:$0xf]
  %v1978 = vld [vmem:[%s1965 + $0x30] sm:$0xf]
  %v1979 = vld [vmem:[%s1965 + $0x34] sm:$0xf]
  %v1980 = vld [vmem:[%s1965 + $0x38] sm:$0xf]
  %v1981 = vld [vmem:[%s1965 + $0x3c] sm:$0xf]
  %v1982 = vld [vmem:[%s1965 + $0x40] sm:$0xf]
  %v1983 = vld [vmem:[%s1965 + $0x44] sm:$0xf]
  %v1984 = vld [vmem:[%s1965 + $0x48] sm:$0xf]
  %v1985 = vld [vmem:[%s1965 + $0x4c] sm:$0xf]
  %v1986 = vld [vmem:[%s1965 + $0x50] sm:$0xf]
  %v1987 = vld [vmem:[%s1965 + $0x54] sm:$0xf]
  %v1988 = vld [vmem:[%s1965 + $0x58] sm:$0xf]
  %v1989 = vld [vmem:[%s1965 + $0x5c] sm:$0xf]
  %v1990 = vld [vmem:[%s1965 + $0x60] sm:$0xf]
  %v1991 = vld [vmem:[%s1965 + $0x64] sm:$0xf]
  %v1992 = vld [vmem:[%s1965 + $0x68] sm:$0xf]
  %v1993 = vld [vmem:[%s1965 + $0x6c] sm:$0xf]
  %v1994 = vld [vmem:[%s1965 + $0x70] sm:$0xf]
  %v1995 = vld [vmem:[%s1965 + $0x74] sm:$0xf]
  %v1996 = vld [vmem:[%s1965 + $0x78] sm:$0xf]
  %v1997 = vld [vmem:[%s1965 + $0x7c] sm:$0xf]
  %v1998 = vld [vmem:[%s1965 + $0x80] sm:$0xf]
  %v1999 = vld [vmem:[%s1965 + $0x84] sm:$0xf]
  %v2000 = vld [vmem:[%s1965 + $0x88] sm:$0xf]
  %v2001 = vld [vmem:[%s1965 + $0x8c] sm:$0xf]
  %v2002 = vld [vmem:[%s1965 + $0x90] sm:$0xf]
  %v2003 = vld [vmem:[%s1965 + $0x94] sm:$0xf]
  %v2004 = vld [vmem:[%s1965 + $0x98] sm:$0xf]
  %v2005 = vld [vmem:[%s1965 + $0x9c] sm:$0xf]
  %v2006 = vld [vmem:[%s1965 + $0xa0] sm:$0xf]
  %v2007 = vld [vmem:[%s1965 + $0xa4] sm:$0xf]
  %v2008 = vld [vmem:[%s1965 + $0xa8] sm:$0xf]
  %v2009 = vld [vmem:[%s1965 + $0xac] sm:$0xf]
  %v2010 = vld [vmem:[%s1965 + $0xb0] sm:$0xf]
  %v2011 = vld [vmem:[%s1965 + $0xb4] sm:$0xf]
  %v2012 = vld [vmem:[%s1965 + $0xb8] sm:$0xf]
  %v2013 = vld [vmem:[%s1965 + $0xbc] sm:$0xf]
  %v2014 = vld [vmem:[%s1965 + $0xc0] sm:$0xf]
  %v2015 = vld [vmem:[%s1965 + $0xc4] sm:$0xf]
  %v2016 = vld [vmem:[%s1965 + $0xc8] sm:$0xf]
  %v2017 = vld [vmem:[%s1965 + $0xcc] sm:$0xf]
  %v2018 = vld [vmem:[%s1965 + $0xd0] sm:$0xf]
  %v2019 = vld [vmem:[%s1965 + $0xd4] sm:$0xf]
  %v2020 = vld [vmem:[%s1965 + $0xd8] sm:$0xf]
  %v2021 = vld [vmem:[%s1965 + $0xdc] sm:$0xf]
  %v2022 = vld [vmem:[%s1965 + $0xe0] sm:$0xf]
  %v2023 = vld [vmem:[%s1965 + $0xe4] sm:$0xf]
  %v2024 = vld [vmem:[%s1965 + $0xe8] sm:$0xf]
  %v2025 = vld [vmem:[%s1965 + $0xec] sm:$0xf]
  %v2026 = vld [vmem:[%s1965 + $0xf0] sm:$0xf]
  %v2027 = vld [vmem:[%s1965 + $0xf4] sm:$0xf]
  %v2028 = vld [vmem:[%s1965 + $0xf8] sm:$0xf]
  %v2029 = vld [vmem:[%s1965 + $0xfc] sm:$0xf]
  %v2030 = vld [vmem:[%s1965 + $0x100] sm:$0xf]
  %v2031 = vld [vmem:[%s1965 + $0x104] sm:$0xf]
  %v2032 = vld [vmem:[%s1965 + $0x108] sm:$0xf]
  %v2033 = vld [vmem:[%s1965 + $0x10c] sm:$0xf]
  %v2034 = vld [vmem:[%s1965 + $0x110] sm:$0xf]
  %v2035 = vld [vmem:[%s1965 + $0x114] sm:$0xf]
  %v2036 = vld [vmem:[%s1965 + $0x118] sm:$0xf]
  %v2037 = vld [vmem:[%s1965 + $0x11c] sm:$0xf]
  %s2038 = scalar_lea.vmem %s5, 128
  %v2039 = vld [vmem:[%s2038] sm:$0xff]
  %v2040 = vld [vmem:[%s2038 + $0x8] sm:$0xff]
  %v2041 = vld [vmem:[%s2038 + $0x10] sm:$0xff]
  %v2042 = vld [vmem:[%s2038 + $0x18] sm:$0xff]
  %v2043 = vld [vmem:[%s2038 + $0x20] sm:$0xff]
  %v2044 = vld [vmem:[%s2038 + $0x28] sm:$0xff]
  %v2045 = vld [vmem:[%s2038 + $0x30] sm:$0xff]
  %v2046 = vld [vmem:[%s2038 + $0x38] sm:$0xff]
  %2048 = vset.pattern.permute.xlu0 0
  %2049 = vperm.xlu0 %2048, %v2039
  %v2050 = vpop.permute.xlu0 %2049
  %2053 = vset.pattern.permute.xlu0 0
  %2054 = vperm.xlu0 %2053, %v2040
  %v2055 = vpop.permute.xlu0 %2054
  %2058 = vset.pattern.permute.xlu0 0
  %2059 = vperm.xlu0 %2058, %v2041
  %v2060 = vpop.permute.xlu0 %2059
  %2063 = vset.pattern.permute.xlu0 0
  %2064 = vperm.xlu0 %2063, %v2042
  %v2065 = vpop.permute.xlu0 %2064
  %2068 = vset.pattern.permute.xlu0 0
  %2069 = vperm.xlu0 %2068, %v2043
  %v2070 = vpop.permute.xlu0 %2069
  %2073 = vset.pattern.permute.xlu0 0
  %2074 = vperm.xlu0 %2073, %v2044
  %v2075 = vpop.permute.xlu0 %2074
  %2078 = vset.pattern.permute.xlu0 0
  %2079 = vperm.xlu0 %2078, %v2045
  %v2080 = vpop.permute.xlu0 %2079
  %2083 = vset.pattern.permute.xlu0 0
  %2084 = vperm.xlu0 %2083, %v2046
  %v2085 = vpop.permute.xlu0 %2084
  %v2111 = vunpack.c.l.b16 %v1941
  %v2112 = vunpack.c.h.b16 %v1941
  %v2113 = vunpack.c.l.b16 %v1942
  %v2114 = vunpack.c.h.b16 %v1942
  %v2115 = vunpack.c.l.b16 %v1943
  %v2116 = vunpack.c.l.b16 %v1944
  %v2117 = vunpack.c.h.b16 %v1944
  %v2118 = vunpack.c.l.b16 %v1945
  %v2119 = vunpack.c.h.b16 %v1945
  %v2120 = vunpack.c.l.b16 %v1946
  %v2121 = vunpack.c.l.b16 %v1947
  %v2122 = vunpack.c.h.b16 %v1947
  %v2123 = vunpack.c.l.b16 %v1948
  %v2124 = vunpack.c.h.b16 %v1948
  %v2125 = vunpack.c.l.b16 %v1949
  %v2126 = vunpack.c.l.b16 %v1950
  %v2127 = vunpack.c.h.b16 %v1950
  %v2128 = vunpack.c.l.b16 %v1951
  %v2129 = vunpack.c.h.b16 %v1951
  %v2130 = vunpack.c.l.b16 %v1952
  %v2131 = vunpack.c.l.b16 %v1953
  %v2132 = vunpack.c.h.b16 %v1953
  %v2133 = vunpack.c.l.b16 %v1954
  %v2134 = vunpack.c.h.b16 %v1954
  %v2135 = vunpack.c.l.b16 %v1955
  %v2136 = vunpack.c.l.b16 %v1956
  %v2137 = vunpack.c.h.b16 %v1956
  %v2138 = vunpack.c.l.b16 %v1957
  %v2139 = vunpack.c.h.b16 %v1957
  %v2140 = vunpack.c.l.b16 %v1958
  %v2141 = vunpack.c.l.b16 %v1959
  %v2142 = vunpack.c.h.b16 %v1959
  %v2143 = vunpack.c.l.b16 %v1960
  %v2144 = vunpack.c.h.b16 %v1960
  %v2145 = vunpack.c.l.b16 %v1961
  %v2146 = vunpack.c.l.b16 %v1962
  %v2147 = vunpack.c.h.b16 %v1962
  %v2148 = vunpack.c.l.b16 %v1963
  %v2149 = vunpack.c.h.b16 %v1963
  %v2150 = vunpack.c.l.b16 %v1964
  %v2151 = vpack.c.b16 %v2116, %v2111
  %v2152 = vpack.c.b16 %v2117, %v2112
  %v2153 = vpack.c.b16 %v2118, %v2113
  %v2154 = vpack.c.b16 %v2119, %v2114
  %v2155 = vpack.c.b16 %v2120, %v2115
  %v2156 = vpack.c.b16 %v2126, %v2121
  %v2157 = vpack.c.b16 %v2127, %v2122
  %v2158 = vpack.c.b16 %v2128, %v2123
  %v2159 = vpack.c.b16 %v2129, %v2124
  %v2160 = vpack.c.b16 %v2130, %v2125
  %v2161 = vpack.c.b16 %v2136, %v2131
  %v2162 = vpack.c.b16 %v2137, %v2132
  %v2163 = vpack.c.b16 %v2138, %v2133
  %v2164 = vpack.c.b16 %v2139, %v2134
  %v2165 = vpack.c.b16 %v2140, %v2135
  %v2166 = vpack.c.b16 %v2146, %v2141
  %v2167 = vpack.c.b16 %v2147, %v2142
  %v2168 = vpack.c.b16 %v2148, %v2143
  %v2169 = vpack.c.b16 %v2149, %v2144
  %v2170 = vpack.c.b16 %v2150, %v2145
  %v2259 = vunpack.c.l.b16 %v1966
  %v2260 = vunpack.c.l.b16 %v1967
  %v2261 = vunpack.c.l.b16 %v1968
  %v2262 = vunpack.c.l.b16 %v1969
  %v2263 = vunpack.c.l.b16 %v1970
  %v2264 = vunpack.c.l.b16 %v1971
  %v2265 = vunpack.c.l.b16 %v1972
  %v2266 = vunpack.c.l.b16 %v1973
  %v2267 = vunpack.c.l.b16 %v1974
  %v2268 = vunpack.c.l.b16 %v1975
  %v2269 = vunpack.c.l.b16 %v1976
  %v2270 = vunpack.c.l.b16 %v1977
  %v2271 = vunpack.c.l.b16 %v1978
  %v2272 = vunpack.c.l.b16 %v1979
  %v2273 = vunpack.c.l.b16 %v1980
  %v2274 = vunpack.c.l.b16 %v1981
  %v2275 = vunpack.c.l.b16 %v1982
  %v2276 = vunpack.c.l.b16 %v1983
  %v2277 = vunpack.c.l.b16 %v1984
  %v2278 = vunpack.c.l.b16 %v1985
  %v2279 = vunpack.c.l.b16 %v1986
  %v2280 = vunpack.c.l.b16 %v1987
  %v2281 = vunpack.c.l.b16 %v1988
  %v2282 = vunpack.c.l.b16 %v1989
  %v2283 = vunpack.c.l.b16 %v1990
  %v2284 = vunpack.c.l.b16 %v1991
  %v2285 = vunpack.c.l.b16 %v1992
  %v2286 = vunpack.c.l.b16 %v1993
  %v2287 = vunpack.c.l.b16 %v1994
  %v2288 = vunpack.c.l.b16 %v1995
  %v2289 = vunpack.c.l.b16 %v1996
  %v2290 = vunpack.c.l.b16 %v1997
  %v2291 = vunpack.c.l.b16 %v1998
  %v2292 = vunpack.c.l.b16 %v1999
  %v2293 = vunpack.c.l.b16 %v2000
  %v2294 = vunpack.c.l.b16 %v2001
  %v2295 = vunpack.c.l.b16 %v2002
  %v2296 = vunpack.c.l.b16 %v2003
  %v2297 = vunpack.c.l.b16 %v2004
  %v2298 = vunpack.c.l.b16 %v2005
  %v2299 = vunpack.c.l.b16 %v2006
  %v2300 = vunpack.c.l.b16 %v2007
  %v2301 = vunpack.c.l.b16 %v2008
  %v2302 = vunpack.c.l.b16 %v2009
  %v2303 = vunpack.c.l.b16 %v2010
  %v2304 = vunpack.c.l.b16 %v2011
  %v2305 = vunpack.c.l.b16 %v2012
  %v2306 = vunpack.c.l.b16 %v2013
  %v2307 = vunpack.c.l.b16 %v2014
  %v2308 = vunpack.c.l.b16 %v2015
  %v2309 = vunpack.c.l.b16 %v2016
  %v2310 = vunpack.c.l.b16 %v2017
  %v2311 = vunpack.c.l.b16 %v2018
  %v2312 = vunpack.c.l.b16 %v2019
  %v2313 = vunpack.c.l.b16 %v2020
  %v2314 = vunpack.c.l.b16 %v2021
  %v2315 = vunpack.c.l.b16 %v2022
  %v2316 = vunpack.c.l.b16 %v2023
  %v2317 = vunpack.c.l.b16 %v2024
  %v2318 = vunpack.c.l.b16 %v2025
  %v2319 = vunpack.c.l.b16 %v2026
  %v2320 = vunpack.c.l.b16 %v2027
  %v2321 = vunpack.c.l.b16 %v2028
  %v2322 = vunpack.c.l.b16 %v2029
  %v2323 = vunpack.c.l.b16 %v2030
  %v2324 = vunpack.c.l.b16 %v2031
  %v2325 = vunpack.c.l.b16 %v2032
  %v2326 = vunpack.c.l.b16 %v2033
  %v2327 = vunpack.c.l.b16 %v2034
  %v2328 = vunpack.c.l.b16 %v2035
  %v2329 = vunpack.c.l.b16 %v2036
  %v2330 = vunpack.c.l.b16 %v2037
  %v2331 = vpack.c.b16 %v2260, %v2259
  %v2332 = vpack.c.b16 %v2262, %v2261
  %v2333 = vpack.c.b16 %v2264, %v2263
  %v2334 = vpack.c.b16 %v2266, %v2265
  %v2335 = vpack.c.b16 %v2268, %v2267
  %v2336 = vpack.c.b16 %v2270, %v2269
  %v2337 = vpack.c.b16 %v2272, %v2271
  %v2338 = vpack.c.b16 %v2274, %v2273
  %v2339 = vpack.c.b16 %v2276, %v2275
  %v2340 = vpack.c.b16 %v2278, %v2277
  %v2341 = vpack.c.b16 %v2280, %v2279
  %v2342 = vpack.c.b16 %v2282, %v2281
  %v2343 = vpack.c.b16 %v2284, %v2283
  %v2344 = vpack.c.b16 %v2286, %v2285
  %v2345 = vpack.c.b16 %v2288, %v2287
  %v2346 = vpack.c.b16 %v2290, %v2289
  %v2347 = vpack.c.b16 %v2292, %v2291
  %v2348 = vpack.c.b16 %v2294, %v2293
  %v2349 = vpack.c.b16 %v2296, %v2295
  %v2350 = vpack.c.b16 %v2298, %v2297
  %v2351 = vpack.c.b16 %v2300, %v2299
  %v2352 = vpack.c.b16 %v2302, %v2301
  %v2353 = vpack.c.b16 %v2304, %v2303
  %v2354 = vpack.c.b16 %v2306, %v2305
  %v2355 = vpack.c.b16 %v2308, %v2307
  %v2356 = vpack.c.b16 %v2310, %v2309
  %v2357 = vpack.c.b16 %v2312, %v2311
  %v2358 = vpack.c.b16 %v2314, %v2313
  %v2359 = vpack.c.b16 %v2316, %v2315
  %v2360 = vpack.c.b16 %v2318, %v2317
  %v2361 = vpack.c.b16 %v2320, %v2319
  %v2362 = vpack.c.b16 %v2322, %v2321
  %v2363 = vpack.c.b16 %v2324, %v2323
  %v2364 = vpack.c.b16 %v2326, %v2325
  %v2365 = vpack.c.b16 %v2328, %v2327
  %v2366 = vpack.c.b16 %v2330, %v2329
  %v2404 = vsel %vm164, %v2155, 0
  %v2407 = vsel %vm164, %v2160, 0
  %v2410 = vsel %vm164, %v2165, 0
  %v2413 = vsel %vm164, %v2170, 0
  %2415 = vmatprep.subr.bf16.mxu0 0
  %2416 = vmatpush1.bf16.msra.mxu0 %v2338
  %2417 = vmatprep.subr.bf16.mxu0 0
  %2418 = vmatpush1.bf16.msra.mxu0 %v2337
  %2419 = vmatprep.subr.bf16.mxu0 0
  %2420 = vmatpush1.bf16.msra.mxu0 %v2336
  %2421 = vmatprep.subr.bf16.mxu0 0
  %2422 = vmatpush1.bf16.msra.mxu0 %v2335
  %2423 = vmatprep.subr.bf16.mxu0 0
  %2424 = vmatpush1.bf16.msra.mxu0 %v2334
  %2425 = vmatprep.subr.bf16.mxu0 0
  %2426 = vmatpush1.bf16.msra.mxu0 %v2333
  %2427 = vmatprep.subr.bf16.mxu0 0
  %2428 = vmatpush1.bf16.msra.mxu0 %v2332
  %2429 = vmatprep.subr.bf16.mxu0 0
  %2430 = vmatpush1.bf16.msra.mxu0 %v2331
  %2431 = vmatprep.subr.bf16.mxu0 0
  %2432 = vmatpush2.bf16.msra.mxu0 %v2346
  %2433 = vmatprep.subr.bf16.mxu0 0
  %2434 = vmatpush2.bf16.msra.mxu0 %v2345
  %2435 = vmatprep.subr.bf16.mxu0 0
  %2436 = vmatpush2.bf16.msra.mxu0 %v2344
  %2437 = vmatprep.subr.bf16.mxu0 0
  %2438 = vmatpush2.bf16.msra.mxu0 %v2343
  %2439 = vmatprep.subr.bf16.mxu0 0
  %2440 = vmatpush2.bf16.msra.mxu0 %v2342
  %2441 = vmatprep.subr.bf16.mxu0 0
  %2442 = vmatpush2.bf16.msra.mxu0 %v2341
  %2443 = vmatprep.subr.bf16.mxu0 0
  %2444 = vmatpush2.bf16.msra.mxu0 %v2340
  %2445 = vmatprep.subr.bf16.mxu0 0
  %2446 = vmatpush2.bf16.msra.mxu0 %v2339
  %2447 = vmatprep.mubr.bf16.mxu0 %v2152
  %2448 = vmatmul.mubr.bf16.gmra.mxu0 %v2151
  %v2449 = vpop.f32.mrf.mxu0
  %v2450 = vadd.f32 %v2050, %v2449
  %v2451 = vpop.f32.mrf.mxu0
  %v2452 = vpop.f32.mrf.mxu0
  %v2453 = vadd.f32 %v2055, %v2452
  %v2454 = vpop.f32.mrf.mxu0
  %2455 = vmatprep.mubr.bf16.mxu0 %v2157
  %2456 = vmatmul.mubr.bf16.gmra.mxu0 %v2156
  %v2457 = vpop.f32.mrf.mxu0
  %v2458 = vadd.f32 %v2060, %v2457
  %v2459 = vpop.f32.mrf.mxu0
  %v2460 = vpop.f32.mrf.mxu0
  %v2461 = vadd.f32 %v2065, %v2460
  %v2462 = vpop.f32.mrf.mxu0
  %2463 = vmatprep.mubr.bf16.mxu0 %v2162
  %2464 = vmatmul.mubr.bf16.gmra.mxu0 %v2161
  %v2465 = vpop.f32.mrf.mxu0
  %v2466 = vadd.f32 %v2070, %v2465
  %v2467 = vpop.f32.mrf.mxu0
  %v2468 = vpop.f32.mrf.mxu0
  %v2469 = vadd.f32 %v2075, %v2468
  %v2470 = vpop.f32.mrf.mxu0
  %2471 = vmatprep.mubr.bf16.mxu0 %v2167
  %2472 = vmatmul.mubr.bf16.gmra.mxu0 %v2166
  %v2473 = vpop.f32.mrf.mxu0
  %v2474 = vadd.f32 %v2080, %v2473
  %v2475 = vpop.f32.mrf.mxu0
  %v2476 = vpop.f32.mrf.mxu0
  %v2477 = vadd.f32 %v2085, %v2476
  %v2478 = vpop.f32.mrf.mxu0
  %2479 = vdwg.mxu0
  %2480 = vmatprep.subr.bf16.mxu0 0
  %2481 = vmatpush1.bf16.msra.mxu0 %v2354
  %2482 = vmatprep.subr.bf16.mxu0 0
  %2483 = vmatpush1.bf16.msra.mxu0 %v2353
  %2484 = vmatprep.subr.bf16.mxu0 0
  %2485 = vmatpush1.bf16.msra.mxu0 %v2352
  %2486 = vmatprep.subr.bf16.mxu0 0
  %2487 = vmatpush1.bf16.msra.mxu0 %v2351
  %2488 = vmatprep.subr.bf16.mxu0 0
  %2489 = vmatpush1.bf16.msra.mxu0 %v2350
  %2490 = vmatprep.subr.bf16.mxu0 0
  %2491 = vmatpush1.bf16.msra.mxu0 %v2349
  %2492 = vmatprep.subr.bf16.mxu0 0
  %2493 = vmatpush1.bf16.msra.mxu0 %v2348
  %2494 = vmatprep.subr.bf16.mxu0 0
  %2495 = vmatpush1.bf16.msra.mxu0 %v2347
  %2496 = vmatprep.subr.bf16.mxu0 0
  %2497 = vmatpush2.bf16.msra.mxu0 %v2362
  %2498 = vmatprep.subr.bf16.mxu0 0
  %2499 = vmatpush2.bf16.msra.mxu0 %v2361
  %2500 = vmatprep.subr.bf16.mxu0 0
  %2501 = vmatpush2.bf16.msra.mxu0 %v2360
  %2502 = vmatprep.subr.bf16.mxu0 0
  %2503 = vmatpush2.bf16.msra.mxu0 %v2359
  %2504 = vmatprep.subr.bf16.mxu0 0
  %2505 = vmatpush2.bf16.msra.mxu0 %v2358
  %2506 = vmatprep.subr.bf16.mxu0 0
  %2507 = vmatpush2.bf16.msra.mxu0 %v2357
  %2508 = vmatprep.subr.bf16.mxu0 0
  %2509 = vmatpush2.bf16.msra.mxu0 %v2356
  %2510 = vmatprep.subr.bf16.mxu0 0
  %2511 = vmatpush2.bf16.msra.mxu0 %v2355
  %2512 = vmatprep.mubr.bf16.mxu0 %v2154
  %2513 = vmatmul.mubr.bf16.gmra.mxu0 %v2153
  %v2514 = vpop.f32.mrf.mxu0
  %v2515 = vadd.f32 %v2450, %v2514
  %v2516 = vpop.f32.mrf.mxu0
  %v2517 = vpop.f32.mrf.mxu0
  %v2518 = vadd.f32 %v2453, %v2517
  %v2519 = vpop.f32.mrf.mxu0
  %2520 = vmatprep.mubr.bf16.mxu0 %v2159
  %2521 = vmatmul.mubr.bf16.gmra.mxu0 %v2158
  %v2522 = vpop.f32.mrf.mxu0
  %v2523 = vadd.f32 %v2458, %v2522
  %v2524 = vpop.f32.mrf.mxu0
  %v2525 = vpop.f32.mrf.mxu0
  %v2526 = vadd.f32 %v2461, %v2525
  %v2527 = vpop.f32.mrf.mxu0
  %2528 = vmatprep.mubr.bf16.mxu0 %v2164
  %2529 = vmatmul.mubr.bf16.gmra.mxu0 %v2163
  %v2530 = vpop.f32.mrf.mxu0
  %v2531 = vadd.f32 %v2466, %v2530
  %v2532 = vpop.f32.mrf.mxu0
  %v2533 = vpop.f32.mrf.mxu0
  %v2534 = vadd.f32 %v2469, %v2533
  %v2535 = vpop.f32.mrf.mxu0
  %2536 = vmatprep.mubr.bf16.mxu0 %v2169
  %2537 = vmatmul.mubr.bf16.gmra.mxu0 %v2168
  %v2538 = vpop.f32.mrf.mxu0
  %v2539 = vadd.f32 %v2474, %v2538
  %v2540 = vpop.f32.mrf.mxu0
  %v2541 = vpop.f32.mrf.mxu0
  %v2542 = vadd.f32 %v2477, %v2541
  %v2543 = vpop.f32.mrf.mxu0
  %2544 = vdwg.mxu0
  %2545 = vmatprep.subr.bf16.mxu0 0
  %2546 = vmatpush1.bf16.msra.mxu0 0
  %2547 = vmatprep.subr.bf16.mxu0 0
  %2548 = vmatpush1.bf16.msra.mxu0 0
  %2549 = vmatprep.subr.bf16.mxu0 0
  %2550 = vmatpush1.bf16.msra.mxu0 0
  %2551 = vmatprep.subr.bf16.mxu0 0
  %2552 = vmatpush1.bf16.msra.mxu0 0
  %2553 = vmatprep.subr.bf16.mxu0 0
  %2554 = vmatpush1.bf16.msra.mxu0 %v2366
  %2555 = vmatprep.subr.bf16.mxu0 0
  %2556 = vmatpush1.bf16.msra.mxu0 %v2365
  %2557 = vmatprep.subr.bf16.mxu0 0
  %2558 = vmatpush1.bf16.msra.mxu0 %v2364
  %2559 = vmatprep.subr.bf16.mxu0 0
  %2560 = vmatpush1.bf16.msra.mxu0 %v2363
  %2561 = vmatprep.subr.bf16.mxu0 0
  %2562 = vmatpush2.bf16.msra.mxu0 0
  %2563 = vmatprep.subr.bf16.mxu0 0
  %2564 = vmatpush2.bf16.msra.mxu0 0
  %2565 = vmatprep.subr.bf16.mxu0 0
  %2566 = vmatpush2.bf16.msra.mxu0 0
  %2567 = vmatprep.subr.bf16.mxu0 0
  %2568 = vmatpush2.bf16.msra.mxu0 0
  %2569 = vmatprep.subr.bf16.mxu0 0
  %2570 = vmatpush2.bf16.msra.mxu0 0
  %2571 = vmatprep.subr.bf16.mxu0 0
  %2572 = vmatpush2.bf16.msra.mxu0 0
  %2573 = vmatprep.subr.bf16.mxu0 0
  %2574 = vmatpush2.bf16.msra.mxu0 0
  %2575 = vmatprep.subr.bf16.mxu0 0
  %2576 = vmatpush2.bf16.msra.mxu0 0
  %2577 = vmatprep.mubr.bf16.mxu0 0
  %2578 = vmatmul.mubr.bf16.gmra.mxu0 %v2404
  %v2579 = vpop.f32.mrf.mxu0
  %v2580 = vadd.f32 %v2515, %v2579
  %v2581 = vpop.f32.mrf.mxu0
  %v2582 = vpop.f32.mrf.mxu0
  %v2583 = vadd.f32 %v2518, %v2582
  %v2584 = vpop.f32.mrf.mxu0
  %2585 = vmatprep.mubr.bf16.mxu0 0
  %2586 = vmatmul.mubr.bf16.gmra.mxu0 %v2407
  %v2587 = vpop.f32.mrf.mxu0
  %v2588 = vadd.f32 %v2523, %v2587
  %v2589 = vpop.f32.mrf.mxu0
  %v2590 = vpop.f32.mrf.mxu0
  %v2591 = vadd.f32 %v2526, %v2590
  %v2592 = vpop.f32.mrf.mxu0
  %2593 = vmatprep.mubr.bf16.mxu0 0
  %2594 = vmatmul.mubr.bf16.gmra.mxu0 %v2410
  %v2595 = vpop.f32.mrf.mxu0
  %v2596 = vadd.f32 %v2531, %v2595
  %v2597 = vpop.f32.mrf.mxu0
  %v2598 = vpop.f32.mrf.mxu0
  %v2599 = vadd.f32 %v2534, %v2598
  %v2600 = vpop.f32.mrf.mxu0
  %2601 = vmatprep.mubr.bf16.mxu0 0
  %2602 = vmatmul.mubr.bf16.gmra.mxu0 %v2413
  %v2603 = vpop.f32.mrf.mxu0
  %v2604 = vadd.f32 %v2539, %v2603
  %v2605 = vpop.f32.mrf.mxu0
  %v2606 = vpop.f32.mrf.mxu0
  %v2607 = vadd.f32 %v2542, %v2606
  %v2608 = vpop.f32.mrf.mxu0
  %2609 = vdwg.mxu0
  %v2610 = vmax.f32 %v2580, 0.0
  %v2611 = vmax.f32 %v2583, 0.0
  %v2612 = vmax.f32 %v2588, 0.0
  %v2613 = vmax.f32 %v2591, 0.0
  %v2614 = vmax.f32 %v2596, 0.0
  %v2615 = vmax.f32 %v2599, 0.0
  %v2616 = vmax.f32 %v2604, 0.0
  %v2617 = vmax.f32 %v2607, 0.0
  %s2618 = scalar_lea.vmem %s6, 96
  %v2619 = vld [vmem:[%s2618] sm:$0xf]
  %v2620 = vld [vmem:[%s2618 + $0x4] sm:$0xf]
  %v2621 = vld [vmem:[%s2618 + $0x8] sm:$0xf]
  %v2622 = vld [vmem:[%s2618 + $0xc] sm:$0xf]
  %v2623 = vld [vmem:[%s2618 + $0x10] sm:$0xf]
  %v2624 = vld [vmem:[%s2618 + $0x14] sm:$0xf]
  %v2625 = vld [vmem:[%s2618 + $0x18] sm:$0xf]
  %v2626 = vld [vmem:[%s2618 + $0x1c] sm:$0xf]
  %v2627 = vpack.c.bf16 %v2611, %v2610
  %v2628 = vpack.c.bf16 %v2613, %v2612
  %v2629 = vpack.c.bf16 %v2615, %v2614
  %v2630 = vpack.c.bf16 %v2617, %v2616
  %v2639 = vunpack.c.l.b16 %v2619
  %v2640 = vunpack.c.l.b16 %v2620
  %v2641 = vunpack.c.l.b16 %v2621
  %v2642 = vunpack.c.l.b16 %v2622
  %v2643 = vunpack.c.l.b16 %v2623
  %v2644 = vunpack.c.l.b16 %v2624
  %v2645 = vunpack.c.l.b16 %v2625
  %v2646 = vunpack.c.l.b16 %v2626
  %v2647 = vpack.c.b16 %v2640, %v2639
  %v2648 = vpack.c.b16 %v2642, %v2641
  %v2649 = vpack.c.b16 %v2644, %v2643
  %v2650 = vpack.c.b16 %v2646, %v2645
  %v2652 = vsel %vm164, %v2647, 0
  %v2655 = vsel %vm164, %v2648, 0
  %v2658 = vsel %vm164, %v2649, 0
  %v2661 = vsel %vm164, %v2650, 0
  %2663 = vmatprep.subr.bf16.mxu0 0
  %2664 = vmatpush1.bf16.msra.mxu0 0
  %2665 = vmatprep.subr.bf16.mxu0 0
  %2666 = vmatpush1.bf16.msra.mxu0 0
  %2667 = vmatprep.subr.bf16.mxu0 0
  %2668 = vmatpush1.bf16.msra.mxu0 0
  %2669 = vmatprep.subr.bf16.mxu0 0
  %2670 = vmatpush1.bf16.msra.mxu0 0
  %2671 = vmatprep.subr.bf16.mxu0 0
  %2672 = vmatpush1.bf16.msra.mxu0 %v2630
  %2673 = vmatprep.subr.bf16.mxu0 0
  %2674 = vmatpush1.bf16.msra.mxu0 %v2629
  %2675 = vmatprep.subr.bf16.mxu0 0
  %2676 = vmatpush1.bf16.msra.mxu0 %v2628
  %2677 = vmatprep.subr.bf16.mxu0 0
  %2678 = vmatpush1.bf16.msra.mxu0 %v2627
  %2679 = vmatprep.subr.bf16.mxu0 0
  %2680 = vmatpush2.bf16.msra.mxu0 0
  %2681 = vmatprep.subr.bf16.mxu0 0
  %2682 = vmatpush2.bf16.msra.mxu0 0
  %2683 = vmatprep.subr.bf16.mxu0 0
  %2684 = vmatpush2.bf16.msra.mxu0 0
  %2685 = vmatprep.subr.bf16.mxu0 0
  %2686 = vmatpush2.bf16.msra.mxu0 0
  %2687 = vmatprep.subr.bf16.mxu0 0
  %2688 = vmatpush2.bf16.msra.mxu0 0
  %2689 = vmatprep.subr.bf16.mxu0 0
  %2690 = vmatpush2.bf16.msra.mxu0 0
  %2691 = vmatprep.subr.bf16.mxu0 0
  %2692 = vmatpush2.bf16.msra.mxu0 0
  %2693 = vmatprep.subr.bf16.mxu0 0
  %2694 = vmatpush2.bf16.msra.mxu0 0
  %2695 = vmatprep.mubr.bf16.mxu0 0
  %2696 = vmatmul.mubr.bf16.gmra.mxu0 %v2652
  %v2697 = vpop.f32.mrf.mxu0
  %v2698 = vadd.f32 0.0, %v2697
  %v2699 = vpop.f32.mrf.mxu0
  %v2700 = vpop.f32.mrf.mxu0
  %v2701 = vadd.f32 0.0, %v2700
  %v2702 = vpop.f32.mrf.mxu0
  %2703 = vmatprep.mubr.bf16.mxu0 0
  %2704 = vmatmul.mubr.bf16.gmra.mxu0 %v2655
  %v2705 = vpop.f32.mrf.mxu0
  %v2706 = vadd.f32 0.0, %v2705
  %v2707 = vpop.f32.mrf.mxu0
  %v2708 = vpop.f32.mrf.mxu0
  %v2709 = vadd.f32 0.0, %v2708
  %v2710 = vpop.f32.mrf.mxu0
  %2711 = vmatprep.mubr.bf16.mxu0 0
  %2712 = vmatmul.mubr.bf16.gmra.mxu0 %v2658
  %v2713 = vpop.f32.mrf.mxu0
  %v2714 = vadd.f32 0.0, %v2713
  %v2715 = vpop.f32.mrf.mxu0
  %v2716 = vpop.f32.mrf.mxu0
  %v2717 = vadd.f32 0.0, %v2716
  %v2718 = vpop.f32.mrf.mxu0
  %2719 = vmatprep.mubr.bf16.mxu0 0
  %2720 = vmatmul.mubr.bf16.gmra.mxu0 %v2661
  %v2721 = vpop.f32.mrf.mxu0
  %v2722 = vadd.f32 0.0, %v2721
  %v2723 = vpop.f32.mrf.mxu0
  %v2724 = vpop.f32.mrf.mxu0
  %v2725 = vadd.f32 0.0, %v2724
  %v2726 = vpop.f32.mrf.mxu0
  %2727 = vdwg.mxu0
  %v2728 = vadd.f32 %v1932, %v2698
  %v2729 = vadd.f32 %v1933, %v2701
  %v2730 = vadd.f32 %v1934, %v2706
  %v2731 = vadd.f32 %v1935, %v2709
  %v2732 = vadd.f32 %v1936, %v2714
  %v2733 = vadd.f32 %v1937, %v2717
  %v2734 = vadd.f32 %v1938, %v2722
  %v2735 = vadd.f32 %v1939, %v2725
  %v2736 = vunpack.c.l.bf16 %v56
  %v2737 = vunpack.c.l.bf16 %v57
  %v2738 = vunpack.c.l.bf16 %v58
  %v2739 = vunpack.c.l.bf16 %v59
  %v2740 = vunpack.c.l.bf16 %v60
  %v2741 = vunpack.c.l.bf16 %v61
  %v2742 = vunpack.c.l.bf16 %v62
  %v2743 = vunpack.c.l.bf16 %v63
  %v2744 = vld [vmem:[%s11] sm:$0xff]
  %v2745 = vld [vmem:[%s11 + $0x8] sm:$0xff]
  %v2746 = vld [vmem:[%s11 + $0x10] sm:$0xff]
  %v2747 = vld [vmem:[%s11 + $0x18] sm:$0xff]
  %vm2748 = vcmask 261120
  %v2750 = vsel %vm2748, %v2736, 0
  %v2753 = vsel %vm2748, %v2737, 0
  %v2756 = vsel %vm2748, %v2738, 0
  %v2759 = vsel %vm2748, %v2739, 0
  %v2762 = vsel %vm2748, %v2740, 0
  %v2765 = vsel %vm2748, %v2741, 0
  %v2768 = vsel %vm2748, %v2742, 0
  %v2771 = vsel %vm2748, %v2743, 0
  %2773 = vmatprep.subr.mxu0 0.0
  %2774 = vmatpush1.msra.mxu0 0.0
  %2775 = vmatprep.subr.mxu0 0.0
  %2776 = vmatpush1.msra.mxu0 0.0
  %2777 = vmatprep.subr.mxu0 0.0
  %2778 = vmatpush1.msra.mxu0 0.0
  %2779 = vmatprep.subr.mxu0 0.0
  %2780 = vmatpush1.msra.mxu0 0.0
  %2781 = vmatprep.subr.mxu0 0.0
  %2782 = vmatpush1.msra.mxu0 0.0
  %2783 = vmatprep.subr.mxu0 0.0
  %2784 = vmatpush1.msra.mxu0 0.0
  %2785 = vmatprep.subr.mxu0 0.0
  %2786 = vmatpush1.msra.mxu0 0.0
  %2787 = vmatprep.subr.mxu0 0.0
  %2788 = vmatpush1.msra.mxu0 0.0
  %2789 = vmatprep.subr.mxu0 0.0
  %2790 = vmatpush1.msra.mxu0 0.0
  %2791 = vmatprep.subr.mxu0 0.0
  %2792 = vmatpush1.msra.mxu0 0.0
  %2793 = vmatprep.subr.mxu0 0.0
  %2794 = vmatpush1.msra.mxu0 0.0
  %2795 = vmatprep.subr.mxu0 0.0
  %2796 = vmatpush1.msra.mxu0 0.0
  %2797 = vmatprep.subr.mxu0 0.0
  %2798 = vmatpush1.msra.mxu0 %v2747
  %2799 = vmatprep.subr.mxu0 0.0
  %2800 = vmatpush1.msra.mxu0 %v2746
  %2801 = vmatprep.subr.mxu0 0.0
  %2802 = vmatpush1.msra.mxu0 %v2745
  %2803 = vmatprep.subr.mxu0 0.0
  %2804 = vmatpush1.msra.mxu0 %v2744
  %2805 = vmatprep.subr.mxu0 0.0
  %2806 = vmatpush2.msra.mxu0 0.0
  %2807 = vmatprep.subr.mxu0 0.0
  %2808 = vmatpush2.msra.mxu0 0.0
  %2809 = vmatprep.subr.mxu0 0.0
  %2810 = vmatpush2.msra.mxu0 0.0
  %2811 = vmatprep.subr.mxu0 0.0
  %2812 = vmatpush2.msra.mxu0 0.0
  %2813 = vmatprep.subr.mxu0 0.0
  %2814 = vmatpush2.msra.mxu0 0.0
  %2815 = vmatprep.subr.mxu0 0.0
  %2816 = vmatpush2.msra.mxu0 0.0
  %2817 = vmatprep.subr.mxu0 0.0
  %2818 = vmatpush2.msra.mxu0 0.0
  %2819 = vmatprep.subr.mxu0 0.0
  %2820 = vmatpush2.msra.mxu0 0.0
  %2821 = vmatprep.subr.mxu0 0.0
  %2822 = vmatpush2.msra.mxu0 0.0
  %2823 = vmatprep.subr.mxu0 0.0
  %2824 = vmatpush2.msra.mxu0 0.0
  %2825 = vmatprep.subr.mxu0 0.0
  %2826 = vmatpush2.msra.mxu0 0.0
  %2827 = vmatprep.subr.mxu0 0.0
  %2828 = vmatpush2.msra.mxu0 0.0
  %2829 = vmatprep.subr.mxu0 0.0
  %2830 = vmatpush2.msra.mxu0 0.0
  %2831 = vmatprep.subr.mxu0 0.0
  %2832 = vmatpush2.msra.mxu0 0.0
  %2833 = vmatprep.subr.mxu0 0.0
  %2834 = vmatpush2.msra.mxu0 0.0
  %2835 = vmatprep.subr.mxu0 0.0
  %2836 = vmatpush2.msra.mxu0 0.0
  %2837 = vmatprep.mubr.f32.mxu0 0.0
  %2838 = vmatmul.mubr.f32.gmra.mxu0 %v2750
  %v2839 = vpop.f32.mrf.mxu0
  %v2840 = vadd.f32 0.0, %v2839
  %v2841 = vpop.f32.mrf.mxu0
  %2842 = vmatprep.mubr.f32.mxu0 0.0
  %2843 = vmatmul.mubr.f32.gmra.mxu0 %v2753
  %v2844 = vpop.f32.mrf.mxu0
  %v2845 = vadd.f32 0.0, %v2844
  %v2846 = vpop.f32.mrf.mxu0
  %2847 = vmatprep.mubr.f32.mxu0 0.0
  %2848 = vmatmul.mubr.f32.gmra.mxu0 %v2756
  %v2849 = vpop.f32.mrf.mxu0
  %v2850 = vadd.f32 0.0, %v2849
  %v2851 = vpop.f32.mrf.mxu0
  %2852 = vmatprep.mubr.f32.mxu0 0.0
  %2853 = vmatmul.mubr.f32.gmra.mxu0 %v2759
  %v2854 = vpop.f32.mrf.mxu0
  %v2855 = vadd.f32 0.0, %v2854
  %v2856 = vpop.f32.mrf.mxu0
  %2857 = vmatprep.mubr.f32.mxu0 0.0
  %2858 = vmatmul.mubr.f32.gmra.mxu0 %v2762
  %v2859 = vpop.f32.mrf.mxu0
  %v2860 = vadd.f32 0.0, %v2859
  %v2861 = vpop.f32.mrf.mxu0
  %2862 = vmatprep.mubr.f32.mxu0 0.0
  %2863 = vmatmul.mubr.f32.gmra.mxu0 %v2765
  %v2864 = vpop.f32.mrf.mxu0
  %v2865 = vadd.f32 0.0, %v2864
  %v2866 = vpop.f32.mrf.mxu0
  %2867 = vmatprep.mubr.f32.mxu0 0.0
  %2868 = vmatmul.mubr.f32.gmra.mxu0 %v2768
  %v2869 = vpop.f32.mrf.mxu0
  %v2870 = vadd.f32 0.0, %v2869
  %v2871 = vpop.f32.mrf.mxu0
  %2872 = vmatprep.mubr.f32.mxu0 0.0
  %2873 = vmatmul.mubr.f32.gmra.mxu0 %v2771
  %v2874 = vpop.f32.mrf.mxu0
  %v2875 = vadd.f32 0.0, %v2874
  %v2876 = vpop.f32.mrf.mxu0
  %2877 = vdwg.mxu0
  %v2878 = vld [vmem:[%s8] sm:$0xff]
  %v2879 = vld [vmem:[%s8 + $0x8] sm:$0xff]
  %v2880 = vld [vmem:[%s8 + $0x10] sm:$0xff]
  %v2881 = vld [vmem:[%s8 + $0x18] sm:$0xff]
  %v2882 = vld [vmem:[%s8 + $0x20] sm:$0xff]
  %v2883 = vld [vmem:[%s8 + $0x28] sm:$0xff]
  %v2884 = vld [vmem:[%s8 + $0x30] sm:$0xff]
  %v2885 = vld [vmem:[%s8 + $0x38] sm:$0xff]
  %v2886 = vld [vmem:[%s9] sm:$0xff]
  %v2887 = vld [vmem:[%s9 + $0x8] sm:$0xff]
  %v2888 = vld [vmem:[%s9 + $0x10] sm:$0xff]
  %v2889 = vld [vmem:[%s9 + $0x18] sm:$0xff]
  %v2890 = vld [vmem:[%s9 + $0x20] sm:$0xff]
  %v2891 = vld [vmem:[%s9 + $0x28] sm:$0xff]
  %v2892 = vld [vmem:[%s9 + $0x30] sm:$0xff]
  %v2893 = vld [vmem:[%s9 + $0x38] sm:$0xff]
  %2895 = vset.pattern.permute.xlu0 0
  %2896 = vperm.xlu0 %2895, %v2886
  %v2897 = vpop.permute.xlu0 %2896
  %2900 = vset.pattern.permute.xlu0 0
  %2901 = vperm.xlu0 %2900, %v2887
  %v2902 = vpop.permute.xlu0 %2901
  %2905 = vset.pattern.permute.xlu0 0
  %2906 = vperm.xlu0 %2905, %v2888
  %v2907 = vpop.permute.xlu0 %2906
  %2910 = vset.pattern.permute.xlu0 0
  %2911 = vperm.xlu0 %2910, %v2889
  %v2912 = vpop.permute.xlu0 %2911
  %2915 = vset.pattern.permute.xlu0 0
  %2916 = vperm.xlu0 %2915, %v2890
  %v2917 = vpop.permute.xlu0 %2916
  %2920 = vset.pattern.permute.xlu0 0
  %2921 = vperm.xlu0 %2920, %v2891
  %v2922 = vpop.permute.xlu0 %2921
  %2925 = vset.pattern.permute.xlu0 0
  %2926 = vperm.xlu0 %2925, %v2892
  %v2927 = vpop.permute.xlu0 %2926
  %2930 = vset.pattern.permute.xlu0 0
  %2931 = vperm.xlu0 %2930, %v2893
  %v2932 = vpop.permute.xlu0 %2931
  %v2935 = vsel %vm164, %v2878, 0
  %v2938 = vsel %vm164, %v2879, 0
  %v2941 = vsel %vm164, %v2880, 0
  %v2944 = vsel %vm164, %v2881, 0
  %v2947 = vsel %vm164, %v2882, 0
  %v2950 = vsel %vm164, %v2883, 0
  %v2953 = vsel %vm164, %v2884, 0
  %v2956 = vsel %vm164, %v2885, 0
  %2958 = vmatprep.subr.mxu0 0.0
  %2959 = vmatpush1.msra.mxu0 0.0
  %2960 = vmatprep.subr.mxu0 0.0
  %2961 = vmatpush1.msra.mxu0 0.0
  %2962 = vmatprep.subr.mxu0 0.0
  %2963 = vmatpush1.msra.mxu0 0.0
  %2964 = vmatprep.subr.mxu0 0.0
  %2965 = vmatpush1.msra.mxu0 0.0
  %2966 = vmatprep.subr.mxu0 0.0
  %2967 = vmatpush1.msra.mxu0 0.0
  %2968 = vmatprep.subr.mxu0 0.0
  %2969 = vmatpush1.msra.mxu0 0.0
  %2970 = vmatprep.subr.mxu0 0.0
  %2971 = vmatpush1.msra.mxu0 0.0
  %2972 = vmatprep.subr.mxu0 0.0
  %2973 = vmatpush1.msra.mxu0 0.0
  %2974 = vmatprep.subr.mxu0 0.0
  %2975 = vmatpush1.msra.mxu0 %v2875
  %2976 = vmatprep.subr.mxu0 0.0
  %2977 = vmatpush1.msra.mxu0 %v2870
  %2978 = vmatprep.subr.mxu0 0.0
  %2979 = vmatpush1.msra.mxu0 %v2865
  %2980 = vmatprep.subr.mxu0 0.0
  %2981 = vmatpush1.msra.mxu0 %v2860
  %2982 = vmatprep.subr.mxu0 0.0
  %2983 = vmatpush1.msra.mxu0 %v2855
  %2984 = vmatprep.subr.mxu0 0.0
  %2985 = vmatpush1.msra.mxu0 %v2850
  %2986 = vmatprep.subr.mxu0 0.0
  %2987 = vmatpush1.msra.mxu0 %v2845
  %2988 = vmatprep.subr.mxu0 0.0
  %2989 = vmatpush1.msra.mxu0 %v2840
  %2990 = vmatprep.subr.mxu0 0.0
  %2991 = vmatpush2.msra.mxu0 0.0
  %2992 = vmatprep.subr.mxu0 0.0
  %2993 = vmatpush2.msra.mxu0 0.0
  %2994 = vmatprep.subr.mxu0 0.0
  %2995 = vmatpush2.msra.mxu0 0.0
  %2996 = vmatprep.subr.mxu0 0.0
  %2997 = vmatpush2.msra.mxu0 0.0
  %2998 = vmatprep.subr.mxu0 0.0
  %2999 = vmatpush2.msra.mxu0 0.0
  %3000 = vmatprep.subr.mxu0 0.0
  %3001 = vmatpush2.msra.mxu0 0.0
  %3002 = vmatprep.subr.mxu0 0.0
  %3003 = vmatpush2.msra.mxu0 0.0
  %3004 = vmatprep.subr.mxu0 0.0
  %3005 = vmatpush2.msra.mxu0 0.0
  %3006 = vmatprep.subr.mxu0 0.0
  %3007 = vmatpush2.msra.mxu0 0.0
  %3008 = vmatprep.subr.mxu0 0.0
  %3009 = vmatpush2.msra.mxu0 0.0
  %3010 = vmatprep.subr.mxu0 0.0
  %3011 = vmatpush2.msra.mxu0 0.0
  %3012 = vmatprep.subr.mxu0 0.0
  %3013 = vmatpush2.msra.mxu0 0.0
  %3014 = vmatprep.subr.mxu0 0.0
  %3015 = vmatpush2.msra.mxu0 0.0
  %3016 = vmatprep.subr.mxu0 0.0
  %3017 = vmatpush2.msra.mxu0 0.0
  %3018 = vmatprep.subr.mxu0 0.0
  %3019 = vmatpush2.msra.mxu0 0.0
  %3020 = vmatprep.subr.mxu0 0.0
  %3021 = vmatpush2.msra.mxu0 0.0
  %3022 = vmatprep.mubr.f32.mxu0 0.0
  %3023 = vmatmul.mubr.f32.gmra.mxu0 %v2935
  %v3024 = vpop.f32.mrf.mxu0
  %v3025 = vadd.f32 %v2897, %v3024
  %v3026 = vpop.f32.mrf.mxu0
  %3027 = vmatprep.mubr.f32.mxu0 0.0
  %3028 = vmatmul.mubr.f32.gmra.mxu0 %v2938
  %v3029 = vpop.f32.mrf.mxu0
  %v3030 = vadd.f32 %v2902, %v3029
  %v3031 = vpop.f32.mrf.mxu0
  %3032 = vmatprep.mubr.f32.mxu0 0.0
  %3033 = vmatmul.mubr.f32.gmra.mxu0 %v2941
  %v3034 = vpop.f32.mrf.mxu0
  %v3035 = vadd.f32 %v2907, %v3034
  %v3036 = vpop.f32.mrf.mxu0
  %3037 = vmatprep.mubr.f32.mxu0 0.0
  %3038 = vmatmul.mubr.f32.gmra.mxu0 %v2944
  %v3039 = vpop.f32.mrf.mxu0
  %v3040 = vadd.f32 %v2912, %v3039
  %v3041 = vpop.f32.mrf.mxu0
  %3042 = vmatprep.mubr.f32.mxu0 0.0
  %3043 = vmatmul.mubr.f32.gmra.mxu0 %v2947
  %v3044 = vpop.f32.mrf.mxu0
  %v3045 = vadd.f32 %v2917, %v3044
  %v3046 = vpop.f32.mrf.mxu0
  %3047 = vmatprep.mubr.f32.mxu0 0.0
  %3048 = vmatmul.mubr.f32.gmra.mxu0 %v2950
  %v3049 = vpop.f32.mrf.mxu0
  %v3050 = vadd.f32 %v2922, %v3049
  %v3051 = vpop.f32.mrf.mxu0
  %3052 = vmatprep.mubr.f32.mxu0 0.0
  %3053 = vmatmul.mubr.f32.gmra.mxu0 %v2953
  %v3054 = vpop.f32.mrf.mxu0
  %v3055 = vadd.f32 %v2927, %v3054
  %v3056 = vpop.f32.mrf.mxu0
  %3057 = vmatprep.mubr.f32.mxu0 0.0
  %3058 = vmatmul.mubr.f32.gmra.mxu0 %v2956
  %v3059 = vpop.f32.mrf.mxu0
  %v3060 = vadd.f32 %v2932, %v3059
  %v3061 = vpop.f32.mrf.mxu0
  %3062 = vdwg.mxu0
  %v3063 = vmax.f32 %v3025, 0.0
  %v3064 = vmax.f32 %v3030, 0.0
  %v3065 = vmax.f32 %v3035, 0.0
  %v3066 = vmax.f32 %v3040, 0.0
  %v3067 = vmax.f32 %v3045, 0.0
  %v3068 = vmax.f32 %v3050, 0.0
  %v3069 = vmax.f32 %v3055, 0.0
  %v3070 = vmax.f32 %v3060, 0.0
  %v3071 = vld [vmem:[%s10] sm:$0xff]
  %v3072 = vld [vmem:[%s10 + $0x8] sm:$0xff]
  %v3073 = vld [vmem:[%s10 + $0x10] sm:$0xff]
  %v3074 = vld [vmem:[%s10 + $0x18] sm:$0xff]
  %v3075 = vld [vmem:[%s10 + $0x20] sm:$0xff]
  %v3076 = vld [vmem:[%s10 + $0x28] sm:$0xff]
  %v3077 = vld [vmem:[%s10 + $0x30] sm:$0xff]
  %v3078 = vld [vmem:[%s10 + $0x38] sm:$0xff]
  %v3080 = vsel %vm164, %v3071, 0
  %v3083 = vsel %vm164, %v3072, 0
  %v3086 = vsel %vm164, %v3073, 0
  %v3089 = vsel %vm164, %v3074, 0
  %v3092 = vsel %vm164, %v3075, 0
  %v3095 = vsel %vm164, %v3076, 0
  %v3098 = vsel %vm164, %v3077, 0
  %v3101 = vsel %vm164, %v3078, 0
  %3103 = vmatprep.subr.mxu0 0.0
  %3104 = vmatpush1.msra.mxu0 0.0
  %3105 = vmatprep.subr.mxu0 0.0
  %3106 = vmatpush1.msra.mxu0 0.0
  %3107 = vmatprep.subr.mxu0 0.0
  %3108 = vmatpush1.msra.mxu0 0.0
  %3109 = vmatprep.subr.mxu0 0.0
  %3110 = vmatpush1.msra.mxu0 0.0
  %3111 = vmatprep.subr.mxu0 0.0
  %3112 = vmatpush1.msra.mxu0 0.0
  %3113 = vmatprep.subr.mxu0 0.0
  %3114 = vmatpush1.msra.mxu0 0.0
  %3115 = vmatprep.subr.mxu0 0.0
  %3116 = vmatpush1.msra.mxu0 0.0
  %3117 = vmatprep.subr.mxu0 0.0
  %3118 = vmatpush1.msra.mxu0 0.0
  %3119 = vmatprep.subr.mxu0 0.0
  %3120 = vmatpush1.msra.mxu0 %v3070
  %3121 = vmatprep.subr.mxu0 0.0
  %3122 = vmatpush1.msra.mxu0 %v3069
  %3123 = vmatprep.subr.mxu0 0.0
  %3124 = vmatpush1.msra.mxu0 %v3068
  %3125 = vmatprep.subr.mxu0 0.0
  %3126 = vmatpush1.msra.mxu0 %v3067
  %3127 = vmatprep.subr.mxu0 0.0
  %3128 = vmatpush1.msra.mxu0 %v3066
  %3129 = vmatprep.subr.mxu0 0.0
  %3130 = vmatpush1.msra.mxu0 %v3065
  %3131 = vmatprep.subr.mxu0 0.0
  %3132 = vmatpush1.msra.mxu0 %v3064
  %3133 = vmatprep.subr.mxu0 0.0
  %3134 = vmatpush1.msra.mxu0 %v3063
  %3135 = vmatprep.subr.mxu0 0.0
  %3136 = vmatpush2.msra.mxu0 0.0
  %3137 = vmatprep.subr.mxu0 0.0
  %3138 = vmatpush2.msra.mxu0 0.0
  %3139 = vmatprep.subr.mxu0 0.0
  %3140 = vmatpush2.msra.mxu0 0.0
  %3141 = vmatprep.subr.mxu0 0.0
  %3142 = vmatpush2.msra.mxu0 0.0
  %3143 = vmatprep.subr.mxu0 0.0
  %3144 = vmatpush2.msra.mxu0 0.0
  %3145 = vmatprep.subr.mxu0 0.0
  %3146 = vmatpush2.msra.mxu0 0.0
  %3147 = vmatprep.subr.mxu0 0.0
  %3148 = vmatpush2.msra.mxu0 0.0
  %3149 = vmatprep.subr.mxu0 0.0
  %3150 = vmatpush2.msra.mxu0 0.0
  %3151 = vmatprep.subr.mxu0 0.0
  %3152 = vmatpush2.msra.mxu0 0.0
  %3153 = vmatprep.subr.mxu0 0.0
  %3154 = vmatpush2.msra.mxu0 0.0
  %3155 = vmatprep.subr.mxu0 0.0
  %3156 = vmatpush2.msra.mxu0 0.0
  %3157 = vmatprep.subr.mxu0 0.0
  %3158 = vmatpush2.msra.mxu0 0.0
  %3159 = vmatprep.subr.mxu0 0.0
  %3160 = vmatpush2.msra.mxu0 0.0
  %3161 = vmatprep.subr.mxu0 0.0
  %3162 = vmatpush2.msra.mxu0 0.0
  %3163 = vmatprep.subr.mxu0 0.0
  %3164 = vmatpush2.msra.mxu0 0.0
  %3165 = vmatprep.subr.mxu0 0.0
  %3166 = vmatpush2.msra.mxu0 0.0
  %3167 = vmatprep.mubr.f32.mxu0 0.0
  %3168 = vmatmul.mubr.f32.gmra.mxu0 %v3080
  %v3169 = vpop.f32.mrf.mxu0
  %v3170 = vadd.f32 0.0, %v3169
  %v3171 = vpop.f32.mrf.mxu0
  %3172 = vmatprep.mubr.f32.mxu0 0.0
  %3173 = vmatmul.mubr.f32.gmra.mxu0 %v3083
  %v3174 = vpop.f32.mrf.mxu0
  %v3175 = vadd.f32 0.0, %v3174
  %v3176 = vpop.f32.mrf.mxu0
  %3177 = vmatprep.mubr.f32.mxu0 0.0
  %3178 = vmatmul.mubr.f32.gmra.mxu0 %v3086
  %v3179 = vpop.f32.mrf.mxu0
  %v3180 = vadd.f32 0.0, %v3179
  %v3181 = vpop.f32.mrf.mxu0
  %3182 = vmatprep.mubr.f32.mxu0 0.0
  %3183 = vmatmul.mubr.f32.gmra.mxu0 %v3089
  %v3184 = vpop.f32.mrf.mxu0
  %v3185 = vadd.f32 0.0, %v3184
  %v3186 = vpop.f32.mrf.mxu0
  %3187 = vmatprep.mubr.f32.mxu0 0.0
  %3188 = vmatmul.mubr.f32.gmra.mxu0 %v3092
  %v3189 = vpop.f32.mrf.mxu0
  %v3190 = vadd.f32 0.0, %v3189
  %v3191 = vpop.f32.mrf.mxu0
  %3192 = vmatprep.mubr.f32.mxu0 0.0
  %3193 = vmatmul.mubr.f32.gmra.mxu0 %v3095
  %v3194 = vpop.f32.mrf.mxu0
  %v3195 = vadd.f32 0.0, %v3194
  %v3196 = vpop.f32.mrf.mxu0
  %3197 = vmatprep.mubr.f32.mxu0 0.0
  %3198 = vmatmul.mubr.f32.gmra.mxu0 %v3098
  %v3199 = vpop.f32.mrf.mxu0
  %v3200 = vadd.f32 0.0, %v3199
  %v3201 = vpop.f32.mrf.mxu0
  %3202 = vmatprep.mubr.f32.mxu0 0.0
  %3203 = vmatmul.mubr.f32.gmra.mxu0 %v3101
  %v3204 = vpop.f32.mrf.mxu0
  %v3205 = vadd.f32 0.0, %v3204
  %v3206 = vpop.f32.mrf.mxu0
  %3207 = vdwg.mxu0
  %v3208 = vld [vmem:[%s12] sm:$0x3]
  %vm3209 = vcmask 15360
  %v3211 = vsel %vm3209, %v3170, 0
  %v3214 = vsel %vm3209, %v3175, 0
  %v3217 = vsel %vm3209, %v3180, 0
  %v3220 = vsel %vm3209, %v3185, 0
  %v3223 = vsel %vm3209, %v3190, 0
  %v3226 = vsel %vm3209, %v3195, 0
  %v3229 = vsel %vm3209, %v3200, 0
  %v3232 = vsel %vm3209, %v3205, 0
  %vm3234 = vcmask 1041408
  %v3236 = vsel %vm3234, %v3208, 0
  %3238 = vmatprep.subr.mxu0 0.0
  %3239 = vmatpush1.msra.mxu0 0.0
  %3240 = vmatprep.subr.mxu0 0.0
  %3241 = vmatpush1.msra.mxu0 0.0
  %3242 = vmatprep.subr.mxu0 0.0
  %3243 = vmatpush1.msra.mxu0 0.0
  %3244 = vmatprep.subr.mxu0 0.0
  %3245 = vmatpush1.msra.mxu0 0.0
  %3246 = vmatprep.subr.mxu0 0.0
  %3247 = vmatpush1.msra.mxu0 0.0
  %3248 = vmatprep.subr.mxu0 0.0
  %3249 = vmatpush1.msra.mxu0 0.0
  %3250 = vmatprep.subr.mxu0 0.0
  %3251 = vmatpush1.msra.mxu0 0.0
  %3252 = vmatprep.subr.mxu0 0.0
  %3253 = vmatpush1.msra.mxu0 0.0
  %3254 = vmatprep.subr.mxu0 0.0
  %3255 = vmatpush1.msra.mxu0 0.0
  %3256 = vmatprep.subr.mxu0 0.0
  %3257 = vmatpush1.msra.mxu0 0.0
  %3258 = vmatprep.subr.mxu0 0.0
  %3259 = vmatpush1.msra.mxu0 0.0
  %3260 = vmatprep.subr.mxu0 0.0
  %3261 = vmatpush1.msra.mxu0 0.0
  %3262 = vmatprep.subr.mxu0 0.0
  %3263 = vmatpush1.msra.mxu0 0.0
  %3264 = vmatprep.subr.mxu0 0.0
  %3265 = vmatpush1.msra.mxu0 0.0
  %3266 = vmatprep.subr.mxu0 0.0
  %3267 = vmatpush1.msra.mxu0 0.0
  %3268 = vmatprep.subr.mxu0 0.0
  %3269 = vmatpush1.msra.mxu0 %v3236
  %3270 = vmatprep.subr.mxu0 0.0
  %3271 = vmatpush2.msra.mxu0 0.0
  %3272 = vmatprep.subr.mxu0 0.0
  %3273 = vmatpush2.msra.mxu0 0.0
  %3274 = vmatprep.subr.mxu0 0.0
  %3275 = vmatpush2.msra.mxu0 0.0
  %3276 = vmatprep.subr.mxu0 0.0
  %3277 = vmatpush2.msra.mxu0 0.0
  %3278 = vmatprep.subr.mxu0 0.0
  %3279 = vmatpush2.msra.mxu0 0.0
  %3280 = vmatprep.subr.mxu0 0.0
  %3281 = vmatpush2.msra.mxu0 0.0
  %3282 = vmatprep.subr.mxu0 0.0
  %3283 = vmatpush2.msra.mxu0 0.0
  %3284 = vmatprep.subr.mxu0 0.0
  %3285 = vmatpush2.msra.mxu0 0.0
  %3286 = vmatprep.subr.mxu0 0.0
  %3287 = vmatpush2.msra.mxu0 0.0
  %3288 = vmatprep.subr.mxu0 0.0
  %3289 = vmatpush2.msra.mxu0 0.0
  %3290 = vmatprep.subr.mxu0 0.0
  %3291 = vmatpush2.msra.mxu0 0.0
  %3292 = vmatprep.subr.mxu0 0.0
  %3293 = vmatpush2.msra.mxu0 0.0
  %3294 = vmatprep.subr.mxu0 0.0
  %3295 = vmatpush2.msra.mxu0 0.0
  %3296 = vmatprep.subr.mxu0 0.0
  %3297 = vmatpush2.msra.mxu0 0.0
  %3298 = vmatprep.subr.mxu0 0.0
  %3299 = vmatpush2.msra.mxu0 0.0
  %3300 = vmatprep.subr.mxu0 0.0
  %3301 = vmatpush2.msra.mxu0 0.0
  %3302 = vmatprep.mubr.f32.mxu0 0.0
  %3303 = vmatmul.mubr.f32.gmra.mxu0 %v3211
  %v3304 = vpop.f32.mrf.mxu0
  %v3305 = vadd.f32 0.0, %v3304
  %v3306 = vpop.f32.mrf.mxu0
  %3307 = vmatprep.mubr.f32.mxu0 0.0
  %3308 = vmatmul.mubr.f32.gmra.mxu0 %v3214
  %v3309 = vpop.f32.mrf.mxu0
  %v3310 = vadd.f32 0.0, %v3309
  %v3311 = vpop.f32.mrf.mxu0
  %3312 = vmatprep.mubr.f32.mxu0 0.0
  %3313 = vmatmul.mubr.f32.gmra.mxu0 %v3217
  %v3314 = vpop.f32.mrf.mxu0
  %v3315 = vadd.f32 0.0, %v3314
  %v3316 = vpop.f32.mrf.mxu0
  %3317 = vmatprep.mubr.f32.mxu0 0.0
  %3318 = vmatmul.mubr.f32.gmra.mxu0 %v3220
  %v3319 = vpop.f32.mrf.mxu0
  %v3320 = vadd.f32 0.0, %v3319
  %v3321 = vpop.f32.mrf.mxu0
  %3322 = vmatprep.mubr.f32.mxu0 0.0
  %3323 = vmatmul.mubr.f32.gmra.mxu0 %v3223
  %v3324 = vpop.f32.mrf.mxu0
  %v3325 = vadd.f32 0.0, %v3324
  %v3326 = vpop.f32.mrf.mxu0
  %3327 = vmatprep.mubr.f32.mxu0 0.0
  %3328 = vmatmul.mubr.f32.gmra.mxu0 %v3226
  %v3329 = vpop.f32.mrf.mxu0
  %v3330 = vadd.f32 0.0, %v3329
  %v3331 = vpop.f32.mrf.mxu0
  %3332 = vmatprep.mubr.f32.mxu0 0.0
  %3333 = vmatmul.mubr.f32.gmra.mxu0 %v3229
  %v3334 = vpop.f32.mrf.mxu0
  %v3335 = vadd.f32 0.0, %v3334
  %v3336 = vpop.f32.mrf.mxu0
  %3337 = vmatprep.mubr.f32.mxu0 0.0
  %3338 = vmatmul.mubr.f32.gmra.mxu0 %v3232
  %v3339 = vpop.f32.mrf.mxu0
  %v3340 = vadd.f32 0.0, %v3339
  %v3341 = vpop.f32.mrf.mxu0
  %3342 = vdwg.mxu0
  %v3343 = vld [vmem:[%s7] sm:$0xff]
  %v3344 = vld [vmem:[%s7 + $0x8] sm:$0xff]
  %v3345 = vld [vmem:[%s7 + $0x10] sm:$0xff]
  %v3346 = vld [vmem:[%s7 + $0x18] sm:$0xff]
  %v3347 = vld [vmem:[%s7 + $0x20] sm:$0xff]
  %v3348 = vld [vmem:[%s7 + $0x28] sm:$0xff]
  %v3349 = vld [vmem:[%s7 + $0x30] sm:$0xff]
  %v3350 = vld [vmem:[%s7 + $0x38] sm:$0xff]
  %3352 = vset.pattern.permute.xlu0 0
  %3353 = vperm.xlu0 %3352, %v3343
  %v3354 = vpop.permute.xlu0 %3353
  %3357 = vset.pattern.permute.xlu0 0
  %3358 = vperm.xlu0 %3357, %v3344
  %v3359 = vpop.permute.xlu0 %3358
  %3362 = vset.pattern.permute.xlu0 0
  %3363 = vperm.xlu0 %3362, %v3345
  %v3364 = vpop.permute.xlu0 %3363
  %3367 = vset.pattern.permute.xlu0 0
  %3368 = vperm.xlu0 %3367, %v3346
  %v3369 = vpop.permute.xlu0 %3368
  %3372 = vset.pattern.permute.xlu0 0
  %3373 = vperm.xlu0 %3372, %v3347
  %v3374 = vpop.permute.xlu0 %3373
  %3377 = vset.pattern.permute.xlu0 0
  %3378 = vperm.xlu0 %3377, %v3348
  %v3379 = vpop.permute.xlu0 %3378
  %3382 = vset.pattern.permute.xlu0 0
  %3383 = vperm.xlu0 %3382, %v3349
  %v3384 = vpop.permute.xlu0 %3383
  %3387 = vset.pattern.permute.xlu0 0
  %3388 = vperm.xlu0 %3387, %v3350
  %v3389 = vpop.permute.xlu0 %3388
  %v3391 = vadd.f32 %v2728, %v3354
  %v3392 = vadd.f32 %v2729, %v3359
  %v3393 = vadd.f32 %v2730, %v3364
  %v3394 = vadd.f32 %v2731, %v3369
  %v3395 = vadd.f32 %v2732, %v3374
  %v3396 = vadd.f32 %v2733, %v3379
  %v3397 = vadd.f32 %v2734, %v3384
  %v3398 = vadd.f32 %v2735, %v3389
  %v3399 = vadd.f32 %v3391, %v3305
  %v3400 = vadd.f32 %v3392, %v3310
  %v3401 = vadd.f32 %v3393, %v3315
  %v3402 = vadd.f32 %v3394, %v3320
  %v3403 = vadd.f32 %v3395, %v3325
  %v3404 = vadd.f32 %v3396, %v3330
  %v3405 = vadd.f32 %v3397, %v3335
  %v3406 = vadd.f32 %v3398, %v3340
  %v3407 = vmax.f32 %v3399, 0.0
  %v3408 = vmax.f32 %v3400, 0.0
  %v3409 = vmax.f32 %v3401, 0.0
  %v3410 = vmax.f32 %v3402, 0.0
  %v3411 = vmax.f32 %v3403, 0.0
  %v3412 = vmax.f32 %v3404, 0.0
  %v3413 = vmax.f32 %v3405, 0.0
  %v3414 = vmax.f32 %v3406, 0.0
  %v3415 = vpack.c.bf16 %v3408, %v3407
  %v3416 = vpack.c.bf16 %v3410, %v3409
  %v3417 = vpack.c.bf16 %v3412, %v3411
  %v3418 = vpack.c.bf16 %v3414, %v3413
  %v3423 = vunpack.c.l.b16 %v3415
  %v3424 = vunpack.c.h.b16 %v3415
  %v3425 = vunpack.c.l.b16 %v3416
  %v3426 = vunpack.c.h.b16 %v3416
  %v3427 = vunpack.c.l.b16 %v3417
  %v3428 = vunpack.c.h.b16 %v3417
  %v3429 = vunpack.c.l.b16 %v3418
  %v3430 = vunpack.c.h.b16 %v3418
  %v3431 = vpack.c.b16 %v3423, %v3423
  %v3432 = vpack.c.b16 %v3424, %v3424
  %v3433 = vpack.c.b16 %v3425, %v3425
  %v3434 = vpack.c.b16 %v3426, %v3426
  %v3435 = vpack.c.b16 %v3427, %v3427
  %v3436 = vpack.c.b16 %v3428, %v3428
  %v3437 = vpack.c.b16 %v3429, %v3429
  %v3438 = vpack.c.b16 %v3430, %v3430
  %vm3447 = vcmask 257024
  %3448 = vst.msk [vmem:[%s16] sm:$0xf] %vm3447, %v3431
  %3449 = vst.msk [vmem:[%s16 + $0x4] sm:$0xf] %vm3447, %v3432
  %3450 = vst.msk [vmem:[%s16 + $0x8] sm:$0xf] %vm3447, %v3433
  %3451 = vst.msk [vmem:[%s16 + $0xc] sm:$0xf] %vm3447, %v3434
  %3452 = vst.msk [vmem:[%s16 + $0x10] sm:$0xf] %vm3447, %v3435
  %3453 = vst.msk [vmem:[%s16 + $0x14] sm:$0xf] %vm3447, %v3436
  %3454 = vst.msk [vmem:[%s16 + $0x18] sm:$0xf] %vm3447, %v3437
  %3455 = vst.msk [vmem:[%s16 + $0x1c] sm:$0xf] %vm3447, %v3438
  %v3456 = vld [vmem:[%s14] sm:$0xf]
  %v3457 = vld [vmem:[%s14 + $0x4] sm:$0xf]
  %v3458 = vld [vmem:[%s14 + $0x8] sm:$0xf]
  %v3459 = vld [vmem:[%s14 + $0xc] sm:$0xf]
  %v3460 = vld [vmem:[%s14 + $0x10] sm:$0xf]
  %v3461 = vld [vmem:[%s14 + $0x14] sm:$0xf]
  %v3462 = vld [vmem:[%s13] sm:$0xff]
  %v3463 = vld [vmem:[%s13 + $0x8] sm:$0xff]
  %v3464 = vld [vmem:[%s13 + $0x10] sm:$0xff]
  %v3465 = vld [vmem:[%s13 + $0x18] sm:$0xff]
  %v3466 = vld [vmem:[%s13 + $0x20] sm:$0xff]
  %v3467 = vld [vmem:[%s13 + $0x28] sm:$0xff]
  %v3468 = vld [vmem:[%s15] sm:$0xff]
  %v3469 = vld [vmem:[%s15 + $0x8] sm:$0xff]
  %v3470 = vld [vmem:[%s15 + $0x10] sm:$0xff]
  %v3471 = vld [vmem:[%s15 + $0x18] sm:$0xff]
  %v3472 = vld [vmem:[%s15 + $0x20] sm:$0xff]
  %v3473 = vld [vmem:[%s15 + $0x28] sm:$0xff]
  %3475 = vset.pattern.permute.xlu0 0
  %3476 = vperm.xlu0 %3475, %v3468
  %v3477 = vpop.permute.xlu0 %3476
  %3480 = vset.pattern.permute.xlu0 0
  %3481 = vperm.xlu0 %3480, %v3469
  %v3482 = vpop.permute.xlu0 %3481
  %3485 = vset.pattern.permute.xlu0 0
  %3486 = vperm.xlu0 %3485, %v3470
  %v3487 = vpop.permute.xlu0 %3486
  %3490 = vset.pattern.permute.xlu0 0
  %3491 = vperm.xlu0 %3490, %v3471
  %v3492 = vpop.permute.xlu0 %3491
  %3495 = vset.pattern.permute.xlu0 0
  %3496 = vperm.xlu0 %3495, %v3472
  %v3497 = vpop.permute.xlu0 %3496
  %3500 = vset.pattern.permute.xlu0 0
  %3501 = vperm.xlu0 %3500, %v3473
  %v3502 = vpop.permute.xlu0 %3501
  %v3510 = vunpack.c.l.b16 %v3456
  %v3511 = vunpack.c.l.b16 %v3457
  %v3512 = vunpack.c.l.b16 %v3458
  %v3513 = vunpack.c.l.b16 %v3459
  %v3514 = vunpack.c.l.b16 %v3460
  %v3515 = vunpack.c.l.b16 %v3461
  %v3516 = vpack.c.b16 %v3511, %v3510
  %v3517 = vpack.c.b16 %v3513, %v3512
  %v3518 = vpack.c.b16 %v3515, %v3514
  %v3525 = vunpack.c.l.b16 %v3462
  %v3526 = vunpack.c.h.b16 %v3462
  %v3527 = vunpack.c.l.b16 %v3463
  %v3528 = vunpack.c.h.b16 %v3463
  %v3529 = vunpack.c.l.b16 %v3464
  %v3530 = vunpack.c.h.b16 %v3464
  %v3531 = vunpack.c.l.b16 %v3465
  %v3532 = vunpack.c.h.b16 %v3465
  %v3533 = vunpack.c.l.b16 %v3466
  %v3534 = vunpack.c.h.b16 %v3466
  %v3535 = vunpack.c.l.b16 %v3467
  %v3536 = vunpack.c.h.b16 %v3467
  %v3537 = vpack.c.b16 %v3529, %v3525
  %v3538 = vpack.c.b16 %v3530, %v3526
  %v3539 = vpack.c.b16 %v3531, %v3527
  %v3540 = vpack.c.b16 %v3532, %v3528
  %v3541 = vpack.c.b16 %v3533, %v3533
  %v3542 = vpack.c.b16 %v3534, %v3534
  %v3543 = vpack.c.b16 %v3535, %v3535
  %v3544 = vpack.c.b16 %v3536, %v3536
  %vm3549 = vcmask 195584
  %v3551 = vsel %vm3549, %v3516, 0
  %v3554 = vsel %vm3549, %v3517, 0
  %v3557 = vsel %vm3549, %v3518, 0
  %vm3559 = vcmask 1043456
  %v3561 = vsel %vm3559, %v3541, 0
  %v3564 = vsel %vm3559, %v3542, 0
  %v3567 = vsel %vm3559, %v3543, 0
  %v3570 = vsel %vm3559, %v3544, 0
  %3572 = vmatprep.subr.bf16.mxu0 0
  %3573 = vmatpush1.bf16.msra.mxu0 0
  %3574 = vmatprep.subr.bf16.mxu0 0
  %3575 = vmatpush1.bf16.msra.mxu0 0
  %3576 = vmatprep.subr.bf16.mxu0 0
  %3577 = vmatpush1.bf16.msra.mxu0 0
  %3578 = vmatprep.subr.bf16.mxu0 0
  %3579 = vmatpush1.bf16.msra.mxu0 0
  %3580 = vmatprep.subr.bf16.mxu0 0
  %3581 = vmatpush1.bf16.msra.mxu0 0
  %3582 = vmatprep.subr.bf16.mxu0 0
  %3583 = vmatpush1.bf16.msra.mxu0 0
  %3584 = vmatprep.subr.bf16.mxu0 %v3564
  %3585 = vmatpush1.bf16.msra.mxu0 %v3561
  %3586 = vmatprep.subr.bf16.mxu0 %v3538
  %3587 = vmatpush1.bf16.msra.mxu0 %v3537
  %3588 = vmatprep.subr.bf16.mxu0 0
  %3589 = vmatpush2.bf16.msra.mxu0 0
  %3590 = vmatprep.subr.bf16.mxu0 0
  %3591 = vmatpush2.bf16.msra.mxu0 0
  %3592 = vmatprep.subr.bf16.mxu0 0
  %3593 = vmatpush2.bf16.msra.mxu0 0
  %3594 = vmatprep.subr.bf16.mxu0 0
  %3595 = vmatpush2.bf16.msra.mxu0 0
  %3596 = vmatprep.subr.bf16.mxu0 0
  %3597 = vmatpush2.bf16.msra.mxu0 0
  %3598 = vmatprep.subr.bf16.mxu0 0
  %3599 = vmatpush2.bf16.msra.mxu0 0
  %3600 = vmatprep.subr.bf16.mxu0 0
  %3601 = vmatpush2.bf16.msra.mxu0 0
  %3602 = vmatprep.subr.bf16.mxu0 0
  %3603 = vmatpush2.bf16.msra.mxu0 0
  %3604 = vmatprep.mubr.bf16.mxu0 0
  %3605 = vmatmul.mubr.bf16.gmra.mxu0 %v3551
  %v3606 = vpop.f32.mrf.mxu0
  %v3607 = vadd.f32 %v3477, %v3606
  %v3608 = vpop.f32.mrf.mxu0
  %v3609 = vadd.f32 %v3477, %v3608
  %v3610 = vpop.f32.mrf.mxu0
  %v3611 = vadd.f32 %v3482, %v3610
  %v3612 = vpop.f32.mrf.mxu0
  %v3613 = vadd.f32 %v3482, %v3612
  %3614 = vmatprep.mubr.bf16.mxu0 0
  %3615 = vmatmul.mubr.bf16.gmra.mxu0 %v3554
  %v3616 = vpop.f32.mrf.mxu0
  %v3617 = vadd.f32 %v3487, %v3616
  %v3618 = vpop.f32.mrf.mxu0
  %v3619 = vadd.f32 %v3487, %v3618
  %v3620 = vpop.f32.mrf.mxu0
  %v3621 = vadd.f32 %v3492, %v3620
  %v3622 = vpop.f32.mrf.mxu0
  %v3623 = vadd.f32 %v3492, %v3622
  %3624 = vmatprep.mubr.bf16.mxu0 0
  %3625 = vmatmul.mubr.bf16.gmra.mxu0 %v3557
  %v3626 = vpop.f32.mrf.mxu0
  %v3627 = vadd.f32 %v3497, %v3626
  %v3628 = vpop.f32.mrf.mxu0
  %v3629 = vadd.f32 %v3497, %v3628
  %v3630 = vpop.f32.mrf.mxu0
  %v3631 = vadd.f32 %v3502, %v3630
  %v3632 = vpop.f32.mrf.mxu0
  %v3633 = vadd.f32 %v3502, %v3632
  %3634 = vdwg.mxu0
  %3635 = vmatprep.subr.bf16.mxu0 0
  %3636 = vmatpush1.bf16.msra.mxu0 0
  %3637 = vmatprep.subr.bf16.mxu0 0
  %3638 = vmatpush1.bf16.msra.mxu0 0
  %3639 = vmatprep.subr.bf16.mxu0 0
  %3640 = vmatpush1.bf16.msra.mxu0 0
  %3641 = vmatprep.subr.bf16.mxu0 0
  %3642 = vmatpush1.bf16.msra.mxu0 0
  %3643 = vmatprep.subr.bf16.mxu0 0
  %3644 = vmatpush1.bf16.msra.mxu0 0
  %3645 = vmatprep.subr.bf16.mxu0 0
  %3646 = vmatpush1.bf16.msra.mxu0 0
  %3647 = vmatprep.subr.bf16.mxu0 %v3570
  %3648 = vmatpush1.bf16.msra.mxu0 %v3567
  %3649 = vmatprep.subr.bf16.mxu0 %v3540
  %3650 = vmatpush1.bf16.msra.mxu0 %v3539
  %3651 = vmatprep.subr.bf16.mxu0 0
  %3652 = vmatpush2.bf16.msra.mxu0 0
  %3653 = vmatprep.subr.bf16.mxu0 0
  %3654 = vmatpush2.bf16.msra.mxu0 0
  %3655 = vmatprep.subr.bf16.mxu0 0
  %3656 = vmatpush2.bf16.msra.mxu0 0
  %3657 = vmatprep.subr.bf16.mxu0 0
  %3658 = vmatpush2.bf16.msra.mxu0 0
  %3659 = vmatprep.subr.bf16.mxu0 0
  %3660 = vmatpush2.bf16.msra.mxu0 0
  %3661 = vmatprep.subr.bf16.mxu0 0
  %3662 = vmatpush2.bf16.msra.mxu0 0
  %3663 = vmatprep.subr.bf16.mxu0 0
  %3664 = vmatpush2.bf16.msra.mxu0 0
  %3665 = vmatprep.subr.bf16.mxu0 0
  %3666 = vmatpush2.bf16.msra.mxu0 0
  %3667 = vmatprep.mubr.bf16.mxu0 0
  %3668 = vmatmul.mubr.bf16.gmra.mxu0 %v3551
  %v3669 = vpop.f32.mrf.mxu0
  %v3670 = vadd.f32 %v3477, %v3669
  %v3671 = vpop.f32.mrf.mxu0
  %v3672 = vadd.f32 %v3477, %v3671
  %v3673 = vpop.f32.mrf.mxu0
  %v3674 = vadd.f32 %v3482, %v3673
  %v3675 = vpop.f32.mrf.mxu0
  %v3676 = vadd.f32 %v3482, %v3675
  %3677 = vmatprep.mubr.bf16.mxu0 0
  %3678 = vmatmul.mubr.bf16.gmra.mxu0 %v3554
  %v3679 = vpop.f32.mrf.mxu0
  %v3680 = vadd.f32 %v3487, %v3679
  %v3681 = vpop.f32.mrf.mxu0
  %v3682 = vadd.f32 %v3487, %v3681
  %v3683 = vpop.f32.mrf.mxu0
  %v3684 = vadd.f32 %v3492, %v3683
  %v3685 = vpop.f32.mrf.mxu0
  %v3686 = vadd.f32 %v3492, %v3685
  %3687 = vmatprep.mubr.bf16.mxu0 0
  %3688 = vmatmul.mubr.bf16.gmra.mxu0 %v3557
  %v3689 = vpop.f32.mrf.mxu0
  %v3690 = vadd.f32 %v3497, %v3689
  %v3691 = vpop.f32.mrf.mxu0
  %v3692 = vadd.f32 %v3497, %v3691
  %v3693 = vpop.f32.mrf.mxu0
  %v3694 = vadd.f32 %v3502, %v3693
  %v3695 = vpop.f32.mrf.mxu0
  %v3696 = vadd.f32 %v3502, %v3695
  %3697 = vdwg.mxu0
  %v3698 = vmax.f32 %v3607, 0.0
  %v3699 = vmax.f32 %v3609, 0.0
  %v3700 = vmax.f32 %v3670, 0.0
  %v3701 = vmax.f32 %v3672, 0.0
  %v3702 = vmax.f32 %v3611, 0.0
  %v3703 = vmax.f32 %v3613, 0.0
  %v3704 = vmax.f32 %v3674, 0.0
  %v3705 = vmax.f32 %v3676, 0.0
  %v3706 = vmax.f32 %v3617, 0.0
  %v3707 = vmax.f32 %v3619, 0.0
  %v3708 = vmax.f32 %v3680, 0.0
  %v3709 = vmax.f32 %v3682, 0.0
  %v3710 = vmax.f32 %v3621, 0.0
  %v3711 = vmax.f32 %v3623, 0.0
  %v3712 = vmax.f32 %v3684, 0.0
  %v3713 = vmax.f32 %v3686, 0.0
  %v3714 = vmax.f32 %v3627, 0.0
  %v3715 = vmax.f32 %v3629, 0.0
  %v3716 = vmax.f32 %v3690, 0.0
  %v3717 = vmax.f32 %v3692, 0.0
  %v3718 = vmax.f32 %v3631, 0.0
  %v3719 = vmax.f32 %v3633, 0.0
  %v3720 = vmax.f32 %v3694, 0.0
  %v3721 = vmax.f32 %v3696, 0.0
  %v3722 = vpack.c.bf16 %v3702, %v3698
  %v3723 = vpack.c.bf16 %v3703, %v3699
  %v3724 = vpack.c.bf16 %v3704, %v3700
  %v3725 = vpack.c.bf16 %v3705, %v3701
  %v3726 = vpack.c.bf16 %v3710, %v3706
  %v3727 = vpack.c.bf16 %v3711, %v3707
  %v3728 = vpack.c.bf16 %v3712, %v3708
  %v3729 = vpack.c.bf16 %v3713, %v3709
  %v3730 = vpack.c.bf16 %v3718, %v3714
  %v3731 = vpack.c.bf16 %v3719, %v3715
  %v3732 = vpack.c.bf16 %v3720, %v3716
  %v3733 = vpack.c.bf16 %v3721, %v3717
  %v3746 = vunpack.c.l.b16 %v3722
  %v3747 = vunpack.c.l.b16 %v3723
  %v3748 = vunpack.c.l.b16 %v3724
  %v3749 = vunpack.c.l.b16 %v3725
  %v3750 = vunpack.c.h.b16 %v3722
  %v3751 = vunpack.c.h.b16 %v3723
  %v3752 = vunpack.c.h.b16 %v3724
  %v3753 = vunpack.c.h.b16 %v3725
  %v3754 = vunpack.c.l.b16 %v3726
  %v3755 = vunpack.c.l.b16 %v3727
  %v3756 = vunpack.c.l.b16 %v3728
  %v3757 = vunpack.c.l.b16 %v3729
  %v3758 = vunpack.c.h.b16 %v3726
  %v3759 = vunpack.c.h.b16 %v3727
  %v3760 = vunpack.c.h.b16 %v3728
  %v3761 = vunpack.c.h.b16 %v3729
  %v3762 = vunpack.c.l.b16 %v3730
  %v3763 = vunpack.c.l.b16 %v3731
  %v3764 = vunpack.c.l.b16 %v3732
  %v3765 = vunpack.c.l.b16 %v3733
  %v3766 = vunpack.c.h.b16 %v3730
  %v3767 = vunpack.c.h.b16 %v3731
  %v3768 = vunpack.c.h.b16 %v3732
  %v3769 = vunpack.c.h.b16 %v3733
  %v3770 = vpack.c.b16 %v3747, %v3746
  %v3771 = vpack.c.b16 %v3749, %v3748
  %v3772 = vpack.c.b16 %v3751, %v3750
  %v3773 = vpack.c.b16 %v3753, %v3752
  %v3774 = vpack.c.b16 %v3755, %v3754
  %v3775 = vpack.c.b16 %v3757, %v3756
  %v3776 = vpack.c.b16 %v3759, %v3758
  %v3777 = vpack.c.b16 %v3761, %v3760
  %v3778 = vpack.c.b16 %v3763, %v3762
  %v3779 = vpack.c.b16 %v3765, %v3764
  %v3780 = vpack.c.b16 %v3767, %v3766
  %v3781 = vpack.c.b16 %v3769, %v3768
  %3794 = vst [vmem:[%s17] sm:$0xff] %v3770
  %3795 = vst [vmem:[%s17 + $0x8] sm:$0xff] %v3771
  %3796 = vst [vmem:[%s17 + $0x10] sm:$0xff] %v3772
  %3797 = vst [vmem:[%s17 + $0x18] sm:$0xff] %v3773
  %3798 = vst [vmem:[%s17 + $0x20] sm:$0xff] %v3774
  %3799 = vst [vmem:[%s17 + $0x28] sm:$0xff] %v3775
  %3800 = vst [vmem:[%s17 + $0x30] sm:$0xff] %v3776
  %3801 = vst [vmem:[%s17 + $0x38] sm:$0xff] %v3777
  %3802 = vst [vmem:[%s17 + $0x40] sm:$0xff] %v3778
  %3803 = vst [vmem:[%s17 + $0x48] sm:$0xff] %v3779
  %3804 = vst [vmem:[%s17 + $0x50] sm:$0xff] %v3780
  %3805 = vst [vmem:[%s17 + $0x58] sm:$0xff] %v3781
  // Predicated region
  $region66: #{_lambda_.15} parent=0 // pred_check
    _
  $region67: #{_lambda_.15} parent=0 // pred_check_branch
    %3807 = sbr.rel (0) target = $region69
  $region68: #{_lambda_.15} parent=0 // pred_region
    _
  $region69: #{_lambda_.15} parent=0 // pred_fallthru
    _
  // Predicated region
  $region70: #{_lambda_.15} parent=0 // pred_check
    _
  $region71: #{_lambda_.15} parent=0 // pred_check_branch
    %3809 = sbr.rel (0) target = $region73
  $region72: #{_lambda_.15} parent=0 // pred_region
    _
  $region73: #{_lambda_.15} parent=0 // pred_fallthru
    _
  // Predicated region
  $region74: #{_lambda_.15} parent=0 // pred_check
    _
  $region75: #{_lambda_.15} parent=0 // pred_check_branch
    %3811 = sbr.rel (0) target = $region77
  $region76: #{_lambda_.15} parent=0 // pred_region
    _
  $region77: #{_lambda_.15} parent=0 // pred_fallthru
    _
  // Predicated region
  $region78: #{_lambda_.15} parent=0 // pred_check
    _
  $region79: #{_lambda_.15} parent=0 // pred_check_branch
    %3813 = sbr.rel (0) target = $region81
  $region80: #{_lambda_.15} parent=0 // pred_region
    _
  $region81: #{_lambda_.15} parent=0 // pred_fallthru
    _

// kernel: _lambda_.17
$region0: #{_lambda_.17}
  #allocation0 [shape = 'u32[]', space=smem, size = 0x4, offset = 0x4, fixed_abs, tag = 'smem constant byte address 0x4 - core index']
  #allocation1 [shape = 'u32[144,128]{1,0:T(1,128)}', space=vmem, size = 0x12000, scoped, tag = 'internal scratch']
  %s0 = inlined_call_operand.vmem [shape: bf16[16,4], index: 0, kind: input, shape index: {}]
  %s1 = inlined_call_operand.vmem [shape: bf16[4,2048], index: 1, kind: input, shape index: {}]
  %s2 = inlined_call_operand.vmem [shape: f32[16,1], index: 2, kind: input, shape index: {}]
  %s3 = inlined_call_operand.vmem [shape: bf16[16,2048], index: 3, kind: output, shape index: {}]
  %s4 = sld [smem:[#allocation0]]
  $region22: #{_lambda_.17} parent=0
    _
  %s6 = ssub.s32 1, %s4
  %s7 = scalar_select 0, %s6, %s4
  // Predicated region
  $region2: #{_lambda_.17} parent=0 // pred_check
    _
  $region3: #{_lambda_.17} parent=0 // pred_check_branch
    %9 = sbr.rel (0) target = $region5
  $region4: #{_lambda_.17} parent=0 // pred_region
    _
  $region5: #{_lambda_.17} parent=0 // pred_fallthru
    _
  // Predicated region
  $region6: #{_lambda_.17} parent=0 // pred_check
    _
  $region7: #{_lambda_.17} parent=0 // pred_check_branch
    %11 = sbr.rel (0) target = $region9
  $region8: #{_lambda_.17} parent=0 // pred_region
    _
  $region9: #{_lambda_.17} parent=0 // pred_fallthru
    _
  // Predicated region
  $region10: #{_lambda_.17} parent=0 // pred_check
    _
  $region11: #{_lambda_.17} parent=0 // pred_check_branch
    %13 = sbr.rel (0) target = $region13
  $region12: #{_lambda_.17} parent=0 // pred_region
    _
  $region13: #{_lambda_.17} parent=0 // pred_fallthru
    _
  %v15 = vld [vmem:[%s0] sm:$0xf]
  %v16 = vld [vmem:[%s0 + $0x4] sm:$0xf]
  %v17 = vld [vmem:[%s1] sm:$0xff]
  %v18 = vld [vmem:[%s1 + $0x8] sm:$0xff]
  %v19 = vld [vmem:[%s1 + $0x10] sm:$0xff]
  %v20 = vld [vmem:[%s1 + $0x18] sm:$0xff]
  %v21 = vld [vmem:[%s2] sm:$0xff]
  %v22 = vld [vmem:[%s2 + $0x8] sm:$0xff]
  %24 = vset.pattern.permute.xlu0 0
  %25 = vperm.xlu0 %24, %v21
  %v26 = vpop.permute.xlu0 %25
  %29 = vset.pattern.permute.xlu0 0
  %30 = vperm.xlu0 %29, %v22
  %v31 = vpop.permute.xlu0 %30
  %v35 = vunpack.c.l.b16 %v15
  %v36 = vunpack.c.l.b16 %v16
  %v37 = vpack.c.b16 %v36, %v35
  %v42 = vcombine.high %v17, %v17
  %v44 = vunpack.c.l.s4 1983009808
  %v45 = vunpack.c.0.s8 %v44
  %v46 = vlaneseq
  %v47 = vshrl.u32 %v46, 7
  %v48 = vsub.s32 %v45, %v47
  %v49 = vrot.slane %v17, %v48
  %v51 = vunpack.c.l.s4 1983009808
  %v52 = vunpack.c.0.s8 %v51
  %v53 = vlaneseq
  %v54 = vshrl.u32 %v53, 7
  %v55 = vsub.s32 %v52, %v54
  %v56 = vrot.slane %v42, %v55
  %v57 = vcombine.high %v49, %v49
  %v58 = vcombine.high %v56, %v56
  %v59 = vcombine.high %v18, %v18
  %v61 = vunpack.c.l.s4 1983009808
  %v62 = vunpack.c.0.s8 %v61
  %v63 = vlaneseq
  %v64 = vshrl.u32 %v63, 7
  %v65 = vsub.s32 %v62, %v64
  %v66 = vrot.slane %v18, %v65
  %v68 = vunpack.c.l.s4 1983009808
  %v69 = vunpack.c.0.s8 %v68
  %v70 = vlaneseq
  %v71 = vshrl.u32 %v70, 7
  %v72 = vsub.s32 %v69, %v71
  %v73 = vrot.slane %v59, %v72
  %v74 = vcombine.high %v66, %v66
  %v75 = vcombine.high %v73, %v73
  %v76 = vcombine.high %v19, %v19
  %v78 = vunpack.c.l.s4 1983009808
  %v79 = vunpack.c.0.s8 %v78
  %v80 = vlaneseq
  %v81 = vshrl.u32 %v80, 7
  %v82 = vsub.s32 %v79, %v81
  %v83 = vrot.slane %v19, %v82
  %v85 = vunpack.c.l.s4 1983009808
  %v86 = vunpack.c.0.s8 %v85
  %v87 = vlaneseq
  %v88 = vshrl.u32 %v87, 7
  %v89 = vsub.s32 %v86, %v88
  %v90 = vrot.slane %v76, %v89
  %v91 = vcombine.high %v83, %v83
  %v92 = vcombine.high %v90, %v90
  %v93 = vcombine.high %v20, %v20
  %v95 = vunpack.c.l.s4 1983009808
  %v96 = vunpack.c.0.s8 %v95
  %v97 = vlaneseq
  %v98 = vshrl.u32 %v97, 7
  %v99 = vsub.s32 %v96, %v98
  %v100 = vrot.slane %v20, %v99
  %v102 = vunpack.c.l.s4 1983009808
  %v103 = vunpack.c.0.s8 %v102
  %v104 = vlaneseq
  %v105 = vshrl.u32 %v104, 7
  %v106 = vsub.s32 %v103, %v105
  %v107 = vrot.slane %v93, %v106
  %v108 = vcombine.high %v100, %v100
  %v109 = vcombine.high %v107, %v107
  %vm110 = vcmask 31744
  %v112 = vsel %vm110, %v37, 0
  %vm114 = vcmask 1041408
  %v116 = vsel %vm114, %v49, 0
  %v119 = vsel %vm114, %v57, 0
  %v122 = vsel %vm114, %v56, 0
  %v125 = vsel %vm114, %v58, 0
  %v128 = vsel %vm114, %v66, 0
  %v131 = vsel %vm114, %v74, 0
  %v134 = vsel %vm114, %v73, 0
  %v137 = vsel %vm114, %v75, 0
  %v140 = vsel %vm114, %v83, 0
  %v143 = vsel %vm114, %v91, 0
  %v146 = vsel %vm114, %v90, 0
  %v149 = vsel %vm114, %v92, 0
  %v152 = vsel %vm114, %v100, 0
  %v155 = vsel %vm114, %v108, 0
  %v158 = vsel %vm114, %v107, 0
  %v161 = vsel %vm114, %v109, 0
  %163 = vmatprep.subr.bf16.mxu0 0
  %164 = vmatpush1.bf16.msra.mxu0 0
  %165 = vmatprep.subr.bf16.mxu0 0
  %166 = vmatpush1.bf16.msra.mxu0 0
  %167 = vmatprep.subr.bf16.mxu0 0
  %168 = vmatpush1.bf16.msra.mxu0 0
  %169 = vmatprep.subr.bf16.mxu0 0
  %170 = vmatpush1.bf16.msra.mxu0 0
  %171 = vmatprep.subr.bf16.mxu0 0
  %172 = vmatpush1.bf16.msra.mxu0 0
  %173 = vmatprep.subr.bf16.mxu0 0
  %174 = vmatpush1.bf16.msra.mxu0 0
  %175 = vmatprep.subr.bf16.mxu0 0
  %176 = vmatpush1.bf16.msra.mxu0 0
  %177 = vmatprep.subr.bf16.mxu0 %v119
  %178 = vmatpush1.bf16.msra.mxu0 %v116
  %179 = vmatprep.subr.bf16.mxu0 0
  %180 = vmatpush2.bf16.msra.mxu0 0
  %181 = vmatprep.subr.bf16.mxu0 0
  %182 = vmatpush2.bf16.msra.mxu0 0
  %183 = vmatprep.subr.bf16.mxu0 0
  %184 = vmatpush2.bf16.msra.mxu0 0
  %185 = vmatprep.subr.bf16.mxu0 0
  %186 = vmatpush2.bf16.msra.mxu0 0
  %187 = vmatprep.subr.bf16.mxu0 0
  %188 = vmatpush2.bf16.msra.mxu0 0
  %189 = vmatprep.subr.bf16.mxu0 0
  %190 = vmatpush2.bf16.msra.mxu0 0
  %191 = vmatprep.subr.bf16.mxu0 0
  %192 = vmatpush2.bf16.msra.mxu0 0
  %193 = vmatprep.subr.bf16.mxu0 0
  %194 = vmatpush2.bf16.msra.mxu0 0
  %195 = vmatprep.mubr.bf16.mxu0 0
  %196 = vmatmul.mubr.bf16.gmra.mxu0 %v112
  %v197 = vpop.f32.mrf.mxu0
  %v198 = vadd.f32 %v26, %v197
  %v199 = vpop.f32.mrf.mxu0
  %v200 = vadd.f32 %v26, %v199
  %v201 = vpop.f32.mrf.mxu0
  %v202 = vadd.f32 %v31, %v201
  %v203 = vpop.f32.mrf.mxu0
  %v204 = vadd.f32 %v31, %v203
  %205 = vdwg.mxu0
  %206 = vmatprep.subr.bf16.mxu0 0
  %207 = vmatpush1.bf16.msra.mxu0 0
  %208 = vmatprep.subr.bf16.mxu0 0
  %209 = vmatpush1.bf16.msra.mxu0 0
  %210 = vmatprep.subr.bf16.mxu0 0
  %211 = vmatpush1.bf16.msra.mxu0 0
  %212 = vmatprep.subr.bf16.mxu0 0
  %213 = vmatpush1.bf16.msra.mxu0 0
  %214 = vmatprep.subr.bf16.mxu0 0
  %215 = vmatpush1.bf16.msra.mxu0 0
  %216 = vmatprep.subr.bf16.mxu0 0
  %217 = vmatpush1.bf16.msra.mxu0 0
  %218 = vmatprep.subr.bf16.mxu0 0
  %219 = vmatpush1.bf16.msra.mxu0 0
  %220 = vmatprep.subr.bf16.mxu0 %v125
  %221 = vmatpush1.bf16.msra.mxu0 %v122
  %222 = vmatprep.subr.bf16.mxu0 0
  %223 = vmatpush2.bf16.msra.mxu0 0
  %224 = vmatprep.subr.bf16.mxu0 0
  %225 = vmatpush2.bf16.msra.mxu0 0
  %226 = vmatprep.subr.bf16.mxu0 0
  %227 = vmatpush2.bf16.msra.mxu0 0
  %228 = vmatprep.subr.bf16.mxu0 0
  %229 = vmatpush2.bf16.msra.mxu0 0
  %230 = vmatprep.subr.bf16.mxu0 0
  %231 = vmatpush2.bf16.msra.mxu0 0
  %232 = vmatprep.subr.bf16.mxu0 0
  %233 = vmatpush2.bf16.msra.mxu0 0
  %234 = vmatprep.subr.bf16.mxu0 0
  %235 = vmatpush2.bf16.msra.mxu0 0
  %236 = vmatprep.subr.bf16.mxu0 0
  %237 = vmatpush2.bf16.msra.mxu0 0
  %238 = vmatprep.mubr.bf16.mxu0 0
  %239 = vmatmul.mubr.bf16.gmra.mxu0 %v112
  %v240 = vpop.f32.mrf.mxu0
  %v241 = vadd.f32 %v26, %v240
  %v242 = vpop.f32.mrf.mxu0
  %v243 = vadd.f32 %v26, %v242
  %v244 = vpop.f32.mrf.mxu0
  %v245 = vadd.f32 %v31, %v244
  %v246 = vpop.f32.mrf.mxu0
  %v247 = vadd.f32 %v31, %v246
  %248 = vdwg.mxu0
  %249 = vmatprep.subr.bf16.mxu0 0
  %250 = vmatpush1.bf16.msra.mxu0 0
  %251 = vmatprep.subr.bf16.mxu0 0
  %252 = vmatpush1.bf16.msra.mxu0 0
  %253 = vmatprep.subr.bf16.mxu0 0
  %254 = vmatpush1.bf16.msra.mxu0 0
  %255 = vmatprep.subr.bf16.mxu0 0
  %256 = vmatpush1.bf16.msra.mxu0 0
  %257 = vmatprep.subr.bf16.mxu0 0
  %258 = vmatpush1.bf16.msra.mxu0 0
  %259 = vmatprep.subr.bf16.mxu0 0
  %260 = vmatpush1.bf16.msra.mxu0 0
  %261 = vmatprep.subr.bf16.mxu0 0
  %262 = vmatpush1.bf16.msra.mxu0 0
  %263 = vmatprep.subr.bf16.mxu0 %v131
  %264 = vmatpush1.bf16.msra.mxu0 %v128
  %265 = vmatprep.subr.bf16.mxu0 0
  %266 = vmatpush2.bf16.msra.mxu0 0
  %267 = vmatprep.subr.bf16.mxu0 0
  %268 = vmatpush2.bf16.msra.mxu0 0
  %269 = vmatprep.subr.bf16.mxu0 0
  %270 = vmatpush2.bf16.msra.mxu0 0
  %271 = vmatprep.subr.bf16.mxu0 0
  %272 = vmatpush2.bf16.msra.mxu0 0
  %273 = vmatprep.subr.bf16.mxu0 0
  %274 = vmatpush2.bf16.msra.mxu0 0
  %275 = vmatprep.subr.bf16.mxu0 0
  %276 = vmatpush2.bf16.msra.mxu0 0
  %277 = vmatprep.subr.bf16.mxu0 0
  %278 = vmatpush2.bf16.msra.mxu0 0
  %279 = vmatprep.subr.bf16.mxu0 0
  %280 = vmatpush2.bf16.msra.mxu0 0
  %281 = vmatprep.mubr.bf16.mxu0 0
  %282 = vmatmul.mubr.bf16.gmra.mxu0 %v112
  %v283 = vpop.f32.mrf.mxu0
  %v284 = vadd.f32 %v26, %v283
  %v285 = vpop.f32.mrf.mxu0
  %v286 = vadd.f32 %v26, %v285
  %v287 = vpop.f32.mrf.mxu0
  %v288 = vadd.f32 %v31, %v287
  %v289 = vpop.f32.mrf.mxu0
  %v290 = vadd.f32 %v31, %v289
  %291 = vdwg.mxu0
  %292 = vmatprep.subr.bf16.mxu0 0
  %293 = vmatpush1.bf16.msra.mxu0 0
  %294 = vmatprep.subr.bf16.mxu0 0
  %295 = vmatpush1.bf16.msra.mxu0 0
  %296 = vmatprep.subr.bf16.mxu0 0
  %297 = vmatpush1.bf16.msra.mxu0 0
  %298 = vmatprep.subr.bf16.mxu0 0
  %299 = vmatpush1.bf16.msra.mxu0 0
  %300 = vmatprep.subr.bf16.mxu0 0
  %301 = vmatpush1.bf16.msra.mxu0 0
  %302 = vmatprep.subr.bf16.mxu0 0
  %303 = vmatpush1.bf16.msra.mxu0 0
  %304 = vmatprep.subr.bf16.mxu0 0
  %305 = vmatpush1.bf16.msra.mxu0 0
  %306 = vmatprep.subr.bf16.mxu0 %v137
  %307 = vmatpush1.bf16.msra.mxu0 %v134
  %308 = vmatprep.subr.bf16.mxu0 0
  %309 = vmatpush2.bf16.msra.mxu0 0
  %310 = vmatprep.subr.bf16.mxu0 0
  %311 = vmatpush2.bf16.msra.mxu0 0
  %312 = vmatprep.subr.bf16.mxu0 0
  %313 = vmatpush2.bf16.msra.mxu0 0
  %314 = vmatprep.subr.bf16.mxu0 0
  %315 = vmatpush2.bf16.msra.mxu0 0
  %316 = vmatprep.subr.bf16.mxu0 0
  %317 = vmatpush2.bf16.msra.mxu0 0
  %318 = vmatprep.subr.bf16.mxu0 0
  %319 = vmatpush2.bf16.msra.mxu0 0
  %320 = vmatprep.subr.bf16.mxu0 0
  %321 = vmatpush2.bf16.msra.mxu0 0
  %322 = vmatprep.subr.bf16.mxu0 0
  %323 = vmatpush2.bf16.msra.mxu0 0
  %324 = vmatprep.mubr.bf16.mxu0 0
  %325 = vmatmul.mubr.bf16.gmra.mxu0 %v112
  %v326 = vpop.f32.mrf.mxu0
  %v327 = vadd.f32 %v26, %v326
  %v328 = vpop.f32.mrf.mxu0
  %v329 = vadd.f32 %v26, %v328
  %v330 = vpop.f32.mrf.mxu0
  %v331 = vadd.f32 %v31, %v330
  %v332 = vpop.f32.mrf.mxu0
  %v333 = vadd.f32 %v31, %v332
  %334 = vdwg.mxu0
  %335 = vmatprep.subr.bf16.mxu0 0
  %336 = vmatpush1.bf16.msra.mxu0 0
  %337 = vmatprep.subr.bf16.mxu0 0
  %338 = vmatpush1.bf16.msra.mxu0 0
  %339 = vmatprep.subr.bf16.mxu0 0
  %340 = vmatpush1.bf16.msra.mxu0 0
  %341 = vmatprep.subr.bf16.mxu0 0
  %342 = vmatpush1.bf16.msra.mxu0 0
  %343 = vmatprep.subr.bf16.mxu0 0
  %344 = vmatpush1.bf16.msra.mxu0 0
  %345 = vmatprep.subr.bf16.mxu0 0
  %346 = vmatpush1.bf16.msra.mxu0 0
  %347 = vmatprep.subr.bf16.mxu0 0
  %348 = vmatpush1.bf16.msra.mxu0 0
  %349 = vmatprep.subr.bf16.mxu0 %v143
  %350 = vmatpush1.bf16.msra.mxu0 %v140
  %351 = vmatprep.subr.bf16.mxu0 0
  %352 = vmatpush2.bf16.msra.mxu0 0
  %353 = vmatprep.subr.bf16.mxu0 0
  %354 = vmatpush2.bf16.msra.mxu0 0
  %355 = vmatprep.subr.bf16.mxu0 0
  %356 = vmatpush2.bf16.msra.mxu0 0
  %357 = vmatprep.subr.bf16.mxu0 0
  %358 = vmatpush2.bf16.msra.mxu0 0
  %359 = vmatprep.subr.bf16.mxu0 0
  %360 = vmatpush2.bf16.msra.mxu0 0
  %361 = vmatprep.subr.bf16.mxu0 0
  %362 = vmatpush2.bf16.msra.mxu0 0
  %363 = vmatprep.subr.bf16.mxu0 0
  %364 = vmatpush2.bf16.msra.mxu0 0
  %365 = vmatprep.subr.bf16.mxu0 0
  %366 = vmatpush2.bf16.msra.mxu0 0
  %367 = vmatprep.mubr.bf16.mxu0 0
  %368 = vmatmul.mubr.bf16.gmra.mxu0 %v112
  %v369 = vpop.f32.mrf.mxu0
  %v370 = vadd.f32 %v26, %v369
  %v371 = vpop.f32.mrf.mxu0
  %v372 = vadd.f32 %v26, %v371
  %v373 = vpop.f32.mrf.mxu0
  %v374 = vadd.f32 %v31, %v373
  %v375 = vpop.f32.mrf.mxu0
  %v376 = vadd.f32 %v31, %v375
  %377 = vdwg.mxu0
  %378 = vmatprep.subr.bf16.mxu0 0
  %379 = vmatpush1.bf16.msra.mxu0 0
  %380 = vmatprep.subr.bf16.mxu0 0
  %381 = vmatpush1.bf16.msra.mxu0 0
  %382 = vmatprep.subr.bf16.mxu0 0
  %383 = vmatpush1.bf16.msra.mxu0 0
  %384 = vmatprep.subr.bf16.mxu0 0
  %385 = vmatpush1.bf16.msra.mxu0 0
  %386 = vmatprep.subr.bf16.mxu0 0
  %387 = vmatpush1.bf16.msra.mxu0 0
  %388 = vmatprep.subr.bf16.mxu0 0
  %389 = vmatpush1.bf16.msra.mxu0 0
  %390 = vmatprep.subr.bf16.mxu0 0
  %391 = vmatpush1.bf16.msra.mxu0 0
  %392 = vmatprep.subr.bf16.mxu0 %v149
  %393 = vmatpush1.bf16.msra.mxu0 %v146
  %394 = vmatprep.subr.bf16.mxu0 0
  %395 = vmatpush2.bf16.msra.mxu0 0
  %396 = vmatprep.subr.bf16.mxu0 0
  %397 = vmatpush2.bf16.msra.mxu0 0
  %398 = vmatprep.subr.bf16.mxu0 0
  %399 = vmatpush2.bf16.msra.mxu0 0
  %400 = vmatprep.subr.bf16.mxu0 0
  %401 = vmatpush2.bf16.msra.mxu0 0
  %402 = vmatprep.subr.bf16.mxu0 0
  %403 = vmatpush2.bf16.msra.mxu0 0
  %404 = vmatprep.subr.bf16.mxu0 0
  %405 = vmatpush2.bf16.msra.mxu0 0
  %406 = vmatprep.subr.bf16.mxu0 0
  %407 = vmatpush2.bf16.msra.mxu0 0
  %408 = vmatprep.subr.bf16.mxu0 0
  %409 = vmatpush2.bf16.msra.mxu0 0
  %410 = vmatprep.mubr.bf16.mxu0 0
  %411 = vmatmul.mubr.bf16.gmra.mxu0 %v112
  %v412 = vpop.f32.mrf.mxu0
  %v413 = vadd.f32 %v26, %v412
  %v414 = vpop.f32.mrf.mxu0
  %v415 = vadd.f32 %v26, %v414
  %v416 = vpop.f32.mrf.mxu0
  %v417 = vadd.f32 %v31, %v416
  %v418 = vpop.f32.mrf.mxu0
  %v419 = vadd.f32 %v31, %v418
  %420 = vdwg.mxu0
  %421 = vmatprep.subr.bf16.mxu0 0
  %422 = vmatpush1.bf16.msra.mxu0 0
  %423 = vmatprep.subr.bf16.mxu0 0
  %424 = vmatpush1.bf16.msra.mxu0 0
  %425 = vmatprep.subr.bf16.mxu0 0
  %426 = vmatpush1.bf16.msra.mxu0 0
  %427 = vmatprep.subr.bf16.mxu0 0
  %428 = vmatpush1.bf16.msra.mxu0 0
  %429 = vmatprep.subr.bf16.mxu0 0
  %430 = vmatpush1.bf16.msra.mxu0 0
  %431 = vmatprep.subr.bf16.mxu0 0
  %432 = vmatpush1.bf16.msra.mxu0 0
  %433 = vmatprep.subr.bf16.mxu0 0
  %434 = vmatpush1.bf16.msra.mxu0 0
  %435 = vmatprep.subr.bf16.mxu0 %v155
  %436 = vmatpush1.bf16.msra.mxu0 %v152
  %437 = vmatprep.subr.bf16.mxu0 0
  %438 = vmatpush2.bf16.msra.mxu0 0
  %439 = vmatprep.subr.bf16.mxu0 0
  %440 = vmatpush2.bf16.msra.mxu0 0
  %441 = vmatprep.subr.bf16.mxu0 0
  %442 = vmatpush2.bf16.msra.mxu0 0
  %443 = vmatprep.subr.bf16.mxu0 0
  %444 = vmatpush2.bf16.msra.mxu0 0
  %445 = vmatprep.subr.bf16.mxu0 0
  %446 = vmatpush2.bf16.msra.mxu0 0
  %447 = vmatprep.subr.bf16.mxu0 0
  %448 = vmatpush2.bf16.msra.mxu0 0
  %449 = vmatprep.subr.bf16.mxu0 0
  %450 = vmatpush2.bf16.msra.mxu0 0
  %451 = vmatprep.subr.bf16.mxu0 0
  %452 = vmatpush2.bf16.msra.mxu0 0
  %453 = vmatprep.mubr.bf16.mxu0 0
  %454 = vmatmul.mubr.bf16.gmra.mxu0 %v112
  %v455 = vpop.f32.mrf.mxu0
  %v456 = vadd.f32 %v26, %v455
  %v457 = vpop.f32.mrf.mxu0
  %v458 = vadd.f32 %v26, %v457
  %v459 = vpop.f32.mrf.mxu0
  %v460 = vadd.f32 %v31, %v459
  %v461 = vpop.f32.mrf.mxu0
  %v462 = vadd.f32 %v31, %v461
  %463 = vdwg.mxu0
  %464 = vmatprep.subr.bf16.mxu0 0
  %465 = vmatpush1.bf16.msra.mxu0 0
  %466 = vmatprep.subr.bf16.mxu0 0
  %467 = vmatpush1.bf16.msra.mxu0 0
  %468 = vmatprep.subr.bf16.mxu0 0
  %469 = vmatpush1.bf16.msra.mxu0 0
  %470 = vmatprep.subr.bf16.mxu0 0
  %471 = vmatpush1.bf16.msra.mxu0 0
  %472 = vmatprep.subr.bf16.mxu0 0
  %473 = vmatpush1.bf16.msra.mxu0 0
  %474 = vmatprep.subr.bf16.mxu0 0
  %475 = vmatpush1.bf16.msra.mxu0 0
  %476 = vmatprep.subr.bf16.mxu0 0
  %477 = vmatpush1.bf16.msra.mxu0 0
  %478 = vmatprep.subr.bf16.mxu0 %v161
  %479 = vmatpush1.bf16.msra.mxu0 %v158
  %480 = vmatprep.subr.bf16.mxu0 0
  %481 = vmatpush2.bf16.msra.mxu0 0
  %482 = vmatprep.subr.bf16.mxu0 0
  %483 = vmatpush2.bf16.msra.mxu0 0
  %484 = vmatprep.subr.bf16.mxu0 0
  %485 = vmatpush2.bf16.msra.mxu0 0
  %486 = vmatprep.subr.bf16.mxu0 0
  %487 = vmatpush2.bf16.msra.mxu0 0
  %488 = vmatprep.subr.bf16.mxu0 0
  %489 = vmatpush2.bf16.msra.mxu0 0
  %490 = vmatprep.subr.bf16.mxu0 0
  %491 = vmatpush2.bf16.msra.mxu0 0
  %492 = vmatprep.subr.bf16.mxu0 0
  %493 = vmatpush2.bf16.msra.mxu0 0
  %494 = vmatprep.subr.bf16.mxu0 0
  %495 = vmatpush2.bf16.msra.mxu0 0
  %496 = vmatprep.mubr.bf16.mxu0 0
  %497 = vmatmul.mubr.bf16.gmra.mxu0 %v112
  %v498 = vpop.f32.mrf.mxu0
  %v499 = vadd.f32 %v26, %v498
  %v500 = vpop.f32.mrf.mxu0
  %v501 = vadd.f32 %v26, %v500
  %v502 = vpop.f32.mrf.mxu0
  %v503 = vadd.f32 %v31, %v502
  %v504 = vpop.f32.mrf.mxu0
  %v505 = vadd.f32 %v31, %v504
  %506 = vdwg.mxu0
  %v507 = vpack.c.bf16 %v202, %v198
  %v508 = vpack.c.bf16 %v204, %v200
  %v509 = vpack.c.bf16 %v245, %v241
  %v510 = vpack.c.bf16 %v247, %v243
  %v511 = vpack.c.bf16 %v288, %v284
  %v512 = vpack.c.bf16 %v290, %v286
  %v513 = vpack.c.bf16 %v331, %v327
  %v514 = vpack.c.bf16 %v333, %v329
  %v515 = vpack.c.bf16 %v374, %v370
  %v516 = vpack.c.bf16 %v376, %v372
  %v517 = vpack.c.bf16 %v417, %v413
  %v518 = vpack.c.bf16 %v419, %v415
  %v519 = vpack.c.bf16 %v460, %v456
  %v520 = vpack.c.bf16 %v462, %v458
  %v521 = vpack.c.bf16 %v503, %v499
  %v522 = vpack.c.bf16 %v505, %v501
  %v539 = vunpack.c.l.b16 %v507
  %v540 = vunpack.c.l.b16 %v508
  %v541 = vunpack.c.l.b16 %v509
  %v542 = vunpack.c.l.b16 %v510
  %v543 = vunpack.c.l.b16 %v511
  %v544 = vunpack.c.l.b16 %v512
  %v545 = vunpack.c.l.b16 %v513
  %v546 = vunpack.c.l.b16 %v514
  %v547 = vunpack.c.l.b16 %v515
  %v548 = vunpack.c.l.b16 %v516
  %v549 = vunpack.c.l.b16 %v517
  %v550 = vunpack.c.l.b16 %v518
  %v551 = vunpack.c.l.b16 %v519
  %v552 = vunpack.c.l.b16 %v520
  %v553 = vunpack.c.l.b16 %v521
  %v554 = vunpack.c.l.b16 %v522
  %v555 = vunpack.c.h.b16 %v507
  %v556 = vunpack.c.h.b16 %v508
  %v557 = vunpack.c.h.b16 %v509
  %v558 = vunpack.c.h.b16 %v510
  %v559 = vunpack.c.h.b16 %v511
  %v560 = vunpack.c.h.b16 %v512
  %v561 = vunpack.c.h.b16 %v513
  %v562 = vunpack.c.h.b16 %v514
  %v563 = vunpack.c.h.b16 %v515
  %v564 = vunpack.c.h.b16 %v516
  %v565 = vunpack.c.h.b16 %v517
  %v566 = vunpack.c.h.b16 %v518
  %v567 = vunpack.c.h.b16 %v519
  %v568 = vunpack.c.h.b16 %v520
  %v569 = vunpack.c.h.b16 %v521
  %v570 = vunpack.c.h.b16 %v522
  %v571 = vpack.c.b16 %v540, %v539
  %v572 = vpack.c.b16 %v542, %v541
  %v573 = vpack.c.b16 %v544, %v543
  %v574 = vpack.c.b16 %v546, %v545
  %v575 = vpack.c.b16 %v548, %v547
  %v576 = vpack.c.b16 %v550, %v549
  %v577 = vpack.c.b16 %v552, %v551
  %v578 = vpack.c.b16 %v554, %v553
  %v579 = vpack.c.b16 %v556, %v555
  %v580 = vpack.c.b16 %v558, %v557
  %v581 = vpack.c.b16 %v560, %v559
  %v582 = vpack.c.b16 %v562, %v561
  %v583 = vpack.c.b16 %v564, %v563
  %v584 = vpack.c.b16 %v566, %v565
  %v585 = vpack.c.b16 %v568, %v567
  %v586 = vpack.c.b16 %v570, %v569
  %603 = vst [vmem:[%s3] sm:$0xff] %v571
  %604 = vst [vmem:[%s3 + $0x8] sm:$0xff] %v572
  %605 = vst [vmem:[%s3 + $0x10] sm:$0xff] %v573
  %606 = vst [vmem:[%s3 + $0x18] sm:$0xff] %v574
  %607 = vst [vmem:[%s3 + $0x20] sm:$0xff] %v575
  %608 = vst [vmem:[%s3 + $0x28] sm:$0xff] %v576
  %609 = vst [vmem:[%s3 + $0x30] sm:$0xff] %v577
  %610 = vst [vmem:[%s3 + $0x38] sm:$0xff] %v578
  %611 = vst [vmem:[%s3 + $0x40] sm:$0xff] %v579
  %612 = vst [vmem:[%s3 + $0x48] sm:$0xff] %v580
  %613 = vst [vmem:[%s3 + $0x50] sm:$0xff] %v581
  %614 = vst [vmem:[%s3 + $0x58] sm:$0xff] %v582
  %615 = vst [vmem:[%s3 + $0x60] sm:$0xff] %v583
  %616 = vst [vmem:[%s3 + $0x68] sm:$0xff] %v584
  %617 = vst [vmem:[%s3 + $0x70] sm:$0xff] %v585
  %618 = vst [vmem:[%s3 + $0x78] sm:$0xff] %v586
  // Predicated region
  $region14: #{_lambda_.17} parent=0 // pred_check
    _
  $region15: #{_lambda_.17} parent=0 // pred_check_branch
    %620 = sbr.rel (0) target = $region17
  $region16: #{_lambda_.17} parent=0 // pred_region
    _
  $region17: #{_lambda_.17} parent=0 // pred_fallthru
    _
  // Predicated region
  $region18: #{_lambda_.17} parent=0 // pred_check
    _
  $region19: #{_lambda_.17} parent=0 // pred_check_branch
    %622 = sbr.rel (0) target = $region21
  $region20: #{_lambda_.17} parent=0 // pred_region
    _
  $region21: #{_lambda_.17} parent=0 // pred_fallthru
    _

// kernel: _lambda_.19
$region0: #{_lambda_.19}
  #allocation0 [shape = 'u32[]', space=smem, size = 0x4, offset = 0x4, fixed_abs, tag = 'smem constant byte address 0x4 - core index']
  #allocation1 [shape = 'u32[144,128]{1,0:T(1,128)}', space=vmem, size = 0x12000, scoped, tag = 'internal scratch']
  %s0 = inlined_call_operand.vmem [shape: f32[2,16,16], index: 0, kind: input, shape index: {}]
  %s1 = inlined_call_operand.vmem [shape: f32[16,64], index: 1, kind: input, shape index: {}]
  %s2 = inlined_call_operand.vmem [shape: f32[64,16], index: 2, kind: input, shape index: {}]
  %s3 = inlined_call_operand.hbm [shape: f32[2,64,64], index: 3, kind: output, shape index: {}]
  %s4 = sld [smem:[#allocation0]]
  $region45: #{_lambda_.19} parent=0
    _
  %s6 = ssub.s32 1, %s4
  %s7 = scalar_select 0, %s6, %s4
  $region1: #{_lambda_.19} parent=0
    #allocation2 [shape = 'u8[65536]{0}', space=vmem, size = 0x10000, scoped, tag = 'output window, operand 0']
    #allocation3 [shape = 's32[2]{0}', space=sflag, size = 0x8, scoped, tag = 'scoped memory for _lambda_.19']
    %8 = vsyncpa [#allocation3], 0
    %s9 = scalar_lea.sflag [#allocation3], 1
    %10 = vsyncpa %s9, 0
    loop: start=0, step=1, limit=4
    $region2: #{_lambda_.19} parent=1 // loop_pre_header
      _
    $region3: #{_lambda_.19} parent=1 // loop_header
      %s12 = sphi 0, %s16
      %p13 = scmp.ge.s32.totalorder %s12, 4
      %s22 = sphi 0, %s24
      %s25 = sphi 0, %s22
      %s26 = sphi 0, %s25
      %s42 = sphi 0, %s26
      %s46 = sphi 0, %s46
      %s48 = sphi 0, %s46
      %s49 = sphi 0, %s48
      %s63 = sphi 0, %s49
      %s67 = sphi 0, %s67
      %s69 = sphi 0, %s67
      %s70 = sphi 0, %s69
      %s84 = sphi 0, %s70
      %s90 = sphi 0, %s92
      %s93 = sphi 0, %s90
      %s94 = sphi 0, %s93
      %s110 = sphi 0, %s94
    $region4: #{_lambda_.19} parent=1 // loop_header_branch
      %15 = sbr.rel (%p13) target = $region8
    $region5: #{_lambda_.19} parent=1 // loop_body
      %s17 = ssub.s32 %s12, 1
      %s18 = ssub.s32 %s12, 2
      %s19 = sadd.s32 %s12, 1
      %s20 = ssub.s32 %s12, %s19
      %p21 = scmp.eq.s32.totalorder %s20, 0
      %s23 = sadd.s32 %s22, 1
      %s24 = scalar_select %p21, %s22, %s23
      %p27 = pneg %p21
      %p28 = scmp.eq.s32.totalorder %s12, 1
      %p29 = por %p27, %p28
      %p30 = scmp.ne.s32.totalorder %s22, %s25
      %p31 = scmp.eq.s32.totalorder %s12, 0
      %p32 = por %p30, %p31
      %p33 = scmp.ne.s32.totalorder %s22, %s25
      %p34 = scmp.eq.s32.totalorder %s17, 1
      %p35 = por %p33, %p34
      %p36 = scmp.ne.s32.totalorder %s25, %s26
      %p37 = scmp.eq.s32.totalorder %s17, 0
      %p38 = por %p36, %p37
      %p39 = scmp.ne.s32.totalorder %s25, %s26
      %p40 = scmp.eq.s32.totalorder %s18, 1
      %p41 = por %p39, %p40
      %p43 = scmp.ne.s32.totalorder %s26, %s42
      %p44 = scmp.eq.s32.totalorder %s18, 0
      %p45 = por %p43, %p44
      %s47 = sadd.s32 %s46, 1
      %p50 = scmp.eq.s32.totalorder %s12, 1
      %p51 = scmp.ne.s32.totalorder %s46, %s48
      %p52 = scmp.eq.s32.totalorder %s12, 0
      %p53 = por %p51, %p52
      %p54 = scmp.ne.s32.totalorder %s46, %s48
      %p55 = scmp.eq.s32.totalorder %s17, 1
      %p56 = por %p54, %p55
      %p57 = scmp.ne.s32.totalorder %s48, %s49
      %p58 = scmp.eq.s32.totalorder %s17, 0
      %p59 = por %p57, %p58
      %p60 = scmp.ne.s32.totalorder %s48, %s49
      %p61 = scmp.eq.s32.totalorder %s18, 1
      %p62 = por %p60, %p61
      %p64 = scmp.ne.s32.totalorder %s49, %s63
      %p65 = scmp.eq.s32.totalorder %s18, 0
      %p66 = por %p64, %p65
      %s68 = sadd.s32 %s67, 1
      %p71 = scmp.eq.s32.totalorder %s12, 1
      %p72 = scmp.ne.s32.totalorder %s67, %s69
      %p73 = scmp.eq.s32.totalorder %s12, 0
      %p74 = por %p72, %p73
      %p75 = scmp.ne.s32.totalorder %s67, %s69
      %p76 = scmp.eq.s32.totalorder %s17, 1
      %p77 = por %p75, %p76
      %p78 = scmp.ne.s32.totalorder %s69, %s70
      %p79 = scmp.eq.s32.totalorder %s17, 0
      %p80 = por %p78, %p79
      %p81 = scmp.ne.s32.totalorder %s69, %s70
      %p82 = scmp.eq.s32.totalorder %s18, 1
      %p83 = por %p81, %p82
      %p85 = scmp.ne.s32.totalorder %s70, %s84
      %p86 = scmp.eq.s32.totalorder %s18, 0
      %p87 = por %p85, %p86
      %s88 = ssub.s32 %s12, %s19
      %p89 = scmp.eq.s32.totalorder %s88, 0
      %s91 = sadd.s32 %s90, 1
      %s92 = scalar_select %p89, %s90, %s91
      %p95 = pneg %p89
      %p96 = scmp.eq.s32.totalorder %s12, 1
      %p97 = por %p95, %p96
      %p98 = scmp.ne.s32.totalorder %s90, %s93
      %p99 = scmp.eq.s32.totalorder %s12, 0
      %p100 = por %p98, %p99
      %p101 = scmp.ne.s32.totalorder %s90, %s93
      %p102 = scmp.eq.s32.totalorder %s17, 1
      %p103 = por %p101, %p102
      %p104 = scmp.ne.s32.totalorder %s93, %s94
      %p105 = scmp.eq.s32.totalorder %s17, 0
      %p106 = por %p104, %p105
      %p107 = scmp.ne.s32.totalorder %s93, %s94
      %p108 = scmp.eq.s32.totalorder %s18, 1
      %p109 = por %p107, %p108
      %p111 = scmp.ne.s32.totalorder %s94, %s110
      %p112 = scmp.eq.s32.totalorder %s18, 0
      %p113 = por %p111, %p112
      %p114 = scmp.le.s32.totalorder 1, %s12
      %p115 = scmp.lt.s32.totalorder %s12, 3
      %p116 = pnand %p114, %p115
      %p117 = pneg %p116
      // Predicated region
      $region9: #{_lambda_.19} parent=5 // pred_check
        _
      $region10: #{_lambda_.19} parent=5 // pred_check_branch
        %119 = sbr.rel (%p116) target = $region12
      $region11: #{_lambda_.19} parent=5 // pred_region
        %s120 = ssub.s32 %s12, 1
        // Predicated region
        $region13: #{_lambda_.19} parent=11 // pred_check
          %p121 = pneg %p59
        $region14: #{_lambda_.19} parent=11 // pred_check_branch
          %123 = sbr.rel (%p121) target = $region16
        $region15: #{_lambda_.19} parent=11 // pred_region
          _
        $region16: #{_lambda_.19} parent=11 // pred_fallthru
          _
        // Predicated region
        $region17: #{_lambda_.19} parent=11 // pred_check
          %p124 = pneg %p80
        $region18: #{_lambda_.19} parent=11 // pred_check_branch
          %126 = sbr.rel (%p124) target = $region20
        $region19: #{_lambda_.19} parent=11 // pred_region
          _
        $region20: #{_lambda_.19} parent=11 // pred_fallthru
          _
      $region12: #{_lambda_.19} parent=5 // pred_fallthru
        _
      %p127 = scmp.lt.s32.totalorder %s12, 2
      // Predicated region
      $region21: #{_lambda_.19} parent=5 // pred_check
        %p128 = pneg %p127
      $region22: #{_lambda_.19} parent=5 // pred_check_branch
        %130 = sbr.rel (%p128) target = $region24
      $region23: #{_lambda_.19} parent=5 // pred_region
        // Predicated region
        $region25: #{_lambda_.19} parent=23 // pred_check
          %p131 = pneg %p32
        $region26: #{_lambda_.19} parent=23 // pred_check_branch
          %133 = sbr.rel (%p131) target = $region28
        $region27: #{_lambda_.19} parent=23 // pred_region
          %p134 = scmp.lt.s32.totalorder %s12, 1
          %s135 = scalar_select %p134, %s12, 1
          %s136 = smul.addr %s135, 2
          %s137 = smul.addr %s136, 8
          %s138 = scalar_lea.vmem %s0, %s137
        $region28: #{_lambda_.19} parent=23 // pred_fallthru
          _
      $region24: #{_lambda_.19} parent=5 // pred_fallthru
        _
      %p139 = scmp.le.s32.totalorder 1, %s12
      %p140 = scmp.lt.s32.totalorder %s12, 3
      %p141 = pnand %p139, %p140
      %p142 = pneg %p141
      // Predicated region
      $region29: #{_lambda_.19} parent=5 // pred_check
        _
      $region30: #{_lambda_.19} parent=5 // pred_check_branch
        %144 = sbr.rel (%p141) target = $region32
      $region31: #{_lambda_.19} parent=5 // pred_region
        %s145 = ssub.s32 %s12, 1
        %p146 = scmp.lt.s32.totalorder %s17, 1
        %s147 = scalar_select %p146, %s17, 1
        %s148 = smul.addr %s147, 2
        %s149 = smul.addr %s148, 8
        %s150 = scalar_lea.vmem %s0, %s149
        %p151 = pneg %p38
        %p152 = pneg %p35
        %p153 = pneg %p59
        %p154 = pneg %p56
        %p155 = pneg %p80
        %p156 = pneg %p77
        %p157 = pneg %p106
        %p158 = pneg %p103
        %s159 = sand.u32 %s93, 1
        %s160 = scalar_lea.sflag [#allocation3], %s159
        %s161 = sand.u32 %s93, 1
        %s162 = smul.addr %s161, 64
        %s163 = scalar_lea.vmem [#allocation2], %s162
        %p164 = scmp.lt.s32.totalorder %s17, 1
        %s165 = scalar_select %p164, %s17, 1
        %s166 = smul.addr %s165, 2
        %s167 = smul.addr %s166, 8
        %s168 = scalar_lea.vmem %s0, %s167
        %v169 = vld [vmem:[%s168] sm:$0xff]
        %v170 = vld [vmem:[%s168 + $0x8] sm:$0xff]
        %v171 = vld [vmem:[%s1] sm:$0xff]
        %v172 = vld [vmem:[%s1 + $0x8] sm:$0xff]
        %vm173 = vcmask 130048
        %v175 = vsel %vm173, %v169, 0
        %v178 = vsel %vm173, %v170, 0
        %180 = vmatprep.subr.mxu0 0.0
        %181 = vmatpush1.msra.mxu0 0.0
        %182 = vmatprep.subr.mxu0 0.0
        %183 = vmatpush1.msra.mxu0 0.0
        %184 = vmatprep.subr.mxu0 0.0
        %185 = vmatpush1.msra.mxu0 0.0
        %186 = vmatprep.subr.mxu0 0.0
        %187 = vmatpush1.msra.mxu0 0.0
        %188 = vmatprep.subr.mxu0 0.0
        %189 = vmatpush1.msra.mxu0 0.0
        %190 = vmatprep.subr.mxu0 0.0
        %191 = vmatpush1.msra.mxu0 0.0
        %192 = vmatprep.subr.mxu0 0.0
        %193 = vmatpush1.msra.mxu0 0.0
        %194 = vmatprep.subr.mxu0 0.0
        %195 = vmatpush1.msra.mxu0 0.0
        %196 = vmatprep.subr.mxu0 0.0
        %197 = vmatpush1.msra.mxu0 0.0
        %198 = vmatprep.subr.mxu0 0.0
        %199 = vmatpush1.msra.mxu0 0.0
        %200 = vmatprep.subr.mxu0 0.0
        %201 = vmatpush1.msra.mxu0 0.0
        %202 = vmatprep.subr.mxu0 0.0
        %203 = vmatpush1.msra.mxu0 0.0
        %204 = vmatprep.subr.mxu0 0.0
        %205 = vmatpush1.msra.mxu0 0.0
        %206 = vmatprep.subr.mxu0 0.0
        %207 = vmatpush1.msra.mxu0 0.0
        %208 = vmatprep.subr.mxu0 0.0
        %209 = vmatpush1.msra.mxu0 %v172
        %210 = vmatprep.subr.mxu0 0.0
        %211 = vmatpush1.msra.mxu0 %v171
        %212 = vmatprep.subr.mxu0 0.0
        %213 = vmatpush2.msra.mxu0 0.0
        %214 = vmatprep.subr.mxu0 0.0
        %215 = vmatpush2.msra.mxu0 0.0
        %216 = vmatprep.subr.mxu0 0.0
        %217 = vmatpush2.msra.mxu0 0.0
        %218 = vmatprep.subr.mxu0 0.0
        %219 = vmatpush2.msra.mxu0 0.0
        %220 = vmatprep.subr.mxu0 0.0
        %221 = vmatpush2.msra.mxu0 0.0
        %222 = vmatprep.subr.mxu0 0.0
        %223 = vmatpush2.msra.mxu0 0.0
        %224 = vmatprep.subr.mxu0 0.0
        %225 = vmatpush2.msra.mxu0 0.0
        %226 = vmatprep.subr.mxu0 0.0
        %227 = vmatpush2.msra.mxu0 0.0
        %228 = vmatprep.subr.mxu0 0.0
        %229 = vmatpush2.msra.mxu0 0.0
        %230 = vmatprep.subr.mxu0 0.0
        %231 = vmatpush2.msra.mxu0 0.0
        %232 = vmatprep.subr.mxu0 0.0
        %233 = vmatpush2.msra.mxu0 0.0
        %234 = vmatprep.subr.mxu0 0.0
        %235 = vmatpush2.msra.mxu0 0.0
        %236 = vmatprep.subr.mxu0 0.0
        %237 = vmatpush2.msra.mxu0 0.0
        %238 = vmatprep.subr.mxu0 0.0
        %239 = vmatpush2.msra.mxu0 0.0
        %240 = vmatprep.subr.mxu0 0.0
        %241 = vmatpush2.msra.mxu0 0.0
        %242 = vmatprep.subr.mxu0 0.0
        %243 = vmatpush2.msra.mxu0 0.0
        %244 = vmatprep.mubr.f32.mxu0 0.0
        %245 = vmatmul.mubr.f32.gmra.mxu0 %v175
        %v246 = vpop.f32.mrf.mxu0
        %v247 = vadd.f32 0.0, %v246
        %v248 = vpop.f32.mrf.mxu0
        %249 = vmatprep.mubr.f32.mxu0 0.0
        %250 = vmatmul.mubr.f32.gmra.mxu0 %v178
        %v251 = vpop.f32.mrf.mxu0
        %v252 = vadd.f32 0.0, %v251
        %v253 = vpop.f32.mrf.mxu0
        %254 = vdwg.mxu0
        %v255 = vld [vmem:[%s2] sm:$0xff]
        %v256 = vld [vmem:[%s2 + $0x8] sm:$0xff]
        %v257 = vld [vmem:[%s2 + $0x10] sm:$0xff]
        %v258 = vld [vmem:[%s2 + $0x18] sm:$0xff]
        %v259 = vld [vmem:[%s2 + $0x20] sm:$0xff]
        %v260 = vld [vmem:[%s2 + $0x28] sm:$0xff]
        %v261 = vld [vmem:[%s2 + $0x30] sm:$0xff]
        %v262 = vld [vmem:[%s2 + $0x38] sm:$0xff]
        %v264 = vsel %vm173, %v255, 0
        %v267 = vsel %vm173, %v256, 0
        %v270 = vsel %vm173, %v257, 0
        %v273 = vsel %vm173, %v258, 0
        %v276 = vsel %vm173, %v259, 0
        %v279 = vsel %vm173, %v260, 0
        %v282 = vsel %vm173, %v261, 0
        %v285 = vsel %vm173, %v262, 0
        %287 = vmatprep.subr.mxu0 0.0
        %288 = vmatpush1.msra.mxu0 0.0
        %289 = vmatprep.subr.mxu0 0.0
        %290 = vmatpush1.msra.mxu0 0.0
        %291 = vmatprep.subr.mxu0 0.0
        %292 = vmatpush1.msra.mxu0 0.0
        %293 = vmatprep.subr.mxu0 0.0
        %294 = vmatpush1.msra.mxu0 0.0
        %295 = vmatprep.subr.mxu0 0.0
        %296 = vmatpush1.msra.mxu0 0.0
        %297 = vmatprep.subr.mxu0 0.0
        %298 = vmatpush1.msra.mxu0 0.0
        %299 = vmatprep.subr.mxu0 0.0
        %300 = vmatpush1.msra.mxu0 0.0
        %301 = vmatprep.subr.mxu0 0.0
        %302 = vmatpush1.msra.mxu0 0.0
        %303 = vmatprep.subr.mxu0 0.0
        %304 = vmatpush1.msra.mxu0 0.0
        %305 = vmatprep.subr.mxu0 0.0
        %306 = vmatpush1.msra.mxu0 0.0
        %307 = vmatprep.subr.mxu0 0.0
        %308 = vmatpush1.msra.mxu0 0.0
        %309 = vmatprep.subr.mxu0 0.0
        %310 = vmatpush1.msra.mxu0 0.0
        %311 = vmatprep.subr.mxu0 0.0
        %312 = vmatpush1.msra.mxu0 0.0
        %313 = vmatprep.subr.mxu0 0.0
        %314 = vmatpush1.msra.mxu0 0.0
        %315 = vmatprep.subr.mxu0 0.0
        %316 = vmatpush1.msra.mxu0 %v252
        %317 = vmatprep.subr.mxu0 0.0
        %318 = vmatpush1.msra.mxu0 %v247
        %319 = vmatprep.subr.mxu0 0.0
        %320 = vmatpush2.msra.mxu0 0.0
        %321 = vmatprep.subr.mxu0 0.0
        %322 = vmatpush2.msra.mxu0 0.0
        %323 = vmatprep.subr.mxu0 0.0
        %324 = vmatpush2.msra.mxu0 0.0
        %325 = vmatprep.subr.mxu0 0.0
        %326 = vmatpush2.msra.mxu0 0.0
        %327 = vmatprep.subr.mxu0 0.0
        %328 = vmatpush2.msra.mxu0 0.0
        %329 = vmatprep.subr.mxu0 0.0
        %330 = vmatpush2.msra.mxu0 0.0
        %331 = vmatprep.subr.mxu0 0.0
        %332 = vmatpush2.msra.mxu0 0.0
        %333 = vmatprep.subr.mxu0 0.0
        %334 = vmatpush2.msra.mxu0 0.0
        %335 = vmatprep.subr.mxu0 0.0
        %336 = vmatpush2.msra.mxu0 0.0
        %337 = vmatprep.subr.mxu0 0.0
        %338 = vmatpush2.msra.mxu0 0.0
        %339 = vmatprep.subr.mxu0 0.0
        %340 = vmatpush2.msra.mxu0 0.0
        %341 = vmatprep.subr.mxu0 0.0
        %342 = vmatpush2.msra.mxu0 0.0
        %343 = vmatprep.subr.mxu0 0.0
        %344 = vmatpush2.msra.mxu0 0.0
        %345 = vmatprep.subr.mxu0 0.0
        %346 = vmatpush2.msra.mxu0 0.0
        %347 = vmatprep.subr.mxu0 0.0
        %348 = vmatpush2.msra.mxu0 0.0
        %349 = vmatprep.subr.mxu0 0.0
        %350 = vmatpush2.msra.mxu0 0.0
        %351 = vmatprep.mubr.f32.mxu0 0.0
        %352 = vmatmul.mubr.f32.gmra.mxu0 %v264
        %v353 = vpop.f32.mrf.mxu0
        %v354 = vadd.f32 0.0, %v353
        %v355 = vpop.f32.mrf.mxu0
        %356 = vmatprep.mubr.f32.mxu0 0.0
        %357 = vmatmul.mubr.f32.gmra.mxu0 %v267
        %v358 = vpop.f32.mrf.mxu0
        %v359 = vadd.f32 0.0, %v358
        %v360 = vpop.f32.mrf.mxu0
        %361 = vmatprep.mubr.f32.mxu0 0.0
        %362 = vmatmul.mubr.f32.gmra.mxu0 %v270
        %v363 = vpop.f32.mrf.mxu0
        %v364 = vadd.f32 0.0, %v363
        %v365 = vpop.f32.mrf.mxu0
        %366 = vmatprep.mubr.f32.mxu0 0.0
        %367 = vmatmul.mubr.f32.gmra.mxu0 %v273
        %v368 = vpop.f32.mrf.mxu0
        %v369 = vadd.f32 0.0, %v368
        %v370 = vpop.f32.mrf.mxu0
        %371 = vmatprep.mubr.f32.mxu0 0.0
        %372 = vmatmul.mubr.f32.gmra.mxu0 %v276
        %v373 = vpop.f32.mrf.mxu0
        %v374 = vadd.f32 0.0, %v373
        %v375 = vpop.f32.mrf.mxu0
        %376 = vmatprep.mubr.f32.mxu0 0.0
        %377 = vmatmul.mubr.f32.gmra.mxu0 %v279
        %v378 = vpop.f32.mrf.mxu0
        %v379 = vadd.f32 0.0, %v378
        %v380 = vpop.f32.mrf.mxu0
        %381 = vmatprep.mubr.f32.mxu0 0.0
        %382 = vmatmul.mubr.f32.gmra.mxu0 %v282
        %v383 = vpop.f32.mrf.mxu0
        %v384 = vadd.f32 0.0, %v383
        %v385 = vpop.f32.mrf.mxu0
        %386 = vmatprep.mubr.f32.mxu0 0.0
        %387 = vmatmul.mubr.f32.gmra.mxu0 %v285
        %v388 = vpop.f32.mrf.mxu0
        %v389 = vadd.f32 0.0, %v388
        %v390 = vpop.f32.mrf.mxu0
        %391 = vdwg.mxu0
        %vm392 = vcmask 523264
        %393 = vst.msk [vmem:[%s163] sm:$0xff] %vm392, %v354
        %394 = vst.msk [vmem:[%s163 + $0x8] sm:$0xff] %vm392, %v359
        %395 = vst.msk [vmem:[%s163 + $0x10] sm:$0xff] %vm392, %v364
        %396 = vst.msk [vmem:[%s163 + $0x18] sm:$0xff] %vm392, %v369
        %397 = vst.msk [vmem:[%s163 + $0x20] sm:$0xff] %vm392, %v374
        %398 = vst.msk [vmem:[%s163 + $0x28] sm:$0xff] %vm392, %v379
        %399 = vst.msk [vmem:[%s163 + $0x30] sm:$0xff] %vm392, %v384
        %400 = vst.msk [vmem:[%s163 + $0x38] sm:$0xff] %vm392, %v389
        %s401 = sand.u32 %s93, 1
        %s402 = scalar_lea.sflag [#allocation3], %s401
        %s403 = sand.u32 %s93, 1
        %s404 = smul.addr %s403, 64
        %s405 = scalar_lea.vmem [#allocation2], %s404
        // Predicated region
        $region33: #{_lambda_.19} parent=31 // pred_check
          %p406 = pneg %p103
        $region34: #{_lambda_.19} parent=31 // pred_check_branch
          %408 = sbr.rel (%p406) target = $region36
        $region35: #{_lambda_.19} parent=31 // pred_region
          %s410 = ssub.s32 1024, 1024
          %411 = vsyncadd %s402, %s410
          %s412 = smul.addr %s17, 8
          %s413 = smul.addr %s412, 128
          %s414 = scalar_lea.hbm %s3, %s413
          %s415 = sshll.u32 %s405, 4
          %s416 = int_to_ptr.vmem [resolvable:$true] %s415
          %421 = dma.vmem_to_hbm [thread:$0]  %s416, 1024, %s414, %s402, 128, 128, 8
        $region36: #{_lambda_.19} parent=31 // pred_fallthru
          _
      $region32: #{_lambda_.19} parent=5 // pred_fallthru
        _
      %p422 = scmp.le.s32.totalorder 2, %s12
      // Predicated region
      $region37: #{_lambda_.19} parent=5 // pred_check
        %p423 = pneg %p422
      $region38: #{_lambda_.19} parent=5 // pred_check_branch
        %425 = sbr.rel (%p423) target = $region40
      $region39: #{_lambda_.19} parent=5 // pred_region
        %s426 = ssub.s32 %s12, 2
        // Predicated region
        $region41: #{_lambda_.19} parent=39 // pred_check
          %p427 = pneg %p109
        $region42: #{_lambda_.19} parent=39 // pred_check_branch
          %429 = sbr.rel (%p427) target = $region44
        $region43: #{_lambda_.19} parent=39 // pred_region
          %s430 = sand.u32 %s94, 1
          %s431 = scalar_lea.sflag [#allocation3], %s430
          %s432 = sand.u32 %s94, 1
          %s433 = smul.addr %s432, 64
          %s434 = scalar_lea.vmem [#allocation2], %s433
          %435 = dma.done %s431, 1024
        $region44: #{_lambda_.19} parent=39 // pred_fallthru
          _
      $region40: #{_lambda_.19} parent=5 // pred_fallthru
        _
    $region6: #{_lambda_.19} parent=1 // loop_footer
      %s16 = sadd.s32 1, %s12
    $region7: #{_lambda_.19} parent=1 // loop_footer_branch
      %11 = sbr.rel target = $region3
    $region8: #{_lambda_.19} parent=1 // loop_exit
      _
    %436 = vsyncpa [#allocation3], 1
    %s437 = scalar_lea.sflag [#allocation3], 1
    %438 = vsyncpa %s437, 1

// kernel: _lambda_.18
$region0: #{_lambda_.18}
  #allocation0 [shape = 'u32[]', space=smem, size = 0x4, offset = 0x4, fixed_abs, tag = 'smem constant byte address 0x4 - core index']
  #allocation1 [shape = 'u32[144,128]{1,0:T(1,128)}', space=vmem, size = 0x12000, scoped, tag = 'internal scratch']
  #allocation2 [shape = 'f32[1,1]{1,0:T(1,128)S(1)}', space=vmem, size = 0x200, scoped, tag = 'scoped memory for _lambda_.18']
  %s0 = inlined_call_operand.vmem [shape: bf16[576,512], index: 0, kind: input, shape index: {}]
  %s1 = inlined_call_operand.vmem [shape: bf16[432,512], index: 1, kind: input, shape index: {}]
  %s2 = inlined_call_operand.vmem [shape: bf16[64,576], index: 2, kind: input, shape index: {}]
  %s3 = inlined_call_operand.vmem [shape: bf16[64,432], index: 3, kind: input, shape index: {}]
  %s4 = inlined_call_operand.vmem [shape: f32[64,1], index: 4, kind: input, shape index: {}]
  %s5 = inlined_call_operand.vmem [shape: bf16[1,64], index: 5, kind: input, shape index: {}]
  %s6 = inlined_call_operand.<no memory space> [shape: f32[1,1], index: 6, kind: input, shape index: {}]
  %s7 = inlined_call_operand.vmem [shape: f32[1,512], index: 7, kind: output, shape index: {}]
  %s8 = sld [smem:[#allocation0]]
  $region38: #{_lambda_.18} parent=0
    _
  %s10 = ssub.s32 1, %s8
  %s11 = scalar_select 0, %s10, %s8
  %v12 = vstv %s6
  %13 = vst [vmem:[#allocation2] sm:$0x1] %v12
  // Predicated region
  $region2: #{_lambda_.18} parent=0 // pred_check
    _
  $region3: #{_lambda_.18} parent=0 // pred_check_branch
    %15 = sbr.rel (0) target = $region5
  $region4: #{_lambda_.18} parent=0 // pred_region
    _
  $region5: #{_lambda_.18} parent=0 // pred_fallthru
    _
  // Predicated region
  $region6: #{_lambda_.18} parent=0 // pred_check
    _
  $region7: #{_lambda_.18} parent=0 // pred_check_branch
    %17 = sbr.rel (0) target = $region9
  $region8: #{_lambda_.18} parent=0 // pred_region
    _
  $region9: #{_lambda_.18} parent=0 // pred_fallthru
    _
  // Predicated region
  $region10: #{_lambda_.18} parent=0 // pred_check
    _
  $region11: #{_lambda_.18} parent=0 // pred_check_branch
    %19 = sbr.rel (0) target = $region13
  $region12: #{_lambda_.18} parent=0 // pred_region
    _
  $region13: #{_lambda_.18} parent=0 // pred_fallthru
    _
  // Predicated region
  $region14: #{_lambda_.18} parent=0 // pred_check
    _
  $region15: #{_lambda_.18} parent=0 // pred_check_branch
    %21 = sbr.rel (0) target = $region17
  $region16: #{_lambda_.18} parent=0 // pred_region
    _
  $region17: #{_lambda_.18} parent=0 // pred_fallthru
    _
  // Predicated region
  $region18: #{_lambda_.18} parent=0 // pred_check
    _
  $region19: #{_lambda_.18} parent=0 // pred_check_branch
    %23 = sbr.rel (0) target = $region21
  $region20: #{_lambda_.18} parent=0 // pred_region
    _
  $region21: #{_lambda_.18} parent=0 // pred_fallthru
    _
  // Predicated region
  $region22: #{_lambda_.18} parent=0 // pred_check
    _
  $region23: #{_lambda_.18} parent=0 // pred_check_branch
    %25 = sbr.rel (0) target = $region25
  $region24: #{_lambda_.18} parent=0 // pred_region
    _
  $region25: #{_lambda_.18} parent=0 // pred_fallthru
    _
  // Predicated region
  $region26: #{_lambda_.18} parent=0 // pred_check
    _
  $region27: #{_lambda_.18} parent=0 // pred_check_branch
    %27 = sbr.rel (0) target = $region29
  $region28: #{_lambda_.18} parent=0 // pred_region
    _
  $region29: #{_lambda_.18} parent=0 // pred_fallthru
    _
  %v29 = vld [vmem:[%s2] sm:$0xff]
  %v30 = vld [vmem:[%s2 + $0x8] sm:$0xff]
  %v31 = vld [vmem:[%s2 + $0x10] sm:$0xf]
  %v32 = vld [vmem:[%s2 + $0x14] sm:$0xff]
  %v33 = vld [vmem:[%s2 + $0x1c] sm:$0xff]
  %v34 = vld [vmem:[%s2 + $0x24] sm:$0xf]
  %v35 = vld [vmem:[%s2 + $0x28] sm:$0xff]
  %v36 = vld [vmem:[%s2 + $0x30] sm:$0xff]
  %v37 = vld [vmem:[%s2 + $0x38] sm:$0xf]
  %v38 = vld [vmem:[%s2 + $0x3c] sm:$0xff]
  %v39 = vld [vmem:[%s2 + $0x44] sm:$0xff]
  %v40 = vld [vmem:[%s2 + $0x4c] sm:$0xf]
  %v41 = vld [vmem:[%s2 + $0x50] sm:$0xff]
  %v42 = vld [vmem:[%s2 + $0x58] sm:$0xff]
  %v43 = vld [vmem:[%s2 + $0x60] sm:$0xf]
  %v44 = vld [vmem:[%s2 + $0x64] sm:$0xff]
  %v45 = vld [vmem:[%s2 + $0x6c] sm:$0xff]
  %v46 = vld [vmem:[%s2 + $0x74] sm:$0xf]
  %v47 = vld [vmem:[%s2 + $0x78] sm:$0xff]
  %v48 = vld [vmem:[%s2 + $0x80] sm:$0xff]
  %v49 = vld [vmem:[%s2 + $0x88] sm:$0xf]
  %v50 = vld [vmem:[%s2 + $0x8c] sm:$0xff]
  %v51 = vld [vmem:[%s2 + $0x94] sm:$0xff]
  %v52 = vld [vmem:[%s2 + $0x9c] sm:$0xf]
  %v53 = vld [vmem:[%s0] sm:$0xff]
  %v54 = vld [vmem:[%s0 + $0x8] sm:$0xff]
  %v55 = vld [vmem:[%s0 + $0x10] sm:$0xff]
  %v56 = vld [vmem:[%s0 + $0x18] sm:$0xff]
  %v57 = vld [vmem:[%s0 + $0x20] sm:$0xff]
  %v58 = vld [vmem:[%s0 + $0x28] sm:$0xff]
  %v59 = vld [vmem:[%s0 + $0x30] sm:$0xff]
  %v60 = vld [vmem:[%s0 + $0x38] sm:$0xff]
  %v61 = vld [vmem:[%s0 + $0x40] sm:$0xff]
  %v62 = vld [vmem:[%s0 + $0x48] sm:$0xff]
  %v63 = vld [vmem:[%s0 + $0x50] sm:$0xff]
  %v64 = vld [vmem:[%s0 + $0x58] sm:$0xff]
  %v65 = vld [vmem:[%s0 + $0x60] sm:$0xff]
  %v66 = vld [vmem:[%s0 + $0x68] sm:$0xff]
  %v67 = vld [vmem:[%s0 + $0x70] sm:$0xff]
  %v68 = vld [vmem:[%s0 + $0x78] sm:$0xff]
  %v69 = vld [vmem:[%s0 + $0x80] sm:$0xff]
  %v70 = vld [vmem:[%s0 + $0x88] sm:$0xff]
  %v71 = vld [vmem:[%s0 + $0x90] sm:$0xff]
  %v72 = vld [vmem:[%s0 + $0x98] sm:$0xff]
  %v73 = vld [vmem:[%s0 + $0xa0] sm:$0xff]
  %v74 = vld [vmem:[%s0 + $0xa8] sm:$0xff]
  %v75 = vld [vmem:[%s0 + $0xb0] sm:$0xff]
  %v76 = vld [vmem:[%s0 + $0xb8] sm:$0xff]
  %v77 = vld [vmem:[%s0 + $0xc0] sm:$0xff]
  %v78 = vld [vmem:[%s0 + $0xc8] sm:$0xff]
  %v79 = vld [vmem:[%s0 + $0xd0] sm:$0xff]
  %v80 = vld [vmem:[%s0 + $0xd8] sm:$0xff]
  %v81 = vld [vmem:[%s0 + $0xe0] sm:$0xff]
  %v82 = vld [vmem:[%s0 + $0xe8] sm:$0xff]
  %v83 = vld [vmem:[%s0 + $0xf0] sm:$0xff]
  %v84 = vld [vmem:[%s0 + $0xf8] sm:$0xff]
  %v85 = vld [vmem:[%s0 + $0x100] sm:$0xff]
  %v86 = vld [vmem:[%s0 + $0x108] sm:$0xff]
  %v87 = vld [vmem:[%s0 + $0x110] sm:$0xff]
  %v88 = vld [vmem:[%s0 + $0x118] sm:$0xff]
  %v89 = vld [vmem:[%s0 + $0x120] sm:$0xff]
  %v90 = vld [vmem:[%s0 + $0x128] sm:$0xff]
  %v91 = vld [vmem:[%s0 + $0x130] sm:$0xff]
  %v92 = vld [vmem:[%s0 + $0x138] sm:$0xff]
  %v93 = vld [vmem:[%s0 + $0x140] sm:$0xff]
  %v94 = vld [vmem:[%s0 + $0x148] sm:$0xff]
  %v95 = vld [vmem:[%s0 + $0x150] sm:$0xff]
  %v96 = vld [vmem:[%s0 + $0x158] sm:$0xff]
  %v97 = vld [vmem:[%s0 + $0x160] sm:$0xff]
  %v98 = vld [vmem:[%s0 + $0x168] sm:$0xff]
  %v99 = vld [vmem:[%s0 + $0x170] sm:$0xff]
  %v100 = vld [vmem:[%s0 + $0x178] sm:$0xff]
  %v101 = vld [vmem:[%s0 + $0x180] sm:$0xff]
  %v102 = vld [vmem:[%s0 + $0x188] sm:$0xff]
  %v103 = vld [vmem:[%s0 + $0x190] sm:$0xff]
  %v104 = vld [vmem:[%s0 + $0x198] sm:$0xff]
  %v105 = vld [vmem:[%s0 + $0x1a0] sm:$0xff]
  %v106 = vld [vmem:[%s0 + $0x1a8] sm:$0xff]
  %v107 = vld [vmem:[%s0 + $0x1b0] sm:$0xff]
  %v108 = vld [vmem:[%s0 + $0x1b8] sm:$0xff]
  %v109 = vld [vmem:[%s0 + $0x1c0] sm:$0xff]
  %v110 = vld [vmem:[%s0 + $0x1c8] sm:$0xff]
  %v111 = vld [vmem:[%s0 + $0x1d0] sm:$0xff]
  %v112 = vld [vmem:[%s0 + $0x1d8] sm:$0xff]
  %v113 = vld [vmem:[%s0 + $0x1e0] sm:$0xff]
  %v114 = vld [vmem:[%s0 + $0x1e8] sm:$0xff]
  %v115 = vld [vmem:[%s0 + $0x1f0] sm:$0xff]
  %v116 = vld [vmem:[%s0 + $0x1f8] sm:$0xff]
  %v117 = vld [vmem:[%s0 + $0x200] sm:$0xff]
  %v118 = vld [vmem:[%s0 + $0x208] sm:$0xff]
  %v119 = vld [vmem:[%s0 + $0x210] sm:$0xff]
  %v120 = vld [vmem:[%s0 + $0x218] sm:$0xff]
  %v121 = vld [vmem:[%s0 + $0x220] sm:$0xff]
  %v122 = vld [vmem:[%s0 + $0x228] sm:$0xff]
  %v123 = vld [vmem:[%s0 + $0x230] sm:$0xff]
  %v124 = vld [vmem:[%s0 + $0x238] sm:$0xff]
  %v125 = vld [vmem:[%s0 + $0x240] sm:$0xff]
  %v126 = vld [vmem:[%s0 + $0x248] sm:$0xff]
  %v127 = vld [vmem:[%s0 + $0x250] sm:$0xff]
  %v128 = vld [vmem:[%s0 + $0x258] sm:$0xff]
  %v129 = vld [vmem:[%s0 + $0x260] sm:$0xff]
  %v130 = vld [vmem:[%s0 + $0x268] sm:$0xff]
  %v131 = vld [vmem:[%s0 + $0x270] sm:$0xff]
  %v132 = vld [vmem:[%s0 + $0x278] sm:$0xff]
  %v133 = vld [vmem:[%s0 + $0x280] sm:$0xff]
  %v134 = vld [vmem:[%s0 + $0x288] sm:$0xff]
  %v135 = vld [vmem:[%s0 + $0x290] sm:$0xff]
  %v136 = vld [vmem:[%s0 + $0x298] sm:$0xff]
  %v137 = vld [vmem:[%s0 + $0x2a0] sm:$0xff]
  %v138 = vld [vmem:[%s0 + $0x2a8] sm:$0xff]
  %v139 = vld [vmem:[%s0 + $0x2b0] sm:$0xff]
  %v140 = vld [vmem:[%s0 + $0x2b8] sm:$0xff]
  %v141 = vld [vmem:[%s0 + $0x2c0] sm:$0xff]
  %v142 = vld [vmem:[%s0 + $0x2c8] sm:$0xff]
  %v143 = vld [vmem:[%s0 + $0x2d0] sm:$0xff]
  %v144 = vld [vmem:[%s0 + $0x2d8] sm:$0xff]
  %v145 = vld [vmem:[%s0 + $0x2e0] sm:$0xff]
  %v146 = vld [vmem:[%s0 + $0x2e8] sm:$0xff]
  %v147 = vld [vmem:[%s0 + $0x2f0] sm:$0xff]
  %v148 = vld [vmem:[%s0 + $0x2f8] sm:$0xff]
  %v149 = vld [vmem:[%s0 + $0x300] sm:$0xff]
  %v150 = vld [vmem:[%s0 + $0x308] sm:$0xff]
  %v151 = vld [vmem:[%s0 + $0x310] sm:$0xff]
  %v152 = vld [vmem:[%s0 + $0x318] sm:$0xff]
  %v153 = vld [vmem:[%s0 + $0x320] sm:$0xff]
  %v154 = vld [vmem:[%s0 + $0x328] sm:$0xff]
  %v155 = vld [vmem:[%s0 + $0x330] sm:$0xff]
  %v156 = vld [vmem:[%s0 + $0x338] sm:$0xff]
  %v157 = vld [vmem:[%s0 + $0x340] sm:$0xff]
  %v158 = vld [vmem:[%s0 + $0x348] sm:$0xff]
  %v159 = vld [vmem:[%s0 + $0x350] sm:$0xff]
  %v160 = vld [vmem:[%s0 + $0x358] sm:$0xff]
  %v161 = vld [vmem:[%s0 + $0x360] sm:$0xff]
  %v162 = vld [vmem:[%s0 + $0x368] sm:$0xff]
  %v163 = vld [vmem:[%s0 + $0x370] sm:$0xff]
  %v164 = vld [vmem:[%s0 + $0x378] sm:$0xff]
  %v165 = vld [vmem:[%s0 + $0x380] sm:$0xff]
  %v166 = vld [vmem:[%s0 + $0x388] sm:$0xff]
  %v167 = vld [vmem:[%s0 + $0x390] sm:$0xff]
  %v168 = vld [vmem:[%s0 + $0x398] sm:$0xff]
  %v169 = vld [vmem:[%s0 + $0x3a0] sm:$0xff]
  %v170 = vld [vmem:[%s0 + $0x3a8] sm:$0xff]
  %v171 = vld [vmem:[%s0 + $0x3b0] sm:$0xff]
  %v172 = vld [vmem:[%s0 + $0x3b8] sm:$0xff]
  %v173 = vld [vmem:[%s0 + $0x3c0] sm:$0xff]
  %v174 = vld [vmem:[%s0 + $0x3c8] sm:$0xff]
  %v175 = vld [vmem:[%s0 + $0x3d0] sm:$0xff]
  %v176 = vld [vmem:[%s0 + $0x3d8] sm:$0xff]
  %v177 = vld [vmem:[%s0 + $0x3e0] sm:$0xff]
  %v178 = vld [vmem:[%s0 + $0x3e8] sm:$0xff]
  %v179 = vld [vmem:[%s0 + $0x3f0] sm:$0xff]
  %v180 = vld [vmem:[%s0 + $0x3f8] sm:$0xff]
  %v181 = vld [vmem:[%s0 + $0x400] sm:$0xff]
  %v182 = vld [vmem:[%s0 + $0x408] sm:$0xff]
  %v183 = vld [vmem:[%s0 + $0x410] sm:$0xff]
  %v184 = vld [vmem:[%s0 + $0x418] sm:$0xff]
  %v185 = vld [vmem:[%s0 + $0x420] sm:$0xff]
  %v186 = vld [vmem:[%s0 + $0x428] sm:$0xff]
  %v187 = vld [vmem:[%s0 + $0x430] sm:$0xff]
  %v188 = vld [vmem:[%s0 + $0x438] sm:$0xff]
  %v189 = vld [vmem:[%s0 + $0x440] sm:$0xff]
  %v190 = vld [vmem:[%s0 + $0x448] sm:$0xff]
  %v191 = vld [vmem:[%s0 + $0x450] sm:$0xff]
  %v192 = vld [vmem:[%s0 + $0x458] sm:$0xff]
  %v193 = vld [vmem:[%s0 + $0x460] sm:$0xff]
  %v194 = vld [vmem:[%s0 + $0x468] sm:$0xff]
  %v195 = vld [vmem:[%s0 + $0x470] sm:$0xff]
  %v196 = vld [vmem:[%s0 + $0x478] sm:$0xff]
  %v197 = vld [vmem:[%s3] sm:$0xff]
  %v198 = vld [vmem:[%s3 + $0x8] sm:$0xff]
  %v199 = vld [vmem:[%s3 + $0x10] sm:$0xff]
  %v200 = vld [vmem:[%s3 + $0x18] sm:$0xff]
  %v201 = vld [vmem:[%s3 + $0x20] sm:$0xff]
  %v202 = vld [vmem:[%s3 + $0x28] sm:$0xff]
  %v203 = vld [vmem:[%s3 + $0x30] sm:$0xff]
  %v204 = vld [vmem:[%s3 + $0x38] sm:$0xff]
  %v205 = vld [vmem:[%s3 + $0x40] sm:$0xff]
  %v206 = vld [vmem:[%s3 + $0x48] sm:$0xff]
  %v207 = vld [vmem:[%s3 + $0x50] sm:$0xff]
  %v208 = vld [vmem:[%s3 + $0x58] sm:$0xff]
  %v209 = vld [vmem:[%s3 + $0x60] sm:$0xff]
  %v210 = vld [vmem:[%s3 + $0x68] sm:$0xff]
  %v211 = vld [vmem:[%s3 + $0x70] sm:$0xff]
  %v212 = vld [vmem:[%s3 + $0x78] sm:$0xff]
  %v213 = vld [vmem:[%s1] sm:$0xff]
  %v214 = vld [vmem:[%s1 + $0x8] sm:$0xff]
  %v215 = vld [vmem:[%s1 + $0x10] sm:$0xff]
  %v216 = vld [vmem:[%s1 + $0x18] sm:$0xff]
  %v217 = vld [vmem:[%s1 + $0x20] sm:$0xff]
  %v218 = vld [vmem:[%s1 + $0x28] sm:$0xff]
  %v219 = vld [vmem:[%s1 + $0x30] sm:$0xff]
  %v220 = vld [vmem:[%s1 + $0x38] sm:$0xff]
  %v221 = vld [vmem:[%s1 + $0x40] sm:$0xff]
  %v222 = vld [vmem:[%s1 + $0x48] sm:$0xff]
  %v223 = vld [vmem:[%s1 + $0x50] sm:$0xff]
  %v224 = vld [vmem:[%s1 + $0x58] sm:$0xff]
  %v225 = vld [vmem:[%s1 + $0x60] sm:$0xff]
  %v226 = vld [vmem:[%s1 + $0x68] sm:$0xff]
  %v227 = vld [vmem:[%s1 + $0x70] sm:$0xff]
  %v228 = vld [vmem:[%s1 + $0x78] sm:$0xff]
  %v229 = vld [vmem:[%s1 + $0x80] sm:$0xff]
  %v230 = vld [vmem:[%s1 + $0x88] sm:$0xff]
  %v231 = vld [vmem:[%s1 + $0x90] sm:$0xff]
  %v232 = vld [vmem:[%s1 + $0x98] sm:$0xff]
  %v233 = vld [vmem:[%s1 + $0xa0] sm:$0xff]
  %v234 = vld [vmem:[%s1 + $0xa8] sm:$0xff]
  %v235 = vld [vmem:[%s1 + $0xb0] sm:$0xff]
  %v236 = vld [vmem:[%s1 + $0xb8] sm:$0xff]
  %v237 = vld [vmem:[%s1 + $0xc0] sm:$0xff]
  %v238 = vld [vmem:[%s1 + $0xc8] sm:$0xff]
  %v239 = vld [vmem:[%s1 + $0xd0] sm:$0xff]
  %v240 = vld [vmem:[%s1 + $0xd8] sm:$0xff]
  %v241 = vld [vmem:[%s1 + $0xe0] sm:$0xff]
  %v242 = vld [vmem:[%s1 + $0xe8] sm:$0xff]
  %v243 = vld [vmem:[%s1 + $0xf0] sm:$0xff]
  %v244 = vld [vmem:[%s1 + $0xf8] sm:$0xff]
  %v245 = vld [vmem:[%s1 + $0x100] sm:$0xff]
  %v246 = vld [vmem:[%s1 + $0x108] sm:$0xff]
  %v247 = vld [vmem:[%s1 + $0x110] sm:$0xff]
  %v248 = vld [vmem:[%s1 + $0x118] sm:$0xff]
  %v249 = vld [vmem:[%s1 + $0x120] sm:$0xff]
  %v250 = vld [vmem:[%s1 + $0x128] sm:$0xff]
  %v251 = vld [vmem:[%s1 + $0x130] sm:$0xff]
  %v252 = vld [vmem:[%s1 + $0x138] sm:$0xff]
  %v253 = vld [vmem:[%s1 + $0x140] sm:$0xff]
  %v254 = vld [vmem:[%s1 + $0x148] sm:$0xff]
  %v255 = vld [vmem:[%s1 + $0x150] sm:$0xff]
  %v256 = vld [vmem:[%s1 + $0x158] sm:$0xff]
  %v257 = vld [vmem:[%s1 + $0x160] sm:$0xff]
  %v258 = vld [vmem:[%s1 + $0x168] sm:$0xff]
  %v259 = vld [vmem:[%s1 + $0x170] sm:$0xff]
  %v260 = vld [vmem:[%s1 + $0x178] sm:$0xff]
  %v261 = vld [vmem:[%s1 + $0x180] sm:$0xff]
  %v262 = vld [vmem:[%s1 + $0x188] sm:$0xff]
  %v263 = vld [vmem:[%s1 + $0x190] sm:$0xff]
  %v264 = vld [vmem:[%s1 + $0x198] sm:$0xff]
  %v265 = vld [vmem:[%s1 + $0x1a0] sm:$0xff]
  %v266 = vld [vmem:[%s1 + $0x1a8] sm:$0xff]
  %v267 = vld [vmem:[%s1 + $0x1b0] sm:$0xff]
  %v268 = vld [vmem:[%s1 + $0x1b8] sm:$0xff]
  %v269 = vld [vmem:[%s1 + $0x1c0] sm:$0xff]
  %v270 = vld [vmem:[%s1 + $0x1c8] sm:$0xff]
  %v271 = vld [vmem:[%s1 + $0x1d0] sm:$0xff]
  %v272 = vld [vmem:[%s1 + $0x1d8] sm:$0xff]
  %v273 = vld [vmem:[%s1 + $0x1e0] sm:$0xff]
  %v274 = vld [vmem:[%s1 + $0x1e8] sm:$0xff]
  %v275 = vld [vmem:[%s1 + $0x1f0] sm:$0xff]
  %v276 = vld [vmem:[%s1 + $0x1f8] sm:$0xff]
  %v277 = vld [vmem:[%s1 + $0x200] sm:$0xff]
  %v278 = vld [vmem:[%s1 + $0x208] sm:$0xff]
  %v279 = vld [vmem:[%s1 + $0x210] sm:$0xff]
  %v280 = vld [vmem:[%s1 + $0x218] sm:$0xff]
  %v281 = vld [vmem:[%s1 + $0x220] sm:$0xff]
  %v282 = vld [vmem:[%s1 + $0x228] sm:$0xff]
  %v283 = vld [vmem:[%s1 + $0x230] sm:$0xff]
  %v284 = vld [vmem:[%s1 + $0x238] sm:$0xff]
  %v285 = vld [vmem:[%s1 + $0x240] sm:$0xff]
  %v286 = vld [vmem:[%s1 + $0x248] sm:$0xff]
  %v287 = vld [vmem:[%s1 + $0x250] sm:$0xff]
  %v288 = vld [vmem:[%s1 + $0x258] sm:$0xff]
  %v289 = vld [vmem:[%s1 + $0x260] sm:$0xff]
  %v290 = vld [vmem:[%s1 + $0x268] sm:$0xff]
  %v291 = vld [vmem:[%s1 + $0x270] sm:$0xff]
  %v292 = vld [vmem:[%s1 + $0x278] sm:$0xff]
  %v293 = vld [vmem:[%s1 + $0x280] sm:$0xff]
  %v294 = vld [vmem:[%s1 + $0x288] sm:$0xff]
  %v295 = vld [vmem:[%s1 + $0x290] sm:$0xff]
  %v296 = vld [vmem:[%s1 + $0x298] sm:$0xff]
  %v297 = vld [vmem:[%s1 + $0x2a0] sm:$0xff]
  %v298 = vld [vmem:[%s1 + $0x2a8] sm:$0xff]
  %v299 = vld [vmem:[%s1 + $0x2b0] sm:$0xff]
  %v300 = vld [vmem:[%s1 + $0x2b8] sm:$0xff]
  %v301 = vld [vmem:[%s1 + $0x2c0] sm:$0xff]
  %v302 = vld [vmem:[%s1 + $0x2c8] sm:$0xff]
  %v303 = vld [vmem:[%s1 + $0x2d0] sm:$0xff]
  %v304 = vld [vmem:[%s1 + $0x2d8] sm:$0xff]
  %v305 = vld [vmem:[%s1 + $0x2e0] sm:$0xff]
  %v306 = vld [vmem:[%s1 + $0x2e8] sm:$0xff]
  %v307 = vld [vmem:[%s1 + $0x2f0] sm:$0xff]
  %v308 = vld [vmem:[%s1 + $0x2f8] sm:$0xff]
  %v309 = vld [vmem:[%s1 + $0x300] sm:$0xff]
  %v310 = vld [vmem:[%s1 + $0x308] sm:$0xff]
  %v311 = vld [vmem:[%s1 + $0x310] sm:$0xff]
  %v312 = vld [vmem:[%s1 + $0x318] sm:$0xff]
  %v313 = vld [vmem:[%s1 + $0x320] sm:$0xff]
  %v314 = vld [vmem:[%s1 + $0x328] sm:$0xff]
  %v315 = vld [vmem:[%s1 + $0x330] sm:$0xff]
  %v316 = vld [vmem:[%s1 + $0x338] sm:$0xff]
  %v317 = vld [vmem:[%s1 + $0x340] sm:$0xff]
  %v318 = vld [vmem:[%s1 + $0x348] sm:$0xff]
  %v319 = vld [vmem:[%s1 + $0x350] sm:$0xff]
  %v320 = vld [vmem:[%s1 + $0x358] sm:$0xff]
  %v337 = vunpack.c.l.b16 %v197
  %v338 = vunpack.c.h.b16 %v197
  %v339 = vunpack.c.l.b16 %v198
  %v340 = vunpack.c.h.b16 %v198
  %v341 = vunpack.c.l.b16 %v199
  %v342 = vunpack.c.h.b16 %v199
  %v343 = vunpack.c.l.b16 %v200
  %v344 = vunpack.c.h.b16 %v200
  %v345 = vunpack.c.l.b16 %v201
  %v346 = vunpack.c.h.b16 %v201
  %v347 = vunpack.c.l.b16 %v202
  %v348 = vunpack.c.h.b16 %v202
  %v349 = vunpack.c.l.b16 %v203
  %v350 = vunpack.c.h.b16 %v203
  %v351 = vunpack.c.l.b16 %v204
  %v352 = vunpack.c.h.b16 %v204
  %v353 = vunpack.c.l.b16 %v205
  %v354 = vunpack.c.h.b16 %v205
  %v355 = vunpack.c.l.b16 %v206
  %v356 = vunpack.c.h.b16 %v206
  %v357 = vunpack.c.l.b16 %v207
  %v358 = vunpack.c.h.b16 %v207
  %v359 = vunpack.c.l.b16 %v208
  %v360 = vunpack.c.h.b16 %v208
  %v361 = vunpack.c.l.b16 %v209
  %v362 = vunpack.c.h.b16 %v209
  %v363 = vunpack.c.l.b16 %v210
  %v364 = vunpack.c.h.b16 %v210
  %v365 = vunpack.c.l.b16 %v211
  %v366 = vunpack.c.h.b16 %v211
  %v367 = vunpack.c.l.b16 %v212
  %v368 = vunpack.c.h.b16 %v212
  %v369 = vpack.c.b16 %v341, %v337
  %v370 = vpack.c.b16 %v342, %v338
  %v371 = vpack.c.b16 %v343, %v339
  %v372 = vpack.c.b16 %v344, %v340
  %v373 = vpack.c.b16 %v349, %v345
  %v374 = vpack.c.b16 %v350, %v346
  %v375 = vpack.c.b16 %v351, %v347
  %v376 = vpack.c.b16 %v352, %v348
  %v377 = vpack.c.b16 %v357, %v353
  %v378 = vpack.c.b16 %v358, %v354
  %v379 = vpack.c.b16 %v359, %v355
  %v380 = vpack.c.b16 %v360, %v356
  %v381 = vpack.c.b16 %v365, %v361
  %v382 = vpack.c.b16 %v366, %v362
  %v383 = vpack.c.b16 %v367, %v363
  %v384 = vpack.c.b16 %v368, %v364
  %v505 = vunpack.c.l.b16 %v213
  %v506 = vunpack.c.h.b16 %v213
  %v507 = vunpack.c.l.b16 %v214
  %v508 = vunpack.c.h.b16 %v214
  %v509 = vunpack.c.l.b16 %v215
  %v510 = vunpack.c.h.b16 %v215
  %v511 = vunpack.c.l.b16 %v216
  %v512 = vunpack.c.h.b16 %v216
  %v513 = vunpack.c.l.b16 %v217
  %v514 = vunpack.c.h.b16 %v217
  %v515 = vunpack.c.l.b16 %v218
  %v516 = vunpack.c.h.b16 %v218
  %v517 = vunpack.c.l.b16 %v219
  %v518 = vunpack.c.h.b16 %v219
  %v519 = vunpack.c.l.b16 %v220
  %v520 = vunpack.c.h.b16 %v220
  %v521 = vunpack.c.l.b16 %v221
  %v522 = vunpack.c.h.b16 %v221
  %v523 = vunpack.c.l.b16 %v222
  %v524 = vunpack.c.h.b16 %v222
  %v525 = vunpack.c.l.b16 %v223
  %v526 = vunpack.c.h.b16 %v223
  %v527 = vunpack.c.l.b16 %v224
  %v528 = vunpack.c.h.b16 %v224
  %v529 = vunpack.c.l.b16 %v225
  %v530 = vunpack.c.h.b16 %v225
  %v531 = vunpack.c.l.b16 %v226
  %v532 = vunpack.c.h.b16 %v226
  %v533 = vunpack.c.l.b16 %v227
  %v534 = vunpack.c.h.b16 %v227
  %v535 = vunpack.c.l.b16 %v228
  %v536 = vunpack.c.h.b16 %v228
  %v537 = vunpack.c.l.b16 %v229
  %v538 = vunpack.c.h.b16 %v229
  %v539 = vunpack.c.l.b16 %v230
  %v540 = vunpack.c.h.b16 %v230
  %v541 = vunpack.c.l.b16 %v231
  %v542 = vunpack.c.h.b16 %v231
  %v543 = vunpack.c.l.b16 %v232
  %v544 = vunpack.c.h.b16 %v232
  %v545 = vunpack.c.l.b16 %v233
  %v546 = vunpack.c.h.b16 %v233
  %v547 = vunpack.c.l.b16 %v234
  %v548 = vunpack.c.h.b16 %v234
  %v549 = vunpack.c.l.b16 %v235
  %v550 = vunpack.c.h.b16 %v235
  %v551 = vunpack.c.l.b16 %v236
  %v552 = vunpack.c.h.b16 %v236
  %v553 = vunpack.c.l.b16 %v237
  %v554 = vunpack.c.h.b16 %v237
  %v555 = vunpack.c.l.b16 %v238
  %v556 = vunpack.c.h.b16 %v238
  %v557 = vunpack.c.l.b16 %v239
  %v558 = vunpack.c.h.b16 %v239
  %v559 = vunpack.c.l.b16 %v240
  %v560 = vunpack.c.h.b16 %v240
  %v561 = vunpack.c.l.b16 %v241
  %v562 = vunpack.c.h.b16 %v241
  %v563 = vunpack.c.l.b16 %v242
  %v564 = vunpack.c.h.b16 %v242
  %v565 = vunpack.c.l.b16 %v243
  %v566 = vunpack.c.h.b16 %v243
  %v567 = vunpack.c.l.b16 %v244
  %v568 = vunpack.c.h.b16 %v244
  %v569 = vunpack.c.l.b16 %v245
  %v570 = vunpack.c.h.b16 %v245
  %v571 = vunpack.c.l.b16 %v246
  %v572 = vunpack.c.h.b16 %v246
  %v573 = vunpack.c.l.b16 %v247
  %v574 = vunpack.c.h.b16 %v247
  %v575 = vunpack.c.l.b16 %v248
  %v576 = vunpack.c.h.b16 %v248
  %v577 = vunpack.c.l.b16 %v249
  %v578 = vunpack.c.h.b16 %v249
  %v579 = vunpack.c.l.b16 %v250
  %v580 = vunpack.c.h.b16 %v250
  %v581 = vunpack.c.l.b16 %v251
  %v582 = vunpack.c.h.b16 %v251
  %v583 = vunpack.c.l.b16 %v252
  %v584 = vunpack.c.h.b16 %v252
  %v585 = vunpack.c.l.b16 %v253
  %v586 = vunpack.c.h.b16 %v253
  %v587 = vunpack.c.l.b16 %v254
  %v588 = vunpack.c.h.b16 %v254
  %v589 = vunpack.c.l.b16 %v255
  %v590 = vunpack.c.h.b16 %v255
  %v591 = vunpack.c.l.b16 %v256
  %v592 = vunpack.c.h.b16 %v256
  %v593 = vunpack.c.l.b16 %v257
  %v594 = vunpack.c.h.b16 %v257
  %v595 = vunpack.c.l.b16 %v258
  %v596 = vunpack.c.h.b16 %v258
  %v597 = vunpack.c.l.b16 %v259
  %v598 = vunpack.c.h.b16 %v259
  %v599 = vunpack.c.l.b16 %v260
  %v600 = vunpack.c.h.b16 %v260
  %v601 = vunpack.c.l.b16 %v261
  %v602 = vunpack.c.h.b16 %v261
  %v603 = vunpack.c.l.b16 %v262
  %v604 = vunpack.c.h.b16 %v262
  %v605 = vunpack.c.l.b16 %v263
  %v606 = vunpack.c.h.b16 %v263
  %v607 = vunpack.c.l.b16 %v264
  %v608 = vunpack.c.h.b16 %v264
  %v609 = vunpack.c.l.b16 %v265
  %v610 = vunpack.c.h.b16 %v265
  %v611 = vunpack.c.l.b16 %v266
  %v612 = vunpack.c.h.b16 %v266
  %v613 = vunpack.c.l.b16 %v267
  %v614 = vunpack.c.h.b16 %v267
  %v615 = vunpack.c.l.b16 %v268
  %v616 = vunpack.c.h.b16 %v268
  %v617 = vunpack.c.l.b16 %v269
  %v618 = vunpack.c.h.b16 %v269
  %v619 = vunpack.c.l.b16 %v270
  %v620 = vunpack.c.h.b16 %v270
  %v621 = vunpack.c.l.b16 %v271
  %v622 = vunpack.c.h.b16 %v271
  %v623 = vunpack.c.l.b16 %v272
  %v624 = vunpack.c.h.b16 %v272
  %v625 = vunpack.c.l.b16 %v273
  %v626 = vunpack.c.h.b16 %v273
  %v627 = vunpack.c.l.b16 %v274
  %v628 = vunpack.c.h.b16 %v274
  %v629 = vunpack.c.l.b16 %v275
  %v630 = vunpack.c.h.b16 %v275
  %v631 = vunpack.c.l.b16 %v276
  %v632 = vunpack.c.h.b16 %v276
  %v633 = vunpack.c.l.b16 %v277
  %v634 = vunpack.c.h.b16 %v277
  %v635 = vunpack.c.l.b16 %v278
  %v636 = vunpack.c.h.b16 %v278
  %v637 = vunpack.c.l.b16 %v279
  %v638 = vunpack.c.h.b16 %v279
  %v639 = vunpack.c.l.b16 %v280
  %v640 = vunpack.c.h.b16 %v280
  %v641 = vunpack.c.l.b16 %v281
  %v642 = vunpack.c.h.b16 %v281
  %v643 = vunpack.c.l.b16 %v282
  %v644 = vunpack.c.h.b16 %v282
  %v645 = vunpack.c.l.b16 %v283
  %v646 = vunpack.c.h.b16 %v283
  %v647 = vunpack.c.l.b16 %v284
  %v648 = vunpack.c.h.b16 %v284
  %v649 = vunpack.c.l.b16 %v285
  %v650 = vunpack.c.h.b16 %v285
  %v651 = vunpack.c.l.b16 %v286
  %v652 = vunpack.c.h.b16 %v286
  %v653 = vunpack.c.l.b16 %v287
  %v654 = vunpack.c.h.b16 %v287
  %v655 = vunpack.c.l.b16 %v288
  %v656 = vunpack.c.h.b16 %v288
  %v657 = vunpack.c.l.b16 %v289
  %v658 = vunpack.c.h.b16 %v289
  %v659 = vunpack.c.l.b16 %v290
  %v660 = vunpack.c.h.b16 %v290
  %v661 = vunpack.c.l.b16 %v291
  %v662 = vunpack.c.h.b16 %v291
  %v663 = vunpack.c.l.b16 %v292
  %v664 = vunpack.c.h.b16 %v292
  %v665 = vunpack.c.l.b16 %v293
  %v666 = vunpack.c.h.b16 %v293
  %v667 = vunpack.c.l.b16 %v294
  %v668 = vunpack.c.h.b16 %v294
  %v669 = vunpack.c.l.b16 %v295
  %v670 = vunpack.c.h.b16 %v295
  %v671 = vunpack.c.l.b16 %v296
  %v672 = vunpack.c.h.b16 %v296
  %v673 = vunpack.c.l.b16 %v297
  %v674 = vunpack.c.h.b16 %v297
  %v675 = vunpack.c.l.b16 %v298
  %v676 = vunpack.c.h.b16 %v298
  %v677 = vunpack.c.l.b16 %v299
  %v678 = vunpack.c.h.b16 %v299
  %v679 = vunpack.c.l.b16 %v300
  %v680 = vunpack.c.h.b16 %v300
  %v681 = vunpack.c.l.b16 %v301
  %v682 = vunpack.c.h.b16 %v301
  %v683 = vunpack.c.l.b16 %v302
  %v684 = vunpack.c.h.b16 %v302
  %v685 = vunpack.c.l.b16 %v303
  %v686 = vunpack.c.h.b16 %v303
  %v687 = vunpack.c.l.b16 %v304
  %v688 = vunpack.c.h.b16 %v304
  %v689 = vunpack.c.l.b16 %v305
  %v690 = vunpack.c.h.b16 %v305
  %v691 = vunpack.c.l.b16 %v306
  %v692 = vunpack.c.h.b16 %v306
  %v693 = vunpack.c.l.b16 %v307
  %v694 = vunpack.c.h.b16 %v307
  %v695 = vunpack.c.l.b16 %v308
  %v696 = vunpack.c.h.b16 %v308
  %v697 = vunpack.c.l.b16 %v309
  %v698 = vunpack.c.h.b16 %v309
  %v699 = vunpack.c.l.b16 %v310
  %v700 = vunpack.c.h.b16 %v310
  %v701 = vunpack.c.l.b16 %v311
  %v702 = vunpack.c.h.b16 %v311
  %v703 = vunpack.c.l.b16 %v312
  %v704 = vunpack.c.h.b16 %v312
  %v705 = vunpack.c.l.b16 %v313
  %v706 = vunpack.c.h.b16 %v313
  %v707 = vunpack.c.l.b16 %v314
  %v708 = vunpack.c.h.b16 %v314
  %v709 = vunpack.c.l.b16 %v315
  %v710 = vunpack.c.h.b16 %v315
  %v711 = vunpack.c.l.b16 %v316
  %v712 = vunpack.c.h.b16 %v316
  %v713 = vunpack.c.l.b16 %v317
  %v714 = vunpack.c.h.b16 %v317
  %v715 = vunpack.c.l.b16 %v318
  %v716 = vunpack.c.h.b16 %v318
  %v717 = vunpack.c.l.b16 %v319
  %v718 = vunpack.c.h.b16 %v319
  %v719 = vunpack.c.l.b16 %v320
  %v720 = vunpack.c.h.b16 %v320
  %v721 = vpack.c.b16 %v509, %v505
  %v722 = vpack.c.b16 %v510, %v506
  %v723 = vpack.c.b16 %v511, %v507
  %v724 = vpack.c.b16 %v512, %v508
  %v725 = vpack.c.b16 %v517, %v513
  %v726 = vpack.c.b16 %v518, %v514
  %v727 = vpack.c.b16 %v519, %v515
  %v728 = vpack.c.b16 %v520, %v516
  %v729 = vpack.c.b16 %v525, %v521
  %v730 = vpack.c.b16 %v526, %v522
  %v731 = vpack.c.b16 %v527, %v523
  %v732 = vpack.c.b16 %v528, %v524
  %v733 = vpack.c.b16 %v533, %v529
  %v734 = vpack.c.b16 %v534, %v530
  %v735 = vpack.c.b16 %v535, %v531
  %v736 = vpack.c.b16 %v536, %v532
  %v737 = vpack.c.b16 %v541, %v537
  %v738 = vpack.c.b16 %v542, %v538
  %v739 = vpack.c.b16 %v543, %v539
  %v740 = vpack.c.b16 %v544, %v540
  %v741 = vpack.c.b16 %v549, %v545
  %v742 = vpack.c.b16 %v550, %v546
  %v743 = vpack.c.b16 %v551, %v547
  %v744 = vpack.c.b16 %v552, %v548
  %v745 = vpack.c.b16 %v557, %v553
  %v746 = vpack.c.b16 %v558, %v554
  %v747 = vpack.c.b16 %v559, %v555
  %v748 = vpack.c.b16 %v560, %v556
  %v749 = vpack.c.b16 %v565, %v561
  %v750 = vpack.c.b16 %v566, %v562
  %v751 = vpack.c.b16 %v567, %v563
  %v752 = vpack.c.b16 %v568, %v564
  %v753 = vpack.c.b16 %v573, %v569
  %v754 = vpack.c.b16 %v574, %v570
  %v755 = vpack.c.b16 %v575, %v571
  %v756 = vpack.c.b16 %v576, %v572
  %v757 = vpack.c.b16 %v581, %v577
  %v758 = vpack.c.b16 %v582, %v578
  %v759 = vpack.c.b16 %v583, %v579
  %v760 = vpack.c.b16 %v584, %v580
  %v761 = vpack.c.b16 %v589, %v585
  %v762 = vpack.c.b16 %v590, %v586
  %v763 = vpack.c.b16 %v591, %v587
  %v764 = vpack.c.b16 %v592, %v588
  %v765 = vpack.c.b16 %v597, %v593
  %v766 = vpack.c.b16 %v598, %v594
  %v767 = vpack.c.b16 %v599, %v595
  %v768 = vpack.c.b16 %v600, %v596
  %v769 = vpack.c.b16 %v605, %v601
  %v770 = vpack.c.b16 %v606, %v602
  %v771 = vpack.c.b16 %v607, %v603
  %v772 = vpack.c.b16 %v608, %v604
  %v773 = vpack.c.b16 %v613, %v609
  %v774 = vpack.c.b16 %v614, %v610
  %v775 = vpack.c.b16 %v615, %v611
  %v776 = vpack.c.b16 %v616, %v612
  %v777 = vpack.c.b16 %v621, %v617
  %v778 = vpack.c.b16 %v622, %v618
  %v779 = vpack.c.b16 %v623, %v619
  %v780 = vpack.c.b16 %v624, %v620
  %v781 = vpack.c.b16 %v629, %v625
  %v782 = vpack.c.b16 %v630, %v626
  %v783 = vpack.c.b16 %v631, %v627
  %v784 = vpack.c.b16 %v632, %v628
  %v785 = vpack.c.b16 %v637, %v633
  %v786 = vpack.c.b16 %v638, %v634
  %v787 = vpack.c.b16 %v639, %v635
  %v788 = vpack.c.b16 %v640, %v636
  %v789 = vpack.c.b16 %v645, %v641
  %v790 = vpack.c.b16 %v646, %v642
  %v791 = vpack.c.b16 %v647, %v643
  %v792 = vpack.c.b16 %v648, %v644
  %v793 = vpack.c.b16 %v653, %v649
  %v794 = vpack.c.b16 %v654, %v650
  %v795 = vpack.c.b16 %v655, %v651
  %v796 = vpack.c.b16 %v656, %v652
  %v797 = vpack.c.b16 %v661, %v657
  %v798 = vpack.c.b16 %v662, %v658
  %v799 = vpack.c.b16 %v663, %v659
  %v800 = vpack.c.b16 %v664, %v660
  %v801 = vpack.c.b16 %v669, %v665
  %v802 = vpack.c.b16 %v670, %v666
  %v803 = vpack.c.b16 %v671, %v667
  %v804 = vpack.c.b16 %v672, %v668
  %v805 = vpack.c.b16 %v677, %v673
  %v806 = vpack.c.b16 %v678, %v674
  %v807 = vpack.c.b16 %v679, %v675
  %v808 = vpack.c.b16 %v680, %v676
  %v809 = vpack.c.b16 %v685, %v681
  %v810 = vpack.c.b16 %v686, %v682
  %v811 = vpack.c.b16 %v687, %v683
  %v812 = vpack.c.b16 %v688, %v684
  %v813 = vpack.c.b16 %v693, %v689
  %v814 = vpack.c.b16 %v694, %v690
  %v815 = vpack.c.b16 %v695, %v691
  %v816 = vpack.c.b16 %v696, %v692
  %v817 = vpack.c.b16 %v701, %v697
  %v818 = vpack.c.b16 %v702, %v698
  %v819 = vpack.c.b16 %v703, %v699
  %v820 = vpack.c.b16 %v704, %v700
  %v821 = vpack.c.b16 %v709, %v705
  %v822 = vpack.c.b16 %v710, %v706
  %v823 = vpack.c.b16 %v711, %v707
  %v824 = vpack.c.b16 %v712, %v708
  %v825 = vpack.c.b16 %v717, %v713
  %v826 = vpack.c.b16 %v718, %v714
  %v827 = vpack.c.b16 %v719, %v715
  %v828 = vpack.c.b16 %v720, %v716
  %vm937 = vcmask 392192
  %v939 = vsel %vm937, %v372, 0
  %v942 = vsel %vm937, %v376, 0
  %v945 = vsel %vm937, %v380, 0
  %v948 = vsel %vm937, %v384, 0
  %950 = vmatprep.subr.bf16.mxu0 %v750
  %951 = vmatpush1.bf16.msra.mxu0 %v749
  %952 = vmatprep.subr.bf16.mxu0 %v746
  %953 = vmatpush1.bf16.msra.mxu0 %v745
  %954 = vmatprep.subr.bf16.mxu0 %v742
  %955 = vmatpush1.bf16.msra.mxu0 %v741
  %956 = vmatprep.subr.bf16.mxu0 %v738
  %957 = vmatpush1.bf16.msra.mxu0 %v737
  %958 = vmatprep.subr.bf16.mxu0 %v734
  %959 = vmatpush1.bf16.msra.mxu0 %v733
  %960 = vmatprep.subr.bf16.mxu0 %v730
  %961 = vmatpush1.bf16.msra.mxu0 %v729
  %962 = vmatprep.subr.bf16.mxu0 %v726
  %963 = vmatpush1.bf16.msra.mxu0 %v725
  %964 = vmatprep.subr.bf16.mxu0 %v722
  %965 = vmatpush1.bf16.msra.mxu0 %v721
  %966 = vmatprep.subr.bf16.mxu0 %v782
  %967 = vmatpush2.bf16.msra.mxu0 %v781
  %968 = vmatprep.subr.bf16.mxu0 %v778
  %969 = vmatpush2.bf16.msra.mxu0 %v777
  %970 = vmatprep.subr.bf16.mxu0 %v774
  %971 = vmatpush2.bf16.msra.mxu0 %v773
  %972 = vmatprep.subr.bf16.mxu0 %v770
  %973 = vmatpush2.bf16.msra.mxu0 %v769
  %974 = vmatprep.subr.bf16.mxu0 %v766
  %975 = vmatpush2.bf16.msra.mxu0 %v765
  %976 = vmatprep.subr.bf16.mxu0 %v762
  %977 = vmatpush2.bf16.msra.mxu0 %v761
  %978 = vmatprep.subr.bf16.mxu0 %v758
  %979 = vmatpush2.bf16.msra.mxu0 %v757
  %980 = vmatprep.subr.bf16.mxu0 %v754
  %981 = vmatpush2.bf16.msra.mxu0 %v753
  %982 = vmatprep.mubr.bf16.mxu0 %v370
  %983 = vmatmul.mubr.bf16.gmra.mxu0 %v369
  %v984 = vpop.f32.mrf.mxu0
  %v985 = vadd.f32 0.0, %v984
  %v986 = vpop.f32.mrf.mxu0
  %v987 = vadd.f32 0.0, %v986
  %v988 = vpop.f32.mrf.mxu0
  %v989 = vadd.f32 0.0, %v988
  %v990 = vpop.f32.mrf.mxu0
  %v991 = vadd.f32 0.0, %v990
  %992 = vmatprep.mubr.bf16.mxu0 %v374
  %993 = vmatmul.mubr.bf16.gmra.mxu0 %v373
  %v994 = vpop.f32.mrf.mxu0
  %v995 = vadd.f32 0.0, %v994
  %v996 = vpop.f32.mrf.mxu0
  %v997 = vadd.f32 0.0, %v996
  %v998 = vpop.f32.mrf.mxu0
  %v999 = vadd.f32 0.0, %v998
  %v1000 = vpop.f32.mrf.mxu0
  %v1001 = vadd.f32 0.0, %v1000
  %1002 = vmatprep.mubr.bf16.mxu0 %v378
  %1003 = vmatmul.mubr.bf16.gmra.mxu0 %v377
  %v1004 = vpop.f32.mrf.mxu0
  %v1005 = vadd.f32 0.0, %v1004
  %v1006 = vpop.f32.mrf.mxu0
  %v1007 = vadd.f32 0.0, %v1006
  %v1008 = vpop.f32.mrf.mxu0
  %v1009 = vadd.f32 0.0, %v1008
  %v1010 = vpop.f32.mrf.mxu0
  %v1011 = vadd.f32 0.0, %v1010
  %1012 = vmatprep.mubr.bf16.mxu0 %v382
  %1013 = vmatmul.mubr.bf16.gmra.mxu0 %v381
  %v1014 = vpop.f32.mrf.mxu0
  %v1015 = vadd.f32 0.0, %v1014
  %v1016 = vpop.f32.mrf.mxu0
  %v1017 = vadd.f32 0.0, %v1016
  %v1018 = vpop.f32.mrf.mxu0
  %v1019 = vadd.f32 0.0, %v1018
  %v1020 = vpop.f32.mrf.mxu0
  %v1021 = vadd.f32 0.0, %v1020
  %1022 = vdwg.mxu0
  %1023 = vmatprep.subr.bf16.mxu0 %v814
  %1024 = vmatpush1.bf16.msra.mxu0 %v813
  %1025 = vmatprep.subr.bf16.mxu0 %v810
  %1026 = vmatpush1.bf16.msra.mxu0 %v809
  %1027 = vmatprep.subr.bf16.mxu0 %v806
  %1028 = vmatpush1.bf16.msra.mxu0 %v805
  %1029 = vmatprep.subr.bf16.mxu0 %v802
  %1030 = vmatpush1.bf16.msra.mxu0 %v801
  %1031 = vmatprep.subr.bf16.mxu0 %v798
  %1032 = vmatpush1.bf16.msra.mxu0 %v797
  %1033 = vmatprep.subr.bf16.mxu0 %v794
  %1034 = vmatpush1.bf16.msra.mxu0 %v793
  %1035 = vmatprep.subr.bf16.mxu0 %v790
  %1036 = vmatpush1.bf16.msra.mxu0 %v789
  %1037 = vmatprep.subr.bf16.mxu0 %v786
  %1038 = vmatpush1.bf16.msra.mxu0 %v785
  %1039 = vmatprep.subr.bf16.mxu0 0
  %1040 = vmatpush2.bf16.msra.mxu0 0
  %1041 = vmatprep.subr.bf16.mxu0 0
  %1042 = vmatpush2.bf16.msra.mxu0 0
  %1043 = vmatprep.subr.bf16.mxu0 0
  %1044 = vmatpush2.bf16.msra.mxu0 0
  %1045 = vmatprep.subr.bf16.mxu0 0
  %1046 = vmatpush2.bf16.msra.mxu0 0
  %1047 = vmatprep.subr.bf16.mxu0 0
  %1048 = vmatpush2.bf16.msra.mxu0 0
  %1049 = vmatprep.subr.bf16.mxu0 %v826
  %1050 = vmatpush2.bf16.msra.mxu0 %v825
  %1051 = vmatprep.subr.bf16.mxu0 %v822
  %1052 = vmatpush2.bf16.msra.mxu0 %v821
  %1053 = vmatprep.subr.bf16.mxu0 %v818
  %1054 = vmatpush2.bf16.msra.mxu0 %v817
  %1055 = vmatprep.mubr.bf16.mxu0 %v939
  %1056 = vmatmul.mubr.bf16.gmra.mxu0 %v371
  %v1057 = vpop.f32.mrf.mxu0
  %v1058 = vadd.f32 %v985, %v1057
  %v1059 = vpop.f32.mrf.mxu0
  %v1060 = vadd.f32 %v987, %v1059
  %v1061 = vpop.f32.mrf.mxu0
  %v1062 = vadd.f32 %v989, %v1061
  %v1063 = vpop.f32.mrf.mxu0
  %v1064 = vadd.f32 %v991, %v1063
  %1065 = vmatprep.mubr.bf16.mxu0 %v942
  %1066 = vmatmul.mubr.bf16.gmra.mxu0 %v375
  %v1067 = vpop.f32.mrf.mxu0
  %v1068 = vadd.f32 %v995, %v1067
  %v1069 = vpop.f32.mrf.mxu0
  %v1070 = vadd.f32 %v997, %v1069
  %v1071 = vpop.f32.mrf.mxu0
  %v1072 = vadd.f32 %v999, %v1071
  %v1073 = vpop.f32.mrf.mxu0
  %v1074 = vadd.f32 %v1001, %v1073
  %1075 = vmatprep.mubr.bf16.mxu0 %v945
  %1076 = vmatmul.mubr.bf16.gmra.mxu0 %v379
  %v1077 = vpop.f32.mrf.mxu0
  %v1078 = vadd.f32 %v1005, %v1077
  %v1079 = vpop.f32.mrf.mxu0
  %v1080 = vadd.f32 %v1007, %v1079
  %v1081 = vpop.f32.mrf.mxu0
  %v1082 = vadd.f32 %v1009, %v1081
  %v1083 = vpop.f32.mrf.mxu0
  %v1084 = vadd.f32 %v1011, %v1083
  %1085 = vmatprep.mubr.bf16.mxu0 %v948
  %1086 = vmatmul.mubr.bf16.gmra.mxu0 %v383
  %v1087 = vpop.f32.mrf.mxu0
  %v1088 = vadd.f32 %v1015, %v1087
  %v1089 = vpop.f32.mrf.mxu0
  %v1090 = vadd.f32 %v1017, %v1089
  %v1091 = vpop.f32.mrf.mxu0
  %v1092 = vadd.f32 %v1019, %v1091
  %v1093 = vpop.f32.mrf.mxu0
  %v1094 = vadd.f32 %v1021, %v1093
  %1095 = vdwg.mxu0
  %1096 = vmatprep.subr.bf16.mxu0 %v752
  %1097 = vmatpush1.bf16.msra.mxu0 %v751
  %1098 = vmatprep.subr.bf16.mxu0 %v748
  %1099 = vmatpush1.bf16.msra.mxu0 %v747
  %1100 = vmatprep.subr.bf16.mxu0 %v744
  %1101 = vmatpush1.bf16.msra.mxu0 %v743
  %1102 = vmatprep.subr.bf16.mxu0 %v740
  %1103 = vmatpush1.bf16.msra.mxu0 %v739
  %1104 = vmatprep.subr.bf16.mxu0 %v736
  %1105 = vmatpush1.bf16.msra.mxu0 %v735
  %1106 = vmatprep.subr.bf16.mxu0 %v732
  %1107 = vmatpush1.bf16.msra.mxu0 %v731
  %1108 = vmatprep.subr.bf16.mxu0 %v728
  %1109 = vmatpush1.bf16.msra.mxu0 %v727
  %1110 = vmatprep.subr.bf16.mxu0 %v724
  %1111 = vmatpush1.bf16.msra.mxu0 %v723
  %1112 = vmatprep.subr.bf16.mxu0 %v784
  %1113 = vmatpush2.bf16.msra.mxu0 %v783
  %1114 = vmatprep.subr.bf16.mxu0 %v780
  %1115 = vmatpush2.bf16.msra.mxu0 %v779
  %1116 = vmatprep.subr.bf16.mxu0 %v776
  %1117 = vmatpush2.bf16.msra.mxu0 %v775
  %1118 = vmatprep.subr.bf16.mxu0 %v772
  %1119 = vmatpush2.bf16.msra.mxu0 %v771
  %1120 = vmatprep.subr.bf16.mxu0 %v768
  %1121 = vmatpush2.bf16.msra.mxu0 %v767
  %1122 = vmatprep.subr.bf16.mxu0 %v764
  %1123 = vmatpush2.bf16.msra.mxu0 %v763
  %1124 = vmatprep.subr.bf16.mxu0 %v760
  %1125 = vmatpush2.bf16.msra.mxu0 %v759
  %1126 = vmatprep.subr.bf16.mxu0 %v756
  %1127 = vmatpush2.bf16.msra.mxu0 %v755
  %1128 = vmatprep.mubr.bf16.mxu0 %v370
  %1129 = vmatmul.mubr.bf16.gmra.mxu0 %v369
  %v1130 = vpop.f32.mrf.mxu0
  %v1131 = vadd.f32 0.0, %v1130
  %v1132 = vpop.f32.mrf.mxu0
  %v1133 = vadd.f32 0.0, %v1132
  %v1134 = vpop.f32.mrf.mxu0
  %v1135 = vadd.f32 0.0, %v1134
  %v1136 = vpop.f32.mrf.mxu0
  %v1137 = vadd.f32 0.0, %v1136
  %1138 = vmatprep.mubr.bf16.mxu0 %v374
  %1139 = vmatmul.mubr.bf16.gmra.mxu0 %v373
  %v1140 = vpop.f32.mrf.mxu0
  %v1141 = vadd.f32 0.0, %v1140
  %v1142 = vpop.f32.mrf.mxu0
  %v1143 = vadd.f32 0.0, %v1142
  %v1144 = vpop.f32.mrf.mxu0
  %v1145 = vadd.f32 0.0, %v1144
  %v1146 = vpop.f32.mrf.mxu0
  %v1147 = vadd.f32 0.0, %v1146
  %1148 = vmatprep.mubr.bf16.mxu0 %v378
  %1149 = vmatmul.mubr.bf16.gmra.mxu0 %v377
  %v1150 = vpop.f32.mrf.mxu0
  %v1151 = vadd.f32 0.0, %v1150
  %v1152 = vpop.f32.mrf.mxu0
  %v1153 = vadd.f32 0.0, %v1152
  %v1154 = vpop.f32.mrf.mxu0
  %v1155 = vadd.f32 0.0, %v1154
  %v1156 = vpop.f32.mrf.mxu0
  %v1157 = vadd.f32 0.0, %v1156
  %1158 = vmatprep.mubr.bf16.mxu0 %v382
  %1159 = vmatmul.mubr.bf16.gmra.mxu0 %v381
  %v1160 = vpop.f32.mrf.mxu0
  %v1161 = vadd.f32 0.0, %v1160
  %v1162 = vpop.f32.mrf.mxu0
  %v1163 = vadd.f32 0.0, %v1162
  %v1164 = vpop.f32.mrf.mxu0
  %v1165 = vadd.f32 0.0, %v1164
  %v1166 = vpop.f32.mrf.mxu0
  %v1167 = vadd.f32 0.0, %v1166
  %1168 = vdwg.mxu0
  %1169 = vmatprep.subr.bf16.mxu0 %v816
  %1170 = vmatpush1.bf16.msra.mxu0 %v815
  %1171 = vmatprep.subr.bf16.mxu0 %v812
  %1172 = vmatpush1.bf16.msra.mxu0 %v811
  %1173 = vmatprep.subr.bf16.mxu0 %v808
  %1174 = vmatpush1.bf16.msra.mxu0 %v807
  %1175 = vmatprep.subr.bf16.mxu0 %v804
  %1176 = vmatpush1.bf16.msra.mxu0 %v803
  %1177 = vmatprep.subr.bf16.mxu0 %v800
  %1178 = vmatpush1.bf16.msra.mxu0 %v799
  %1179 = vmatprep.subr.bf16.mxu0 %v796
  %1180 = vmatpush1.bf16.msra.mxu0 %v795
  %1181 = vmatprep.subr.bf16.mxu0 %v792
  %1182 = vmatpush1.bf16.msra.mxu0 %v791
  %1183 = vmatprep.subr.bf16.mxu0 %v788
  %1184 = vmatpush1.bf16.msra.mxu0 %v787
  %1185 = vmatprep.subr.bf16.mxu0 0
  %1186 = vmatpush2.bf16.msra.mxu0 0
  %1187 = vmatprep.subr.bf16.mxu0 0
  %1188 = vmatpush2.bf16.msra.mxu0 0
  %1189 = vmatprep.subr.bf16.mxu0 0
  %1190 = vmatpush2.bf16.msra.mxu0 0
  %1191 = vmatprep.subr.bf16.mxu0 0
  %1192 = vmatpush2.bf16.msra.mxu0 0
  %1193 = vmatprep.subr.bf16.mxu0 0
  %1194 = vmatpush2.bf16.msra.mxu0 0
  %1195 = vmatprep.subr.bf16.mxu0 %v828
  %1196 = vmatpush2.bf16.msra.mxu0 %v827
  %1197 = vmatprep.subr.bf16.mxu0 %v824
  %1198 = vmatpush2.bf16.msra.mxu0 %v823
  %1199 = vmatprep.subr.bf16.mxu0 %v820
  %1200 = vmatpush2.bf16.msra.mxu0 %v819
  %1201 = vmatprep.mubr.bf16.mxu0 %v939
  %1202 = vmatmul.mubr.bf16.gmra.mxu0 %v371
  %v1203 = vpop.f32.mrf.mxu0
  %v1204 = vadd.f32 %v1131, %v1203
  %v1205 = vpop.f32.mrf.mxu0
  %v1206 = vadd.f32 %v1133, %v1205
  %v1207 = vpop.f32.mrf.mxu0
  %v1208 = vadd.f32 %v1135, %v1207
  %v1209 = vpop.f32.mrf.mxu0
  %v1210 = vadd.f32 %v1137, %v1209
  %1211 = vmatprep.mubr.bf16.mxu0 %v942
  %1212 = vmatmul.mubr.bf16.gmra.mxu0 %v375
  %v1213 = vpop.f32.mrf.mxu0
  %v1214 = vadd.f32 %v1141, %v1213
  %v1215 = vpop.f32.mrf.mxu0
  %v1216 = vadd.f32 %v1143, %v1215
  %v1217 = vpop.f32.mrf.mxu0
  %v1218 = vadd.f32 %v1145, %v1217
  %v1219 = vpop.f32.mrf.mxu0
  %v1220 = vadd.f32 %v1147, %v1219
  %1221 = vmatprep.mubr.bf16.mxu0 %v945
  %1222 = vmatmul.mubr.bf16.gmra.mxu0 %v379
  %v1223 = vpop.f32.mrf.mxu0
  %v1224 = vadd.f32 %v1151, %v1223
  %v1225 = vpop.f32.mrf.mxu0
  %v1226 = vadd.f32 %v1153, %v1225
  %v1227 = vpop.f32.mrf.mxu0
  %v1228 = vadd.f32 %v1155, %v1227
  %v1229 = vpop.f32.mrf.mxu0
  %v1230 = vadd.f32 %v1157, %v1229
  %1231 = vmatprep.mubr.bf16.mxu0 %v948
  %1232 = vmatmul.mubr.bf16.gmra.mxu0 %v383
  %v1233 = vpop.f32.mrf.mxu0
  %v1234 = vadd.f32 %v1161, %v1233
  %v1235 = vpop.f32.mrf.mxu0
  %v1236 = vadd.f32 %v1163, %v1235
  %v1237 = vpop.f32.mrf.mxu0
  %v1238 = vadd.f32 %v1165, %v1237
  %v1239 = vpop.f32.mrf.mxu0
  %v1240 = vadd.f32 %v1167, %v1239
  %1241 = vdwg.mxu0
  %v1266 = vunpack.c.l.b16 %v29
  %v1267 = vunpack.c.h.b16 %v29
  %v1268 = vunpack.c.l.b16 %v30
  %v1269 = vunpack.c.h.b16 %v30
  %v1270 = vunpack.c.l.b16 %v31
  %v1271 = vunpack.c.l.b16 %v32
  %v1272 = vunpack.c.h.b16 %v32
  %v1273 = vunpack.c.l.b16 %v33
  %v1274 = vunpack.c.h.b16 %v33
  %v1275 = vunpack.c.l.b16 %v34
  %v1276 = vunpack.c.l.b16 %v35
  %v1277 = vunpack.c.h.b16 %v35
  %v1278 = vunpack.c.l.b16 %v36
  %v1279 = vunpack.c.h.b16 %v36
  %v1280 = vunpack.c.l.b16 %v37
  %v1281 = vunpack.c.l.b16 %v38
  %v1282 = vunpack.c.h.b16 %v38
  %v1283 = vunpack.c.l.b16 %v39
  %v1284 = vunpack.c.h.b16 %v39
  %v1285 = vunpack.c.l.b16 %v40
  %v1286 = vunpack.c.l.b16 %v41
  %v1287 = vunpack.c.h.b16 %v41
  %v1288 = vunpack.c.l.b16 %v42
  %v1289 = vunpack.c.h.b16 %v42
  %v1290 = vunpack.c.l.b16 %v43
  %v1291 = vunpack.c.l.b16 %v44
  %v1292 = vunpack.c.h.b16 %v44
  %v1293 = vunpack.c.l.b16 %v45
  %v1294 = vunpack.c.h.b16 %v45
  %v1295 = vunpack.c.l.b16 %v46
  %v1296 = vunpack.c.l.b16 %v47
  %v1297 = vunpack.c.h.b16 %v47
  %v1298 = vunpack.c.l.b16 %v48
  %v1299 = vunpack.c.h.b16 %v48
  %v1300 = vunpack.c.l.b16 %v49
  %v1301 = vunpack.c.l.b16 %v50
  %v1302 = vunpack.c.h.b16 %v50
  %v1303 = vunpack.c.l.b16 %v51
  %v1304 = vunpack.c.h.b16 %v51
  %v1305 = vunpack.c.l.b16 %v52
  %v1306 = vpack.c.b16 %v1271, %v1266
  %v1307 = vpack.c.b16 %v1272, %v1267
  %v1308 = vpack.c.b16 %v1273, %v1268
  %v1309 = vpack.c.b16 %v1274, %v1269
  %v1310 = vpack.c.b16 %v1275, %v1270
  %v1311 = vpack.c.b16 %v1281, %v1276
  %v1312 = vpack.c.b16 %v1282, %v1277
  %v1313 = vpack.c.b16 %v1283, %v1278
  %v1314 = vpack.c.b16 %v1284, %v1279
  %v1315 = vpack.c.b16 %v1285, %v1280
  %v1316 = vpack.c.b16 %v1291, %v1286
  %v1317 = vpack.c.b16 %v1292, %v1287
  %v1318 = vpack.c.b16 %v1293, %v1288
  %v1319 = vpack.c.b16 %v1294, %v1289
  %v1320 = vpack.c.b16 %v1295, %v1290
  %v1321 = vpack.c.b16 %v1301, %v1296
  %v1322 = vpack.c.b16 %v1302, %v1297
  %v1323 = vpack.c.b16 %v1303, %v1298
  %v1324 = vpack.c.b16 %v1304, %v1299
  %v1325 = vpack.c.b16 %v1305, %v1300
  %v1486 = vunpack.c.l.b16 %v53
  %v1487 = vunpack.c.h.b16 %v53
  %v1488 = vunpack.c.l.b16 %v54
  %v1489 = vunpack.c.h.b16 %v54
  %v1490 = vunpack.c.l.b16 %v55
  %v1491 = vunpack.c.h.b16 %v55
  %v1492 = vunpack.c.l.b16 %v56
  %v1493 = vunpack.c.h.b16 %v56
  %v1494 = vunpack.c.l.b16 %v57
  %v1495 = vunpack.c.h.b16 %v57
  %v1496 = vunpack.c.l.b16 %v58
  %v1497 = vunpack.c.h.b16 %v58
  %v1498 = vunpack.c.l.b16 %v59
  %v1499 = vunpack.c.h.b16 %v59
  %v1500 = vunpack.c.l.b16 %v60
  %v1501 = vunpack.c.h.b16 %v60
  %v1502 = vunpack.c.l.b16 %v61
  %v1503 = vunpack.c.h.b16 %v61
  %v1504 = vunpack.c.l.b16 %v62
  %v1505 = vunpack.c.h.b16 %v62
  %v1506 = vunpack.c.l.b16 %v63
  %v1507 = vunpack.c.h.b16 %v63
  %v1508 = vunpack.c.l.b16 %v64
  %v1509 = vunpack.c.h.b16 %v64
  %v1510 = vunpack.c.l.b16 %v65
  %v1511 = vunpack.c.h.b16 %v65
  %v1512 = vunpack.c.l.b16 %v66
  %v1513 = vunpack.c.h.b16 %v66
  %v1514 = vunpack.c.l.b16 %v67
  %v1515 = vunpack.c.h.b16 %v67
  %v1516 = vunpack.c.l.b16 %v68
  %v1517 = vunpack.c.h.b16 %v68
  %v1518 = vunpack.c.l.b16 %v69
  %v1519 = vunpack.c.h.b16 %v69
  %v1520 = vunpack.c.l.b16 %v70
  %v1521 = vunpack.c.h.b16 %v70
  %v1522 = vunpack.c.l.b16 %v71
  %v1523 = vunpack.c.h.b16 %v71
  %v1524 = vunpack.c.l.b16 %v72
  %v1525 = vunpack.c.h.b16 %v72
  %v1526 = vunpack.c.l.b16 %v73
  %v1527 = vunpack.c.h.b16 %v73
  %v1528 = vunpack.c.l.b16 %v74
  %v1529 = vunpack.c.h.b16 %v74
  %v1530 = vunpack.c.l.b16 %v75
  %v1531 = vunpack.c.h.b16 %v75
  %v1532 = vunpack.c.l.b16 %v76
  %v1533 = vunpack.c.h.b16 %v76
  %v1534 = vunpack.c.l.b16 %v77
  %v1535 = vunpack.c.h.b16 %v77
  %v1536 = vunpack.c.l.b16 %v78
  %v1537 = vunpack.c.h.b16 %v78
  %v1538 = vunpack.c.l.b16 %v79
  %v1539 = vunpack.c.h.b16 %v79
  %v1540 = vunpack.c.l.b16 %v80
  %v1541 = vunpack.c.h.b16 %v80
  %v1542 = vunpack.c.l.b16 %v81
  %v1543 = vunpack.c.h.b16 %v81
  %v1544 = vunpack.c.l.b16 %v82
  %v1545 = vunpack.c.h.b16 %v82
  %v1546 = vunpack.c.l.b16 %v83
  %v1547 = vunpack.c.h.b16 %v83
  %v1548 = vunpack.c.l.b16 %v84
  %v1549 = vunpack.c.h.b16 %v84
  %v1550 = vunpack.c.l.b16 %v85
  %v1551 = vunpack.c.h.b16 %v85
  %v1552 = vunpack.c.l.b16 %v86
  %v1553 = vunpack.c.h.b16 %v86
  %v1554 = vunpack.c.l.b16 %v87
  %v1555 = vunpack.c.h.b16 %v87
  %v1556 = vunpack.c.l.b16 %v88
  %v1557 = vunpack.c.h.b16 %v88
  %v1558 = vunpack.c.l.b16 %v89
  %v1559 = vunpack.c.h.b16 %v89
  %v1560 = vunpack.c.l.b16 %v90
  %v1561 = vunpack.c.h.b16 %v90
  %v1562 = vunpack.c.l.b16 %v91
  %v1563 = vunpack.c.h.b16 %v91
  %v1564 = vunpack.c.l.b16 %v92
  %v1565 = vunpack.c.h.b16 %v92
  %v1566 = vunpack.c.l.b16 %v93
  %v1567 = vunpack.c.h.b16 %v93
  %v1568 = vunpack.c.l.b16 %v94
  %v1569 = vunpack.c.h.b16 %v94
  %v1570 = vunpack.c.l.b16 %v95
  %v1571 = vunpack.c.h.b16 %v95
  %v1572 = vunpack.c.l.b16 %v96
  %v1573 = vunpack.c.h.b16 %v96
  %v1574 = vunpack.c.l.b16 %v97
  %v1575 = vunpack.c.h.b16 %v97
  %v1576 = vunpack.c.l.b16 %v98
  %v1577 = vunpack.c.h.b16 %v98
  %v1578 = vunpack.c.l.b16 %v99
  %v1579 = vunpack.c.h.b16 %v99
  %v1580 = vunpack.c.l.b16 %v100
  %v1581 = vunpack.c.h.b16 %v100
  %v1582 = vunpack.c.l.b16 %v101
  %v1583 = vunpack.c.h.b16 %v101
  %v1584 = vunpack.c.l.b16 %v102
  %v1585 = vunpack.c.h.b16 %v102
  %v1586 = vunpack.c.l.b16 %v103
  %v1587 = vunpack.c.h.b16 %v103
  %v1588 = vunpack.c.l.b16 %v104
  %v1589 = vunpack.c.h.b16 %v104
  %v1590 = vunpack.c.l.b16 %v105
  %v1591 = vunpack.c.h.b16 %v105
  %v1592 = vunpack.c.l.b16 %v106
  %v1593 = vunpack.c.h.b16 %v106
  %v1594 = vunpack.c.l.b16 %v107
  %v1595 = vunpack.c.h.b16 %v107
  %v1596 = vunpack.c.l.b16 %v108
  %v1597 = vunpack.c.h.b16 %v108
  %v1598 = vunpack.c.l.b16 %v109
  %v1599 = vunpack.c.h.b16 %v109
  %v1600 = vunpack.c.l.b16 %v110
  %v1601 = vunpack.c.h.b16 %v110
  %v1602 = vunpack.c.l.b16 %v111
  %v1603 = vunpack.c.h.b16 %v111
  %v1604 = vunpack.c.l.b16 %v112
  %v1605 = vunpack.c.h.b16 %v112
  %v1606 = vunpack.c.l.b16 %v113
  %v1607 = vunpack.c.h.b16 %v113
  %v1608 = vunpack.c.l.b16 %v114
  %v1609 = vunpack.c.h.b16 %v114
  %v1610 = vunpack.c.l.b16 %v115
  %v1611 = vunpack.c.h.b16 %v115
  %v1612 = vunpack.c.l.b16 %v116
  %v1613 = vunpack.c.h.b16 %v116
  %v1614 = vunpack.c.l.b16 %v117
  %v1615 = vunpack.c.h.b16 %v117
  %v1616 = vunpack.c.l.b16 %v118
  %v1617 = vunpack.c.h.b16 %v118
  %v1618 = vunpack.c.l.b16 %v119
  %v1619 = vunpack.c.h.b16 %v119
  %v1620 = vunpack.c.l.b16 %v120
  %v1621 = vunpack.c.h.b16 %v120
  %v1622 = vunpack.c.l.b16 %v121
  %v1623 = vunpack.c.h.b16 %v121
  %v1624 = vunpack.c.l.b16 %v122
  %v1625 = vunpack.c.h.b16 %v122
  %v1626 = vunpack.c.l.b16 %v123
  %v1627 = vunpack.c.h.b16 %v123
  %v1628 = vunpack.c.l.b16 %v124
  %v1629 = vunpack.c.h.b16 %v124
  %v1630 = vunpack.c.l.b16 %v125
  %v1631 = vunpack.c.h.b16 %v125
  %v1632 = vunpack.c.l.b16 %v126
  %v1633 = vunpack.c.h.b16 %v126
  %v1634 = vunpack.c.l.b16 %v127
  %v1635 = vunpack.c.h.b16 %v127
  %v1636 = vunpack.c.l.b16 %v128
  %v1637 = vunpack.c.h.b16 %v128
  %v1638 = vunpack.c.l.b16 %v129
  %v1639 = vunpack.c.h.b16 %v129
  %v1640 = vunpack.c.l.b16 %v130
  %v1641 = vunpack.c.h.b16 %v130
  %v1642 = vunpack.c.l.b16 %v131
  %v1643 = vunpack.c.h.b16 %v131
  %v1644 = vunpack.c.l.b16 %v132
  %v1645 = vunpack.c.h.b16 %v132
  %v1646 = vunpack.c.l.b16 %v133
  %v1647 = vunpack.c.h.b16 %v133
  %v1648 = vunpack.c.l.b16 %v134
  %v1649 = vunpack.c.h.b16 %v134
  %v1650 = vunpack.c.l.b16 %v135
  %v1651 = vunpack.c.h.b16 %v135
  %v1652 = vunpack.c.l.b16 %v136
  %v1653 = vunpack.c.h.b16 %v136
  %v1654 = vunpack.c.l.b16 %v137
  %v1655 = vunpack.c.h.b16 %v137
  %v1656 = vunpack.c.l.b16 %v138
  %v1657 = vunpack.c.h.b16 %v138
  %v1658 = vunpack.c.l.b16 %v139
  %v1659 = vunpack.c.h.b16 %v139
  %v1660 = vunpack.c.l.b16 %v140
  %v1661 = vunpack.c.h.b16 %v140
  %v1662 = vunpack.c.l.b16 %v141
  %v1663 = vunpack.c.h.b16 %v141
  %v1664 = vunpack.c.l.b16 %v142
  %v1665 = vunpack.c.h.b16 %v142
  %v1666 = vunpack.c.l.b16 %v143
  %v1667 = vunpack.c.h.b16 %v143
  %v1668 = vunpack.c.l.b16 %v144
  %v1669 = vunpack.c.h.b16 %v144
  %v1670 = vunpack.c.l.b16 %v145
  %v1671 = vunpack.c.h.b16 %v145
  %v1672 = vunpack.c.l.b16 %v146
  %v1673 = vunpack.c.h.b16 %v146
  %v1674 = vunpack.c.l.b16 %v147
  %v1675 = vunpack.c.h.b16 %v147
  %v1676 = vunpack.c.l.b16 %v148
  %v1677 = vunpack.c.h.b16 %v148
  %v1678 = vunpack.c.l.b16 %v149
  %v1679 = vunpack.c.h.b16 %v149
  %v1680 = vunpack.c.l.b16 %v150
  %v1681 = vunpack.c.h.b16 %v150
  %v1682 = vunpack.c.l.b16 %v151
  %v1683 = vunpack.c.h.b16 %v151
  %v1684 = vunpack.c.l.b16 %v152
  %v1685 = vunpack.c.h.b16 %v152
  %v1686 = vunpack.c.l.b16 %v153
  %v1687 = vunpack.c.h.b16 %v153
  %v1688 = vunpack.c.l.b16 %v154
  %v1689 = vunpack.c.h.b16 %v154
  %v1690 = vunpack.c.l.b16 %v155
  %v1691 = vunpack.c.h.b16 %v155
  %v1692 = vunpack.c.l.b16 %v156
  %v1693 = vunpack.c.h.b16 %v156
  %v1694 = vunpack.c.l.b16 %v157
  %v1695 = vunpack.c.h.b16 %v157
  %v1696 = vunpack.c.l.b16 %v158
  %v1697 = vunpack.c.h.b16 %v158
  %v1698 = vunpack.c.l.b16 %v159
  %v1699 = vunpack.c.h.b16 %v159
  %v1700 = vunpack.c.l.b16 %v160
  %v1701 = vunpack.c.h.b16 %v160
  %v1702 = vunpack.c.l.b16 %v161
  %v1703 = vunpack.c.h.b16 %v161
  %v1704 = vunpack.c.l.b16 %v162
  %v1705 = vunpack.c.h.b16 %v162
  %v1706 = vunpack.c.l.b16 %v163
  %v1707 = vunpack.c.h.b16 %v163
  %v1708 = vunpack.c.l.b16 %v164
  %v1709 = vunpack.c.h.b16 %v164
  %v1710 = vunpack.c.l.b16 %v165
  %v1711 = vunpack.c.h.b16 %v165
  %v1712 = vunpack.c.l.b16 %v166
  %v1713 = vunpack.c.h.b16 %v166
  %v1714 = vunpack.c.l.b16 %v167
  %v1715 = vunpack.c.h.b16 %v167
  %v1716 = vunpack.c.l.b16 %v168
  %v1717 = vunpack.c.h.b16 %v168
  %v1718 = vunpack.c.l.b16 %v169
  %v1719 = vunpack.c.h.b16 %v169
  %v1720 = vunpack.c.l.b16 %v170
  %v1721 = vunpack.c.h.b16 %v170
  %v1722 = vunpack.c.l.b16 %v171
  %v1723 = vunpack.c.h.b16 %v171
  %v1724 = vunpack.c.l.b16 %v172
  %v1725 = vunpack.c.h.b16 %v172
  %v1726 = vunpack.c.l.b16 %v173
  %v1727 = vunpack.c.h.b16 %v173
  %v1728 = vunpack.c.l.b16 %v174
  %v1729 = vunpack.c.h.b16 %v174
  %v1730 = vunpack.c.l.b16 %v175
  %v1731 = vunpack.c.h.b16 %v175
  %v1732 = vunpack.c.l.b16 %v176
  %v1733 = vunpack.c.h.b16 %v176
  %v1734 = vunpack.c.l.b16 %v177
  %v1735 = vunpack.c.h.b16 %v177
  %v1736 = vunpack.c.l.b16 %v178
  %v1737 = vunpack.c.h.b16 %v178
  %v1738 = vunpack.c.l.b16 %v179
  %v1739 = vunpack.c.h.b16 %v179
  %v1740 = vunpack.c.l.b16 %v180
  %v1741 = vunpack.c.h.b16 %v180
  %v1742 = vunpack.c.l.b16 %v181
  %v1743 = vunpack.c.h.b16 %v181
  %v1744 = vunpack.c.l.b16 %v182
  %v1745 = vunpack.c.h.b16 %v182
  %v1746 = vunpack.c.l.b16 %v183
  %v1747 = vunpack.c.h.b16 %v183
  %v1748 = vunpack.c.l.b16 %v184
  %v1749 = vunpack.c.h.b16 %v184
  %v1750 = vunpack.c.l.b16 %v185
  %v1751 = vunpack.c.h.b16 %v185
  %v1752 = vunpack.c.l.b16 %v186
  %v1753 = vunpack.c.h.b16 %v186
  %v1754 = vunpack.c.l.b16 %v187
  %v1755 = vunpack.c.h.b16 %v187
  %v1756 = vunpack.c.l.b16 %v188
  %v1757 = vunpack.c.h.b16 %v188
  %v1758 = vunpack.c.l.b16 %v189
  %v1759 = vunpack.c.h.b16 %v189
  %v1760 = vunpack.c.l.b16 %v190
  %v1761 = vunpack.c.h.b16 %v190
  %v1762 = vunpack.c.l.b16 %v191
  %v1763 = vunpack.c.h.b16 %v191
  %v1764 = vunpack.c.l.b16 %v192
  %v1765 = vunpack.c.h.b16 %v192
  %v1766 = vunpack.c.l.b16 %v193
  %v1767 = vunpack.c.h.b16 %v193
  %v1768 = vunpack.c.l.b16 %v194
  %v1769 = vunpack.c.h.b16 %v194
  %v1770 = vunpack.c.l.b16 %v195
  %v1771 = vunpack.c.h.b16 %v195
  %v1772 = vunpack.c.l.b16 %v196
  %v1773 = vunpack.c.h.b16 %v196
  %v1774 = vpack.c.b16 %v1490, %v1486
  %v1775 = vpack.c.b16 %v1491, %v1487
  %v1776 = vpack.c.b16 %v1492, %v1488
  %v1777 = vpack.c.b16 %v1493, %v1489
  %v1778 = vpack.c.b16 %v1498, %v1494
  %v1779 = vpack.c.b16 %v1499, %v1495
  %v1780 = vpack.c.b16 %v1500, %v1496
  %v1781 = vpack.c.b16 %v1501, %v1497
  %v1782 = vpack.c.b16 %v1506, %v1502
  %v1783 = vpack.c.b16 %v1507, %v1503
  %v1784 = vpack.c.b16 %v1508, %v1504
  %v1785 = vpack.c.b16 %v1509, %v1505
  %v1786 = vpack.c.b16 %v1514, %v1510
  %v1787 = vpack.c.b16 %v1515, %v1511
  %v1788 = vpack.c.b16 %v1516, %v1512
  %v1789 = vpack.c.b16 %v1517, %v1513
  %v1790 = vpack.c.b16 %v1522, %v1518
  %v1791 = vpack.c.b16 %v1523, %v1519
  %v1792 = vpack.c.b16 %v1524, %v1520
  %v1793 = vpack.c.b16 %v1525, %v1521
  %v1794 = vpack.c.b16 %v1530, %v1526
  %v1795 = vpack.c.b16 %v1531, %v1527
  %v1796 = vpack.c.b16 %v1532, %v1528
  %v1797 = vpack.c.b16 %v1533, %v1529
  %v1798 = vpack.c.b16 %v1538, %v1534
  %v1799 = vpack.c.b16 %v1539, %v1535
  %v1800 = vpack.c.b16 %v1540, %v1536
  %v1801 = vpack.c.b16 %v1541, %v1537
  %v1802 = vpack.c.b16 %v1546, %v1542
  %v1803 = vpack.c.b16 %v1547, %v1543
  %v1804 = vpack.c.b16 %v1548, %v1544
  %v1805 = vpack.c.b16 %v1549, %v1545
  %v1806 = vpack.c.b16 %v1554, %v1550
  %v1807 = vpack.c.b16 %v1555, %v1551
  %v1808 = vpack.c.b16 %v1556, %v1552
  %v1809 = vpack.c.b16 %v1557, %v1553
  %v1810 = vpack.c.b16 %v1562, %v1558
  %v1811 = vpack.c.b16 %v1563, %v1559
  %v1812 = vpack.c.b16 %v1564, %v1560
  %v1813 = vpack.c.b16 %v1565, %v1561
  %v1814 = vpack.c.b16 %v1570, %v1566
  %v1815 = vpack.c.b16 %v1571, %v1567
  %v1816 = vpack.c.b16 %v1572, %v1568
  %v1817 = vpack.c.b16 %v1573, %v1569
  %v1818 = vpack.c.b16 %v1578, %v1574
  %v1819 = vpack.c.b16 %v1579, %v1575
  %v1820 = vpack.c.b16 %v1580, %v1576
  %v1821 = vpack.c.b16 %v1581, %v1577
  %v1822 = vpack.c.b16 %v1586, %v1582
  %v1823 = vpack.c.b16 %v1587, %v1583
  %v1824 = vpack.c.b16 %v1588, %v1584
  %v1825 = vpack.c.b16 %v1589, %v1585
  %v1826 = vpack.c.b16 %v1594, %v1590
  %v1827 = vpack.c.b16 %v1595, %v1591
  %v1828 = vpack.c.b16 %v1596, %v1592
  %v1829 = vpack.c.b16 %v1597, %v1593
  %v1830 = vpack.c.b16 %v1602, %v1598
  %v1831 = vpack.c.b16 %v1603, %v1599
  %v1832 = vpack.c.b16 %v1604, %v1600
  %v1833 = vpack.c.b16 %v1605, %v1601
  %v1834 = vpack.c.b16 %v1610, %v1606
  %v1835 = vpack.c.b16 %v1611, %v1607
  %v1836 = vpack.c.b16 %v1612, %v1608
  %v1837 = vpack.c.b16 %v1613, %v1609
  %v1838 = vpack.c.b16 %v1618, %v1614
  %v1839 = vpack.c.b16 %v1619, %v1615
  %v1840 = vpack.c.b16 %v1620, %v1616
  %v1841 = vpack.c.b16 %v1621, %v1617
  %v1842 = vpack.c.b16 %v1626, %v1622
  %v1843 = vpack.c.b16 %v1627, %v1623
  %v1844 = vpack.c.b16 %v1628, %v1624
  %v1845 = vpack.c.b16 %v1629, %v1625
  %v1846 = vpack.c.b16 %v1634, %v1630
  %v1847 = vpack.c.b16 %v1635, %v1631
  %v1848 = vpack.c.b16 %v1636, %v1632
  %v1849 = vpack.c.b16 %v1637, %v1633
  %v1850 = vpack.c.b16 %v1642, %v1638
  %v1851 = vpack.c.b16 %v1643, %v1639
  %v1852 = vpack.c.b16 %v1644, %v1640
  %v1853 = vpack.c.b16 %v1645, %v1641
  %v1854 = vpack.c.b16 %v1650, %v1646
  %v1855 = vpack.c.b16 %v1651, %v1647
  %v1856 = vpack.c.b16 %v1652, %v1648
  %v1857 = vpack.c.b16 %v1653, %v1649
  %v1858 = vpack.c.b16 %v1658, %v1654
  %v1859 = vpack.c.b16 %v1659, %v1655
  %v1860 = vpack.c.b16 %v1660, %v1656
  %v1861 = vpack.c.b16 %v1661, %v1657
  %v1862 = vpack.c.b16 %v1666, %v1662
  %v1863 = vpack.c.b16 %v1667, %v1663
  %v1864 = vpack.c.b16 %v1668, %v1664
  %v1865 = vpack.c.b16 %v1669, %v1665
  %v1866 = vpack.c.b16 %v1674, %v1670
  %v1867 = vpack.c.b16 %v1675, %v1671
  %v1868 = vpack.c.b16 %v1676, %v1672
  %v1869 = vpack.c.b16 %v1677, %v1673
  %v1870 = vpack.c.b16 %v1682, %v1678
  %v1871 = vpack.c.b16 %v1683, %v1679
  %v1872 = vpack.c.b16 %v1684, %v1680
  %v1873 = vpack.c.b16 %v1685, %v1681
  %v1874 = vpack.c.b16 %v1690, %v1686
  %v1875 = vpack.c.b16 %v1691, %v1687
  %v1876 = vpack.c.b16 %v1692, %v1688
  %v1877 = vpack.c.b16 %v1693, %v1689
  %v1878 = vpack.c.b16 %v1698, %v1694
  %v1879 = vpack.c.b16 %v1699, %v1695
  %v1880 = vpack.c.b16 %v1700, %v1696
  %v1881 = vpack.c.b16 %v1701, %v1697
  %v1882 = vpack.c.b16 %v1706, %v1702
  %v1883 = vpack.c.b16 %v1707, %v1703
  %v1884 = vpack.c.b16 %v1708, %v1704
  %v1885 = vpack.c.b16 %v1709, %v1705
  %v1886 = vpack.c.b16 %v1714, %v1710
  %v1887 = vpack.c.b16 %v1715, %v1711
  %v1888 = vpack.c.b16 %v1716, %v1712
  %v1889 = vpack.c.b16 %v1717, %v1713
  %v1890 = vpack.c.b16 %v1722, %v1718
  %v1891 = vpack.c.b16 %v1723, %v1719
  %v1892 = vpack.c.b16 %v1724, %v1720
  %v1893 = vpack.c.b16 %v1725, %v1721
  %v1894 = vpack.c.b16 %v1730, %v1726
  %v1895 = vpack.c.b16 %v1731, %v1727
  %v1896 = vpack.c.b16 %v1732, %v1728
  %v1897 = vpack.c.b16 %v1733, %v1729
  %v1898 = vpack.c.b16 %v1738, %v1734
  %v1899 = vpack.c.b16 %v1739, %v1735
  %v1900 = vpack.c.b16 %v1740, %v1736
  %v1901 = vpack.c.b16 %v1741, %v1737
  %v1902 = vpack.c.b16 %v1746, %v1742
  %v1903 = vpack.c.b16 %v1747, %v1743
  %v1904 = vpack.c.b16 %v1748, %v1744
  %v1905 = vpack.c.b16 %v1749, %v1745
  %v1906 = vpack.c.b16 %v1754, %v1750
  %v1907 = vpack.c.b16 %v1755, %v1751
  %v1908 = vpack.c.b16 %v1756, %v1752
  %v1909 = vpack.c.b16 %v1757, %v1753
  %v1910 = vpack.c.b16 %v1762, %v1758
  %v1911 = vpack.c.b16 %v1763, %v1759
  %v1912 = vpack.c.b16 %v1764, %v1760
  %v1913 = vpack.c.b16 %v1765, %v1761
  %v1914 = vpack.c.b16 %v1770, %v1766
  %v1915 = vpack.c.b16 %v1771, %v1767
  %v1916 = vpack.c.b16 %v1772, %v1768
  %v1917 = vpack.c.b16 %v1773, %v1769
  %vm2062 = vcmask 523264
  %v2064 = vsel %vm2062, %v1310, 0
  %v2067 = vsel %vm2062, %v1315, 0
  %v2070 = vsel %vm2062, %v1320, 0
  %v2073 = vsel %vm2062, %v1325, 0
  %2075 = vmatprep.subr.bf16.mxu0 %v1803
  %2076 = vmatpush1.bf16.msra.mxu0 %v1802
  %2077 = vmatprep.subr.bf16.mxu0 %v1799
  %2078 = vmatpush1.bf16.msra.mxu0 %v1798
  %2079 = vmatprep.subr.bf16.mxu0 %v1795
  %2080 = vmatpush1.bf16.msra.mxu0 %v1794
  %2081 = vmatprep.subr.bf16.mxu0 %v1791
  %2082 = vmatpush1.bf16.msra.mxu0 %v1790
  %2083 = vmatprep.subr.bf16.mxu0 %v1787
  %2084 = vmatpush1.bf16.msra.mxu0 %v1786
  %2085 = vmatprep.subr.bf16.mxu0 %v1783
  %2086 = vmatpush1.bf16.msra.mxu0 %v1782
  %2087 = vmatprep.subr.bf16.mxu0 %v1779
  %2088 = vmatpush1.bf16.msra.mxu0 %v1778
  %2089 = vmatprep.subr.bf16.mxu0 %v1775
  %2090 = vmatpush1.bf16.msra.mxu0 %v1774
  %2091 = vmatprep.subr.bf16.mxu0 %v1835
  %2092 = vmatpush2.bf16.msra.mxu0 %v1834
  %2093 = vmatprep.subr.bf16.mxu0 %v1831
  %2094 = vmatpush2.bf16.msra.mxu0 %v1830
  %2095 = vmatprep.subr.bf16.mxu0 %v1827
  %2096 = vmatpush2.bf16.msra.mxu0 %v1826
  %2097 = vmatprep.subr.bf16.mxu0 %v1823
  %2098 = vmatpush2.bf16.msra.mxu0 %v1822
  %2099 = vmatprep.subr.bf16.mxu0 %v1819
  %2100 = vmatpush2.bf16.msra.mxu0 %v1818
  %2101 = vmatprep.subr.bf16.mxu0 %v1815
  %2102 = vmatpush2.bf16.msra.mxu0 %v1814
  %2103 = vmatprep.subr.bf16.mxu0 %v1811
  %2104 = vmatpush2.bf16.msra.mxu0 %v1810
  %2105 = vmatprep.subr.bf16.mxu0 %v1807
  %2106 = vmatpush2.bf16.msra.mxu0 %v1806
  %2107 = vmatprep.mubr.bf16.mxu0 %v1307
  %2108 = vmatmul.mubr.bf16.gmra.mxu0 %v1306
  %v2109 = vpop.f32.mrf.mxu0
  %v2110 = vadd.f32 %v1058, %v2109
  %v2111 = vpop.f32.mrf.mxu0
  %v2112 = vadd.f32 %v1060, %v2111
  %v2113 = vpop.f32.mrf.mxu0
  %v2114 = vadd.f32 %v1062, %v2113
  %v2115 = vpop.f32.mrf.mxu0
  %v2116 = vadd.f32 %v1064, %v2115
  %2117 = vmatprep.mubr.bf16.mxu0 %v1312
  %2118 = vmatmul.mubr.bf16.gmra.mxu0 %v1311
  %v2119 = vpop.f32.mrf.mxu0
  %v2120 = vadd.f32 %v1068, %v2119
  %v2121 = vpop.f32.mrf.mxu0
  %v2122 = vadd.f32 %v1070, %v2121
  %v2123 = vpop.f32.mrf.mxu0
  %v2124 = vadd.f32 %v1072, %v2123
  %v2125 = vpop.f32.mrf.mxu0
  %v2126 = vadd.f32 %v1074, %v2125
  %2127 = vmatprep.mubr.bf16.mxu0 %v1317
  %2128 = vmatmul.mubr.bf16.gmra.mxu0 %v1316
  %v2129 = vpop.f32.mrf.mxu0
  %v2130 = vadd.f32 %v1078, %v2129
  %v2131 = vpop.f32.mrf.mxu0
  %v2132 = vadd.f32 %v1080, %v2131
  %v2133 = vpop.f32.mrf.mxu0
  %v2134 = vadd.f32 %v1082, %v2133
  %v2135 = vpop.f32.mrf.mxu0
  %v2136 = vadd.f32 %v1084, %v2135
  %2137 = vmatprep.mubr.bf16.mxu0 %v1322
  %2138 = vmatmul.mubr.bf16.gmra.mxu0 %v1321
  %v2139 = vpop.f32.mrf.mxu0
  %v2140 = vadd.f32 %v1088, %v2139
  %v2141 = vpop.f32.mrf.mxu0
  %v2142 = vadd.f32 %v1090, %v2141
  %v2143 = vpop.f32.mrf.mxu0
  %v2144 = vadd.f32 %v1092, %v2143
  %v2145 = vpop.f32.mrf.mxu0
  %v2146 = vadd.f32 %v1094, %v2145
  %2147 = vdwg.mxu0
  %2148 = vmatprep.subr.bf16.mxu0 %v1867
  %2149 = vmatpush1.bf16.msra.mxu0 %v1866
  %2150 = vmatprep.subr.bf16.mxu0 %v1863
  %2151 = vmatpush1.bf16.msra.mxu0 %v1862
  %2152 = vmatprep.subr.bf16.mxu0 %v1859
  %2153 = vmatpush1.bf16.msra.mxu0 %v1858
  %2154 = vmatprep.subr.bf16.mxu0 %v1855
  %2155 = vmatpush1.bf16.msra.mxu0 %v1854
  %2156 = vmatprep.subr.bf16.mxu0 %v1851
  %2157 = vmatpush1.bf16.msra.mxu0 %v1850
  %2158 = vmatprep.subr.bf16.mxu0 %v1847
  %2159 = vmatpush1.bf16.msra.mxu0 %v1846
  %2160 = vmatprep.subr.bf16.mxu0 %v1843
  %2161 = vmatpush1.bf16.msra.mxu0 %v1842
  %2162 = vmatprep.subr.bf16.mxu0 %v1839
  %2163 = vmatpush1.bf16.msra.mxu0 %v1838
  %2164 = vmatprep.subr.bf16.mxu0 %v1899
  %2165 = vmatpush2.bf16.msra.mxu0 %v1898
  %2166 = vmatprep.subr.bf16.mxu0 %v1895
  %2167 = vmatpush2.bf16.msra.mxu0 %v1894
  %2168 = vmatprep.subr.bf16.mxu0 %v1891
  %2169 = vmatpush2.bf16.msra.mxu0 %v1890
  %2170 = vmatprep.subr.bf16.mxu0 %v1887
  %2171 = vmatpush2.bf16.msra.mxu0 %v1886
  %2172 = vmatprep.subr.bf16.mxu0 %v1883
  %2173 = vmatpush2.bf16.msra.mxu0 %v1882
  %2174 = vmatprep.subr.bf16.mxu0 %v1879
  %2175 = vmatpush2.bf16.msra.mxu0 %v1878
  %2176 = vmatprep.subr.bf16.mxu0 %v1875
  %2177 = vmatpush2.bf16.msra.mxu0 %v1874
  %2178 = vmatprep.subr.bf16.mxu0 %v1871
  %2179 = vmatpush2.bf16.msra.mxu0 %v1870
  %2180 = vmatprep.mubr.bf16.mxu0 %v1309
  %2181 = vmatmul.mubr.bf16.gmra.mxu0 %v1308
  %v2182 = vpop.f32.mrf.mxu0
  %v2183 = vadd.f32 %v2110, %v2182
  %v2184 = vpop.f32.mrf.mxu0
  %v2185 = vadd.f32 %v2112, %v2184
  %v2186 = vpop.f32.mrf.mxu0
  %v2187 = vadd.f32 %v2114, %v2186
  %v2188 = vpop.f32.mrf.mxu0
  %v2189 = vadd.f32 %v2116, %v2188
  %2190 = vmatprep.mubr.bf16.mxu0 %v1314
  %2191 = vmatmul.mubr.bf16.gmra.mxu0 %v1313
  %v2192 = vpop.f32.mrf.mxu0
  %v2193 = vadd.f32 %v2120, %v2192
  %v2194 = vpop.f32.mrf.mxu0
  %v2195 = vadd.f32 %v2122, %v2194
  %v2196 = vpop.f32.mrf.mxu0
  %v2197 = vadd.f32 %v2124, %v2196
  %v2198 = vpop.f32.mrf.mxu0
  %v2199 = vadd.f32 %v2126, %v2198
  %2200 = vmatprep.mubr.bf16.mxu0 %v1319
  %2201 = vmatmul.mubr.bf16.gmra.mxu0 %v1318
  %v2202 = vpop.f32.mrf.mxu0
  %v2203 = vadd.f32 %v2130, %v2202
  %v2204 = vpop.f32.mrf.mxu0
  %v2205 = vadd.f32 %v2132, %v2204
  %v2206 = vpop.f32.mrf.mxu0
  %v2207 = vadd.f32 %v2134, %v2206
  %v2208 = vpop.f32.mrf.mxu0
  %v2209 = vadd.f32 %v2136, %v2208
  %2210 = vmatprep.mubr.bf16.mxu0 %v1324
  %2211 = vmatmul.mubr.bf16.gmra.mxu0 %v1323
  %v2212 = vpop.f32.mrf.mxu0
  %v2213 = vadd.f32 %v2140, %v2212
  %v2214 = vpop.f32.mrf.mxu0
  %v2215 = vadd.f32 %v2142, %v2214
  %v2216 = vpop.f32.mrf.mxu0
  %v2217 = vadd.f32 %v2144, %v2216
  %v2218 = vpop.f32.mrf.mxu0
  %v2219 = vadd.f32 %v2146, %v2218
  %2220 = vdwg.mxu0
  %2221 = vmatprep.subr.bf16.mxu0 0
  %2222 = vmatpush1.bf16.msra.mxu0 0
  %2223 = vmatprep.subr.bf16.mxu0 0
  %2224 = vmatpush1.bf16.msra.mxu0 0
  %2225 = vmatprep.subr.bf16.mxu0 0
  %2226 = vmatpush1.bf16.msra.mxu0 0
  %2227 = vmatprep.subr.bf16.mxu0 0
  %2228 = vmatpush1.bf16.msra.mxu0 0
  %2229 = vmatprep.subr.bf16.mxu0 %v1915
  %2230 = vmatpush1.bf16.msra.mxu0 %v1914
  %2231 = vmatprep.subr.bf16.mxu0 %v1911
  %2232 = vmatpush1.bf16.msra.mxu0 %v1910
  %2233 = vmatprep.subr.bf16.mxu0 %v1907
  %2234 = vmatpush1.bf16.msra.mxu0 %v1906
  %2235 = vmatprep.subr.bf16.mxu0 %v1903
  %2236 = vmatpush1.bf16.msra.mxu0 %v1902
  %2237 = vmatprep.subr.bf16.mxu0 0
  %2238 = vmatpush2.bf16.msra.mxu0 0
  %2239 = vmatprep.subr.bf16.mxu0 0
  %2240 = vmatpush2.bf16.msra.mxu0 0
  %2241 = vmatprep.subr.bf16.mxu0 0
  %2242 = vmatpush2.bf16.msra.mxu0 0
  %2243 = vmatprep.subr.bf16.mxu0 0
  %2244 = vmatpush2.bf16.msra.mxu0 0
  %2245 = vmatprep.subr.bf16.mxu0 0
  %2246 = vmatpush2.bf16.msra.mxu0 0
  %2247 = vmatprep.subr.bf16.mxu0 0
  %2248 = vmatpush2.bf16.msra.mxu0 0
  %2249 = vmatprep.subr.bf16.mxu0 0
  %2250 = vmatpush2.bf16.msra.mxu0 0
  %2251 = vmatprep.subr.bf16.mxu0 0
  %2252 = vmatpush2.bf16.msra.mxu0 0
  %2253 = vmatprep.mubr.bf16.mxu0 0
  %2254 = vmatmul.mubr.bf16.gmra.mxu0 %v2064
  %v2255 = vpop.f32.mrf.mxu0
  %v2256 = vadd.f32 %v2183, %v2255
  %v2257 = vpop.f32.mrf.mxu0
  %v2258 = vadd.f32 %v2185, %v2257
  %v2259 = vpop.f32.mrf.mxu0
  %v2260 = vadd.f32 %v2187, %v2259
  %v2261 = vpop.f32.mrf.mxu0
  %v2262 = vadd.f32 %v2189, %v2261
  %2263 = vmatprep.mubr.bf16.mxu0 0
  %2264 = vmatmul.mubr.bf16.gmra.mxu0 %v2067
  %v2265 = vpop.f32.mrf.mxu0
  %v2266 = vadd.f32 %v2193, %v2265
  %v2267 = vpop.f32.mrf.mxu0
  %v2268 = vadd.f32 %v2195, %v2267
  %v2269 = vpop.f32.mrf.mxu0
  %v2270 = vadd.f32 %v2197, %v2269
  %v2271 = vpop.f32.mrf.mxu0
  %v2272 = vadd.f32 %v2199, %v2271
  %2273 = vmatprep.mubr.bf16.mxu0 0
  %2274 = vmatmul.mubr.bf16.gmra.mxu0 %v2070
  %v2275 = vpop.f32.mrf.mxu0
  %v2276 = vadd.f32 %v2203, %v2275
  %v2277 = vpop.f32.mrf.mxu0
  %v2278 = vadd.f32 %v2205, %v2277
  %v2279 = vpop.f32.mrf.mxu0
  %v2280 = vadd.f32 %v2207, %v2279
  %v2281 = vpop.f32.mrf.mxu0
  %v2282 = vadd.f32 %v2209, %v2281
  %2283 = vmatprep.mubr.bf16.mxu0 0
  %2284 = vmatmul.mubr.bf16.gmra.mxu0 %v2073
  %v2285 = vpop.f32.mrf.mxu0
  %v2286 = vadd.f32 %v2213, %v2285
  %v2287 = vpop.f32.mrf.mxu0
  %v2288 = vadd.f32 %v2215, %v2287
  %v2289 = vpop.f32.mrf.mxu0
  %v2290 = vadd.f32 %v2217, %v2289
  %v2291 = vpop.f32.mrf.mxu0
  %v2292 = vadd.f32 %v2219, %v2291
  %2293 = vdwg.mxu0
  %2294 = vmatprep.subr.bf16.mxu0 %v1805
  %2295 = vmatpush1.bf16.msra.mxu0 %v1804
  %2296 = vmatprep.subr.bf16.mxu0 %v1801
  %2297 = vmatpush1.bf16.msra.mxu0 %v1800
  %2298 = vmatprep.subr.bf16.mxu0 %v1797
  %2299 = vmatpush1.bf16.msra.mxu0 %v1796
  %2300 = vmatprep.subr.bf16.mxu0 %v1793
  %2301 = vmatpush1.bf16.msra.mxu0 %v1792
  %2302 = vmatprep.subr.bf16.mxu0 %v1789
  %2303 = vmatpush1.bf16.msra.mxu0 %v1788
  %2304 = vmatprep.subr.bf16.mxu0 %v1785
  %2305 = vmatpush1.bf16.msra.mxu0 %v1784
  %2306 = vmatprep.subr.bf16.mxu0 %v1781
  %2307 = vmatpush1.bf16.msra.mxu0 %v1780
  %2308 = vmatprep.subr.bf16.mxu0 %v1777
  %2309 = vmatpush1.bf16.msra.mxu0 %v1776
  %2310 = vmatprep.subr.bf16.mxu0 %v1837
  %2311 = vmatpush2.bf16.msra.mxu0 %v1836
  %2312 = vmatprep.subr.bf16.mxu0 %v1833
  %2313 = vmatpush2.bf16.msra.mxu0 %v1832
  %2314 = vmatprep.subr.bf16.mxu0 %v1829
  %2315 = vmatpush2.bf16.msra.mxu0 %v1828
  %2316 = vmatprep.subr.bf16.mxu0 %v1825
  %2317 = vmatpush2.bf16.msra.mxu0 %v1824
  %2318 = vmatprep.subr.bf16.mxu0 %v1821
  %2319 = vmatpush2.bf16.msra.mxu0 %v1820
  %2320 = vmatprep.subr.bf16.mxu0 %v1817
  %2321 = vmatpush2.bf16.msra.mxu0 %v1816
  %2322 = vmatprep.subr.bf16.mxu0 %v1813
  %2323 = vmatpush2.bf16.msra.mxu0 %v1812
  %2324 = vmatprep.subr.bf16.mxu0 %v1809
  %2325 = vmatpush2.bf16.msra.mxu0 %v1808
  %2326 = vmatprep.mubr.bf16.mxu0 %v1307
  %2327 = vmatmul.mubr.bf16.gmra.mxu0 %v1306
  %v2328 = vpop.f32.mrf.mxu0
  %v2329 = vadd.f32 %v1204, %v2328
  %v2330 = vpop.f32.mrf.mxu0
  %v2331 = vadd.f32 %v1206, %v2330
  %v2332 = vpop.f32.mrf.mxu0
  %v2333 = vadd.f32 %v1208, %v2332
  %v2334 = vpop.f32.mrf.mxu0
  %v2335 = vadd.f32 %v1210, %v2334
  %2336 = vmatprep.mubr.bf16.mxu0 %v1312
  %2337 = vmatmul.mubr.bf16.gmra.mxu0 %v1311
  %v2338 = vpop.f32.mrf.mxu0
  %v2339 = vadd.f32 %v1214, %v2338
  %v2340 = vpop.f32.mrf.mxu0
  %v2341 = vadd.f32 %v1216, %v2340
  %v2342 = vpop.f32.mrf.mxu0
  %v2343 = vadd.f32 %v1218, %v2342
  %v2344 = vpop.f32.mrf.mxu0
  %v2345 = vadd.f32 %v1220, %v2344
  %2346 = vmatprep.mubr.bf16.mxu0 %v1317
  %2347 = vmatmul.mubr.bf16.gmra.mxu0 %v1316
  %v2348 = vpop.f32.mrf.mxu0
  %v2349 = vadd.f32 %v1224, %v2348
  %v2350 = vpop.f32.mrf.mxu0
  %v2351 = vadd.f32 %v1226, %v2350
  %v2352 = vpop.f32.mrf.mxu0
  %v2353 = vadd.f32 %v1228, %v2352
  %v2354 = vpop.f32.mrf.mxu0
  %v2355 = vadd.f32 %v1230, %v2354
  %2356 = vmatprep.mubr.bf16.mxu0 %v1322
  %2357 = vmatmul.mubr.bf16.gmra.mxu0 %v1321
  %v2358 = vpop.f32.mrf.mxu0
  %v2359 = vadd.f32 %v1234, %v2358
  %v2360 = vpop.f32.mrf.mxu0
  %v2361 = vadd.f32 %v1236, %v2360
  %v2362 = vpop.f32.mrf.mxu0
  %v2363 = vadd.f32 %v1238, %v2362
  %v2364 = vpop.f32.mrf.mxu0
  %v2365 = vadd.f32 %v1240, %v2364
  %2366 = vdwg.mxu0
  %2367 = vmatprep.subr.bf16.mxu0 %v1869
  %2368 = vmatpush1.bf16.msra.mxu0 %v1868
  %2369 = vmatprep.subr.bf16.mxu0 %v1865
  %2370 = vmatpush1.bf16.msra.mxu0 %v1864
  %2371 = vmatprep.subr.bf16.mxu0 %v1861
  %2372 = vmatpush1.bf16.msra.mxu0 %v1860
  %2373 = vmatprep.subr.bf16.mxu0 %v1857
  %2374 = vmatpush1.bf16.msra.mxu0 %v1856
  %2375 = vmatprep.subr.bf16.mxu0 %v1853
  %2376 = vmatpush1.bf16.msra.mxu0 %v1852
  %2377 = vmatprep.subr.bf16.mxu0 %v1849
  %2378 = vmatpush1.bf16.msra.mxu0 %v1848
  %2379 = vmatprep.subr.bf16.mxu0 %v1845
  %2380 = vmatpush1.bf16.msra.mxu0 %v1844
  %2381 = vmatprep.subr.bf16.mxu0 %v1841
  %2382 = vmatpush1.bf16.msra.mxu0 %v1840
  %2383 = vmatprep.subr.bf16.mxu0 %v1901
  %2384 = vmatpush2.bf16.msra.mxu0 %v1900
  %2385 = vmatprep.subr.bf16.mxu0 %v1897
  %2386 = vmatpush2.bf16.msra.mxu0 %v1896
  %2387 = vmatprep.subr.bf16.mxu0 %v1893
  %2388 = vmatpush2.bf16.msra.mxu0 %v1892
  %2389 = vmatprep.subr.bf16.mxu0 %v1889
  %2390 = vmatpush2.bf16.msra.mxu0 %v1888
  %2391 = vmatprep.subr.bf16.mxu0 %v1885
  %2392 = vmatpush2.bf16.msra.mxu0 %v1884
  %2393 = vmatprep.subr.bf16.mxu0 %v1881
  %2394 = vmatpush2.bf16.msra.mxu0 %v1880
  %2395 = vmatprep.subr.bf16.mxu0 %v1877
  %2396 = vmatpush2.bf16.msra.mxu0 %v1876
  %2397 = vmatprep.subr.bf16.mxu0 %v1873
  %2398 = vmatpush2.bf16.msra.mxu0 %v1872
  %2399 = vmatprep.mubr.bf16.mxu0 %v1309
  %2400 = vmatmul.mubr.bf16.gmra.mxu0 %v1308
  %v2401 = vpop.f32.mrf.mxu0
  %v2402 = vadd.f32 %v2329, %v2401
  %v2403 = vpop.f32.mrf.mxu0
  %v2404 = vadd.f32 %v2331, %v2403
  %v2405 = vpop.f32.mrf.mxu0
  %v2406 = vadd.f32 %v2333, %v2405
  %v2407 = vpop.f32.mrf.mxu0
  %v2408 = vadd.f32 %v2335, %v2407
  %2409 = vmatprep.mubr.bf16.mxu0 %v1314
  %2410 = vmatmul.mubr.bf16.gmra.mxu0 %v1313
  %v2411 = vpop.f32.mrf.mxu0
  %v2412 = vadd.f32 %v2339, %v2411
  %v2413 = vpop.f32.mrf.mxu0
  %v2414 = vadd.f32 %v2341, %v2413
  %v2415 = vpop.f32.mrf.mxu0
  %v2416 = vadd.f32 %v2343, %v2415
  %v2417 = vpop.f32.mrf.mxu0
  %v2418 = vadd.f32 %v2345, %v2417
  %2419 = vmatprep.mubr.bf16.mxu0 %v1319
  %2420 = vmatmul.mubr.bf16.gmra.mxu0 %v1318
  %v2421 = vpop.f32.mrf.mxu0
  %v2422 = vadd.f32 %v2349, %v2421
  %v2423 = vpop.f32.mrf.mxu0
  %v2424 = vadd.f32 %v2351, %v2423
  %v2425 = vpop.f32.mrf.mxu0
  %v2426 = vadd.f32 %v2353, %v2425
  %v2427 = vpop.f32.mrf.mxu0
  %v2428 = vadd.f32 %v2355, %v2427
  %2429 = vmatprep.mubr.bf16.mxu0 %v1324
  %2430 = vmatmul.mubr.bf16.gmra.mxu0 %v1323
  %v2431 = vpop.f32.mrf.mxu0
  %v2432 = vadd.f32 %v2359, %v2431
  %v2433 = vpop.f32.mrf.mxu0
  %v2434 = vadd.f32 %v2361, %v2433
  %v2435 = vpop.f32.mrf.mxu0
  %v2436 = vadd.f32 %v2363, %v2435
  %v2437 = vpop.f32.mrf.mxu0
  %v2438 = vadd.f32 %v2365, %v2437
  %2439 = vdwg.mxu0
  %2440 = vmatprep.subr.bf16.mxu0 0
  %2441 = vmatpush1.bf16.msra.mxu0 0
  %2442 = vmatprep.subr.bf16.mxu0 0
  %2443 = vmatpush1.bf16.msra.mxu0 0
  %2444 = vmatprep.subr.bf16.mxu0 0
  %2445 = vmatpush1.bf16.msra.mxu0 0
  %2446 = vmatprep.subr.bf16.mxu0 0
  %2447 = vmatpush1.bf16.msra.mxu0 0
  %2448 = vmatprep.subr.bf16.mxu0 %v1917
  %2449 = vmatpush1.bf16.msra.mxu0 %v1916
  %2450 = vmatprep.subr.bf16.mxu0 %v1913
  %2451 = vmatpush1.bf16.msra.mxu0 %v1912
  %2452 = vmatprep.subr.bf16.mxu0 %v1909
  %2453 = vmatpush1.bf16.msra.mxu0 %v1908
  %2454 = vmatprep.subr.bf16.mxu0 %v1905
  %2455 = vmatpush1.bf16.msra.mxu0 %v1904
  %2456 = vmatprep.subr.bf16.mxu0 0
  %2457 = vmatpush2.bf16.msra.mxu0 0
  %2458 = vmatprep.subr.bf16.mxu0 0
  %2459 = vmatpush2.bf16.msra.mxu0 0
  %2460 = vmatprep.subr.bf16.mxu0 0
  %2461 = vmatpush2.bf16.msra.mxu0 0
  %2462 = vmatprep.subr.bf16.mxu0 0
  %2463 = vmatpush2.bf16.msra.mxu0 0
  %2464 = vmatprep.subr.bf16.mxu0 0
  %2465 = vmatpush2.bf16.msra.mxu0 0
  %2466 = vmatprep.subr.bf16.mxu0 0
  %2467 = vmatpush2.bf16.msra.mxu0 0
  %2468 = vmatprep.subr.bf16.mxu0 0
  %2469 = vmatpush2.bf16.msra.mxu0 0
  %2470 = vmatprep.subr.bf16.mxu0 0
  %2471 = vmatpush2.bf16.msra.mxu0 0
  %2472 = vmatprep.mubr.bf16.mxu0 0
  %2473 = vmatmul.mubr.bf16.gmra.mxu0 %v2064
  %v2474 = vpop.f32.mrf.mxu0
  %v2475 = vadd.f32 %v2402, %v2474
  %v2476 = vpop.f32.mrf.mxu0
  %v2477 = vadd.f32 %v2404, %v2476
  %v2478 = vpop.f32.mrf.mxu0
  %v2479 = vadd.f32 %v2406, %v2478
  %v2480 = vpop.f32.mrf.mxu0
  %v2481 = vadd.f32 %v2408, %v2480
  %2482 = vmatprep.mubr.bf16.mxu0 0
  %2483 = vmatmul.mubr.bf16.gmra.mxu0 %v2067
  %v2484 = vpop.f32.mrf.mxu0
  %v2485 = vadd.f32 %v2412, %v2484
  %v2486 = vpop.f32.mrf.mxu0
  %v2487 = vadd.f32 %v2414, %v2486
  %v2488 = vpop.f32.mrf.mxu0
  %v2489 = vadd.f32 %v2416, %v2488
  %v2490 = vpop.f32.mrf.mxu0
  %v2491 = vadd.f32 %v2418, %v2490
  %2492 = vmatprep.mubr.bf16.mxu0 0
  %2493 = vmatmul.mubr.bf16.gmra.mxu0 %v2070
  %v2494 = vpop.f32.mrf.mxu0
  %v2495 = vadd.f32 %v2422, %v2494
  %v2496 = vpop.f32.mrf.mxu0
  %v2497 = vadd.f32 %v2424, %v2496
  %v2498 = vpop.f32.mrf.mxu0
  %v2499 = vadd.f32 %v2426, %v2498
  %v2500 = vpop.f32.mrf.mxu0
  %v2501 = vadd.f32 %v2428, %v2500
  %2502 = vmatprep.mubr.bf16.mxu0 0
  %2503 = vmatmul.mubr.bf16.gmra.mxu0 %v2073
  %v2504 = vpop.f32.mrf.mxu0
  %v2505 = vadd.f32 %v2432, %v2504
  %v2506 = vpop.f32.mrf.mxu0
  %v2507 = vadd.f32 %v2434, %v2506
  %v2508 = vpop.f32.mrf.mxu0
  %v2509 = vadd.f32 %v2436, %v2508
  %v2510 = vpop.f32.mrf.mxu0
  %v2511 = vadd.f32 %v2438, %v2510
  %2512 = vdwg.mxu0
  %v2513 = vld [vmem:[%s4] sm:$0xff]
  %v2514 = vld [vmem:[%s4 + $0x8] sm:$0xff]
  %v2515 = vld [vmem:[%s4 + $0x10] sm:$0xff]
  %v2516 = vld [vmem:[%s4 + $0x18] sm:$0xff]
  %v2517 = vld [vmem:[%s4 + $0x20] sm:$0xff]
  %v2518 = vld [vmem:[%s4 + $0x28] sm:$0xff]
  %v2519 = vld [vmem:[%s4 + $0x30] sm:$0xff]
  %v2520 = vld [vmem:[%s4 + $0x38] sm:$0xff]
  %2522 = vset.pattern.permute.xlu0 0
  %2523 = vperm.xlu0 %2522, %v2513
  %v2524 = vpop.permute.xlu0 %2523
  %2527 = vset.pattern.permute.xlu0 0
  %2528 = vperm.xlu0 %2527, %v2514
  %v2529 = vpop.permute.xlu0 %2528
  %2532 = vset.pattern.permute.xlu0 0
  %2533 = vperm.xlu0 %2532, %v2515
  %v2534 = vpop.permute.xlu0 %2533
  %2537 = vset.pattern.permute.xlu0 0
  %2538 = vperm.xlu0 %2537, %v2516
  %v2539 = vpop.permute.xlu0 %2538
  %2542 = vset.pattern.permute.xlu0 0
  %2543 = vperm.xlu0 %2542, %v2517
  %v2544 = vpop.permute.xlu0 %2543
  %2547 = vset.pattern.permute.xlu0 0
  %2548 = vperm.xlu0 %2547, %v2518
  %v2549 = vpop.permute.xlu0 %2548
  %2552 = vset.pattern.permute.xlu0 0
  %2553 = vperm.xlu0 %2552, %v2519
  %v2554 = vpop.permute.xlu0 %2553
  %2557 = vset.pattern.permute.xlu0 0
  %2558 = vperm.xlu0 %2557, %v2520
  %v2559 = vpop.permute.xlu0 %2558
  %v2561 = vadd.f32 %v2256, %v2524
  %v2562 = vadd.f32 %v2258, %v2524
  %v2563 = vadd.f32 %v2475, %v2524
  %v2564 = vadd.f32 %v2477, %v2524
  %v2565 = vadd.f32 %v2260, %v2529
  %v2566 = vadd.f32 %v2262, %v2529
  %v2567 = vadd.f32 %v2479, %v2529
  %v2568 = vadd.f32 %v2481, %v2529
  %v2569 = vadd.f32 %v2266, %v2534
  %v2570 = vadd.f32 %v2268, %v2534
  %v2571 = vadd.f32 %v2485, %v2534
  %v2572 = vadd.f32 %v2487, %v2534
  %v2573 = vadd.f32 %v2270, %v2539
  %v2574 = vadd.f32 %v2272, %v2539
  %v2575 = vadd.f32 %v2489, %v2539
  %v2576 = vadd.f32 %v2491, %v2539
  %v2577 = vadd.f32 %v2276, %v2544
  %v2578 = vadd.f32 %v2278, %v2544
  %v2579 = vadd.f32 %v2495, %v2544
  %v2580 = vadd.f32 %v2497, %v2544
  %v2581 = vadd.f32 %v2280, %v2549
  %v2582 = vadd.f32 %v2282, %v2549
  %v2583 = vadd.f32 %v2499, %v2549
  %v2584 = vadd.f32 %v2501, %v2549
  %v2585 = vadd.f32 %v2286, %v2554
  %v2586 = vadd.f32 %v2288, %v2554
  %v2587 = vadd.f32 %v2505, %v2554
  %v2588 = vadd.f32 %v2507, %v2554
  %v2589 = vadd.f32 %v2290, %v2559
  %v2590 = vadd.f32 %v2292, %v2559
  %v2591 = vadd.f32 %v2509, %v2559
  %v2592 = vadd.f32 %v2511, %v2559
  %v2593 = vmax.f32 %v2561, 0.0
  %v2594 = vmax.f32 %v2562, 0.0
  %v2595 = vmax.f32 %v2563, 0.0
  %v2596 = vmax.f32 %v2564, 0.0
  %v2597 = vmax.f32 %v2565, 0.0
  %v2598 = vmax.f32 %v2566, 0.0
  %v2599 = vmax.f32 %v2567, 0.0
  %v2600 = vmax.f32 %v2568, 0.0
  %v2601 = vmax.f32 %v2569, 0.0
  %v2602 = vmax.f32 %v2570, 0.0
  %v2603 = vmax.f32 %v2571, 0.0
  %v2604 = vmax.f32 %v2572, 0.0
  %v2605 = vmax.f32 %v2573, 0.0
  %v2606 = vmax.f32 %v2574, 0.0
  %v2607 = vmax.f32 %v2575, 0.0
  %v2608 = vmax.f32 %v2576, 0.0
  %v2609 = vmax.f32 %v2577, 0.0
  %v2610 = vmax.f32 %v2578, 0.0
  %v2611 = vmax.f32 %v2579, 0.0
  %v2612 = vmax.f32 %v2580, 0.0
  %v2613 = vmax.f32 %v2581, 0.0
  %v2614 = vmax.f32 %v2582, 0.0
  %v2615 = vmax.f32 %v2583, 0.0
  %v2616 = vmax.f32 %v2584, 0.0
  %v2617 = vmax.f32 %v2585, 0.0
  %v2618 = vmax.f32 %v2586, 0.0
  %v2619 = vmax.f32 %v2587, 0.0
  %v2620 = vmax.f32 %v2588, 0.0
  %v2621 = vmax.f32 %v2589, 0.0
  %v2622 = vmax.f32 %v2590, 0.0
  %v2623 = vmax.f32 %v2591, 0.0
  %v2624 = vmax.f32 %v2592, 0.0
  %v2625 = vld [vmem:[%s5] sm:$0x1]
  %v2626 = vpack.c.bf16 %v2597, %v2593
  %v2627 = vpack.c.bf16 %v2598, %v2594
  %v2628 = vpack.c.bf16 %v2599, %v2595
  %v2629 = vpack.c.bf16 %v2600, %v2596
  %v2630 = vpack.c.bf16 %v2605, %v2601
  %v2631 = vpack.c.bf16 %v2606, %v2602
  %v2632 = vpack.c.bf16 %v2607, %v2603
  %v2633 = vpack.c.bf16 %v2608, %v2604
  %v2634 = vpack.c.bf16 %v2613, %v2609
  %v2635 = vpack.c.bf16 %v2614, %v2610
  %v2636 = vpack.c.bf16 %v2615, %v2611
  %v2637 = vpack.c.bf16 %v2616, %v2612
  %v2638 = vpack.c.bf16 %v2621, %v2617
  %v2639 = vpack.c.bf16 %v2622, %v2618
  %v2640 = vpack.c.bf16 %v2623, %v2619
  %v2641 = vpack.c.bf16 %v2624, %v2620
  %v2642 = vld [vmem:[#allocation2] sm:$0x1]
  %2644 = vset.pattern.permute.xlu0 0
  %2645 = vperm.xlu0 %2644, %v2642
  %v2646 = vpop.permute.xlu0 %2645
  %v2648 = vlaneseq
  %v2649 = vshrl.u32 %v2648, 7
  %v2650 = vsub.s32 0, %v2649
  %v2651 = vrot.slane %v2646, %v2650
  %v2653 = vsel %vm2062, %v2625, 0
  %2655 = vmatprep.subr.bf16.mxu0 0
  %2656 = vmatpush1.bf16.msra.mxu0 0
  %2657 = vmatprep.subr.bf16.mxu0 0
  %2658 = vmatpush1.bf16.msra.mxu0 0
  %2659 = vmatprep.subr.bf16.mxu0 0
  %2660 = vmatpush1.bf16.msra.mxu0 0
  %2661 = vmatprep.subr.bf16.mxu0 0
  %2662 = vmatpush1.bf16.msra.mxu0 0
  %2663 = vmatprep.subr.bf16.mxu0 %v2639
  %2664 = vmatpush1.bf16.msra.mxu0 %v2638
  %2665 = vmatprep.subr.bf16.mxu0 %v2635
  %2666 = vmatpush1.bf16.msra.mxu0 %v2634
  %2667 = vmatprep.subr.bf16.mxu0 %v2631
  %2668 = vmatpush1.bf16.msra.mxu0 %v2630
  %2669 = vmatprep.subr.bf16.mxu0 %v2627
  %2670 = vmatpush1.bf16.msra.mxu0 %v2626
  %2671 = vmatprep.subr.bf16.mxu0 0
  %2672 = vmatpush2.bf16.msra.mxu0 0
  %2673 = vmatprep.subr.bf16.mxu0 0
  %2674 = vmatpush2.bf16.msra.mxu0 0
  %2675 = vmatprep.subr.bf16.mxu0 0
  %2676 = vmatpush2.bf16.msra.mxu0 0
  %2677 = vmatprep.subr.bf16.mxu0 0
  %2678 = vmatpush2.bf16.msra.mxu0 0
  %2679 = vmatprep.subr.bf16.mxu0 0
  %2680 = vmatpush2.bf16.msra.mxu0 0
  %2681 = vmatprep.subr.bf16.mxu0 0
  %2682 = vmatpush2.bf16.msra.mxu0 0
  %2683 = vmatprep.subr.bf16.mxu0 0
  %2684 = vmatpush2.bf16.msra.mxu0 0
  %2685 = vmatprep.subr.bf16.mxu0 0
  %2686 = vmatpush2.bf16.msra.mxu0 0
  %2687 = vmatprep.mubr.bf16.mxu0 0
  %2688 = vmatmul.mubr.bf16.gmra.mxu0 %v2653
  %v2689 = vpop.f32.mrf.mxu0
  %v2690 = vadd.f32 %v2651, %v2689
  %v2691 = vpop.f32.mrf.mxu0
  %v2692 = vadd.f32 %v2651, %v2691
  %v2693 = vpop.f32.mrf.mxu0
  %v2694 = vpop.f32.mrf.mxu0
  %2695 = vdwg.mxu0
  %2696 = vmatprep.subr.bf16.mxu0 0
  %2697 = vmatpush1.bf16.msra.mxu0 0
  %2698 = vmatprep.subr.bf16.mxu0 0
  %2699 = vmatpush1.bf16.msra.mxu0 0
  %2700 = vmatprep.subr.bf16.mxu0 0
  %2701 = vmatpush1.bf16.msra.mxu0 0
  %2702 = vmatprep.subr.bf16.mxu0 0
  %2703 = vmatpush1.bf16.msra.mxu0 0
  %2704 = vmatprep.subr.bf16.mxu0 %v2641
  %2705 = vmatpush1.bf16.msra.mxu0 %v2640
  %2706 = vmatprep.subr.bf16.mxu0 %v2637
  %2707 = vmatpush1.bf16.msra.mxu0 %v2636
  %2708 = vmatprep.subr.bf16.mxu0 %v2633
  %2709 = vmatpush1.bf16.msra.mxu0 %v2632
  %2710 = vmatprep.subr.bf16.mxu0 %v2629
  %2711 = vmatpush1.bf16.msra.mxu0 %v2628
  %2712 = vmatprep.subr.bf16.mxu0 0
  %2713 = vmatpush2.bf16.msra.mxu0 0
  %2714 = vmatprep.subr.bf16.mxu0 0
  %2715 = vmatpush2.bf16.msra.mxu0 0
  %2716 = vmatprep.subr.bf16.mxu0 0
  %2717 = vmatpush2.bf16.msra.mxu0 0
  %2718 = vmatprep.subr.bf16.mxu0 0
  %2719 = vmatpush2.bf16.msra.mxu0 0
  %2720 = vmatprep.subr.bf16.mxu0 0
  %2721 = vmatpush2.bf16.msra.mxu0 0
  %2722 = vmatprep.subr.bf16.mxu0 0
  %2723 = vmatpush2.bf16.msra.mxu0 0
  %2724 = vmatprep.subr.bf16.mxu0 0
  %2725 = vmatpush2.bf16.msra.mxu0 0
  %2726 = vmatprep.subr.bf16.mxu0 0
  %2727 = vmatpush2.bf16.msra.mxu0 0
  %2728 = vmatprep.mubr.bf16.mxu0 0
  %2729 = vmatmul.mubr.bf16.gmra.mxu0 %v2653
  %v2730 = vpop.f32.mrf.mxu0
  %v2731 = vadd.f32 %v2651, %v2730
  %v2732 = vpop.f32.mrf.mxu0
  %v2733 = vadd.f32 %v2651, %v2732
  %v2734 = vpop.f32.mrf.mxu0
  %v2735 = vpop.f32.mrf.mxu0
  %2736 = vdwg.mxu0
  %v2741 = vcombine.low %v2690, %v2692
  %v2742 = vcombine.low %v2731, %v2733
  %v2744 = vunpack.c.l.s4 1966171168
  %v2745 = vunpack.c.0.s8 %v2744
  %v2746 = vlaneseq
  %v2747 = vshrl.u32 %v2746, 7
  %v2748 = vsub.s32 %v2745, %v2747
  %v2749 = vrot.slane %v2741, %v2748
  %v2751 = vunpack.c.l.s4 1966171168
  %v2752 = vunpack.c.0.s8 %v2751
  %v2753 = vlaneseq
  %v2754 = vshrl.u32 %v2753, 7
  %v2755 = vsub.s32 %v2752, %v2754
  %v2756 = vrot.slane %v2742, %v2755
  %v2757 = vcombine.low %v2749, %v2756
  %v2759 = vunpack.c.l.s4 1966171168
  %v2760 = vunpack.c.0.s8 %v2759
  %v2761 = vlaneseq
  %v2762 = vshrl.u32 %v2761, 7
  %v2763 = vsub.s32 %v2760, %v2762
  %v2764 = vrot.slane %v2757, %v2763
  %v2766 = vlaneseq
  %vm2767 = vcmp.ge.s32.totalorder %v2766, 0
  %vm2768 = vcmp.lt.s32.totalorder %v2766, 512
  %vm2769 = vmand %vm2767, %vm2768
  %2770 = vst.msk [vmem:[%s7] sm:$0xf] %vm2769, %v2764
  // Predicated region
  $region30: #{_lambda_.18} parent=0 // pred_check
    _
  $region31: #{_lambda_.18} parent=0 // pred_check_branch
    %2772 = sbr.rel (0) target = $region33
  $region32: #{_lambda_.18} parent=0 // pred_region
    _
  $region33: #{_lambda_.18} parent=0 // pred_fallthru
    _
  // Predicated region
  $region34: #{_lambda_.18} parent=0 // pred_check
    _
  $region35: #{_lambda_.18} parent=0 // pred_check_branch
    %2774 = sbr.rel (0) target = $region37
  $region36: #{_lambda_.18} parent=0 // pred_region
    _
  $region37: #{_lambda_.18} parent=0 // pred_fallthru
    _

</llo_original>
